<compile_context>
chip_gen: v7x
topology: tpu7x:2x2x1
jax: 0.10.0
libtpu: 0.0.40
codegen_flags: <defaults>
</compile_context>

<pallas_src>
import functools
import math

import jax
import jax.numpy as jnp
from jax import lax
from jax.experimental import pallas as pl
from jax.experimental.pallas import tpu as pltpu

_VMEM_BUDGET = 48 * 1024 * 1024  # fits v7x (64 MiB physical) with headroom; fine on v5e/v6e


# ----------------------------------------------------------------------------
# sass(): exact re-implementation of the PyTorch order/direction generation
# (pure Python, runs at trace time; includes the original o3_inverse quirk).
# ----------------------------------------------------------------------------
def sass(hw_shape):
    H, W = hw_shape
    L = H * W
    o1, o2, o3, o4 = [], [], [], []
    d1, d2, d3, d4 = [], [], [], []
    o1_inverse = [-1] * L
    o2_inverse = [-1] * L
    o3_inverse = [-1] * L
    o4_inverse = [-1] * L

    if H % 2 == 1:
        i, j = H - 1, W - 1
        j_d = "left"
    else:
        i, j = H - 1, 0
        j_d = "right"
    while i > -1:
        idx = i * W + j
        o1_inverse[idx] = len(o1)
        o1.append(idx)
        if j_d == "right":
            if j < W - 1:
                j = j + 1
                d1.append(1)
            else:
                i = i - 1
                d1.append(3)
                j_d = "left"
        elif j > 0:
            j = j - 1
            d1.append(2)
        else:
            i = i - 1
            d1.append(3)
            j_d = "right"
    d1 = [0] + d1[:-1]

    i, j = 0, 0
    i_d = "down"
    while j < W:
        idx = i * W + j
        o2_inverse[idx] = len(o2)
        o2.append(idx)
        if i_d == "down":
            if i < H - 1:
                i = i + 1
                d2.append(4)
            else:
                j = j + 1
                d2.append(1)
                i_d = "up"
        elif i > 0:
            i = i - 1
            d2.append(3)
        else:
            j = j + 1
            d2.append(1)
            i_d = "down"
    d2 = [0] + d2[:-1]

    for diag in range(H + W - 1):
        if diag % 2 == 0:
            for i in range(min(diag + 1, H)):
                j = diag - i
                if j < W:
                    idx = i * W + j
                    o3.append(idx)
                    o3_inverse[idx] = len(o1) - 1  # NOTE: reproduces original code exactly
                    d3.append(1 if j == diag else 4)
        else:
            for j in range(min(diag + 1, W)):
                i = diag - j
                if i < H:
                    idx = i * W + j
                    o3.append(idx)
                    o3_inverse[idx] = len(o1) - 1
                    d3.append(4 if i == diag else 1)
    d3 = [0] + d3[:-1]

    for diag in range(H + W - 1):
        if diag % 2 == 0:
            for i in range(min(diag + 1, H)):
                j = diag - i
                if j < W:
                    idx = i * W + (W - j - 1)
                    o4.append(idx)
                    o4_inverse[idx] = len(o4) - 1
                    d4.append(1 if j == diag else 4)
        else:
            for j in range(min(diag + 1, W)):
                i = diag - j
                if i < H:
                    idx = i * W + (W - j - 1)
                    o4.append(idx)
                    o4_inverse[idx] = len(o4) - 1
                    d4.append(4 if i == diag else 1)
    d4 = [0] + d4[:-1]

    return ((o1, o2, o3, o4),
            (o1_inverse, o2_inverse, o3_inverse, o4_inverse),
            (d1, d2, d3, d4))


# ----------------------------------------------------------------------------
# Tiled matmul kernel (bf16 MXU operands, f32 accumulate, optional fused
# SiLU-gating of the LHS:  out = (x * silu(z)) @ w + b).
# ----------------------------------------------------------------------------
def _mm_kernel(gated, *args):
    if gated:
        x_ref, z_ref, w_ref, b_ref, o_ref, acc_ref = args
    else:
        x_ref, w_ref, b_ref, o_ref, acc_ref = args

    @pl.when(pl.program_id(2) == 0)
    def _():
        acc_ref[...] = jnp.zeros_like(acc_ref)

    if gated:
        z = z_ref[...].astype(jnp.float32)
        lhs = (x_ref[...].astype(jnp.float32) * (z * jax.nn.sigmoid(z)))
        lhs = lhs.astype(jnp.bfloat16)
    else:
        lhs = x_ref[...].astype(jnp.bfloat16)
    acc_ref[...] += jnp.dot(lhs, w_ref[...], preferred_element_type=jnp.float32)

    @pl.when(pl.program_id(2) == pl.num_programs(2) - 1)
    def _():
        o_ref[...] = (acc_ref[...] + b_ref[...]).astype(o_ref.dtype)


def _tile_and_pad(dim, cap):
    if dim <= cap:
        return dim, dim
    pad = (-dim) % cap
    return cap, dim + pad


def _pad2(a, r, c):
    if a.shape == (r, c):
        return a
    return jnp.pad(a, ((0, r - a.shape[0]), (0, c - a.shape[1])))


def pallas_matmul(x, w, b=None, *, z=None, tm_max=256, tn_max=256, tk_max=512):
    """out = (x [* silu(z)]) @ w + b  -- tiled over (M, N, K)."""
    m, k = x.shape
    n = w.shape[1]
    gated = z is not None

    tm, mp = _tile_and_pad(m, tm_max)
    tn, np_ = _tile_and_pad(n, tn_max)
    tk, kp = _tile_and_pad(k, tk_max)

    xin = x if gated else x.astype(jnp.bfloat16)   # gate math stays f32 (v5e VPU has no bf16)
    xin = _pad2(xin, mp, kp)
    wp = _pad2(w.astype(jnp.bfloat16), kp, np_)
    if b is None:
        bp = jnp.zeros((1, np_), jnp.float32)
    else:
        bp = _pad2(b.reshape(1, n).astype(jnp.float32), 1, np_)

    operands = [xin]
    in_specs = [pl.BlockSpec((tm, tk), lambda i, j, kk: (i, kk))]
    if gated:
        operands.append(_pad2(z, mp, kp))
        in_specs.append(pl.BlockSpec((tm, tk), lambda i, j, kk: (i, kk)))
    operands += [wp, bp]
    in_specs += [pl.BlockSpec((tk, tn), lambda i, j, kk: (kk, j)),
                 pl.BlockSpec((1, tn), lambda i, j, kk: (0, j))]

    out = pl.pallas_call(
        functools.partial(_mm_kernel, gated),
        out_shape=jax.ShapeDtypeStruct((mp, np_), jnp.float32),
        grid_spec=pltpu.PrefetchScalarGridSpec(
            num_scalar_prefetch=0,
            grid=(mp // tm, np_ // tn, kp // tk),
            in_specs=in_specs,
            out_specs=pl.BlockSpec((tm, tn), lambda i, j, kk: (i, j)),
            scratch_shapes=[pltpu.VMEM((tm, tn), jnp.float32)],
        ),
        compiler_params=pltpu.CompilerParams(
            dimension_semantics=("parallel", "parallel", "arbitrary"),
            vmem_limit_bytes=_VMEM_BUDGET),
    )(*operands)
    if (mp, np_) != (m, n):
        out = out[:m, :n]
    return out


# ----------------------------------------------------------------------------
# Fused BottConv (pointwise1 + bias -> 3x3 depthwise -> pointwise2) + SiLU.
# One grid step per batch image; the padded intermediate lives in VMEM only.
# ----------------------------------------------------------------------------
def _bottconv_kernel(H, W, x_ref, w1_ref, b1_ref, wdw_ref, w2_ref, o_ref,
                     pad_scr, mid_scr):
    mid = w1_ref.shape[1]
    # pointwise 1 (MXU) + bias
    h = jnp.dot(x_ref[...].astype(jnp.bfloat16), w1_ref[...],
                preferred_element_type=jnp.float32) + b1_ref[...]        # (L, mid)
    # scatter rows into zero-padded halo scratch (all 2-D static ops)
    pad_scr[...] = jnp.zeros_like(pad_scr)
    for i in range(H):
        pad_scr[i + 1, 1:W + 1, :] = h[i * W:(i + 1) * W, :]
    # 3x3 depthwise conv, one output row at a time
    for i in range(H):
        acc = jnp.zeros((W, mid), jnp.float32)
        for ky in range(3):
            for kx in range(3):
                tap = ky * 3 + kx
                acc = acc + pad_scr[i + ky, kx:kx + W, :] * wdw_ref[tap:tap + 1, :]
        mid_scr[i * W:(i + 1) * W, :] = acc
    # pointwise 2 (MXU) + SiLU
    g = jnp.dot(mid_scr[...].astype(jnp.bfloat16), w2_ref[...],
                preferred_element_type=jnp.float32)                      # (L, E)
    o_ref[...] = g * jax.nn.sigmoid(g)


def pallas_bottconv_silu(x_bld, w1, b1, wdw, w2, H, W):
    # TODO(synk): for large H*W tile over row-blocks with an explicit halo instead of
    #             one whole image per grid step.
    bsz, L, E = x_bld.shape
    mid = w1.shape[1]
    return pl.pallas_call(
        functools.partial(_bottconv_kernel, H, W),
        out_shape=jax.ShapeDtypeStruct((bsz, L, E), jnp.float32),
        grid_spec=pltpu.PrefetchScalarGridSpec(
            num_scalar_prefetch=0,
            grid=(bsz,),
            in_specs=[
                pl.BlockSpec((None, L, E), lambda b: (b, 0, 0)),
                pl.BlockSpec((E, mid), lambda b: (0, 0)),
                pl.BlockSpec((1, mid), lambda b: (0, 0)),
                pl.BlockSpec((9, mid), lambda b: (0, 0)),
                pl.BlockSpec((mid, E), lambda b: (0, 0)),
            ],
            out_specs=pl.BlockSpec((None, L, E), lambda b: (b, 0, 0)),
            scratch_shapes=[pltpu.VMEM((H + 2, W + 2, mid), jnp.float32),
                            pltpu.VMEM((L, mid), jnp.float32)],
        ),
        compiler_params=pltpu.CompilerParams(
            dimension_semantics=("parallel",),
            vmem_limit_bytes=_VMEM_BUDGET),
    )(x_bld,
      w1.astype(jnp.bfloat16),
      b1.reshape(1, mid).astype(jnp.float32),
      wdw.reshape(9, mid).astype(jnp.float32),
      w2.astype(jnp.bfloat16))


# ----------------------------------------------------------------------------
# Selective scan: all 4 directions per grid step, lane-dense layouts, chunked
# recurrence (8 statically-unrolled timesteps per fori iteration), state carried
# across L-blocks in a VMEM scratch.
# ----------------------------------------------------------------------------
def _scan_kernel(u_ref, dt_ref, A_ref, Beff_ref, C_ref, D4_ref, bias_ref,
                 y_ref, state_scr, ybuf_scr):
    N, E = A_ref.shape
    TL = dt_ref.shape[0]
    TS = 8                       # timesteps per statically-unrolled chunk
    n_sub = TL // TS

    # reset carried SSM state at the start of each sequence
    @pl.when(pl.program_id(1) == 0)
    def _():
        state_scr[...] = jnp.zeros_like(state_scr)

    A = A_ref[...]               # (N, E)
    bias_row = bias_ref[...]     # (1, E)
    d4 = D4_ref[...]             # (1, 4E)

    init = tuple(state_scr[k * N:(k + 1) * N, :] for k in range(4))

    def sub_body(s, states):
        r0 = pl.multiple_of(s * TS, TS)
        # chunk-level (recomputed, no full-length scratch) operands
        dt_sp = jax.nn.softplus(dt_ref[pl.ds(r0, TS), :] + bias_row)      # (TS, E)
        u_ch = u_ref[pl.ds(r0, TS), :]                                     # (TS, 4E)
        c_ch = C_ref[pl.ds(r0, TS), :]                                     # (TS, N)
        bT = Beff_ref[pl.ds(r0, TS), :].T                                  # (4N, TS)
        w = [dt_sp * u_ch[:, k * E:(k + 1) * E] for k in range(4)]         # 4 x (TS, E)
        sts = list(states)
        for t in range(TS):                                                # static unroll
            dA_t = jnp.exp(dt_sp[t:t + 1, :] * A)                          # (N, E), shared
            c_row = c_ch[t:t + 1, :]                                       # (1, N)
            for k in range(4):                                             # 4 directions
                st = dA_t * sts[k] + bT[k * N:(k + 1) * N, t:t + 1] * w[k][t:t + 1, :]
                sts[k] = st
                ybuf_scr[t:t + 1, k * E:(k + 1) * E] = jnp.dot(
                    c_row, st, preferred_element_type=jnp.float32)         # (1, E)
        # blocked, aligned, lane-dense 8-row store (+ skip-connection u * D)
        y_ref[pl.ds(r0, TS), :] = ybuf_scr[...] + u_ch * d4
        return tuple(sts)

    final = lax.fori_loop(0, n_sub, sub_body, init)
    for k in range(4):
        state_scr[k * N:(k + 1) * N, :] = final[k]


def _pick_l_block(L):
    if L <= 512:
        return L
    for cand in (512, 384, 256, 128):
        if L % cand == 0:
            return cand
    return L


def pallas_selective_scan(u_cat, dt, A_t, Beff_cat, C, D4, bias):
    bsz, L, E4 = u_cat.shape
    E = dt.shape[-1]
    N = A_t.shape[0]
    assert E4 == 4 * E
    assert L % 8 == 0  # TODO(synk): pad ragged sequence lengths to a multiple of 8
    tl = _pick_l_block(L)
    n_lb = L // tl

    return pl.pallas_call(
        _scan_kernel,
        out_shape=jax.ShapeDtypeStruct((bsz, L, 4 * E), jnp.float32),
        grid_spec=pltpu.PrefetchScalarGridSpec(
            num_scalar_prefetch=0,
            grid=(bsz, n_lb),
            in_specs=[
                pl.BlockSpec((None, tl, 4 * E), lambda b, lb: (b, lb, 0)),  # u (4 dirs on lanes)
                pl.BlockSpec((None, tl, E), lambda b, lb: (b, lb, 0)),      # dt (pre-softplus)
                pl.BlockSpec((N, E), lambda b, lb: (0, 0)),                 # A^T
                pl.BlockSpec((None, tl, 4 * N), lambda b, lb: (b, lb, 0)),  # B_eff (4 dirs)
                pl.BlockSpec((None, tl, N), lambda b, lb: (b, lb, 0)),      # C
                pl.BlockSpec((1, 4 * E), lambda b, lb: (0, 0)),             # D tiled x4
                pl.BlockSpec((1, E), lambda b, lb: (0, 0)),                 # delta_bias
            ],
            out_specs=pl.BlockSpec((None, tl, 4 * E), lambda b, lb: (b, lb, 0)),
            scratch_shapes=[pltpu.VMEM((4 * N, E), jnp.float32),   # carried SSM state
                            pltpu.VMEM((8, 4 * E), jnp.float32)],  # per-chunk y staging
        ),
        compiler_params=pltpu.CompilerParams(
            dimension_semantics=("parallel", "arbitrary"),
            vmem_limit_bytes=_VMEM_BUDGET),
    )(u_cat, dt, A_t, Beff_cat, C, D4, bias)


# ----------------------------------------------------------------------------
# Deterministic (synthetic) parameter initialization — shapes match the module.
# ----------------------------------------------------------------------------
def init_params(key, d_model, d_state=16, expand=2, dt_min=0.001, dt_max=0.1,
                dt_init_floor=1e-4, dt_scale=1.0):
    d_inner = int(expand * d_model)
    dt_rank = math.ceil(d_model / 16)
    mid = d_inner // 16
    ks = jax.random.split(key, 12)
    p = {}
    p["w_in"] = jax.random.normal(ks[0], (d_model, 2 * d_inner), jnp.float32) * 0.05
    p["w_pw1"] = jax.random.normal(ks[1], (d_inner, mid), jnp.float32) * 0.1
    p["b_pw1"] = jax.random.normal(ks[2], (mid,), jnp.float32) * 0.02
    p["w_dw"] = jax.random.normal(ks[3], (3, 3, mid), jnp.float32) * 0.2
    p["w_pw2"] = jax.random.normal(ks[4], (mid, d_inner), jnp.float32) * 0.1
    p["w_xproj"] = jax.random.normal(ks[5], (d_inner, dt_rank + 2 * d_state),
                                     jnp.float32) * 0.05
    dt_init_std = dt_rank ** -0.5 * dt_scale
    p["w_dtproj"] = jax.random.uniform(ks[6], (dt_rank, d_inner), jnp.float32,
                                       minval=-dt_init_std, maxval=dt_init_std)
    dtv = jnp.exp(jax.random.uniform(ks[7], (d_inner,), jnp.float32)
                  * (math.log(dt_max) - math.log(dt_min)) + math.log(dt_min))
    dtv = jnp.maximum(dtv, dt_init_floor)
    p["b_dtproj"] = dtv + jnp.log(-jnp.expm1(-dtv))
    A = jnp.tile(jnp.arange(1, d_state + 1, dtype=jnp.float32)[None, :], (d_inner, 1))
    p["A_log"] = jnp.log(A)
    p["D"] = jnp.ones((d_inner,), jnp.float32)
    p["w_out"] = jax.random.normal(ks[8], (d_inner, d_model), jnp.float32) * 0.05
    p["dir_Bs"] = 0.02 * jax.random.truncated_normal(ks[9], -2.0, 2.0,
                                                     (5, d_state), jnp.float32)
    cfg = dict(d_model=d_model, d_inner=d_inner, d_state=d_state,
               dt_rank=dt_rank, mid=mid)
    return p, cfg


# ----------------------------------------------------------------------------
# Forward pass.
# ----------------------------------------------------------------------------
def savss_forward(x, hw_shape, params, cfg):
    bsz, L, d_model = x.shape
    H, W = hw_shape
    E, N, R = cfg["d_inner"], cfg["d_state"], cfg["dt_rank"]

    # in_proj (no bias)
    xz = pallas_matmul(x.reshape(bsz * L, d_model), params["w_in"])        # (B*L, 2E)
    xpart = xz[:, :E].reshape(bsz, L, E)
    z = xz[:, E:]                                                          # (B*L, E)

    # fused BottConv + SiLU (NHWC; 1x1 convs are channel matmuls)
    x_conv = pallas_bottconv_silu(xpart, params["w_pw1"], params["b_pw1"],
                                  params["w_dw"], params["w_pw2"], H, W)   # (B, L, E)

    # x_proj, dt_proj (dt_proj bias is applied here AND again as delta_bias in the scan,
    # exactly like the PyTorch module)
    x_dbl = pallas_matmul(x_conv.reshape(bsz * L, E), params["w_xproj"])   # (B*L, R+2N)
    dt_r = x_dbl[:, :R]
    Bc = x_dbl[:, R:R + N].reshape(bsz, L, N)
    Cc = x_dbl[:, R + N:].reshape(bsz, L, N)
    dt = pallas_matmul(dt_r, params["w_dtproj"], params["b_dtproj"]).reshape(bsz, L, E)

    # scan orders / directions (static Python at trace time)
    orders_py, inv_py, dirs_py = sass(hw_shape)
    orders = [jnp.array(o, jnp.int32) for o in orders_py]
    invs = [jnp.array(o, jnp.int32) for o in inv_py]
    dircodes = [jnp.array(d, jnp.int32) for d in dirs_py]

    # TODO(synk): the order / inverse-order permutations stay as jnp.take in XLA glue;
    #             an in-kernel gather via scalar-prefetched index tables would remove the
    #             4x HBM replication of x_conv and the extra y round trip.
    u_cat = jnp.concatenate([jnp.take(x_conv, o, axis=1) for o in orders], axis=-1)   # (B,L,4E)
    dBs = [jnp.take(params["dir_Bs"], d, axis=0) for d in dircodes]                   # (L,N) each
    Beff_cat = jnp.concatenate([Bc + dB[None] for dB in dBs], axis=-1)                # (B,L,4N)

    A_t = -(jnp.exp(params["A_log"])).T                                               # (N, E)
    D4 = jnp.tile(params["D"], 4).reshape(1, 4 * E)
    bias = params["b_dtproj"].reshape(1, E)

    y_cat = pallas_selective_scan(u_cat, dt, A_t, Beff_cat, Cc, D4, bias)             # (B,L,4E)

    # inverse-order gathers + direction sum (glue; preserves the o3_inverse quirk)
    ysum = jnp.zeros((bsz, L, E), jnp.float32)
    for k in range(4):
        ysum = ysum + jnp.take(y_cat[..., k * E:(k + 1) * E], invs[k], axis=1)

    # fused gate (ysum * silu(z)) + out_proj
    out = pallas_matmul(ysum.reshape(bsz * L, E), params["w_out"], z=z)
    return out.reshape(bsz, L, d_model)


# ----------------------------------------------------------------------------
# Pure-JAX f32 reference (for correctness check)
# ----------------------------------------------------------------------------
def _ref_selective_scan(u, delta, A, Bm, Cm, Dvec, delta_bias):
    delta = jax.nn.softplus(delta + delta_bias[None, None, :])
    dA = jnp.exp(jnp.einsum("ble,en->blen", delta, A))
    dBu = jnp.einsum("ble,bln,ble->blen", delta, Bm, u)

    def step(state, xs):
        dA_l, dBu_l, c_l = xs
        state = dA_l * state + dBu_l
        return state, jnp.einsum("ben,bn->be", state, c_l)

    init = jnp.zeros((u.shape[0], u.shape[2], A.shape[1]), jnp.float32)
    _, ys = lax.scan(step, init, (jnp.swapaxes(dA, 0, 1),
                                  jnp.swapaxes(dBu, 0, 1),
                                  jnp.swapaxes(Cm, 0, 1)))
    return jnp.swapaxes(ys, 0, 1) + u * Dvec[None, None, :]


def ref_forward(x, hw_shape, params, cfg):
    bsz, L, d_model = x.shape
    H, W = hw_shape
    E, N, R = cfg["d_inner"], cfg["d_state"], cfg["dt_rank"]
    hp = lax.Precision.HIGHEST
    silu = lambda v: v * jax.nn.sigmoid(v)

    xz = jnp.dot(x, params["w_in"], precision=hp)
    xpart, z = xz[..., :E], xz[..., E:]
    h = jnp.dot(xpart.reshape(bsz, H, W, E), params["w_pw1"], precision=hp) + params["b_pw1"]
    hpad = jnp.pad(h, ((0, 0), (1, 1), (1, 1), (0, 0)))
    acc = jnp.zeros_like(h)
    for ky in range(3):
        for kx in range(3):
            acc = acc + hpad[:, ky:ky + H, kx:kx + W, :] * params["w_dw"][ky, kx, :]
    x_conv = silu(jnp.dot(acc, params["w_pw2"], precision=hp)).reshape(bsz, L, E)
    x_dbl = jnp.dot(x_conv, params["w_xproj"], precision=hp)
    dt_r, Bc, Cc = x_dbl[..., :R], x_dbl[..., R:R + N], x_dbl[..., R + N:]
    dt = jnp.dot(dt_r, params["w_dtproj"], precision=hp) + params["b_dtproj"]

    orders, inv_orders, directions = sass(hw_shape)
    A = -jnp.exp(params["A_log"])
    ys = []
    for o, inv, dcode in zip(orders, inv_orders, directions):
        u = jnp.take(x_conv, jnp.array(o, jnp.int32), axis=1)
        dB = jnp.take(params["dir_Bs"], jnp.array(dcode, jnp.int32), axis=0)
        yk = _ref_selective_scan(u, dt, A, Bc + dB[None], Cc,
                                 params["D"], params["b_dtproj"])
        ys.append(jnp.take(yk, jnp.array(inv, jnp.int32), axis=1))
    y = sum(ys) * silu(z)
    return jnp.dot(y, params["w_out"], precision=hp)


# ----------------------------------------------------------------------------
if __name__ == "__main__":
    key = jax.random.PRNGKey(0)
    d_model, bsz, H, W = 32, 2, 8, 8
    L = H * W

    kp, kx = jax.random.split(key)
    params, cfg = init_params(kp, d_model)
    x = jax.random.normal(kx, (bsz, L, d_model), jnp.float32)

    fwd = jax.jit(lambda xx: savss_forward(xx, (H, W), params, cfg))
    out = jax.block_until_ready(fwd(x))

    ref = jax.block_until_ready(ref_forward(x, (H, W), params, cfg))
    err = float(jnp.max(jnp.abs(out - ref)))
    scale = float(jnp.max(jnp.abs(ref)))
    tol = 2e-3 + 4e-2 * scale   # bf16 MXU operands vs f32 reference
    if not (err < tol):
        raise AssertionError(f"Pallas output mismatch: max abs err = {err} (tol {tol})")
    print("KERNEL_OK")
</pallas_src>

<mosaic_0001>
module attributes {stable_mosaic.version = 11 : i64} {
  func.func @_mm_kernel(%arg0: i32, %arg1: i32, %arg2: i32, %arg3: memref<128x32xbf16, #tpu.memory_space<vmem>>, %arg4: memref<32x128xbf16, #tpu.memory_space<vmem>>, %arg5: memref<1x128xf32, #tpu.memory_space<vmem>>, %arg6: memref<128x128xf32, #tpu.memory_space<vmem>>, %arg7: memref<128x128xf32, #tpu.memory_space<vmem>>) attributes {dimension_semantics = [#tpu.dimension_semantics<parallel>, #tpu.dimension_semantics<parallel>, #tpu.dimension_semantics<arbitrary>], iteration_bounds = array<i64: 1, 1, 1>, scalar_prefetch = 0 : i64, scratch_operands = 1 : i64, tpu.core_type = #tpu.core_type<tc>, window_params = [{transform_indices = @transform_0, window_bounds = array<i64: 128, 32>}, {transform_indices = @transform_1, window_bounds = array<i64: 32, 128>}, {transform_indices = @transform_2, window_bounds = array<i64: 1, 128>}, {transform_indices = @transform_3, window_bounds = array<i64: 128, 128>}]} {
    %c0_i32 = arith.constant 0 : i32
    %0 = arith.cmpi eq, %arg2, %c0_i32 : i32
    %1 = arith.extui %0 : i1 to i32
    %c0_i32_0 = arith.constant 0 : i32
    %2 = arith.cmpi ne, %1, %c0_i32_0 : i32
    scf.if %2 {
      %cst_10 = arith.constant 0.000000e+00 : f32
      %12 = vector.broadcast %cst_10 : f32 to vector<128x128xf32>
      %c0_11 = arith.constant 0 : index
      %c0_12 = arith.constant 0 : index
      %13 = vector.load %arg7[%c0_11, %c0_12] : memref<128x128xf32, #tpu.memory_space<vmem>>, vector<128x128xf32>
      tpu.vector_store %arg7[%c0_11, %c0_12], %12 {strides = array<i32>} : memref<128x128xf32, #tpu.memory_space<vmem>>, vector<128x128xf32>,
    } else {
    }
    %c0 = arith.constant 0 : index
    %c0_1 = arith.constant 0 : index
    %3 = vector.load %arg3[%c0, %c0_1] : memref<128x32xbf16, #tpu.memory_space<vmem>>, vector<128x32xbf16>
    %c0_2 = arith.constant 0 : index
    %c0_3 = arith.constant 0 : index
    %4 = vector.load %arg7[%c0_2, %c0_3] : memref<128x128xf32, #tpu.memory_space<vmem>>, vector<128x128xf32>
    %c0_4 = arith.constant 0 : index
    %c0_5 = arith.constant 0 : index
    %5 = vector.load %arg4[%c0_4, %c0_5] : memref<32x128xbf16, #tpu.memory_space<vmem>>, vector<32x128xbf16>
    %cst = arith.constant dense<0.000000e+00> : vector<128x128xf32>
    %6 = tpu.matmul %3, %5, %cst {dimension_numbers = #tpu.dot_dimension_numbers<[1], [0], [0], [1], [0, 0, 1, 1], [], []>} : vector<128x32xbf16>, vector<32x128xbf16>, vector<128x128xf32> -> vector<128x128xf32>
    %7 = arith.addf %4, %6 : vector<128x128xf32>
    %c0_6 = arith.constant 0 : index
    %c0_7 = arith.constant 0 : index
    %8 = vector.load %arg7[%c0_6, %c0_7] : memref<128x128xf32, #tpu.memory_space<vmem>>, vector<128x128xf32>
    tpu.vector_store %arg7[%c0_6, %c0_7], %7 {strides = array<i32>} : memref<128x128xf32, #tpu.memory_space<vmem>>, vector<128x128xf32>,
    %c0_i32_8 = arith.constant 0 : i32
    %9 = arith.cmpi eq, %arg2, %c0_i32_8 : i32
    %10 = arith.extui %9 : i1 to i32
    %c0_i32_9 = arith.constant 0 : i32
    %11 = arith.cmpi ne, %10, %c0_i32_9 : i32
    scf.if %11 {
      %c0_10 = arith.constant 0 : index
      %c0_11 = arith.constant 0 : index
      %12 = vector.load %arg7[%c0_10, %c0_11] : memref<128x128xf32, #tpu.memory_space<vmem>>, vector<128x128xf32>
      %c0_12 = arith.constant 0 : index
      %c0_13 = arith.constant 0 : index
      %13 = vector.load %arg5[%c0_12, %c0_13] : memref<1x128xf32, #tpu.memory_space<vmem>>, vector<1x128xf32>
      %14 = vector.broadcast %13 : vector<1x128xf32> to vector<128x128xf32>
      %15 = arith.addf %12, %14 : vector<128x128xf32>
      %c0_14 = arith.constant 0 : index
      %c0_15 = arith.constant 0 : index
      %16 = vector.load %arg6[%c0_14, %c0_15] : memref<128x128xf32, #tpu.memory_space<vmem>>, vector<128x128xf32>
      tpu.vector_store %arg6[%c0_14, %c0_15], %15 {strides = array<i32>} : memref<128x128xf32, #tpu.memory_space<vmem>>, vector<128x128xf32>,
    } else {
    }
    return
  }
  func.func @transform_0(%arg0: i32, %arg1: i32, %arg2: i32) -> (i32, i32) {
    %c0_i32 = arith.constant 0 : i32
    return %arg0, %arg2 : i32, i32
  }
  func.func @transform_1(%arg0: i32, %arg1: i32, %arg2: i32) -> (i32, i32) {
    %c0_i32 = arith.constant 0 : i32
    return %arg2, %arg1 : i32, i32
  }
  func.func @transform_2(%arg0: i32, %arg1: i32, %arg2: i32) -> (i32, i32) {
    %c0_i32 = arith.constant 0 : i32
    %c0_i32_0 = arith.constant 0 : i32
    return %c0_i32, %arg1 : i32, i32
  }
  func.func @transform_3(%arg0: i32, %arg1: i32, %arg2: i32) -> (i32, i32) {
    %c0_i32 = arith.constant 0 : i32
    return %arg0, %arg1 : i32, i32
  }
}

module attributes {stable_mosaic.version = 11 : i64} {
  func.func @_bottconv_kernel(%arg0: i32, %arg1: memref<1x64x64xf32, #tpu.memory_space<vmem>>, %arg2: memref<64x4xbf16, #tpu.memory_space<vmem>>, %arg3: memref<1x4xf32, #tpu.memory_space<vmem>>, %arg4: memref<9x4xf32, #tpu.memory_space<vmem>>, %arg5: memref<4x64xbf16, #tpu.memory_space<vmem>>, %arg6: memref<1x64x64xf32, #tpu.memory_space<vmem>>, %arg7: memref<10x10x4xf32, #tpu.memory_space<vmem>>, %arg8: memref<64x4xf32, #tpu.memory_space<vmem>>) attributes {dimension_semantics = [#tpu.dimension_semantics<parallel>], iteration_bounds = array<i64: 2>, scalar_prefetch = 0 : i64, scratch_operands = 2 : i64, tpu.core_type = #tpu.core_type<tc>, window_params = [{transform_indices = @transform_0, window_bounds = array<i64: 1, 64, 64>}, {pipeline_mode = #tpu.pipeline_mode<synchronous>, transform_indices = @transform_1, window_bounds = array<i64: 64, 4>}, {pipeline_mode = #tpu.pipeline_mode<synchronous>, transform_indices = @transform_2, window_bounds = array<i64: 1, 4>}, {pipeline_mode = #tpu.pipeline_mode<synchronous>, transform_indices = @transform_3, window_bounds = array<i64: 9, 4>}, {pipeline_mode = #tpu.pipeline_mode<synchronous>, transform_indices = @transform_4, window_bounds = array<i64: 4, 64>}, {transform_indices = @transform_5, window_bounds = array<i64: 1, 64, 64>}]} {
    %c0 = arith.constant 0 : index
    %c0_0 = arith.constant 0 : index
    %c0_1 = arith.constant 0 : index
    %0 = vector.load %arg1[%c0, %c0_0, %c0_1] : memref<1x64x64xf32, #tpu.memory_space<vmem>>, vector<1x64x64xf32>
    %1 = vector.shape_cast %0 : vector<1x64x64xf32> to vector<64x64xf32>
    %2 = arith.truncf %1 : vector<64x64xf32> to vector<64x64xbf16>
    %c0_2 = arith.constant 0 : index
    %c0_3 = arith.constant 0 : index
    %3 = vector.load %arg2[%c0_2, %c0_3] : memref<64x4xbf16, #tpu.memory_space<vmem>>, vector<64x4xbf16>
    %cst = arith.constant dense<0.000000e+00> : vector<64x4xf32>
    %4 = tpu.matmul %2, %3, %cst {dimension_numbers = #tpu.dot_dimension_numbers<[1], [0], [0], [1], [0, 0, 1, 1], [], []>} : vector<64x64xbf16>, vector<64x4xbf16>, vector<64x4xf32> -> vector<64x4xf32>
    %c0_4 = arith.constant 0 : index
    %c0_5 = arith.constant 0 : index
    %5 = vector.load %arg3[%c0_4, %c0_5] : memref<1x4xf32, #tpu.memory_space<vmem>>, vector<1x4xf32>
    %6 = vector.broadcast %5 : vector<1x4xf32> to vector<64x4xf32>
    %7 = arith.addf %4, %6 : vector<64x4xf32>
    %cst_6 = arith.constant 0.000000e+00 : f32
    %8 = vector.broadcast %cst_6 : f32 to vector<10x10x4xf32>
    %c0_7 = arith.constant 0 : index
    %c0_8 = arith.constant 0 : index
    %c0_9 = arith.constant 0 : index
    %9 = vector.load %arg7[%c0_7, %c0_8, %c0_9] : memref<10x10x4xf32, #tpu.memory_space<vmem>>, vector<10x10x4xf32>
    tpu.vector_store %arg7[%c0_7, %c0_8, %c0_9], %8 {strides = array<i32>} : memref<10x10x4xf32, #tpu.memory_space<vmem>>, vector<10x10x4xf32>,
    %10 = vector.extract_strided_slice %7 {offsets = [0, 0], sizes = [8, 4], strides = [1, 1]} : vector<64x4xf32> to vector<8x4xf32>
    %c1 = arith.constant 1 : index
    %c1_10 = arith.constant 1 : index
    %c0_11 = arith.constant 0 : index
    %11 = vector.load %arg7[%c1, %c1_10, %c0_11] : memref<10x10x4xf32, #tpu.memory_space<vmem>>, vector<1x8x4xf32>
    %12 = vector.shape_cast %11 : vector<1x8x4xf32> to vector<8x4xf32>
    %13 = vector.shape_cast %10 : vector<8x4xf32> to vector<1x8x4xf32>
    tpu.vector_store %arg7[%c1, %c1_10, %c0_11], %13 {strides = array<i32>} : memref<10x10x4xf32, #tpu.memory_space<vmem>>, vector<1x8x4xf32>,
    %14 = vector.extract_strided_slice %7 {offsets = [8, 0], sizes = [8, 4], strides = [1, 1]} : vector<64x4xf32> to vector<8x4xf32>
    %c2 = arith.constant 2 : index
    %c1_12 = arith.constant 1 : index
    %c0_13 = arith.constant 0 : index
    %15 = vector.load %arg7[%c2, %c1_12, %c0_13] : memref<10x10x4xf32, #tpu.memory_space<vmem>>, vector<1x8x4xf32>
    %16 = vector.shape_cast %15 : vector<1x8x4xf32> to vector<8x4xf32>
    %17 = vector.shape_cast %14 : vector<8x4xf32> to vector<1x8x4xf32>
    tpu.vector_store %arg7[%c2, %c1_12, %c0_13], %17 {strides = array<i32>} : memref<10x10x4xf32, #tpu.memory_space<vmem>>, vector<1x8x4xf32>,
    %18 = vector.extract_strided_slice %7 {offsets = [16, 0], sizes = [8, 4], strides = [1, 1]} : vector<64x4xf32> to vector<8x4xf32>
    %c3 = arith.constant 3 : index
    %c1_14 = arith.constant 1 : index
    %c0_15 = arith.constant 0 : index
    %19 = vector.load %arg7[%c3, %c1_14, %c0_15] : memref<10x10x4xf32, #tpu.memory_space<vmem>>, vector<1x8x4xf32>
    %20 = vector.shape_cast %19 : vector<1x8x4xf32> to vector<8x4xf32>
    %21 = vector.shape_cast %18 : vector<8x4xf32> to vector<1x8x4xf32>
    tpu.vector_store %arg7[%c3, %c1_14, %c0_15], %21 {strides = array<i32>} : memref<10x10x4xf32, #tpu.memory_space<vmem>>, vector<1x8x4xf32>,
    %22 = vector.extract_strided_slice %7 {offsets = [24, 0], sizes = [8, 4], strides = [1, 1]} : vector<64x4xf32> to vector<8x4xf32>
    %c4 = arith.constant 4 : index
    %c1_16 = arith.constant 1 : index
    %c0_17 = arith.constant 0 : index
    %23 = vector.load %arg7[%c4, %c1_16, %c0_17] : memref<10x10x4xf32, #tpu.memory_space<vmem>>, vector<1x8x4xf32>
    %24 = vector.shape_cast %23 : vector<1x8x4xf32> to vector<8x4xf32>
    %25 = vector.shape_cast %22 : vector<8x4xf32> to vector<1x8x4xf32>
    tpu.vector_store %arg7[%c4, %c1_16, %c0_17], %25 {strides = array<i32>} : memref<10x10x4xf32, #tpu.memory_space<vmem>>, vector<1x8x4xf32>,
    %26 = vector.extract_strided_slice %7 {offsets = [32, 0], sizes = [8, 4], strides = [1, 1]} : vector<64x4xf32> to vector<8x4xf32>
    %c5 = arith.constant 5 : index
    %c1_18 = arith.constant 1 : index
    %c0_19 = arith.constant 0 : index
    %27 = vector.load %arg7[%c5, %c1_18, %c0_19] : memref<10x10x4xf32, #tpu.memory_space<vmem>>, vector<1x8x4xf32>
    %28 = vector.shape_cast %27 : vector<1x8x4xf32> to vector<8x4xf32>
    %29 = vector.shape_cast %26 : vector<8x4xf32> to vector<1x8x4xf32>
    tpu.vector_store %arg7[%c5, %c1_18, %c0_19], %29 {strides = array<i32>} : memref<10x10x4xf32, #tpu.memory_space<vmem>>, vector<1x8x4xf32>,
    %30 = vector.extract_strided_slice %7 {offsets = [40, 0], sizes = [8, 4], strides = [1, 1]} : vector<64x4xf32> to vector<8x4xf32>
    %c6 = arith.constant 6 : index
    %c1_20 = arith.constant 1 : index
    %c0_21 = arith.constant 0 : index
    %31 = vector.load %arg7[%c6, %c1_20, %c0_21] : memref<10x10x4xf32, #tpu.memory_space<vmem>>, vector<1x8x4xf32>
    %32 = vector.shape_cast %31 : vector<1x8x4xf32> to vector<8x4xf32>
    %33 = vector.shape_cast %30 : vector<8x4xf32> to vector<1x8x4xf32>
    tpu.vector_store %arg7[%c6, %c1_20, %c0_21], %33 {strides = array<i32>} : memref<10x10x4xf32, #tpu.memory_space<vmem>>, vector<1x8x4xf32>,
    %34 = vector.extract_strided_slice %7 {offsets = [48, 0], sizes = [8, 4], strides = [1, 1]} : vector<64x4xf32> to vector<8x4xf32>
    %c7 = arith.constant 7 : index
    %c1_22 = arith.constant 1 : index
    %c0_23 = arith.constant 0 : index
    %35 = vector.load %arg7[%c7, %c1_22, %c0_23] : memref<10x10x4xf32, #tpu.memory_space<vmem>>, vector<1x8x4xf32>
    %36 = vector.shape_cast %35 : vector<1x8x4xf32> to vector<8x4xf32>
    %37 = vector.shape_cast %34 : vector<8x4xf32> to vector<1x8x4xf32>
    tpu.vector_store %arg7[%c7, %c1_22, %c0_23], %37 {strides = array<i32>} : memref<10x10x4xf32, #tpu.memory_space<vmem>>, vector<1x8x4xf32>,
    %38 = vector.extract_strided_slice %7 {offsets = [56, 0], sizes = [8, 4], strides = [1, 1]} : vector<64x4xf32> to vector<8x4xf32>
    %c8 = arith.constant 8 : index
    %c1_24 = arith.constant 1 : index
    %c0_25 = arith.constant 0 : index
    %39 = vector.load %arg7[%c8, %c1_24, %c0_25] : memref<10x10x4xf32, #tpu.memory_space<vmem>>, vector<1x8x4xf32>
    %40 = vector.shape_cast %39 : vector<1x8x4xf32> to vector<8x4xf32>
    %41 = vector.shape_cast %38 : vector<8x4xf32> to vector<1x8x4xf32>
    tpu.vector_store %arg7[%c8, %c1_24, %c0_25], %41 {strides = array<i32>} : memref<10x10x4xf32, #tpu.memory_space<vmem>>, vector<1x8x4xf32>,
    %cst_26 = arith.constant 0.000000e+00 : f32
    %42 = vector.broadcast %cst_26 : f32 to vector<8x4xf32>
    %c0_27 = arith.constant 0 : index
    %c0_28 = arith.constant 0 : index
    %c0_29 = arith.constant 0 : index
    %43 = vector.load %arg7[%c0_27, %c0_28, %c0_29] : memref<10x10x4xf32, #tpu.memory_space<vmem>>, vector<1x8x4xf32>
    %44 = vector.shape_cast %43 : vector<1x8x4xf32> to vector<8x4xf32>
    %c0_30 = arith.constant 0 : index
    %c0_31 = arith.constant 0 : index
    %45 = vector.load %arg4[%c0_30, %c0_31] : memref<9x4xf32, #tpu.memory_space<vmem>>, vector<1x4xf32>
    %46 = vector.broadcast %45 : vector<1x4xf32> to vector<8x4xf32>
    %47 = arith.mulf %44, %46 : vector<8x4xf32>
    %48 = arith.addf %42, %47 : vector<8x4xf32>
    %c0_32 = arith.constant 0 : index
    %c1_33 = arith.constant 1 : index
    %c0_34 = arith.constant 0 : index
    %49 = vector.load %arg7[%c0_32, %c1_33, %c0_34] : memref<10x10x4xf32, #tpu.memory_space<vmem>>, vector<1x8x4xf32>
    %50 = vector.shape_cast %49 : vector<1x8x4xf32> to vector<8x4xf32>
    %c1_35 = arith.constant 1 : index
    %c0_36 = arith.constant 0 : index
    %51 = vector.load %arg4[%c1_35, %c0_36] : memref<9x4xf32, #tpu.memory_space<vmem>>, vector<1x4xf32>
    %52 = vector.broadcast %51 : vector<1x4xf32> to vector<8x4xf32>
    %53 = arith.mulf %50, %52 : vector<8x4xf32>
    %54 = arith.addf %48, %53 : vector<8x4xf32>
    %c0_37 = arith.constant 0 : index
    %c2_38 = arith.constant 2 : index
    %c0_39 = arith.constant 0 : index
    %55 = vector.load %arg7[%c0_37, %c2_38, %c0_39] : memref<10x10x4xf32, #tpu.memory_space<vmem>>, vector<1x8x4xf32>
    %56 = vector.shape_cast %55 : vector<1x8x4xf32> to vector<8x4xf32>
    %c2_40 = arith.constant 2 : index
    %c0_41 = arith.constant 0 : index
    %57 = vector.load %arg4[%c2_40, %c0_41] : memref<9x4xf32, #tpu.memory_space<vmem>>, vector<1x4xf32>
    %58 = vector.broadcast %57 : vector<1x4xf32> to vector<8x4xf32>
    %59 = arith.mulf %56, %58 : vector<8x4xf32>
    %60 = arith.addf %54, %59 : vector<8x4xf32>
    %c1_42 = arith.constant 1 : index
    %c0_43 = arith.constant 0 : index
    %c0_44 = arith.constant 0 : index
    %61 = vector.load %arg7[%c1_42, %c0_43, %c0_44] : memref<10x10x4xf32, #tpu.memory_space<vmem>>, vector<1x8x4xf32>
    %62 = vector.shape_cast %61 : vector<1x8x4xf32> to vector<8x4xf32>
    %c3_45 = arith.constant 3 : index
    %c0_46 = arith.constant 0 : index
    %63 = vector.load %arg4[%c3_45, %c0_46] : memref<9x4xf32, #tpu.memory_space<vmem>>, vector<1x4xf32>
    %64 = vector.broadcast %63 : vector<1x4xf32> to vector<8x4xf32>
    %65 = arith.mulf %62, %64 : vector<8x4xf32>
    %66 = arith.addf %60, %65 : vector<8x4xf32>
    %c1_47 = arith.constant 1 : index
    %c1_48 = arith.constant 1 : index
    %c0_49 = arith.constant 0 : index
    %67 = vector.load %arg7[%c1_47, %c1_48, %c0_49] : memref<10x10x4xf32, #tpu.memory_space<vmem>>, vector<1x8x4xf32>
    %68 = vector.shape_cast %67 : vector<1x8x4xf32> to vector<8x4xf32>
    %c4_50 = arith.constant 4 : index
    %c0_51 = arith.constant 0 : index
    %69 = vector.load %arg4[%c4_50, %c0_51] : memref<9x4xf32, #tpu.memory_space<vmem>>, vector<1x4xf32>
    %70 = vector.broadcast %69 : vector<1x4xf32> to vector<8x4xf32>
    %71 = arith.mulf %68, %70 : vector<8x4xf32>
    %72 = arith.addf %66, %71 : vector<8x4xf32>
    %c1_52 = arith.constant 1 : index
    %c2_53 = arith.constant 2 : index
    %c0_54 = arith.constant 0 : index
    %73 = vector.load %arg7[%c1_52, %c2_53, %c0_54] : memref<10x10x4xf32, #tpu.memory_space<vmem>>, vector<1x8x4xf32>
    %74 = vector.shape_cast %73 : vector<1x8x4xf32> to vector<8x4xf32>
    %c5_55 = arith.constant 5 : index
    %c0_56 = arith.constant 0 : index
    %75 = vector.load %arg4[%c5_55, %c0_56] : memref<9x4xf32, #tpu.memory_space<vmem>>, vector<1x4xf32>
    %76 = vector.broadcast %75 : vector<1x4xf32> to vector<8x4xf32>
    %77 = arith.mulf %74, %76 : vector<8x4xf32>
    %78 = arith.addf %72, %77 : vector<8x4xf32>
    %c2_57 = arith.constant 2 : index
    %c0_58 = arith.constant 0 : index
    %c0_59 = arith.constant 0 : index
    %79 = vector.load %arg7[%c2_57, %c0_58, %c0_59] : memref<10x10x4xf32, #tpu.memory_space<vmem>>, vector<1x8x4xf32>
    %80 = vector.shape_cast %79 : vector<1x8x4xf32> to vector<8x4xf32>
    %c6_60 = arith.constant 6 : index
    %c0_61 = arith.constant 0 : index
    %81 = vector.load %arg4[%c6_60, %c0_61] : memref<9x4xf32, #tpu.memory_space<vmem>>, vector<1x4xf32>
    %82 = vector.broadcast %81 : vector<1x4xf32> to vector<8x4xf32>
    %83 = arith.mulf %80, %82 : vector<8x4xf32>
    %84 = arith.addf %78, %83 : vector<8x4xf32>
    %c2_62 = arith.constant 2 : index
    %c1_63 = arith.constant 1 : index
    %c0_64 = arith.constant 0 : index
    %85 = vector.load %arg7[%c2_62, %c1_63, %c0_64] : memref<10x10x4xf32, #tpu.memory_space<vmem>>, vector<1x8x4xf32>
    %86 = vector.shape_cast %85 : vector<1x8x4xf32> to vector<8x4xf32>
    %c7_65 = arith.constant 7 : index
    %c0_66 = arith.constant 0 : index
    %87 = vector.load %arg4[%c7_65, %c0_66] : memref<9x4xf32, #tpu.memory_space<vmem>>, vector<1x4xf32>
    %88 = vector.broadcast %87 : vector<1x4xf32> to vector<8x4xf32>
    %89 = arith.mulf %86, %88 : vector<8x4xf32>
    %90 = arith.addf %84, %89 : vector<8x4xf32>
    %c2_67 = arith.constant 2 : index
    %c2_68 = arith.constant 2 : index
    %c0_69 = arith.constant 0 : index
    %91 = vector.load %arg7[%c2_67, %c2_68, %c0_69] : memref<10x10x4xf32, #tpu.memory_space<vmem>>, vector<1x8x4xf32>
    %92 = vector.shape_cast %91 : vector<1x8x4xf32> to vector<8x4xf32>
    %c8_70 = arith.constant 8 : index
    %c0_71 = arith.constant 0 : index
    %93 = vector.load %arg4[%c8_70, %c0_71] : memref<9x4xf32, #tpu.memory_space<vmem>>, vector<1x4xf32>
    %94 = vector.broadcast %93 : vector<1x4xf32> to vector<8x4xf32>
    %95 = arith.mulf %92, %94 : vector<8x4xf32>
    %96 = arith.addf %90, %95 : vector<8x4xf32>
    %c0_72 = arith.constant 0 : index
    %c0_73 = arith.constant 0 : index
    %97 = vector.load %arg8[%c0_72, %c0_73] : memref<64x4xf32, #tpu.memory_space<vmem>>, vector<8x4xf32>
    tpu.vector_store %arg8[%c0_72, %c0_73], %96 {strides = array<i32>} : memref<64x4xf32, #tpu.memory_space<vmem>>, vector<8x4xf32>,
    %cst_74 = arith.constant 0.000000e+00 : f32
    %98 = vector.broadcast %cst_74 : f32 to vector<8x4xf32>
    %c1_75 = arith.constant 1 : index
    %c0_76 = arith.constant 0 : index
    %c0_77 = arith.constant 0 : index
    %99 = vector.load %arg7[%c1_75, %c0_76, %c0_77] : memref<10x10x4xf32, #tpu.memory_space<vmem>>, vector<1x8x4xf32>
    %100 = vector.shape_cast %99 : vector<1x8x4xf32> to vector<8x4xf32>
    %c0_78 = arith.constant 0 : index
    %c0_79 = arith.constant 0 : index
    %101 = vector.load %arg4[%c0_78, %c0_79] : memref<9x4xf32, #tpu.memory_space<vmem>>, vector<1x4xf32>
    %102 = vector.broadcast %101 : vector<1x4xf32> to vector<8x4xf32>
    %103 = arith.mulf %100, %102 : vector<8x4xf32>
    %104 = arith.addf %98, %103 : vector<8x4xf32>
    %c1_80 = arith.constant 1 : index
    %c1_81 = arith.constant 1 : index
    %c0_82 = arith.constant 0 : index
    %105 = vector.load %arg7[%c1_80, %c1_81, %c0_82] : memref<10x10x4xf32, #tpu.memory_space<vmem>>, vector<1x8x4xf32>
    %106 = vector.shape_cast %105 : vector<1x8x4xf32> to vector<8x4xf32>
    %c1_83 = arith.constant 1 : index
    %c0_84 = arith.constant 0 : index
    %107 = vector.load %arg4[%c1_83, %c0_84] : memref<9x4xf32, #tpu.memory_space<vmem>>, vector<1x4xf32>
    %108 = vector.broadcast %107 : vector<1x4xf32> to vector<8x4xf32>
    %109 = arith.mulf %106, %108 : vector<8x4xf32>
    %110 = arith.addf %104, %109 : vector<8x4xf32>
    %c1_85 = arith.constant 1 : index
    %c2_86 = arith.constant 2 : index
    %c0_87 = arith.constant 0 : index
    %111 = vector.load %arg7[%c1_85, %c2_86, %c0_87] : memref<10x10x4xf32, #tpu.memory_space<vmem>>, vector<1x8x4xf32>
    %112 = vector.shape_cast %111 : vector<1x8x4xf32> to vector<8x4xf32>
    %c2_88 = arith.constant 2 : index
    %c0_89 = arith.constant 0 : index
    %113 = vector.load %arg4[%c2_88, %c0_89] : memref<9x4xf32, #tpu.memory_space<vmem>>, vector<1x4xf32>
    %114 = vector.broadcast %113 : vector<1x4xf32> to vector<8x4xf32>
    %115 = arith.mulf %112, %114 : vector<8x4xf32>
    %116 = arith.addf %110, %115 : vector<8x4xf32>
    %c2_90 = arith.constant 2 : index
    %c0_91 = arith.constant 0 : index
    %c0_92 = arith.constant 0 : index
    %117 = vector.load %arg7[%c2_90, %c0_91, %c0_92] : memref<10x10x4xf32, #tpu.memory_space<vmem>>, vector<1x8x4xf32>
    %118 = vector.shape_cast %117 : vector<1x8x4xf32> to vector<8x4xf32>
    %c3_93 = arith.constant 3 : index
    %c0_94 = arith.constant 0 : index
    %119 = vector.load %arg4[%c3_93, %c0_94] : memref<9x4xf32, #tpu.memory_space<vmem>>, vector<1x4xf32>
    %120 = vector.broadcast %119 : vector<1x4xf32> to vector<8x4xf32>
    %121 = arith.mulf %118, %120 : vector<8x4xf32>
    %122 = arith.addf %116, %121 : vector<8x4xf32>
    %c2_95 = arith.constant 2 : index
    %c1_96 = arith.constant 1 : index
    %c0_97 = arith.constant 0 : index
    %123 = vector.load %arg7[%c2_95, %c1_96, %c0_97] : memref<10x10x4xf32, #tpu.memory_space<vmem>>, vector<1x8x4xf32>
    %124 = vector.shape_cast %123 : vector<1x8x4xf32> to vector<8x4xf32>
    %c4_98 = arith.constant 4 : index
    %c0_99 = arith.constant 0 : index
    %125 = vector.load %arg4[%c4_98, %c0_99] : memref<9x4xf32, #tpu.memory_space<vmem>>, vector<1x4xf32>
    %126 = vector.broadcast %125 : vector<1x4xf32> to vector<8x4xf32>
    %127 = arith.mulf %124, %126 : vector<8x4xf32>
    %128 = arith.addf %122, %127 : vector<8x4xf32>
    %c2_100 = arith.constant 2 : index
    %c2_101 = arith.constant 2 : index
    %c0_102 = arith.constant 0 : index
    %129 = vector.load %arg7[%c2_100, %c2_101, %c0_102] : memref<10x10x4xf32, #tpu.memory_space<vmem>>, vector<1x8x4xf32>
    %130 = vector.shape_cast %129 : vector<1x8x4xf32> to vector<8x4xf32>
    %c5_103 = arith.constant 5 : index
    %c0_104 = arith.constant 0 : index
    %131 = vector.load %arg4[%c5_103, %c0_104] : memref<9x4xf32, #tpu.memory_space<vmem>>, vector<1x4xf32>
    %132 = vector.broadcast %131 : vector<1x4xf32> to vector<8x4xf32>
    %133 = arith.mulf %130, %132 : vector<8x4xf32>
    %134 = arith.addf %128, %133 : vector<8x4xf32>
    %c3_105 = arith.constant 3 : index
    %c0_106 = arith.constant 0 : index
    %c0_107 = arith.constant 0 : index
    %135 = vector.load %arg7[%c3_105, %c0_106, %c0_107] : memref<10x10x4xf32, #tpu.memory_space<vmem>>, vector<1x8x4xf32>
    %136 = vector.shape_cast %135 : vector<1x8x4xf32> to vector<8x4xf32>
    %c6_108 = arith.constant 6 : index
    %c0_109 = arith.constant 0 : index
    %137 = vector.load %arg4[%c6_108, %c0_109] : memref<9x4xf32, #tpu.memory_space<vmem>>, vector<1x4xf32>
    %138 = vector.broadcast %137 : vector<1x4xf32> to vector<8x4xf32>
    %139 = arith.mulf %136, %138 : vector<8x4xf32>
    %140 = arith.addf %134, %139 : vector<8x4xf32>
    %c3_110 = arith.constant 3 : index
    %c1_111 = arith.constant 1 : index
    %c0_112 = arith.constant 0 : index
    %141 = vector.load %arg7[%c3_110, %c1_111, %c0_112] : memref<10x10x4xf32, #tpu.memory_space<vmem>>, vector<1x8x4xf32>
    %142 = vector.shape_cast %141 : vector<1x8x4xf32> to vector<8x4xf32>
    %c7_113 = arith.constant 7 : index
    %c0_114 = arith.constant 0 : index
    %143 = vector.load %arg4[%c7_113, %c0_114] : memref<9x4xf32, #tpu.memory_space<vmem>>, vector<1x4xf32>
    %144 = vector.broadcast %143 : vector<1x4xf32> to vector<8x4xf32>
    %145 = arith.mulf %142, %144 : vector<8x4xf32>
    %146 = arith.addf %140, %145 : vector<8x4xf32>
    %c3_115 = arith.constant 3 : index
    %c2_116 = arith.constant 2 : index
    %c0_117 = arith.constant 0 : index
    %147 = vector.load %arg7[%c3_115, %c2_116, %c0_117] : memref<10x10x4xf32, #tpu.memory_space<vmem>>, vector<1x8x4xf32>
    %148 = vector.shape_cast %147 : vector<1x8x4xf32> to vector<8x4xf32>
    %c8_118 = arith.constant 8 : index
    %c0_119 = arith.constant 0 : index
    %149 = vector.load %arg4[%c8_118, %c0_119] : memref<9x4xf32, #tpu.memory_space<vmem>>, vector<1x4xf32>
    %150 = vector.broadcast %149 : vector<1x4xf32> to vector<8x4xf32>
    %151 = arith.mulf %148, %150 : vector<8x4xf32>
    %152 = arith.addf %146, %151 : vector<8x4xf32>
    %c8_120 = arith.constant 8 : index
    %c0_121 = arith.constant 0 : index
    %153 = vector.load %arg8[%c8_120, %c0_121] : memref<64x4xf32, #tpu.memory_space<vmem>>, vector<8x4xf32>
    tpu.vector_store %arg8[%c8_120, %c0_121], %152 {strides = array<i32>} : memref<64x4xf32, #tpu.memory_space<vmem>>, vector<8x4xf32>,
    %cst_122 = arith.constant 0.000000e+00 : f32
    %154 = vector.broadcast %cst_122 : f32 to vector<8x4xf32>
    %c2_123 = arith.constant 2 : index
    %c0_124 = arith.constant 0 : index
    %c0_125 = arith.constant 0 : index
    %155 = vector.load %arg7[%c2_123, %c0_124, %c0_125] : memref<10x10x4xf32, #tpu.memory_space<vmem>>, vector<1x8x4xf32>
    %156 = vector.shape_cast %155 : vector<1x8x4xf32> to vector<8x4xf32>
    %c0_126 = arith.constant 0 : index
    %c0_127 = arith.constant 0 : index
    %157 = vector.load %arg4[%c0_126, %c0_127] : memref<9x4xf32, #tpu.memory_space<vmem>>, vector<1x4xf32>
    %158 = vector.broadcast %157 : vector<1x4xf32> to vector<8x4xf32>
    %159 = arith.mulf %156, %158 : vector<8x4xf32>
    %160 = arith.addf %154, %159 : vector<8x4xf32>
    %c2_128 = arith.constant 2 : index
    %c1_129 = arith.constant 1 : index
    %c0_130 = arith.constant 0 : index
    %161 = vector.load %arg7[%c2_128, %c1_129, %c0_130] : memref<10x10x4xf32, #tpu.memory_space<vmem>>, vector<1x8x4xf32>
    %162 = vector.shape_cast %161 : vector<1x8x4xf32> to vector<8x4xf32>
    %c1_131 = arith.constant 1 : index
    %c0_132 = arith.constant 0 : index
    %163 = vector.load %arg4[%c1_131, %c0_132] : memref<9x4xf32, #tpu.memory_space<vmem>>, vector<1x4xf32>
    %164 = vector.broadcast %163 : vector<1x4xf32> to vector<8x4xf32>
    %165 = arith.mulf %162, %164 : vector<8x4xf32>
    %166 = arith.addf %160, %165 : vector<8x4xf32>
    %c2_133 = arith.constant 2 : index
    %c2_134 = arith.constant 2 : index
    %c0_135 = arith.constant 0 : index
    %167 = vector.load %arg7[%c2_133, %c2_134, %c0_135] : memref<10x10x4xf32, #tpu.memory_space<vmem>>, vector<1x8x4xf32>
    %168 = vector.shape_cast %167 : vector<1x8x4xf32> to vector<8x4xf32>
    %c2_136 = arith.constant 2 : index
    %c0_137 = arith.constant 0 : index
    %169 = vector.load %arg4[%c2_136, %c0_137] : memref<9x4xf32, #tpu.memory_space<vmem>>, vector<1x4xf32>
    %170 = vector.broadcast %169 : vector<1x4xf32> to vector<8x4xf32>
    %171 = arith.mulf %168, %170 : vector<8x4xf32>
    %172 = arith.addf %166, %171 : vector<8x4xf32>
    %c3_138 = arith.constant 3 : index
    %c0_139 = arith.constant 0 : index
    %c0_140 = arith.constant 0 : index
    %173 = vector.load %arg7[%c3_138, %c0_139, %c0_140] : memref<10x10x4xf32, #tpu.memory_space<vmem>>, vector<1x8x4xf32>
    %174 = vector.shape_cast %173 : vector<1x8x4xf32> to vector<8x4xf32>
    %c3_141 = arith.constant 3 : index
    %c0_142 = arith.constant 0 : index
    %175 = vector.load %arg4[%c3_141, %c0_142] : memref<9x4xf32, #tpu.memory_space<vmem>>, vector<1x4xf32>
    %176 = vector.broadcast %175 : vector<1x4xf32> to vector<8x4xf32>
    %177 = arith.mulf %174, %176 : vector<8x4xf32>
    %178 = arith.addf %172, %177 : vector<8x4xf32>
    %c3_143 = arith.constant 3 : index
    %c1_144 = arith.constant 1 : index
    %c0_145 = arith.constant 0 : index
    %179 = vector.load %arg7[%c3_143, %c1_144, %c0_145] : memref<10x10x4xf32, #tpu.memory_space<vmem>>, vector<1x8x4xf32>
    %180 = vector.shape_cast %179 : vector<1x8x4xf32> to vector<8x4xf32>
    %c4_146 = arith.constant 4 : index
    %c0_147 = arith.constant 0 : index
    %181 = vector.load %arg4[%c4_146, %c0_147] : memref<9x4xf32, #tpu.memory_space<vmem>>, vector<1x4xf32>
    %182 = vector.broadcast %181 : vector<1x4xf32> to vector<8x4xf32>
    %183 = arith.mulf %180, %182 : vector<8x4xf32>
    %184 = arith.addf %178, %183 : vector<8x4xf32>
    %c3_148 = arith.constant 3 : index
    %c2_149 = arith.constant 2 : index
    %c0_150 = arith.constant 0 : index
    %185 = vector.load %arg7[%c3_148, %c2_149, %c0_150] : memref<10x10x4xf32, #tpu.memory_space<vmem>>, vector<1x8x4xf32>
    %186 = vector.shape_cast %185 : vector<1x8x4xf32> to vector<8x4xf32>
    %c5_151 = arith.constant 5 : index
    %c0_152 = arith.constant 0 : index
    %187 = vector.load %arg4[%c5_151, %c0_152] : memref<9x4xf32, #tpu.memory_space<vmem>>, vector<1x4xf32>
    %188 = vector.broadcast %187 : vector<1x4xf32> to vector<8x4xf32>
    %189 = arith.mulf %186, %188 : vector<8x4xf32>
    %190 = arith.addf %184, %189 : vector<8x4xf32>
    %c4_153 = arith.constant 4 : index
    %c0_154 = arith.constant 0 : index
    %c0_155 = arith.constant 0 : index
    %191 = vector.load %arg7[%c4_153, %c0_154, %c0_155] : memref<10x10x4xf32, #tpu.memory_space<vmem>>, vector<1x8x4xf32>
    %192 = vector.shape_cast %191 : vector<1x8x4xf32> to vector<8x4xf32>
    %c6_156 = arith.constant 6 : index
    %c0_157 = arith.constant 0 : index
    %193 = vector.load %arg4[%c6_156, %c0_157] : memref<9x4xf32, #tpu.memory_space<vmem>>, vector<1x4xf32>
    %194 = vector.broadcast %193 : vector<1x4xf32> to vector<8x4xf32>
    %195 = arith.mulf %192, %194 : vector<8x4xf32>
    %196 = arith.addf %190, %195 : vector<8x4xf32>
    %c4_158 = arith.constant 4 : index
    %c1_159 = arith.constant 1 : index
    %c0_160 = arith.constant 0 : index
    %197 = vector.load %arg7[%c4_158, %c1_159, %c0_160] : memref<10x10x4xf32, #tpu.memory_space<vmem>>, vector<1x8x4xf32>
    %198 = vector.shape_cast %197 : vector<1x8x4xf32> to vector<8x4xf32>
    %c7_161 = arith.constant 7 : index
    %c0_162 = arith.constant 0 : index
    %199 = vector.load %arg4[%c7_161, %c0_162] : memref<9x4xf32, #tpu.memory_space<vmem>>, vector<1x4xf32>
    %200 = vector.broadcast %199 : vector<1x4xf32> to vector<8x4xf32>
    %201 = arith.mulf %198, %200 : vector<8x4xf32>
    %202 = arith.addf %196, %201 : vector<8x4xf32>
    %c4_163 = arith.constant 4 : index
    %c2_164 = arith.constant 2 : index
    %c0_165 = arith.constant 0 : index
    %203 = vector.load %arg7[%c4_163, %c2_164, %c0_165] : memref<10x10x4xf32, #tpu.memory_space<vmem>>, vector<1x8x4xf32>
    %204 = vector.shape_cast %203 : vector<1x8x4xf32> to vector<8x4xf32>
    %c8_166 = arith.constant 8 : index
    %c0_167 = arith.constant 0 : index
    %205 = vector.load %arg4[%c8_166, %c0_167] : memref<9x4xf32, #tpu.memory_space<vmem>>, vector<1x4xf32>
    %206 = vector.broadcast %205 : vector<1x4xf32> to vector<8x4xf32>
    %207 = arith.mulf %204, %206 : vector<8x4xf32>
    %208 = arith.addf %202, %207 : vector<8x4xf32>
    %c16 = arith.constant 16 : index
    %c0_168 = arith.constant 0 : index
    %209 = vector.load %arg8[%c16, %c0_168] : memref<64x4xf32, #tpu.memory_space<vmem>>, vector<8x4xf32>
    tpu.vector_store %arg8[%c16, %c0_168], %208 {strides = array<i32>} : memref<64x4xf32, #tpu.memory_space<vmem>>, vector<8x4xf32>,
    %cst_169 = arith.constant 0.000000e+00 : f32
    %210 = vector.broadcast %cst_169 : f32 to vector<8x4xf32>
    %c3_170 = arith.constant 3 : index
    %c0_171 = arith.constant 0 : index
    %c0_172 = arith.constant 0 : index
    %211 = vector.load %arg7[%c3_170, %c0_171, %c0_172] : memref<10x10x4xf32, #tpu.memory_space<vmem>>, vector<1x8x4xf32>
    %212 = vector.shape_cast %211 : vector<1x8x4xf32> to vector<8x4xf32>
    %c0_173 = arith.constant 0 : index
    %c0_174 = arith.constant 0 : index
    %213 = vector.load %arg4[%c0_173, %c0_174] : memref<9x4xf32, #tpu.memory_space<vmem>>, vector<1x4xf32>
    %214 = vector.broadcast %213 : vector<1x4xf32> to vector<8x4xf32>
    %215 = arith.mulf %212, %214 : vector<8x4xf32>
    %216 = arith.addf %210, %215 : vector<8x4xf32>
    %c3_175 = arith.constant 3 : index
    %c1_176 = arith.constant 1 : index
    %c0_177 = arith.constant 0 : index
    %217 = vector.load %arg7[%c3_175, %c1_176, %c0_177] : memref<10x10x4xf32, #tpu.memory_space<vmem>>, vector<1x8x4xf32>
    %218 = vector.shape_cast %217 : vector<1x8x4xf32> to vector<8x4xf32>
    %c1_178 = arith.constant 1 : index
    %c0_179 = arith.constant 0 : index
    %219 = vector.load %arg4[%c1_178, %c0_179] : memref<9x4xf32, #tpu.memory_space<vmem>>, vector<1x4xf32>
    %220 = vector.broadcast %219 : vector<1x4xf32> to vector<8x4xf32>
    %221 = arith.mulf %218, %220 : vector<8x4xf32>
    %222 = arith.addf %216, %221 : vector<8x4xf32>
    %c3_180 = arith.constant 3 : index
    %c2_181 = arith.constant 2 : index
    %c0_182 = arith.constant 0 : index
    %223 = vector.load %arg7[%c3_180, %c2_181, %c0_182] : memref<10x10x4xf32, #tpu.memory_space<vmem>>, vector<1x8x4xf32>
    %224 = vector.shape_cast %223 : vector<1x8x4xf32> to vector<8x4xf32>
    %c2_183 = arith.constant 2 : index
    %c0_184 = arith.constant 0 : index
    %225 = vector.load %arg4[%c2_183, %c0_184] : memref<9x4xf32, #tpu.memory_space<vmem>>, vector<1x4xf32>
    %226 = vector.broadcast %225 : vector<1x4xf32> to vector<8x4xf32>
    %227 = arith.mulf %224, %226 : vector<8x4xf32>
    %228 = arith.addf %222, %227 : vector<8x4xf32>
    %c4_185 = arith.constant 4 : index
    %c0_186 = arith.constant 0 : index
    %c0_187 = arith.constant 0 : index
    %229 = vector.load %arg7[%c4_185, %c0_186, %c0_187] : memref<10x10x4xf32, #tpu.memory_space<vmem>>, vector<1x8x4xf32>
    %230 = vector.shape_cast %229 : vector<1x8x4xf32> to vector<8x4xf32>
    %c3_188 = arith.constant 3 : index
    %c0_189 = arith.constant 0 : index
    %231 = vector.load %arg4[%c3_188, %c0_189] : memref<9x4xf32, #tpu.memory_space<vmem>>, vector<1x4xf32>
    %232 = vector.broadcast %231 : vector<1x4xf32> to vector<8x4xf32>
    %233 = arith.mulf %230, %232 : vector<8x4xf32>
    %234 = arith.addf %228, %233 : vector<8x4xf32>
    %c4_190 = arith.constant 4 : index
    %c1_191 = arith.constant 1 : index
    %c0_192 = arith.constant 0 : index
    %235 = vector.load %arg7[%c4_190, %c1_191, %c0_192] : memref<10x10x4xf32, #tpu.memory_space<vmem>>, vector<1x8x4xf32>
    %236 = vector.shape_cast %235 : vector<1x8x4xf32> to vector<8x4xf32>
    %c4_193 = arith.constant 4 : index
    %c0_194 = arith.constant 0 : index
    %237 = vector.load %arg4[%c4_193, %c0_194] : memref<9x4xf32, #tpu.memory_space<vmem>>, vector<1x4xf32>
    %238 = vector.broadcast %237 : vector<1x4xf32> to vector<8x4xf32>
    %239 = arith.mulf %236, %238 : vector<8x4xf32>
    %240 = arith.addf %234, %239 : vector<8x4xf32>
    %c4_195 = arith.constant 4 : index
    %c2_196 = arith.constant 2 : index
    %c0_197 = arith.constant 0 : index
    %241 = vector.load %arg7[%c4_195, %c2_196, %c0_197] : memref<10x10x4xf32, #tpu.memory_space<vmem>>, vector<1x8x4xf32>
    %242 = vector.shape_cast %241 : vector<1x8x4xf32> to vector<8x4xf32>
    %c5_198 = arith.constant 5 : index
    %c0_199 = arith.constant 0 : index
    %243 = vector.load %arg4[%c5_198, %c0_199] : memref<9x4xf32, #tpu.memory_space<vmem>>, vector<1x4xf32>
    %244 = vector.broadcast %243 : vector<1x4xf32> to vector<8x4xf32>
    %245 = arith.mulf %242, %244 : vector<8x4xf32>
    %246 = arith.addf %240, %245 : vector<8x4xf32>
    %c5_200 = arith.constant 5 : index
    %c0_201 = arith.constant 0 : index
    %c0_202 = arith.constant 0 : index
    %247 = vector.load %arg7[%c5_200, %c0_201, %c0_202] : memref<10x10x4xf32, #tpu.memory_space<vmem>>, vector<1x8x4xf32>
    %248 = vector.shape_cast %247 : vector<1x8x4xf32> to vector<8x4xf32>
    %c6_203 = arith.constant 6 : index
    %c0_204 = arith.constant 0 : index
    %249 = vector.load %arg4[%c6_203, %c0_204] : memref<9x4xf32, #tpu.memory_space<vmem>>, vector<1x4xf32>
    %250 = vector.broadcast %249 : vector<1x4xf32> to vector<8x4xf32>
    %251 = arith.mulf %248, %250 : vector<8x4xf32>
    %252 = arith.addf %246, %251 : vector<8x4xf32>
    %c5_205 = arith.constant 5 : index
    %c1_206 = arith.constant 1 : index
    %c0_207 = arith.constant 0 : index
    %253 = vector.load %arg7[%c5_205, %c1_206, %c0_207] : memref<10x10x4xf32, #tpu.memory_space<vmem>>, vector<1x8x4xf32>
    %254 = vector.shape_cast %253 : vector<1x8x4xf32> to vector<8x4xf32>
    %c7_208 = arith.constant 7 : index
    %c0_209 = arith.constant 0 : index
    %255 = vector.load %arg4[%c7_208, %c0_209] : memref<9x4xf32, #tpu.memory_space<vmem>>, vector<1x4xf32>
    %256 = vector.broadcast %255 : vector<1x4xf32> to vector<8x4xf32>
    %257 = arith.mulf %254, %256 : vector<8x4xf32>
    %258 = arith.addf %252, %257 : vector<8x4xf32>
    %c5_210 = arith.constant 5 : index
    %c2_211 = arith.constant 2 : index
    %c0_212 = arith.constant 0 : index
    %259 = vector.load %arg7[%c5_210, %c2_211, %c0_212] : memref<10x10x4xf32, #tpu.memory_space<vmem>>, vector<1x8x4xf32>
    %260 = vector.shape_cast %259 : vector<1x8x4xf32> to vector<8x4xf32>
    %c8_213 = arith.constant 8 : index
    %c0_214 = arith.constant 0 : index
    %261 = vector.load %arg4[%c8_213, %c0_214] : memref<9x4xf32, #tpu.memory_space<vmem>>, vector<1x4xf32>
    %262 = vector.broadcast %261 : vector<1x4xf32> to vector<8x4xf32>
    %263 = arith.mulf %260, %262 : vector<8x4xf32>
    %264 = arith.addf %258, %263 : vector<8x4xf32>
    %c24 = arith.constant 24 : index
    %c0_215 = arith.constant 0 : index
    %265 = vector.load %arg8[%c24, %c0_215] : memref<64x4xf32, #tpu.memory_space<vmem>>, vector<8x4xf32>
    tpu.vector_store %arg8[%c24, %c0_215], %264 {strides = array<i32>} : memref<64x4xf32, #tpu.memory_space<vmem>>, vector<8x4xf32>,
    %cst_216 = arith.constant 0.000000e+00 : f32
    %266 = vector.broadcast %cst_216 : f32 to vector<8x4xf32>
    %c4_217 = arith.constant 4 : index
    %c0_218 = arith.constant 0 : index
    %c0_219 = arith.constant 0 : index
    %267 = vector.load %arg7[%c4_217, %c0_218, %c0_219] : memref<10x10x4xf32, #tpu.memory_space<vmem>>, vector<1x8x4xf32>
    %268 = vector.shape_cast %267 : vector<1x8x4xf32> to vector<8x4xf32>
    %c0_220 = arith.constant 0 : index
    %c0_221 = arith.constant 0 : index
    %269 = vector.load %arg4[%c0_220, %c0_221] : memref<9x4xf32, #tpu.memory_space<vmem>>, vector<1x4xf32>
    %270 = vector.broadcast %269 : vector<1x4xf32> to vector<8x4xf32>
    %271 = arith.mulf %268, %270 : vector<8x4xf32>
    %272 = arith.addf %266, %271 : vector<8x4xf32>
    %c4_222 = arith.constant 4 : index
    %c1_223 = arith.constant 1 : index
    %c0_224 = arith.constant 0 : index
    %273 = vector.load %arg7[%c4_222, %c1_223, %c0_224] : memref<10x10x4xf32, #tpu.memory_space<vmem>>, vector<1x8x4xf32>
    %274 = vector.shape_cast %273 : vector<1x8x4xf32> to vector<8x4xf32>
    %c1_225 = arith.constant 1 : index
    %c0_226 = arith.constant 0 : index
    %275 = vector.load %arg4[%c1_225, %c0_226] : memref<9x4xf32, #tpu.memory_space<vmem>>, vector<1x4xf32>
    %276 = vector.broadcast %275 : vector<1x4xf32> to vector<8x4xf32>
    %277 = arith.mulf %274, %276 : vector<8x4xf32>
    %278 = arith.addf %272, %277 : vector<8x4xf32>
    %c4_227 = arith.constant 4 : index
    %c2_228 = arith.constant 2 : index
    %c0_229 = arith.constant 0 : index
    %279 = vector.load %arg7[%c4_227, %c2_228, %c0_229] : memref<10x10x4xf32, #tpu.memory_space<vmem>>, vector<1x8x4xf32>
    %280 = vector.shape_cast %279 : vector<1x8x4xf32> to vector<8x4xf32>
    %c2_230 = arith.constant 2 : index
    %c0_231 = arith.constant 0 : index
    %281 = vector.load %arg4[%c2_230, %c0_231] : memref<9x4xf32, #tpu.memory_space<vmem>>, vector<1x4xf32>
    %282 = vector.broadcast %281 : vector<1x4xf32> to vector<8x4xf32>
    %283 = arith.mulf %280, %282 : vector<8x4xf32>
    %284 = arith.addf %278, %283 : vector<8x4xf32>
    %c5_232 = arith.constant 5 : index
    %c0_233 = arith.constant 0 : index
    %c0_234 = arith.constant 0 : index
    %285 = vector.load %arg7[%c5_232, %c0_233, %c0_234] : memref<10x10x4xf32, #tpu.memory_space<vmem>>, vector<1x8x4xf32>
    %286 = vector.shape_cast %285 : vector<1x8x4xf32> to vector<8x4xf32>
    %c3_235 = arith.constant 3 : index
    %c0_236 = arith.constant 0 : index
    %287 = vector.load %arg4[%c3_235, %c0_236] : memref<9x4xf32, #tpu.memory_space<vmem>>, vector<1x4xf32>
    %288 = vector.broadcast %287 : vector<1x4xf32> to vector<8x4xf32>
    %289 = arith.mulf %286, %288 : vector<8x4xf32>
    %290 = arith.addf %284, %289 : vector<8x4xf32>
    %c5_237 = arith.constant 5 : index
    %c1_238 = arith.constant 1 : index
    %c0_239 = arith.constant 0 : index
    %291 = vector.load %arg7[%c5_237, %c1_238, %c0_239] : memref<10x10x4xf32, #tpu.memory_space<vmem>>, vector<1x8x4xf32>
    %292 = vector.shape_cast %291 : vector<1x8x4xf32> to vector<8x4xf32>
    %c4_240 = arith.constant 4 : index
    %c0_241 = arith.constant 0 : index
    %293 = vector.load %arg4[%c4_240, %c0_241] : memref<9x4xf32, #tpu.memory_space<vmem>>, vector<1x4xf32>
    %294 = vector.broadcast %293 : vector<1x4xf32> to vector<8x4xf32>
    %295 = arith.mulf %292, %294 : vector<8x4xf32>
    %296 = arith.addf %290, %295 : vector<8x4xf32>
    %c5_242 = arith.constant 5 : index
    %c2_243 = arith.constant 2 : index
    %c0_244 = arith.constant 0 : index
    %297 = vector.load %arg7[%c5_242, %c2_243, %c0_244] : memref<10x10x4xf32, #tpu.memory_space<vmem>>, vector<1x8x4xf32>
    %298 = vector.shape_cast %297 : vector<1x8x4xf32> to vector<8x4xf32>
    %c5_245 = arith.constant 5 : index
    %c0_246 = arith.constant 0 : index
    %299 = vector.load %arg4[%c5_245, %c0_246] : memref<9x4xf32, #tpu.memory_space<vmem>>, vector<1x4xf32>
    %300 = vector.broadcast %299 : vector<1x4xf32> to vector<8x4xf32>
    %301 = arith.mulf %298, %300 : vector<8x4xf32>
    %302 = arith.addf %296, %301 : vector<8x4xf32>
    %c6_247 = arith.constant 6 : index
    %c0_248 = arith.constant 0 : index
    %c0_249 = arith.constant 0 : index
    %303 = vector.load %arg7[%c6_247, %c0_248, %c0_249] : memref<10x10x4xf32, #tpu.memory_space<vmem>>, vector<1x8x4xf32>
    %304 = vector.shape_cast %303 : vector<1x8x4xf32> to vector<8x4xf32>
    %c6_250 = arith.constant 6 : index
    %c0_251 = arith.constant 0 : index
    %305 = vector.load %arg4[%c6_250, %c0_251] : memref<9x4xf32, #tpu.memory_space<vmem>>, vector<1x4xf32>
    %306 = vector.broadcast %305 : vector<1x4xf32> to vector<8x4xf32>
    %307 = arith.mulf %304, %306 : vector<8x4xf32>
    %308 = arith.addf %302, %307 : vector<8x4xf32>
    %c6_252 = arith.constant 6 : index
    %c1_253 = arith.constant 1 : index
    %c0_254 = arith.constant 0 : index
    %309 = vector.load %arg7[%c6_252, %c1_253, %c0_254] : memref<10x10x4xf32, #tpu.memory_space<vmem>>, vector<1x8x4xf32>
    %310 = vector.shape_cast %309 : vector<1x8x4xf32> to vector<8x4xf32>
    %c7_255 = arith.constant 7 : index
    %c0_256 = arith.constant 0 : index
    %311 = vector.load %arg4[%c7_255, %c0_256] : memref<9x4xf32, #tpu.memory_space<vmem>>, vector<1x4xf32>
    %312 = vector.broadcast %311 : vector<1x4xf32> to vector<8x4xf32>
    %313 = arith.mulf %310, %312 : vector<8x4xf32>
    %314 = arith.addf %308, %313 : vector<8x4xf32>
    %c6_257 = arith.constant 6 : index
    %c2_258 = arith.constant 2 : index
    %c0_259 = arith.constant 0 : index
    %315 = vector.load %arg7[%c6_257, %c2_258, %c0_259] : memref<10x10x4xf32, #tpu.memory_space<vmem>>, vector<1x8x4xf32>
    %316 = vector.shape_cast %315 : vector<1x8x4xf32> to vector<8x4xf32>
    %c8_260 = arith.constant 8 : index
    %c0_261 = arith.constant 0 : index
    %317 = vector.load %arg4[%c8_260, %c0_261] : memref<9x4xf32, #tpu.memory_space<vmem>>, vector<1x4xf32>
    %318 = vector.broadcast %317 : vector<1x4xf32> to vector<8x4xf32>
    %319 = arith.mulf %316, %318 : vector<8x4xf32>
    %320 = arith.addf %314, %319 : vector<8x4xf32>
    %c32 = arith.constant 32 : index
    %c0_262 = arith.constant 0 : index
    %321 = vector.load %arg8[%c32, %c0_262] : memref<64x4xf32, #tpu.memory_space<vmem>>, vector<8x4xf32>
    tpu.vector_store %arg8[%c32, %c0_262], %320 {strides = array<i32>} : memref<64x4xf32, #tpu.memory_space<vmem>>, vector<8x4xf32>,
    %cst_263 = arith.constant 0.000000e+00 : f32
    %322 = vector.broadcast %cst_263 : f32 to vector<8x4xf32>
    %c5_264 = arith.constant 5 : index
    %c0_265 = arith.constant 0 : index
    %c0_266 = arith.constant 0 : index
    %323 = vector.load %arg7[%c5_264, %c0_265, %c0_266] : memref<10x10x4xf32, #tpu.memory_space<vmem>>, vector<1x8x4xf32>
    %324 = vector.shape_cast %323 : vector<1x8x4xf32> to vector<8x4xf32>
    %c0_267 = arith.constant 0 : index
    %c0_268 = arith.constant 0 : index
    %325 = vector.load %arg4[%c0_267, %c0_268] : memref<9x4xf32, #tpu.memory_space<vmem>>, vector<1x4xf32>
    %326 = vector.broadcast %325 : vector<1x4xf32> to vector<8x4xf32>
    %327 = arith.mulf %324, %326 : vector<8x4xf32>
    %328 = arith.addf %322, %327 : vector<8x4xf32>
    %c5_269 = arith.constant 5 : index
    %c1_270 = arith.constant 1 : index
    %c0_271 = arith.constant 0 : index
    %329 = vector.load %arg7[%c5_269, %c1_270, %c0_271] : memref<10x10x4xf32, #tpu.memory_space<vmem>>, vector<1x8x4xf32>
    %330 = vector.shape_cast %329 : vector<1x8x4xf32> to vector<8x4xf32>
    %c1_272 = arith.constant 1 : index
    %c0_273 = arith.constant 0 : index
    %331 = vector.load %arg4[%c1_272, %c0_273] : memref<9x4xf32, #tpu.memory_space<vmem>>, vector<1x4xf32>
    %332 = vector.broadcast %331 : vector<1x4xf32> to vector<8x4xf32>
    %333 = arith.mulf %330, %332 : vector<8x4xf32>
    %334 = arith.addf %328, %333 : vector<8x4xf32>
    %c5_274 = arith.constant 5 : index
    %c2_275 = arith.constant 2 : index
    %c0_276 = arith.constant 0 : index
    %335 = vector.load %arg7[%c5_274, %c2_275, %c0_276] : memref<10x10x4xf32, #tpu.memory_space<vmem>>, vector<1x8x4xf32>
    %336 = vector.shape_cast %335 : vector<1x8x4xf32> to vector<8x4xf32>
    %c2_277 = arith.constant 2 : index
    %c0_278 = arith.constant 0 : index
    %337 = vector.load %arg4[%c2_277, %c0_278] : memref<9x4xf32, #tpu.memory_space<vmem>>, vector<1x4xf32>
    %338 = vector.broadcast %337 : vector<1x4xf32> to vector<8x4xf32>
    %339 = arith.mulf %336, %338 : vector<8x4xf32>
    %340 = arith.addf %334, %339 : vector<8x4xf32>
    %c6_279 = arith.constant 6 : index
    %c0_280 = arith.constant 0 : index
    %c0_281 = arith.constant 0 : index
    %341 = vector.load %arg7[%c6_279, %c0_280, %c0_281] : memref<10x10x4xf32, #tpu.memory_space<vmem>>, vector<1x8x4xf32>
    %342 = vector.shape_cast %341 : vector<1x8x4xf32> to vector<8x4xf32>
    %c3_282 = arith.constant 3 : index
    %c0_283 = arith.constant 0 : index
    %343 = vector.load %arg4[%c3_282, %c0_283] : memref<9x4xf32, #tpu.memory_space<vmem>>, vector<1x4xf32>
    %344 = vector.broadcast %343 : vector<1x4xf32> to vector<8x4xf32>
    %345 = arith.mulf %342, %344 : vector<8x4xf32>
    %346 = arith.addf %340, %345 : vector<8x4xf32>
    %c6_284 = arith.constant 6 : index
    %c1_285 = arith.constant 1 : index
    %c0_286 = arith.constant 0 : index
    %347 = vector.load %arg7[%c6_284, %c1_285, %c0_286] : memref<10x10x4xf32, #tpu.memory_space<vmem>>, vector<1x8x4xf32>
    %348 = vector.shape_cast %347 : vector<1x8x4xf32> to vector<8x4xf32>
    %c4_287 = arith.constant 4 : index
    %c0_288 = arith.constant 0 : index
    %349 = vector.load %arg4[%c4_287, %c0_288] : memref<9x4xf32, #tpu.memory_space<vmem>>, vector<1x4xf32>
    %350 = vector.broadcast %349 : vector<1x4xf32> to vector<8x4xf32>
    %351 = arith.mulf %348, %350 : vector<8x4xf32>
    %352 = arith.addf %346, %351 : vector<8x4xf32>
    %c6_289 = arith.constant 6 : index
    %c2_290 = arith.constant 2 : index
    %c0_291 = arith.constant 0 : index
    %353 = vector.load %arg7[%c6_289, %c2_290, %c0_291] : memref<10x10x4xf32, #tpu.memory_space<vmem>>, vector<1x8x4xf32>
    %354 = vector.shape_cast %353 : vector<1x8x4xf32> to vector<8x4xf32>
    %c5_292 = arith.constant 5 : index
    %c0_293 = arith.constant 0 : index
    %355 = vector.load %arg4[%c5_292, %c0_293] : memref<9x4xf32, #tpu.memory_space<vmem>>, vector<1x4xf32>
    %356 = vector.broadcast %355 : vector<1x4xf32> to vector<8x4xf32>
    %357 = arith.mulf %354, %356 : vector<8x4xf32>
    %358 = arith.addf %352, %357 : vector<8x4xf32>
    %c7_294 = arith.constant 7 : index
    %c0_295 = arith.constant 0 : index
    %c0_296 = arith.constant 0 : index
    %359 = vector.load %arg7[%c7_294, %c0_295, %c0_296] : memref<10x10x4xf32, #tpu.memory_space<vmem>>, vector<1x8x4xf32>
    %360 = vector.shape_cast %359 : vector<1x8x4xf32> to vector<8x4xf32>
    %c6_297 = arith.constant 6 : index
    %c0_298 = arith.constant 0 : index
    %361 = vector.load %arg4[%c6_297, %c0_298] : memref<9x4xf32, #tpu.memory_space<vmem>>, vector<1x4xf32>
    %362 = vector.broadcast %361 : vector<1x4xf32> to vector<8x4xf32>
    %363 = arith.mulf %360, %362 : vector<8x4xf32>
    %364 = arith.addf %358, %363 : vector<8x4xf32>
    %c7_299 = arith.constant 7 : index
    %c1_300 = arith.constant 1 : index
    %c0_301 = arith.constant 0 : index
    %365 = vector.load %arg7[%c7_299, %c1_300, %c0_301] : memref<10x10x4xf32, #tpu.memory_space<vmem>>, vector<1x8x4xf32>
    %366 = vector.shape_cast %365 : vector<1x8x4xf32> to vector<8x4xf32>
    %c7_302 = arith.constant 7 : index
    %c0_303 = arith.constant 0 : index
    %367 = vector.load %arg4[%c7_302, %c0_303] : memref<9x4xf32, #tpu.memory_space<vmem>>, vector<1x4xf32>
    %368 = vector.broadcast %367 : vector<1x4xf32> to vector<8x4xf32>
    %369 = arith.mulf %366, %368 : vector<8x4xf32>
    %370 = arith.addf %364, %369 : vector<8x4xf32>
    %c7_304 = arith.constant 7 : index
    %c2_305 = arith.constant 2 : index
    %c0_306 = arith.constant 0 : index
    %371 = vector.load %arg7[%c7_304, %c2_305, %c0_306] : memref<10x10x4xf32, #tpu.memory_space<vmem>>, vector<1x8x4xf32>
    %372 = vector.shape_cast %371 : vector<1x8x4xf32> to vector<8x4xf32>
    %c8_307 = arith.constant 8 : index
    %c0_308 = arith.constant 0 : index
    %373 = vector.load %arg4[%c8_307, %c0_308] : memref<9x4xf32, #tpu.memory_space<vmem>>, vector<1x4xf32>
    %374 = vector.broadcast %373 : vector<1x4xf32> to vector<8x4xf32>
    %375 = arith.mulf %372, %374 : vector<8x4xf32>
    %376 = arith.addf %370, %375 : vector<8x4xf32>
    %c40 = arith.constant 40 : index
    %c0_309 = arith.constant 0 : index
    %377 = vector.load %arg8[%c40, %c0_309] : memref<64x4xf32, #tpu.memory_space<vmem>>, vector<8x4xf32>
    tpu.vector_store %arg8[%c40, %c0_309], %376 {strides = array<i32>} : memref<64x4xf32, #tpu.memory_space<vmem>>, vector<8x4xf32>,
    %cst_310 = arith.constant 0.000000e+00 : f32
    %378 = vector.broadcast %cst_310 : f32 to vector<8x4xf32>
    %c6_311 = arith.constant 6 : index
    %c0_312 = arith.constant 0 : index
    %c0_313 = arith.constant 0 : index
    %379 = vector.load %arg7[%c6_311, %c0_312, %c0_313] : memref<10x10x4xf32, #tpu.memory_space<vmem>>, vector<1x8x4xf32>
    %380 = vector.shape_cast %379 : vector<1x8x4xf32> to vector<8x4xf32>
    %c0_314 = arith.constant 0 : index
    %c0_315 = arith.constant 0 : index
    %381 = vector.load %arg4[%c0_314, %c0_315] : memref<9x4xf32, #tpu.memory_space<vmem>>, vector<1x4xf32>
    %382 = vector.broadcast %381 : vector<1x4xf32> to vector<8x4xf32>
    %383 = arith.mulf %380, %382 : vector<8x4xf32>
    %384 = arith.addf %378, %383 : vector<8x4xf32>
    %c6_316 = arith.constant 6 : index
    %c1_317 = arith.constant 1 : index
    %c0_318 = arith.constant 0 : index
    %385 = vector.load %arg7[%c6_316, %c1_317, %c0_318] : memref<10x10x4xf32, #tpu.memory_space<vmem>>, vector<1x8x4xf32>
    %386 = vector.shape_cast %385 : vector<1x8x4xf32> to vector<8x4xf32>
    %c1_319 = arith.constant 1 : index
    %c0_320 = arith.constant 0 : index
    %387 = vector.load %arg4[%c1_319, %c0_320] : memref<9x4xf32, #tpu.memory_space<vmem>>, vector<1x4xf32>
    %388 = vector.broadcast %387 : vector<1x4xf32> to vector<8x4xf32>
    %389 = arith.mulf %386, %388 : vector<8x4xf32>
    %390 = arith.addf %384, %389 : vector<8x4xf32>
    %c6_321 = arith.constant 6 : index
    %c2_322 = arith.constant 2 : index
    %c0_323 = arith.constant 0 : index
    %391 = vector.load %arg7[%c6_321, %c2_322, %c0_323] : memref<10x10x4xf32, #tpu.memory_space<vmem>>, vector<1x8x4xf32>
    %392 = vector.shape_cast %391 : vector<1x8x4xf32> to vector<8x4xf32>
    %c2_324 = arith.constant 2 : index
    %c0_325 = arith.constant 0 : index
    %393 = vector.load %arg4[%c2_324, %c0_325] : memref<9x4xf32, #tpu.memory_space<vmem>>, vector<1x4xf32>
    %394 = vector.broadcast %393 : vector<1x4xf32> to vector<8x4xf32>
    %395 = arith.mulf %392, %394 : vector<8x4xf32>
    %396 = arith.addf %390, %395 : vector<8x4xf32>
    %c7_326 = arith.constant 7 : index
    %c0_327 = arith.constant 0 : index
    %c0_328 = arith.constant 0 : index
    %397 = vector.load %arg7[%c7_326, %c0_327, %c0_328] : memref<10x10x4xf32, #tpu.memory_space<vmem>>, vector<1x8x4xf32>
    %398 = vector.shape_cast %397 : vector<1x8x4xf32> to vector<8x4xf32>
    %c3_329 = arith.constant 3 : index
    %c0_330 = arith.constant 0 : index
    %399 = vector.load %arg4[%c3_329, %c0_330] : memref<9x4xf32, #tpu.memory_space<vmem>>, vector<1x4xf32>
    %400 = vector.broadcast %399 : vector<1x4xf32> to vector<8x4xf32>
    %401 = arith.mulf %398, %400 : vector<8x4xf32>
    %402 = arith.addf %396, %401 : vector<8x4xf32>
    %c7_331 = arith.constant 7 : index
    %c1_332 = arith.constant 1 : index
    %c0_333 = arith.constant 0 : index
    %403 = vector.load %arg7[%c7_331, %c1_332, %c0_333] : memref<10x10x4xf32, #tpu.memory_space<vmem>>, vector<1x8x4xf32>
    %404 = vector.shape_cast %403 : vector<1x8x4xf32> to vector<8x4xf32>
    %c4_334 = arith.constant 4 : index
    %c0_335 = arith.constant 0 : index
    %405 = vector.load %arg4[%c4_334, %c0_335] : memref<9x4xf32, #tpu.memory_space<vmem>>, vector<1x4xf32>
    %406 = vector.broadcast %405 : vector<1x4xf32> to vector<8x4xf32>
    %407 = arith.mulf %404, %406 : vector<8x4xf32>
    %408 = arith.addf %402, %407 : vector<8x4xf32>
    %c7_336 = arith.constant 7 : index
    %c2_337 = arith.constant 2 : index
    %c0_338 = arith.constant 0 : index
    %409 = vector.load %arg7[%c7_336, %c2_337, %c0_338] : memref<10x10x4xf32, #tpu.memory_space<vmem>>, vector<1x8x4xf32>
    %410 = vector.shape_cast %409 : vector<1x8x4xf32> to vector<8x4xf32>
    %c5_339 = arith.constant 5 : index
    %c0_340 = arith.constant 0 : index
    %411 = vector.load %arg4[%c5_339, %c0_340] : memref<9x4xf32, #tpu.memory_space<vmem>>, vector<1x4xf32>
    %412 = vector.broadcast %411 : vector<1x4xf32> to vector<8x4xf32>
    %413 = arith.mulf %410, %412 : vector<8x4xf32>
    %414 = arith.addf %408, %413 : vector<8x4xf32>
    %c8_341 = arith.constant 8 : index
    %c0_342 = arith.constant 0 : index
    %c0_343 = arith.constant 0 : index
    %415 = vector.load %arg7[%c8_341, %c0_342, %c0_343] : memref<10x10x4xf32, #tpu.memory_space<vmem>>, vector<1x8x4xf32>
    %416 = vector.shape_cast %415 : vector<1x8x4xf32> to vector<8x4xf32>
    %c6_344 = arith.constant 6 : index
    %c0_345 = arith.constant 0 : index
    %417 = vector.load %arg4[%c6_344, %c0_345] : memref<9x4xf32, #tpu.memory_space<vmem>>, vector<1x4xf32>
    %418 = vector.broadcast %417 : vector<1x4xf32> to vector<8x4xf32>
    %419 = arith.mulf %416, %418 : vector<8x4xf32>
    %420 = arith.addf %414, %419 : vector<8x4xf32>
    %c8_346 = arith.constant 8 : index
    %c1_347 = arith.constant 1 : index
    %c0_348 = arith.constant 0 : index
    %421 = vector.load %arg7[%c8_346, %c1_347, %c0_348] : memref<10x10x4xf32, #tpu.memory_space<vmem>>, vector<1x8x4xf32>
    %422 = vector.shape_cast %421 : vector<1x8x4xf32> to vector<8x4xf32>
    %c7_349 = arith.constant 7 : index
    %c0_350 = arith.constant 0 : index
    %423 = vector.load %arg4[%c7_349, %c0_350] : memref<9x4xf32, #tpu.memory_space<vmem>>, vector<1x4xf32>
    %424 = vector.broadcast %423 : vector<1x4xf32> to vector<8x4xf32>
    %425 = arith.mulf %422, %424 : vector<8x4xf32>
    %426 = arith.addf %420, %425 : vector<8x4xf32>
    %c8_351 = arith.constant 8 : index
    %c2_352 = arith.constant 2 : index
    %c0_353 = arith.constant 0 : index
    %427 = vector.load %arg7[%c8_351, %c2_352, %c0_353] : memref<10x10x4xf32, #tpu.memory_space<vmem>>, vector<1x8x4xf32>
    %428 = vector.shape_cast %427 : vector<1x8x4xf32> to vector<8x4xf32>
    %c8_354 = arith.constant 8 : index
    %c0_355 = arith.constant 0 : index
    %429 = vector.load %arg4[%c8_354, %c0_355] : memref<9x4xf32, #tpu.memory_space<vmem>>, vector<1x4xf32>
    %430 = vector.broadcast %429 : vector<1x4xf32> to vector<8x4xf32>
    %431 = arith.mulf %428, %430 : vector<8x4xf32>
    %432 = arith.addf %426, %431 : vector<8x4xf32>
    %c48 = arith.constant 48 : index
    %c0_356 = arith.constant 0 : index
    %433 = vector.load %arg8[%c48, %c0_356] : memref<64x4xf32, #tpu.memory_space<vmem>>, vector<8x4xf32>
    tpu.vector_store %arg8[%c48, %c0_356], %432 {strides = array<i32>} : memref<64x4xf32, #tpu.memory_space<vmem>>, vector<8x4xf32>,
    %cst_357 = arith.constant 0.000000e+00 : f32
    %434 = vector.broadcast %cst_357 : f32 to vector<8x4xf32>
    %c7_358 = arith.constant 7 : index
    %c0_359 = arith.constant 0 : index
    %c0_360 = arith.constant 0 : index
    %435 = vector.load %arg7[%c7_358, %c0_359, %c0_360] : memref<10x10x4xf32, #tpu.memory_space<vmem>>, vector<1x8x4xf32>
    %436 = vector.shape_cast %435 : vector<1x8x4xf32> to vector<8x4xf32>
    %c0_361 = arith.constant 0 : index
    %c0_362 = arith.constant 0 : index
    %437 = vector.load %arg4[%c0_361, %c0_362] : memref<9x4xf32, #tpu.memory_space<vmem>>, vector<1x4xf32>
    %438 = vector.broadcast %437 : vector<1x4xf32> to vector<8x4xf32>
    %439 = arith.mulf %436, %438 : vector<8x4xf32>
    %440 = arith.addf %434, %439 : vector<8x4xf32>
    %c7_363 = arith.constant 7 : index
    %c1_364 = arith.constant 1 : index
    %c0_365 = arith.constant 0 : index
    %441 = vector.load %arg7[%c7_363, %c1_364, %c0_365] : memref<10x10x4xf32, #tpu.memory_space<vmem>>, vector<1x8x4xf32>
    %442 = vector.shape_cast %441 : vector<1x8x4xf32> to vector<8x4xf32>
    %c1_366 = arith.constant 1 : index
    %c0_367 = arith.constant 0 : index
    %443 = vector.load %arg4[%c1_366, %c0_367] : memref<9x4xf32, #tpu.memory_space<vmem>>, vector<1x4xf32>
    %444 = vector.broadcast %443 : vector<1x4xf32> to vector<8x4xf32>
    %445 = arith.mulf %442, %444 : vector<8x4xf32>
    %446 = arith.addf %440, %445 : vector<8x4xf32>
    %c7_368 = arith.constant 7 : index
    %c2_369 = arith.constant 2 : index
    %c0_370 = arith.constant 0 : index
    %447 = vector.load %arg7[%c7_368, %c2_369, %c0_370] : memref<10x10x4xf32, #tpu.memory_space<vmem>>, vector<1x8x4xf32>
    %448 = vector.shape_cast %447 : vector<1x8x4xf32> to vector<8x4xf32>
    %c2_371 = arith.constant 2 : index
    %c0_372 = arith.constant 0 : index
    %449 = vector.load %arg4[%c2_371, %c0_372] : memref<9x4xf32, #tpu.memory_space<vmem>>, vector<1x4xf32>
    %450 = vector.broadcast %449 : vector<1x4xf32> to vector<8x4xf32>
    %451 = arith.mulf %448, %450 : vector<8x4xf32>
    %452 = arith.addf %446, %451 : vector<8x4xf32>
    %c8_373 = arith.constant 8 : index
    %c0_374 = arith.constant 0 : index
    %c0_375 = arith.constant 0 : index
    %453 = vector.load %arg7[%c8_373, %c0_374, %c0_375] : memref<10x10x4xf32, #tpu.memory_space<vmem>>, vector<1x8x4xf32>
    %454 = vector.shape_cast %453 : vector<1x8x4xf32> to vector<8x4xf32>
    %c3_376 = arith.constant 3 : index
    %c0_377 = arith.constant 0 : index
    %455 = vector.load %arg4[%c3_376, %c0_377] : memref<9x4xf32, #tpu.memory_space<vmem>>, vector<1x4xf32>
    %456 = vector.broadcast %455 : vector<1x4xf32> to vector<8x4xf32>
    %457 = arith.mulf %454, %456 : vector<8x4xf32>
    %458 = arith.addf %452, %457 : vector<8x4xf32>
    %c8_378 = arith.constant 8 : index
    %c1_379 = arith.constant 1 : index
    %c0_380 = arith.constant 0 : index
    %459 = vector.load %arg7[%c8_378, %c1_379, %c0_380] : memref<10x10x4xf32, #tpu.memory_space<vmem>>, vector<1x8x4xf32>
    %460 = vector.shape_cast %459 : vector<1x8x4xf32> to vector<8x4xf32>
    %c4_381 = arith.constant 4 : index
    %c0_382 = arith.constant 0 : index
    %461 = vector.load %arg4[%c4_381, %c0_382] : memref<9x4xf32, #tpu.memory_space<vmem>>, vector<1x4xf32>
    %462 = vector.broadcast %461 : vector<1x4xf32> to vector<8x4xf32>
    %463 = arith.mulf %460, %462 : vector<8x4xf32>
    %464 = arith.addf %458, %463 : vector<8x4xf32>
    %c8_383 = arith.constant 8 : index
    %c2_384 = arith.constant 2 : index
    %c0_385 = arith.constant 0 : index
    %465 = vector.load %arg7[%c8_383, %c2_384, %c0_385] : memref<10x10x4xf32, #tpu.memory_space<vmem>>, vector<1x8x4xf32>
    %466 = vector.shape_cast %465 : vector<1x8x4xf32> to vector<8x4xf32>
    %c5_386 = arith.constant 5 : index
    %c0_387 = arith.constant 0 : index
    %467 = vector.load %arg4[%c5_386, %c0_387] : memref<9x4xf32, #tpu.memory_space<vmem>>, vector<1x4xf32>
    %468 = vector.broadcast %467 : vector<1x4xf32> to vector<8x4xf32>
    %469 = arith.mulf %466, %468 : vector<8x4xf32>
    %470 = arith.addf %464, %469 : vector<8x4xf32>
    %c9 = arith.constant 9 : index
    %c0_388 = arith.constant 0 : index
    %c0_389 = arith.constant 0 : index
    %471 = vector.load %arg7[%c9, %c0_388, %c0_389] : memref<10x10x4xf32, #tpu.memory_space<vmem>>, vector<1x8x4xf32>
    %472 = vector.shape_cast %471 : vector<1x8x4xf32> to vector<8x4xf32>
    %c6_390 = arith.constant 6 : index
    %c0_391 = arith.constant 0 : index
    %473 = vector.load %arg4[%c6_390, %c0_391] : memref<9x4xf32, #tpu.memory_space<vmem>>, vector<1x4xf32>
    %474 = vector.broadcast %473 : vector<1x4xf32> to vector<8x4xf32>
    %475 = arith.mulf %472, %474 : vector<8x4xf32>
    %476 = arith.addf %470, %475 : vector<8x4xf32>
    %c9_392 = arith.constant 9 : index
    %c1_393 = arith.constant 1 : index
    %c0_394 = arith.constant 0 : index
    %477 = vector.load %arg7[%c9_392, %c1_393, %c0_394] : memref<10x10x4xf32, #tpu.memory_space<vmem>>, vector<1x8x4xf32>
    %478 = vector.shape_cast %477 : vector<1x8x4xf32> to vector<8x4xf32>
    %c7_395 = arith.constant 7 : index
    %c0_396 = arith.constant 0 : index
    %479 = vector.load %arg4[%c7_395, %c0_396] : memref<9x4xf32, #tpu.memory_space<vmem>>, vector<1x4xf32>
    %480 = vector.broadcast %479 : vector<1x4xf32> to vector<8x4xf32>
    %481 = arith.mulf %478, %480 : vector<8x4xf32>
    %482 = arith.addf %476, %481 : vector<8x4xf32>
    %c9_397 = arith.constant 9 : index
    %c2_398 = arith.constant 2 : index
    %c0_399 = arith.constant 0 : index
    %483 = vector.load %arg7[%c9_397, %c2_398, %c0_399] : memref<10x10x4xf32, #tpu.memory_space<vmem>>, vector<1x8x4xf32>
    %484 = vector.shape_cast %483 : vector<1x8x4xf32> to vector<8x4xf32>
    %c8_400 = arith.constant 8 : index
    %c0_401 = arith.constant 0 : index
    %485 = vector.load %arg4[%c8_400, %c0_401] : memref<9x4xf32, #tpu.memory_space<vmem>>, vector<1x4xf32>
    %486 = vector.broadcast %485 : vector<1x4xf32> to vector<8x4xf32>
    %487 = arith.mulf %484, %486 : vector<8x4xf32>
    %488 = arith.addf %482, %487 : vector<8x4xf32>
    %c56 = arith.constant 56 : index
    %c0_402 = arith.constant 0 : index
    %489 = vector.load %arg8[%c56, %c0_402] : memref<64x4xf32, #tpu.memory_space<vmem>>, vector<8x4xf32>
    tpu.vector_store %arg8[%c56, %c0_402], %488 {strides = array<i32>} : memref<64x4xf32, #tpu.memory_space<vmem>>, vector<8x4xf32>,
    %c0_403 = arith.constant 0 : index
    %c0_404 = arith.constant 0 : index
    %490 = vector.load %arg8[%c0_403, %c0_404] : memref<64x4xf32, #tpu.memory_space<vmem>>, vector<64x4xf32>
    %491 = arith.truncf %490 : vector<64x4xf32> to vector<64x4xbf16>
    %c0_405 = arith.constant 0 : index
    %c0_406 = arith.constant 0 : index
    %492 = vector.load %arg5[%c0_405, %c0_406] : memref<4x64xbf16, #tpu.memory_space<vmem>>, vector<4x64xbf16>
    %cst_407 = arith.constant dense<0.000000e+00> : vector<64x64xf32>
    %493 = tpu.matmul %491, %492, %cst_407 {dimension_numbers = #tpu.dot_dimension_numbers<[1], [0], [0], [1], [0, 0, 1, 1], [], []>} : vector<64x4xbf16>, vector<4x64xbf16>, vector<64x64xf32> -> vector<64x64xf32>
    %494 = arith.negf %493 : vector<64x64xf32>
    %495 = math.exp %494 : vector<64x64xf32>
    %cst_408 = arith.constant 1.000000e+00 : f32
    %496 = vector.broadcast %cst_408 : f32 to vector<64x64xf32>
    %497 = arith.addf %496, %495 : vector<64x64xf32>
    %498 = arith.divf %496, %497 : vector<64x64xf32>
    %499 = arith.mulf %493, %498 : vector<64x64xf32>
    %c0_409 = arith.constant 0 : index
    %c0_410 = arith.constant 0 : index
    %c0_411 = arith.constant 0 : index
    %500 = vector.load %arg6[%c0_409, %c0_410, %c0_411] : memref<1x64x64xf32, #tpu.memory_space<vmem>>, vector<1x64x64xf32>
    %501 = vector.shape_cast %500 : vector<1x64x64xf32> to vector<64x64xf32>
    %502 = vector.shape_cast %499 : vector<64x64xf32> to vector<1x64x64xf32>
    tpu.vector_store %arg6[%c0_409, %c0_410, %c0_411], %502 {strides = array<i32>} : memref<1x64x64xf32, #tpu.memory_space<vmem>>, vector<1x64x64xf32>,
    return
  }
  func.func @transform_0(%arg0: i32) -> (i32, i32, i32) {
    %c0_i32 = arith.constant 0 : i32
    %c0_i32_0 = arith.constant 0 : i32
    %c0_i32_1 = arith.constant 0 : i32
    return %arg0, %c0_i32, %c0_i32_0 : i32, i32, i32
  }
  func.func @transform_1(%arg0: i32) -> (i32, i32) {
    %c0_i32 = arith.constant 0 : i32
    %c0_i32_0 = arith.constant 0 : i32
    %c0_i32_1 = arith.constant 0 : i32
    return %c0_i32, %c0_i32_0 : i32, i32
  }
  func.func @transform_2(%arg0: i32) -> (i32, i32) {
    %c0_i32 = arith.constant 0 : i32
    %c0_i32_0 = arith.constant 0 : i32
    %c0_i32_1 = arith.constant 0 : i32
    return %c0_i32, %c0_i32_0 : i32, i32
  }
  func.func @transform_3(%arg0: i32) -> (i32, i32) {
    %c0_i32 = arith.constant 0 : i32
    %c0_i32_0 = arith.constant 0 : i32
    %c0_i32_1 = arith.constant 0 : i32
    return %c0_i32, %c0_i32_0 : i32, i32
  }
  func.func @transform_4(%arg0: i32) -> (i32, i32) {
    %c0_i32 = arith.constant 0 : i32
    %c0_i32_0 = arith.constant 0 : i32
    %c0_i32_1 = arith.constant 0 : i32
    return %c0_i32, %c0_i32_0 : i32, i32
  }
  func.func @transform_5(%arg0: i32) -> (i32, i32, i32) {
    %c0_i32 = arith.constant 0 : i32
    %c0_i32_0 = arith.constant 0 : i32
    %c0_i32_1 = arith.constant 0 : i32
    return %arg0, %c0_i32, %c0_i32_0 : i32, i32, i32
  }
}

module attributes {stable_mosaic.version = 11 : i64} {
  func.func @_mm_kernel(%arg0: i32, %arg1: i32, %arg2: i32, %arg3: memref<128x64xbf16, #tpu.memory_space<vmem>>, %arg4: memref<64x34xbf16, #tpu.memory_space<vmem>>, %arg5: memref<1x34xf32, #tpu.memory_space<vmem>>, %arg6: memref<128x34xf32, #tpu.memory_space<vmem>>, %arg7: memref<128x34xf32, #tpu.memory_space<vmem>>) attributes {dimension_semantics = [#tpu.dimension_semantics<parallel>, #tpu.dimension_semantics<parallel>, #tpu.dimension_semantics<arbitrary>], iteration_bounds = array<i64: 1, 1, 1>, scalar_prefetch = 0 : i64, scratch_operands = 1 : i64, tpu.core_type = #tpu.core_type<tc>, window_params = [{transform_indices = @transform_0, window_bounds = array<i64: 128, 64>}, {transform_indices = @transform_1, window_bounds = array<i64: 64, 34>}, {transform_indices = @transform_2, window_bounds = array<i64: 1, 34>}, {transform_indices = @transform_3, window_bounds = array<i64: 128, 34>}]} {
    %c0_i32 = arith.constant 0 : i32
    %0 = arith.cmpi eq, %arg2, %c0_i32 : i32
    %1 = arith.extui %0 : i1 to i32
    %c0_i32_0 = arith.constant 0 : i32
    %2 = arith.cmpi ne, %1, %c0_i32_0 : i32
    scf.if %2 {
      %cst_10 = arith.constant 0.000000e+00 : f32
      %12 = vector.broadcast %cst_10 : f32 to vector<128x34xf32>
      %c0_11 = arith.constant 0 : index
      %c0_12 = arith.constant 0 : index
      %13 = vector.load %arg7[%c0_11, %c0_12] : memref<128x34xf32, #tpu.memory_space<vmem>>, vector<128x34xf32>
      tpu.vector_store %arg7[%c0_11, %c0_12], %12 {strides = array<i32>} : memref<128x34xf32, #tpu.memory_space<vmem>>, vector<128x34xf32>,
    } else {
    }
    %c0 = arith.constant 0 : index
    %c0_1 = arith.constant 0 : index
    %3 = vector.load %arg3[%c0, %c0_1] : memref<128x64xbf16, #tpu.memory_space<vmem>>, vector<128x64xbf16>
    %c0_2 = arith.constant 0 : index
    %c0_3 = arith.constant 0 : index
    %4 = vector.load %arg7[%c0_2, %c0_3] : memref<128x34xf32, #tpu.memory_space<vmem>>, vector<128x34xf32>
    %c0_4 = arith.constant 0 : index
    %c0_5 = arith.constant 0 : index
    %5 = vector.load %arg4[%c0_4, %c0_5] : memref<64x34xbf16, #tpu.memory_space<vmem>>, vector<64x34xbf16>
    %cst = arith.constant dense<0.000000e+00> : vector<128x34xf32>
    %6 = tpu.matmul %3, %5, %cst {dimension_numbers = #tpu.dot_dimension_numbers<[1], [0], [0], [1], [0, 0, 1, 1], [], []>} : vector<128x64xbf16>, vector<64x34xbf16>, vector<128x34xf32> -> vector<128x34xf32>
    %7 = arith.addf %4, %6 : vector<128x34xf32>
    %c0_6 = arith.constant 0 : index
    %c0_7 = arith.constant 0 : index
    %8 = vector.load %arg7[%c0_6, %c0_7] : memref<128x34xf32, #tpu.memory_space<vmem>>, vector<128x34xf32>
    tpu.vector_store %arg7[%c0_6, %c0_7], %7 {strides = array<i32>} : memref<128x34xf32, #tpu.memory_space<vmem>>, vector<128x34xf32>,
    %c0_i32_8 = arith.constant 0 : i32
    %9 = arith.cmpi eq, %arg2, %c0_i32_8 : i32
    %10 = arith.extui %9 : i1 to i32
    %c0_i32_9 = arith.constant 0 : i32
    %11 = arith.cmpi ne, %10, %c0_i32_9 : i32
    scf.if %11 {
      %c0_10 = arith.constant 0 : index
      %c0_11 = arith.constant 0 : index
      %12 = vector.load %arg7[%c0_10, %c0_11] : memref<128x34xf32, #tpu.memory_space<vmem>>, vector<128x34xf32>
      %c0_12 = arith.constant 0 : index
      %c0_13 = arith.constant 0 : index
      %13 = vector.load %arg5[%c0_12, %c0_13] : memref<1x34xf32, #tpu.memory_space<vmem>>, vector<1x34xf32>
      %14 = vector.broadcast %13 : vector<1x34xf32> to vector<128x34xf32>
      %15 = arith.addf %12, %14 : vector<128x34xf32>
      %c0_14 = arith.constant 0 : index
      %c0_15 = arith.constant 0 : index
      %16 = vector.load %arg6[%c0_14, %c0_15] : memref<128x34xf32, #tpu.memory_space<vmem>>, vector<128x34xf32>
      tpu.vector_store %arg6[%c0_14, %c0_15], %15 {strides = array<i32>} : memref<128x34xf32, #tpu.memory_space<vmem>>, vector<128x34xf32>,
    } else {
    }
    return
  }
  func.func @transform_0(%arg0: i32, %arg1: i32, %arg2: i32) -> (i32, i32) {
    %c0_i32 = arith.constant 0 : i32
    return %arg0, %arg2 : i32, i32
  }
  func.func @transform_1(%arg0: i32, %arg1: i32, %arg2: i32) -> (i32, i32) {
    %c0_i32 = arith.constant 0 : i32
    return %arg2, %arg1 : i32, i32
  }
  func.func @transform_2(%arg0: i32, %arg1: i32, %arg2: i32) -> (i32, i32) {
    %c0_i32 = arith.constant 0 : i32
    %c0_i32_0 = arith.constant 0 : i32
    return %c0_i32, %arg1 : i32, i32
  }
  func.func @transform_3(%arg0: i32, %arg1: i32, %arg2: i32) -> (i32, i32) {
    %c0_i32 = arith.constant 0 : i32
    return %arg0, %arg1 : i32, i32
  }
}

module attributes {stable_mosaic.version = 11 : i64} {
  func.func @_mm_kernel(%arg0: i32, %arg1: i32, %arg2: i32, %arg3: memref<128x2xbf16, #tpu.memory_space<vmem>>, %arg4: memref<2x64xbf16, #tpu.memory_space<vmem>>, %arg5: memref<1x64xf32, #tpu.memory_space<vmem>>, %arg6: memref<128x64xf32, #tpu.memory_space<vmem>>, %arg7: memref<128x64xf32, #tpu.memory_space<vmem>>) attributes {dimension_semantics = [#tpu.dimension_semantics<parallel>, #tpu.dimension_semantics<parallel>, #tpu.dimension_semantics<arbitrary>], iteration_bounds = array<i64: 1, 1, 1>, scalar_prefetch = 0 : i64, scratch_operands = 1 : i64, tpu.core_type = #tpu.core_type<tc>, window_params = [{transform_indices = @transform_0, window_bounds = array<i64: 128, 2>}, {transform_indices = @transform_1, window_bounds = array<i64: 2, 64>}, {transform_indices = @transform_2, window_bounds = array<i64: 1, 64>}, {transform_indices = @transform_3, window_bounds = array<i64: 128, 64>}]} {
    %c0_i32 = arith.constant 0 : i32
    %0 = arith.cmpi eq, %arg2, %c0_i32 : i32
    %1 = arith.extui %0 : i1 to i32
    %c0_i32_0 = arith.constant 0 : i32
    %2 = arith.cmpi ne, %1, %c0_i32_0 : i32
    scf.if %2 {
      %cst_10 = arith.constant 0.000000e+00 : f32
      %12 = vector.broadcast %cst_10 : f32 to vector<128x64xf32>
      %c0_11 = arith.constant 0 : index
      %c0_12 = arith.constant 0 : index
      %13 = vector.load %arg7[%c0_11, %c0_12] : memref<128x64xf32, #tpu.memory_space<vmem>>, vector<128x64xf32>
      tpu.vector_store %arg7[%c0_11, %c0_12], %12 {strides = array<i32>} : memref<128x64xf32, #tpu.memory_space<vmem>>, vector<128x64xf32>,
    } else {
    }
    %c0 = arith.constant 0 : index
    %c0_1 = arith.constant 0 : index
    %3 = vector.load %arg3[%c0, %c0_1] : memref<128x2xbf16, #tpu.memory_space<vmem>>, vector<128x2xbf16>
    %c0_2 = arith.constant 0 : index
    %c0_3 = arith.constant 0 : index
    %4 = vector.load %arg7[%c0_2, %c0_3] : memref<128x64xf32, #tpu.memory_space<vmem>>, vector<128x64xf32>
    %c0_4 = arith.constant 0 : index
    %c0_5 = arith.constant 0 : index
    %5 = vector.load %arg4[%c0_4, %c0_5] : memref<2x64xbf16, #tpu.memory_space<vmem>>, vector<2x64xbf16>
    %cst = arith.constant dense<0.000000e+00> : vector<128x64xf32>
    %6 = tpu.matmul %3, %5, %cst {dimension_numbers = #tpu.dot_dimension_numbers<[1], [0], [0], [1], [0, 0, 1, 1], [], []>} : vector<128x2xbf16>, vector<2x64xbf16>, vector<128x64xf32> -> vector<128x64xf32>
    %7 = arith.addf %4, %6 : vector<128x64xf32>
    %c0_6 = arith.constant 0 : index
    %c0_7 = arith.constant 0 : index
    %8 = vector.load %arg7[%c0_6, %c0_7] : memref<128x64xf32, #tpu.memory_space<vmem>>, vector<128x64xf32>
    tpu.vector_store %arg7[%c0_6, %c0_7], %7 {strides = array<i32>} : memref<128x64xf32, #tpu.memory_space<vmem>>, vector<128x64xf32>,
    %c0_i32_8 = arith.constant 0 : i32
    %9 = arith.cmpi eq, %arg2, %c0_i32_8 : i32
    %10 = arith.extui %9 : i1 to i32
    %c0_i32_9 = arith.constant 0 : i32
    %11 = arith.cmpi ne, %10, %c0_i32_9 : i32
    scf.if %11 {
      %c0_10 = arith.constant 0 : index
      %c0_11 = arith.constant 0 : index
      %12 = vector.load %arg7[%c0_10, %c0_11] : memref<128x64xf32, #tpu.memory_space<vmem>>, vector<128x64xf32>
      %c0_12 = arith.constant 0 : index
      %c0_13 = arith.constant 0 : index
      %13 = vector.load %arg5[%c0_12, %c0_13] : memref<1x64xf32, #tpu.memory_space<vmem>>, vector<1x64xf32>
      %14 = vector.broadcast %13 : vector<1x64xf32> to vector<128x64xf32>
      %15 = arith.addf %12, %14 : vector<128x64xf32>
      %c0_14 = arith.constant 0 : index
      %c0_15 = arith.constant 0 : index
      %16 = vector.load %arg6[%c0_14, %c0_15] : memref<128x64xf32, #tpu.memory_space<vmem>>, vector<128x64xf32>
      tpu.vector_store %arg6[%c0_14, %c0_15], %15 {strides = array<i32>} : memref<128x64xf32, #tpu.memory_space<vmem>>, vector<128x64xf32>,
    } else {
    }
    return
  }
  func.func @transform_0(%arg0: i32, %arg1: i32, %arg2: i32) -> (i32, i32) {
    %c0_i32 = arith.constant 0 : i32
    return %arg0, %arg2 : i32, i32
  }
  func.func @transform_1(%arg0: i32, %arg1: i32, %arg2: i32) -> (i32, i32) {
    %c0_i32 = arith.constant 0 : i32
    return %arg2, %arg1 : i32, i32
  }
  func.func @transform_2(%arg0: i32, %arg1: i32, %arg2: i32) -> (i32, i32) {
    %c0_i32 = arith.constant 0 : i32
    %c0_i32_0 = arith.constant 0 : i32
    return %c0_i32, %arg1 : i32, i32
  }
  func.func @transform_3(%arg0: i32, %arg1: i32, %arg2: i32) -> (i32, i32) {
    %c0_i32 = arith.constant 0 : i32
    return %arg0, %arg1 : i32, i32
  }
}

module attributes {stable_mosaic.version = 11 : i64} {
  func.func @_scan_kernel(%arg0: i32, %arg1: i32, %arg2: memref<1x64x256xf32, #tpu.memory_space<vmem>>, %arg3: memref<1x64x64xf32, #tpu.memory_space<vmem>>, %arg4: memref<16x64xf32, #tpu.memory_space<vmem>>, %arg5: memref<1x64x64xf32, #tpu.memory_space<vmem>>, %arg6: memref<1x64x16xf32, #tpu.memory_space<vmem>>, %arg7: memref<1x256xf32, #tpu.memory_space<vmem>>, %arg8: memref<1x64xf32, #tpu.memory_space<vmem>>, %arg9: memref<1x64x256xf32, #tpu.memory_space<vmem>>, %arg10: memref<64x64xf32, #tpu.memory_space<vmem>>, %arg11: memref<8x256xf32, #tpu.memory_space<vmem>>) attributes {dimension_semantics = [#tpu.dimension_semantics<parallel>, #tpu.dimension_semantics<arbitrary>], iteration_bounds = array<i64: 2, 1>, scalar_prefetch = 0 : i64, scratch_operands = 2 : i64, tpu.core_type = #tpu.core_type<tc>, window_params = [{transform_indices = @transform_0, window_bounds = array<i64: 1, 64, 256>}, {transform_indices = @transform_1, window_bounds = array<i64: 1, 64, 64>}, {pipeline_mode = #tpu.pipeline_mode<synchronous>, transform_indices = @transform_2, window_bounds = array<i64: 16, 64>}, {transform_indices = @transform_3, window_bounds = array<i64: 1, 64, 64>}, {transform_indices = @transform_4, window_bounds = array<i64: 1, 64, 16>}, {pipeline_mode = #tpu.pipeline_mode<synchronous>, transform_indices = @transform_5, window_bounds = array<i64: 1, 256>}, {pipeline_mode = #tpu.pipeline_mode<synchronous>, transform_indices = @transform_6, window_bounds = array<i64: 1, 64>}, {transform_indices = @transform_7, window_bounds = array<i64: 1, 64, 256>}]} {
    %c0_i32 = arith.constant 0 : i32
    %0 = arith.cmpi eq, %arg1, %c0_i32 : i32
    %1 = arith.extui %0 : i1 to i32
    %c0_i32_0 = arith.constant 0 : i32
    %2 = arith.cmpi ne, %1, %c0_i32_0 : i32
    scf.if %2 {
      %cst = arith.constant 0.000000e+00 : f32
      %16 = vector.broadcast %cst : f32 to vector<64x64xf32>
      %c0_21 = arith.constant 0 : index
      %c0_22 = arith.constant 0 : index
      %17 = vector.load %arg10[%c0_21, %c0_22] : memref<64x64xf32, #tpu.memory_space<vmem>>, vector<64x64xf32>
      tpu.vector_store %arg10[%c0_21, %c0_22], %16 {strides = array<i32>} : memref<64x64xf32, #tpu.memory_space<vmem>>, vector<64x64xf32>,
    } else {
    }
    %c0 = arith.constant 0 : index
    %c0_1 = arith.constant 0 : index
    %3 = vector.load %arg4[%c0, %c0_1] : memref<16x64xf32, #tpu.memory_space<vmem>>, vector<16x64xf32>
    %c0_2 = arith.constant 0 : index
    %c0_3 = arith.constant 0 : index
    %4 = vector.load %arg8[%c0_2, %c0_3] : memref<1x64xf32, #tpu.memory_space<vmem>>, vector<1x64xf32>
    %c0_4 = arith.constant 0 : index
    %c0_5 = arith.constant 0 : index
    %5 = vector.load %arg7[%c0_4, %c0_5] : memref<1x256xf32, #tpu.memory_space<vmem>>, vector<1x256xf32>
    %c0_6 = arith.constant 0 : index
    %c0_7 = arith.constant 0 : index
    %6 = vector.load %arg10[%c0_6, %c0_7] : memref<64x64xf32, #tpu.memory_space<vmem>>, vector<16x64xf32>
    %c16 = arith.constant 16 : index
    %c0_8 = arith.constant 0 : index
    %7 = vector.load %arg10[%c16, %c0_8] : memref<64x64xf32, #tpu.memory_space<vmem>>, vector<16x64xf32>
    %c32 = arith.constant 32 : index
    %c0_9 = arith.constant 0 : index
    %8 = vector.load %arg10[%c32, %c0_9] : memref<64x64xf32, #tpu.memory_space<vmem>>, vector<16x64xf32>
    %c48 = arith.constant 48 : index
    %c0_10 = arith.constant 0 : index
    %9 = vector.load %arg10[%c48, %c0_10] : memref<64x64xf32, #tpu.memory_space<vmem>>, vector<16x64xf32>
    %c0_i32_11 = arith.constant 0 : i32
    %c8_i32 = arith.constant 8 : i32
    %10 = arith.addi %c0_i32_11, %c8_i32 : i32
    %c1_i32 = arith.constant 1 : i32
    %11:4 = scf.for %arg12 = %c0_i32_11 to %10 step %c1_i32 iter_args(%arg13 = %6, %arg14 = %7, %arg15 = %8, %arg16 = %9) -> (vector<16x64xf32>, vector<16x64xf32>, vector<16x64xf32>, vector<16x64xf32>)  : i32 {
      %c8_i32_21 = arith.constant 8 : i32
      %16 = arith.muli %arg12, %c8_i32_21 : i32
      %17 = tpu.assume_multiple %16, 8 : i32
      %c0_22 = arith.constant 0 : index
      %18 = arith.index_cast %17 : i32 to index
      %c0_23 = arith.constant 0 : index
      %19 = vector.load %arg3[%c0_22, %18, %c0_23] : memref<1x64x64xf32, #tpu.memory_space<vmem>>, vector<1x8x64xf32>
      %20 = vector.shape_cast %19 : vector<1x8x64xf32> to vector<8x64xf32>
      %21 = vector.broadcast %4 : vector<1x64xf32> to vector<8x64xf32>
      %22 = arith.addf %20, %21 : vector<8x64xf32>
      %cst = arith.constant 0.000000e+00 : f32
      %23 = vector.broadcast %cst : f32 to vector<8x64xf32>
      %24 = arith.maximumf %22, %23 : vector<8x64xf32>
      %25 = vector.broadcast %cst : f32 to vector<8x64xf32>
      %26 = arith.subf %22, %25 : vector<8x64xf32>
      %27 = arith.cmpf one, %26, %26 : vector<8x64xf32>
      %28 = vector.broadcast %cst : f32 to vector<8x64xf32>
      %29 = arith.addf %22, %28 : vector<8x64xf32>
      %30 = math.absf %26 : vector<8x64xf32>
      %cst_24 = arith.constant 0.000000e+00 : f32
      %31 = vector.broadcast %cst_24 : f32 to vector<8x64xf32>
      %32 = arith.subf %31, %30 : vector<8x64xf32>
      %33 = math.exp %32 : vector<8x64xf32>
      %34 = math.log1p %33 : vector<8x64xf32>
      %35 = arith.addf %24, %34 : vector<8x64xf32>
      %36 = arith.select %27, %29, %35 : vector<8x64xi1>, vector<8x64xf32>
      %c0_25 = arith.constant 0 : index
      %37 = arith.index_cast %17 : i32 to index
      %c0_26 = arith.constant 0 : index
      %38 = vector.load %arg2[%c0_25, %37, %c0_26] : memref<1x64x256xf32, #tpu.memory_space<vmem>>, vector<1x8x256xf32>
      %39 = vector.shape_cast %38 : vector<1x8x256xf32> to vector<8x256xf32>
      %c0_27 = arith.constant 0 : index
      %40 = arith.index_cast %17 : i32 to index
      %c0_28 = arith.constant 0 : index
      %41 = vector.load %arg6[%c0_27, %40, %c0_28] : memref<1x64x16xf32, #tpu.memory_space<vmem>>, vector<1x8x16xf32>
      %42 = vector.shape_cast %41 : vector<1x8x16xf32> to vector<8x16xf32>
      %c0_29 = arith.constant 0 : index
      %43 = arith.index_cast %17 : i32 to index
      %c0_30 = arith.constant 0 : index
      %44 = vector.load %arg5[%c0_29, %43, %c0_30] : memref<1x64x64xf32, #tpu.memory_space<vmem>>, vector<1x8x64xf32>
      %45 = vector.shape_cast %44 : vector<1x8x64xf32> to vector<8x64xf32>
      %46 = tpu.transpose %45, [1, 0] : vector<8x64xf32> -> vector<64x8xf32>
      %47 = vector.extract_strided_slice %39 {offsets = [0, 0], sizes = [8, 64], strides = [1, 1]} : vector<8x256xf32> to vector<8x64xf32>
      %48 = arith.mulf %36, %47 : vector<8x64xf32>
      %49 = vector.extract_strided_slice %39 {offsets = [0, 64], sizes = [8, 64], strides = [1, 1]} : vector<8x256xf32> to vector<8x64xf32>
      %50 = arith.mulf %36, %49 : vector<8x64xf32>
      %51 = vector.extract_strided_slice %39 {offsets = [0, 128], sizes = [8, 64], strides = [1, 1]} : vector<8x256xf32> to vector<8x64xf32>
      %52 = arith.mulf %36, %51 : vector<8x64xf32>
      %53 = vector.extract_strided_slice %39 {offsets = [0, 192], sizes = [8, 64], strides = [1, 1]} : vector<8x256xf32> to vector<8x64xf32>
      %54 = arith.mulf %36, %53 : vector<8x64xf32>
      %55 = vector.extract_strided_slice %36 {offsets = [0, 0], sizes = [1, 64], strides = [1, 1]} : vector<8x64xf32> to vector<1x64xf32>
      %56 = vector.broadcast %55 : vector<1x64xf32> to vector<16x64xf32>
      %57 = arith.mulf %56, %3 : vector<16x64xf32>
      %58 = math.exp %57 : vector<16x64xf32>
      %59 = vector.extract_strided_slice %42 {offsets = [0, 0], sizes = [1, 16], strides = [1, 1]} : vector<8x16xf32> to vector<1x16xf32>
      %60 = arith.mulf %58, %arg13 : vector<16x64xf32>
      %61 = vector.extract_strided_slice %46 {offsets = [0, 0], sizes = [16, 1], strides = [1, 1]} : vector<64x8xf32> to vector<16x1xf32>
      %62 = vector.extract_strided_slice %48 {offsets = [0, 0], sizes = [1, 64], strides = [1, 1]} : vector<8x64xf32> to vector<1x64xf32>
      %63 = vector.broadcast %61 : vector<16x1xf32> to vector<16x64xf32>
      %64 = vector.broadcast %62 : vector<1x64xf32> to vector<16x64xf32>
      %65 = arith.mulf %63, %64 : vector<16x64xf32>
      %66 = arith.addf %60, %65 : vector<16x64xf32>
      %cst_31 = arith.constant dense<0.000000e+00> : vector<1x64xf32>
      %67 = tpu.matmul %59, %66, %cst_31 {dimension_numbers = #tpu.dot_dimension_numbers<[1], [0], [0], [1], [0, 0, 1, 1], [], []>} : vector<1x16xf32>, vector<16x64xf32>, vector<1x64xf32> -> vector<1x64xf32>
      %c0_32 = arith.constant 0 : index
      %c0_33 = arith.constant 0 : index
      %68 = vector.load %arg11[%c0_32, %c0_33] : memref<8x256xf32, #tpu.memory_space<vmem>>, vector<1x64xf32>
      tpu.vector_store %arg11[%c0_32, %c0_33], %67 {strides = array<i32>} : memref<8x256xf32, #tpu.memory_space<vmem>>, vector<1x64xf32>,
      %69 = arith.mulf %58, %arg14 : vector<16x64xf32>
      %70 = vector.extract_strided_slice %46 {offsets = [16, 0], sizes = [16, 1], strides = [1, 1]} : vector<64x8xf32> to vector<16x1xf32>
      %71 = vector.extract_strided_slice %50 {offsets = [0, 0], sizes = [1, 64], strides = [1, 1]} : vector<8x64xf32> to vector<1x64xf32>
      %72 = vector.broadcast %70 : vector<16x1xf32> to vector<16x64xf32>
      %73 = vector.broadcast %71 : vector<1x64xf32> to vector<16x64xf32>
      %74 = arith.mulf %72, %73 : vector<16x64xf32>
      %75 = arith.addf %69, %74 : vector<16x64xf32>
      %cst_34 = arith.constant dense<0.000000e+00> : vector<1x64xf32>
      %76 = tpu.matmul %59, %75, %cst_34 {dimension_numbers = #tpu.dot_dimension_numbers<[1], [0], [0], [1], [0, 0, 1, 1], [], []>} : vector<1x16xf32>, vector<16x64xf32>, vector<1x64xf32> -> vector<1x64xf32>
      %c0_35 = arith.constant 0 : index
      %c64 = arith.constant 64 : index
      %77 = vector.load %arg11[%c0_35, %c64] : memref<8x256xf32, #tpu.memory_space<vmem>>, vector<1x64xf32>
      tpu.vector_store %arg11[%c0_35, %c64], %76 {strides = array<i32>} : memref<8x256xf32, #tpu.memory_space<vmem>>, vector<1x64xf32>,
      %78 = arith.mulf %58, %arg15 : vector<16x64xf32>
      %79 = vector.extract_strided_slice %46 {offsets = [32, 0], sizes = [16, 1], strides = [1, 1]} : vector<64x8xf32> to vector<16x1xf32>
      %80 = vector.extract_strided_slice %52 {offsets = [0, 0], sizes = [1, 64], strides = [1, 1]} : vector<8x64xf32> to vector<1x64xf32>
      %81 = vector.broadcast %79 : vector<16x1xf32> to vector<16x64xf32>
      %82 = vector.broadcast %80 : vector<1x64xf32> to vector<16x64xf32>
      %83 = arith.mulf %81, %82 : vector<16x64xf32>
      %84 = arith.addf %78, %83 : vector<16x64xf32>
      %cst_36 = arith.constant dense<0.000000e+00> : vector<1x64xf32>
      %85 = tpu.matmul %59, %84, %cst_36 {dimension_numbers = #tpu.dot_dimension_numbers<[1], [0], [0], [1], [0, 0, 1, 1], [], []>} : vector<1x16xf32>, vector<16x64xf32>, vector<1x64xf32> -> vector<1x64xf32>
      %c0_37 = arith.constant 0 : index
      %c128 = arith.constant 128 : index
      %86 = vector.load %arg11[%c0_37, %c128] : memref<8x256xf32, #tpu.memory_space<vmem>>, vector<1x64xf32>
      tpu.vector_store %arg11[%c0_37, %c128], %85 {strides = array<i32>} : memref<8x256xf32, #tpu.memory_space<vmem>>, vector<1x64xf32>,
      %87 = arith.mulf %58, %arg16 : vector<16x64xf32>
      %88 = vector.extract_strided_slice %46 {offsets = [48, 0], sizes = [16, 1], strides = [1, 1]} : vector<64x8xf32> to vector<16x1xf32>
      %89 = vector.extract_strided_slice %54 {offsets = [0, 0], sizes = [1, 64], strides = [1, 1]} : vector<8x64xf32> to vector<1x64xf32>
      %90 = vector.broadcast %88 : vector<16x1xf32> to vector<16x64xf32>
      %91 = vector.broadcast %89 : vector<1x64xf32> to vector<16x64xf32>
      %92 = arith.mulf %90, %91 : vector<16x64xf32>
      %93 = arith.addf %87, %92 : vector<16x64xf32>
      %cst_38 = arith.constant dense<0.000000e+00> : vector<1x64xf32>
      %94 = tpu.matmul %59, %93, %cst_38 {dimension_numbers = #tpu.dot_dimension_numbers<[1], [0], [0], [1], [0, 0, 1, 1], [], []>} : vector<1x16xf32>, vector<16x64xf32>, vector<1x64xf32> -> vector<1x64xf32>
      %c0_39 = arith.constant 0 : index
      %c192 = arith.constant 192 : index
      %95 = vector.load %arg11[%c0_39, %c192] : memref<8x256xf32, #tpu.memory_space<vmem>>, vector<1x64xf32>
      tpu.vector_store %arg11[%c0_39, %c192], %94 {strides = array<i32>} : memref<8x256xf32, #tpu.memory_space<vmem>>, vector<1x64xf32>,
      %96 = vector.extract_strided_slice %36 {offsets = [1, 0], sizes = [1, 64], strides = [1, 1]} : vector<8x64xf32> to vector<1x64xf32>
      %97 = vector.broadcast %96 : vector<1x64xf32> to vector<16x64xf32>
      %98 = arith.mulf %97, %3 : vector<16x64xf32>
      %99 = math.exp %98 : vector<16x64xf32>
      %100 = vector.extract_strided_slice %42 {offsets = [1, 0], sizes = [1, 16], strides = [1, 1]} : vector<8x16xf32> to vector<1x16xf32>
      %101 = arith.mulf %99, %66 : vector<16x64xf32>
      %102 = vector.extract_strided_slice %46 {offsets = [0, 1], sizes = [16, 1], strides = [1, 1]} : vector<64x8xf32> to vector<16x1xf32>
      %103 = vector.extract_strided_slice %48 {offsets = [1, 0], sizes = [1, 64], strides = [1, 1]} : vector<8x64xf32> to vector<1x64xf32>
      %104 = vector.broadcast %102 : vector<16x1xf32> to vector<16x64xf32>
      %105 = vector.broadcast %103 : vector<1x64xf32> to vector<16x64xf32>
      %106 = arith.mulf %104, %105 : vector<16x64xf32>
      %107 = arith.addf %101, %106 : vector<16x64xf32>
      %cst_40 = arith.constant dense<0.000000e+00> : vector<1x64xf32>
      %108 = tpu.matmul %100, %107, %cst_40 {dimension_numbers = #tpu.dot_dimension_numbers<[1], [0], [0], [1], [0, 0, 1, 1], [], []>} : vector<1x16xf32>, vector<16x64xf32>, vector<1x64xf32> -> vector<1x64xf32>
      %c1 = arith.constant 1 : index
      %c0_41 = arith.constant 0 : index
      %109 = vector.load %arg11[%c1, %c0_41] : memref<8x256xf32, #tpu.memory_space<vmem>>, vector<1x64xf32>
      tpu.vector_store %arg11[%c1, %c0_41], %108 {strides = array<i32>} : memref<8x256xf32, #tpu.memory_space<vmem>>, vector<1x64xf32>,
      %110 = arith.mulf %99, %75 : vector<16x64xf32>
      %111 = vector.extract_strided_slice %46 {offsets = [16, 1], sizes = [16, 1], strides = [1, 1]} : vector<64x8xf32> to vector<16x1xf32>
      %112 = vector.extract_strided_slice %50 {offsets = [1, 0], sizes = [1, 64], strides = [1, 1]} : vector<8x64xf32> to vector<1x64xf32>
      %113 = vector.broadcast %111 : vector<16x1xf32> to vector<16x64xf32>
      %114 = vector.broadcast %112 : vector<1x64xf32> to vector<16x64xf32>
      %115 = arith.mulf %113, %114 : vector<16x64xf32>
      %116 = arith.addf %110, %115 : vector<16x64xf32>
      %cst_42 = arith.constant dense<0.000000e+00> : vector<1x64xf32>
      %117 = tpu.matmul %100, %116, %cst_42 {dimension_numbers = #tpu.dot_dimension_numbers<[1], [0], [0], [1], [0, 0, 1, 1], [], []>} : vector<1x16xf32>, vector<16x64xf32>, vector<1x64xf32> -> vector<1x64xf32>
      %c1_43 = arith.constant 1 : index
      %c64_44 = arith.constant 64 : index
      %118 = vector.load %arg11[%c1_43, %c64_44] : memref<8x256xf32, #tpu.memory_space<vmem>>, vector<1x64xf32>
      tpu.vector_store %arg11[%c1_43, %c64_44], %117 {strides = array<i32>} : memref<8x256xf32, #tpu.memory_space<vmem>>, vector<1x64xf32>,
      %119 = arith.mulf %99, %84 : vector<16x64xf32>
      %120 = vector.extract_strided_slice %46 {offsets = [32, 1], sizes = [16, 1], strides = [1, 1]} : vector<64x8xf32> to vector<16x1xf32>
      %121 = vector.extract_strided_slice %52 {offsets = [1, 0], sizes = [1, 64], strides = [1, 1]} : vector<8x64xf32> to vector<1x64xf32>
      %122 = vector.broadcast %120 : vector<16x1xf32> to vector<16x64xf32>
      %123 = vector.broadcast %121 : vector<1x64xf32> to vector<16x64xf32>
      %124 = arith.mulf %122, %123 : vector<16x64xf32>
      %125 = arith.addf %119, %124 : vector<16x64xf32>
      %cst_45 = arith.constant dense<0.000000e+00> : vector<1x64xf32>
      %126 = tpu.matmul %100, %125, %cst_45 {dimension_numbers = #tpu.dot_dimension_numbers<[1], [0], [0], [1], [0, 0, 1, 1], [], []>} : vector<1x16xf32>, vector<16x64xf32>, vector<1x64xf32> -> vector<1x64xf32>
      %c1_46 = arith.constant 1 : index
      %c128_47 = arith.constant 128 : index
      %127 = vector.load %arg11[%c1_46, %c128_47] : memref<8x256xf32, #tpu.memory_space<vmem>>, vector<1x64xf32>
      tpu.vector_store %arg11[%c1_46, %c128_47], %126 {strides = array<i32>} : memref<8x256xf32, #tpu.memory_space<vmem>>, vector<1x64xf32>,
      %128 = arith.mulf %99, %93 : vector<16x64xf32>
      %129 = vector.extract_strided_slice %46 {offsets = [48, 1], sizes = [16, 1], strides = [1, 1]} : vector<64x8xf32> to vector<16x1xf32>
      %130 = vector.extract_strided_slice %54 {offsets = [1, 0], sizes = [1, 64], strides = [1, 1]} : vector<8x64xf32> to vector<1x64xf32>
      %131 = vector.broadcast %129 : vector<16x1xf32> to vector<16x64xf32>
      %132 = vector.broadcast %130 : vector<1x64xf32> to vector<16x64xf32>
      %133 = arith.mulf %131, %132 : vector<16x64xf32>
      %134 = arith.addf %128, %133 : vector<16x64xf32>
      %cst_48 = arith.constant dense<0.000000e+00> : vector<1x64xf32>
      %135 = tpu.matmul %100, %134, %cst_48 {dimension_numbers = #tpu.dot_dimension_numbers<[1], [0], [0], [1], [0, 0, 1, 1], [], []>} : vector<1x16xf32>, vector<16x64xf32>, vector<1x64xf32> -> vector<1x64xf32>
      %c1_49 = arith.constant 1 : index
      %c192_50 = arith.constant 192 : index
      %136 = vector.load %arg11[%c1_49, %c192_50] : memref<8x256xf32, #tpu.memory_space<vmem>>, vector<1x64xf32>
      tpu.vector_store %arg11[%c1_49, %c192_50], %135 {strides = array<i32>} : memref<8x256xf32, #tpu.memory_space<vmem>>, vector<1x64xf32>,
      %137 = vector.extract_strided_slice %36 {offsets = [2, 0], sizes = [1, 64], strides = [1, 1]} : vector<8x64xf32> to vector<1x64xf32>
      %138 = vector.broadcast %137 : vector<1x64xf32> to vector<16x64xf32>
      %139 = arith.mulf %138, %3 : vector<16x64xf32>
      %140 = math.exp %139 : vector<16x64xf32>
      %141 = vector.extract_strided_slice %42 {offsets = [2, 0], sizes = [1, 16], strides = [1, 1]} : vector<8x16xf32> to vector<1x16xf32>
      %142 = arith.mulf %140, %107 : vector<16x64xf32>
      %143 = vector.extract_strided_slice %46 {offsets = [0, 2], sizes = [16, 1], strides = [1, 1]} : vector<64x8xf32> to vector<16x1xf32>
      %144 = vector.extract_strided_slice %48 {offsets = [2, 0], sizes = [1, 64], strides = [1, 1]} : vector<8x64xf32> to vector<1x64xf32>
      %145 = vector.broadcast %143 : vector<16x1xf32> to vector<16x64xf32>
      %146 = vector.broadcast %144 : vector<1x64xf32> to vector<16x64xf32>
      %147 = arith.mulf %145, %146 : vector<16x64xf32>
      %148 = arith.addf %142, %147 : vector<16x64xf32>
      %cst_51 = arith.constant dense<0.000000e+00> : vector<1x64xf32>
      %149 = tpu.matmul %141, %148, %cst_51 {dimension_numbers = #tpu.dot_dimension_numbers<[1], [0], [0], [1], [0, 0, 1, 1], [], []>} : vector<1x16xf32>, vector<16x64xf32>, vector<1x64xf32> -> vector<1x64xf32>
      %c2 = arith.constant 2 : index
      %c0_52 = arith.constant 0 : index
      %150 = vector.load %arg11[%c2, %c0_52] : memref<8x256xf32, #tpu.memory_space<vmem>>, vector<1x64xf32>
      tpu.vector_store %arg11[%c2, %c0_52], %149 {strides = array<i32>} : memref<8x256xf32, #tpu.memory_space<vmem>>, vector<1x64xf32>,
      %151 = arith.mulf %140, %116 : vector<16x64xf32>
      %152 = vector.extract_strided_slice %46 {offsets = [16, 2], sizes = [16, 1], strides = [1, 1]} : vector<64x8xf32> to vector<16x1xf32>
      %153 = vector.extract_strided_slice %50 {offsets = [2, 0], sizes = [1, 64], strides = [1, 1]} : vector<8x64xf32> to vector<1x64xf32>
      %154 = vector.broadcast %152 : vector<16x1xf32> to vector<16x64xf32>
      %155 = vector.broadcast %153 : vector<1x64xf32> to vector<16x64xf32>
      %156 = arith.mulf %154, %155 : vector<16x64xf32>
      %157 = arith.addf %151, %156 : vector<16x64xf32>
      %cst_53 = arith.constant dense<0.000000e+00> : vector<1x64xf32>
      %158 = tpu.matmul %141, %157, %cst_53 {dimension_numbers = #tpu.dot_dimension_numbers<[1], [0], [0], [1], [0, 0, 1, 1], [], []>} : vector<1x16xf32>, vector<16x64xf32>, vector<1x64xf32> -> vector<1x64xf32>
      %c2_54 = arith.constant 2 : index
      %c64_55 = arith.constant 64 : index
      %159 = vector.load %arg11[%c2_54, %c64_55] : memref<8x256xf32, #tpu.memory_space<vmem>>, vector<1x64xf32>
      tpu.vector_store %arg11[%c2_54, %c64_55], %158 {strides = array<i32>} : memref<8x256xf32, #tpu.memory_space<vmem>>, vector<1x64xf32>,
      %160 = arith.mulf %140, %125 : vector<16x64xf32>
      %161 = vector.extract_strided_slice %46 {offsets = [32, 2], sizes = [16, 1], strides = [1, 1]} : vector<64x8xf32> to vector<16x1xf32>
      %162 = vector.extract_strided_slice %52 {offsets = [2, 0], sizes = [1, 64], strides = [1, 1]} : vector<8x64xf32> to vector<1x64xf32>
      %163 = vector.broadcast %161 : vector<16x1xf32> to vector<16x64xf32>
      %164 = vector.broadcast %162 : vector<1x64xf32> to vector<16x64xf32>
      %165 = arith.mulf %163, %164 : vector<16x64xf32>
      %166 = arith.addf %160, %165 : vector<16x64xf32>
      %cst_56 = arith.constant dense<0.000000e+00> : vector<1x64xf32>
      %167 = tpu.matmul %141, %166, %cst_56 {dimension_numbers = #tpu.dot_dimension_numbers<[1], [0], [0], [1], [0, 0, 1, 1], [], []>} : vector<1x16xf32>, vector<16x64xf32>, vector<1x64xf32> -> vector<1x64xf32>
      %c2_57 = arith.constant 2 : index
      %c128_58 = arith.constant 128 : index
      %168 = vector.load %arg11[%c2_57, %c128_58] : memref<8x256xf32, #tpu.memory_space<vmem>>, vector<1x64xf32>
      tpu.vector_store %arg11[%c2_57, %c128_58], %167 {strides = array<i32>} : memref<8x256xf32, #tpu.memory_space<vmem>>, vector<1x64xf32>,
      %169 = arith.mulf %140, %134 : vector<16x64xf32>
      %170 = vector.extract_strided_slice %46 {offsets = [48, 2], sizes = [16, 1], strides = [1, 1]} : vector<64x8xf32> to vector<16x1xf32>
      %171 = vector.extract_strided_slice %54 {offsets = [2, 0], sizes = [1, 64], strides = [1, 1]} : vector<8x64xf32> to vector<1x64xf32>
      %172 = vector.broadcast %170 : vector<16x1xf32> to vector<16x64xf32>
      %173 = vector.broadcast %171 : vector<1x64xf32> to vector<16x64xf32>
      %174 = arith.mulf %172, %173 : vector<16x64xf32>
      %175 = arith.addf %169, %174 : vector<16x64xf32>
      %cst_59 = arith.constant dense<0.000000e+00> : vector<1x64xf32>
      %176 = tpu.matmul %141, %175, %cst_59 {dimension_numbers = #tpu.dot_dimension_numbers<[1], [0], [0], [1], [0, 0, 1, 1], [], []>} : vector<1x16xf32>, vector<16x64xf32>, vector<1x64xf32> -> vector<1x64xf32>
      %c2_60 = arith.constant 2 : index
      %c192_61 = arith.constant 192 : index
      %177 = vector.load %arg11[%c2_60, %c192_61] : memref<8x256xf32, #tpu.memory_space<vmem>>, vector<1x64xf32>
      tpu.vector_store %arg11[%c2_60, %c192_61], %176 {strides = array<i32>} : memref<8x256xf32, #tpu.memory_space<vmem>>, vector<1x64xf32>,
      %178 = vector.extract_strided_slice %36 {offsets = [3, 0], sizes = [1, 64], strides = [1, 1]} : vector<8x64xf32> to vector<1x64xf32>
      %179 = vector.broadcast %178 : vector<1x64xf32> to vector<16x64xf32>
      %180 = arith.mulf %179, %3 : vector<16x64xf32>
      %181 = math.exp %180 : vector<16x64xf32>
      %182 = vector.extract_strided_slice %42 {offsets = [3, 0], sizes = [1, 16], strides = [1, 1]} : vector<8x16xf32> to vector<1x16xf32>
      %183 = arith.mulf %181, %148 : vector<16x64xf32>
      %184 = vector.extract_strided_slice %46 {offsets = [0, 3], sizes = [16, 1], strides = [1, 1]} : vector<64x8xf32> to vector<16x1xf32>
      %185 = vector.extract_strided_slice %48 {offsets = [3, 0], sizes = [1, 64], strides = [1, 1]} : vector<8x64xf32> to vector<1x64xf32>
      %186 = vector.broadcast %184 : vector<16x1xf32> to vector<16x64xf32>
      %187 = vector.broadcast %185 : vector<1x64xf32> to vector<16x64xf32>
      %188 = arith.mulf %186, %187 : vector<16x64xf32>
      %189 = arith.addf %183, %188 : vector<16x64xf32>
      %cst_62 = arith.constant dense<0.000000e+00> : vector<1x64xf32>
      %190 = tpu.matmul %182, %189, %cst_62 {dimension_numbers = #tpu.dot_dimension_numbers<[1], [0], [0], [1], [0, 0, 1, 1], [], []>} : vector<1x16xf32>, vector<16x64xf32>, vector<1x64xf32> -> vector<1x64xf32>
      %c3 = arith.constant 3 : index
      %c0_63 = arith.constant 0 : index
      %191 = vector.load %arg11[%c3, %c0_63] : memref<8x256xf32, #tpu.memory_space<vmem>>, vector<1x64xf32>
      tpu.vector_store %arg11[%c3, %c0_63], %190 {strides = array<i32>} : memref<8x256xf32, #tpu.memory_space<vmem>>, vector<1x64xf32>,
      %192 = arith.mulf %181, %157 : vector<16x64xf32>
      %193 = vector.extract_strided_slice %46 {offsets = [16, 3], sizes = [16, 1], strides = [1, 1]} : vector<64x8xf32> to vector<16x1xf32>
      %194 = vector.extract_strided_slice %50 {offsets = [3, 0], sizes = [1, 64], strides = [1, 1]} : vector<8x64xf32> to vector<1x64xf32>
      %195 = vector.broadcast %193 : vector<16x1xf32> to vector<16x64xf32>
      %196 = vector.broadcast %194 : vector<1x64xf32> to vector<16x64xf32>
      %197 = arith.mulf %195, %196 : vector<16x64xf32>
      %198 = arith.addf %192, %197 : vector<16x64xf32>
      %cst_64 = arith.constant dense<0.000000e+00> : vector<1x64xf32>
      %199 = tpu.matmul %182, %198, %cst_64 {dimension_numbers = #tpu.dot_dimension_numbers<[1], [0], [0], [1], [0, 0, 1, 1], [], []>} : vector<1x16xf32>, vector<16x64xf32>, vector<1x64xf32> -> vector<1x64xf32>
      %c3_65 = arith.constant 3 : index
      %c64_66 = arith.constant 64 : index
      %200 = vector.load %arg11[%c3_65, %c64_66] : memref<8x256xf32, #tpu.memory_space<vmem>>, vector<1x64xf32>
      tpu.vector_store %arg11[%c3_65, %c64_66], %199 {strides = array<i32>} : memref<8x256xf32, #tpu.memory_space<vmem>>, vector<1x64xf32>,
      %201 = arith.mulf %181, %166 : vector<16x64xf32>
      %202 = vector.extract_strided_slice %46 {offsets = [32, 3], sizes = [16, 1], strides = [1, 1]} : vector<64x8xf32> to vector<16x1xf32>
      %203 = vector.extract_strided_slice %52 {offsets = [3, 0], sizes = [1, 64], strides = [1, 1]} : vector<8x64xf32> to vector<1x64xf32>
      %204 = vector.broadcast %202 : vector<16x1xf32> to vector<16x64xf32>
      %205 = vector.broadcast %203 : vector<1x64xf32> to vector<16x64xf32>
      %206 = arith.mulf %204, %205 : vector<16x64xf32>
      %207 = arith.addf %201, %206 : vector<16x64xf32>
      %cst_67 = arith.constant dense<0.000000e+00> : vector<1x64xf32>
      %208 = tpu.matmul %182, %207, %cst_67 {dimension_numbers = #tpu.dot_dimension_numbers<[1], [0], [0], [1], [0, 0, 1, 1], [], []>} : vector<1x16xf32>, vector<16x64xf32>, vector<1x64xf32> -> vector<1x64xf32>
      %c3_68 = arith.constant 3 : index
      %c128_69 = arith.constant 128 : index
      %209 = vector.load %arg11[%c3_68, %c128_69] : memref<8x256xf32, #tpu.memory_space<vmem>>, vector<1x64xf32>
      tpu.vector_store %arg11[%c3_68, %c128_69], %208 {strides = array<i32>} : memref<8x256xf32, #tpu.memory_space<vmem>>, vector<1x64xf32>,
      %210 = arith.mulf %181, %175 : vector<16x64xf32>
      %211 = vector.extract_strided_slice %46 {offsets = [48, 3], sizes = [16, 1], strides = [1, 1]} : vector<64x8xf32> to vector<16x1xf32>
      %212 = vector.extract_strided_slice %54 {offsets = [3, 0], sizes = [1, 64], strides = [1, 1]} : vector<8x64xf32> to vector<1x64xf32>
      %213 = vector.broadcast %211 : vector<16x1xf32> to vector<16x64xf32>
      %214 = vector.broadcast %212 : vector<1x64xf32> to vector<16x64xf32>
      %215 = arith.mulf %213, %214 : vector<16x64xf32>
      %216 = arith.addf %210, %215 : vector<16x64xf32>
      %cst_70 = arith.constant dense<0.000000e+00> : vector<1x64xf32>
      %217 = tpu.matmul %182, %216, %cst_70 {dimension_numbers = #tpu.dot_dimension_numbers<[1], [0], [0], [1], [0, 0, 1, 1], [], []>} : vector<1x16xf32>, vector<16x64xf32>, vector<1x64xf32> -> vector<1x64xf32>
      %c3_71 = arith.constant 3 : index
      %c192_72 = arith.constant 192 : index
      %218 = vector.load %arg11[%c3_71, %c192_72] : memref<8x256xf32, #tpu.memory_space<vmem>>, vector<1x64xf32>
      tpu.vector_store %arg11[%c3_71, %c192_72], %217 {strides = array<i32>} : memref<8x256xf32, #tpu.memory_space<vmem>>, vector<1x64xf32>,
      %219 = vector.extract_strided_slice %36 {offsets = [4, 0], sizes = [1, 64], strides = [1, 1]} : vector<8x64xf32> to vector<1x64xf32>
      %220 = vector.broadcast %219 : vector<1x64xf32> to vector<16x64xf32>
      %221 = arith.mulf %220, %3 : vector<16x64xf32>
      %222 = math.exp %221 : vector<16x64xf32>
      %223 = vector.extract_strided_slice %42 {offsets = [4, 0], sizes = [1, 16], strides = [1, 1]} : vector<8x16xf32> to vector<1x16xf32>
      %224 = arith.mulf %222, %189 : vector<16x64xf32>
      %225 = vector.extract_strided_slice %46 {offsets = [0, 4], sizes = [16, 1], strides = [1, 1]} : vector<64x8xf32> to vector<16x1xf32>
      %226 = vector.extract_strided_slice %48 {offsets = [4, 0], sizes = [1, 64], strides = [1, 1]} : vector<8x64xf32> to vector<1x64xf32>
      %227 = vector.broadcast %225 : vector<16x1xf32> to vector<16x64xf32>
      %228 = vector.broadcast %226 : vector<1x64xf32> to vector<16x64xf32>
      %229 = arith.mulf %227, %228 : vector<16x64xf32>
      %230 = arith.addf %224, %229 : vector<16x64xf32>
      %cst_73 = arith.constant dense<0.000000e+00> : vector<1x64xf32>
      %231 = tpu.matmul %223, %230, %cst_73 {dimension_numbers = #tpu.dot_dimension_numbers<[1], [0], [0], [1], [0, 0, 1, 1], [], []>} : vector<1x16xf32>, vector<16x64xf32>, vector<1x64xf32> -> vector<1x64xf32>
      %c4 = arith.constant 4 : index
      %c0_74 = arith.constant 0 : index
      %232 = vector.load %arg11[%c4, %c0_74] : memref<8x256xf32, #tpu.memory_space<vmem>>, vector<1x64xf32>
      tpu.vector_store %arg11[%c4, %c0_74], %231 {strides = array<i32>} : memref<8x256xf32, #tpu.memory_space<vmem>>, vector<1x64xf32>,
      %233 = arith.mulf %222, %198 : vector<16x64xf32>
      %234 = vector.extract_strided_slice %46 {offsets = [16, 4], sizes = [16, 1], strides = [1, 1]} : vector<64x8xf32> to vector<16x1xf32>
      %235 = vector.extract_strided_slice %50 {offsets = [4, 0], sizes = [1, 64], strides = [1, 1]} : vector<8x64xf32> to vector<1x64xf32>
      %236 = vector.broadcast %234 : vector<16x1xf32> to vector<16x64xf32>
      %237 = vector.broadcast %235 : vector<1x64xf32> to vector<16x64xf32>
      %238 = arith.mulf %236, %237 : vector<16x64xf32>
      %239 = arith.addf %233, %238 : vector<16x64xf32>
      %cst_75 = arith.constant dense<0.000000e+00> : vector<1x64xf32>
      %240 = tpu.matmul %223, %239, %cst_75 {dimension_numbers = #tpu.dot_dimension_numbers<[1], [0], [0], [1], [0, 0, 1, 1], [], []>} : vector<1x16xf32>, vector<16x64xf32>, vector<1x64xf32> -> vector<1x64xf32>
      %c4_76 = arith.constant 4 : index
      %c64_77 = arith.constant 64 : index
      %241 = vector.load %arg11[%c4_76, %c64_77] : memref<8x256xf32, #tpu.memory_space<vmem>>, vector<1x64xf32>
      tpu.vector_store %arg11[%c4_76, %c64_77], %240 {strides = array<i32>} : memref<8x256xf32, #tpu.memory_space<vmem>>, vector<1x64xf32>,
      %242 = arith.mulf %222, %207 : vector<16x64xf32>
      %243 = vector.extract_strided_slice %46 {offsets = [32, 4], sizes = [16, 1], strides = [1, 1]} : vector<64x8xf32> to vector<16x1xf32>
      %244 = vector.extract_strided_slice %52 {offsets = [4, 0], sizes = [1, 64], strides = [1, 1]} : vector<8x64xf32> to vector<1x64xf32>
      %245 = vector.broadcast %243 : vector<16x1xf32> to vector<16x64xf32>
      %246 = vector.broadcast %244 : vector<1x64xf32> to vector<16x64xf32>
      %247 = arith.mulf %245, %246 : vector<16x64xf32>
      %248 = arith.addf %242, %247 : vector<16x64xf32>
      %cst_78 = arith.constant dense<0.000000e+00> : vector<1x64xf32>
      %249 = tpu.matmul %223, %248, %cst_78 {dimension_numbers = #tpu.dot_dimension_numbers<[1], [0], [0], [1], [0, 0, 1, 1], [], []>} : vector<1x16xf32>, vector<16x64xf32>, vector<1x64xf32> -> vector<1x64xf32>
      %c4_79 = arith.constant 4 : index
      %c128_80 = arith.constant 128 : index
      %250 = vector.load %arg11[%c4_79, %c128_80] : memref<8x256xf32, #tpu.memory_space<vmem>>, vector<1x64xf32>
      tpu.vector_store %arg11[%c4_79, %c128_80], %249 {strides = array<i32>} : memref<8x256xf32, #tpu.memory_space<vmem>>, vector<1x64xf32>,
      %251 = arith.mulf %222, %216 : vector<16x64xf32>
      %252 = vector.extract_strided_slice %46 {offsets = [48, 4], sizes = [16, 1], strides = [1, 1]} : vector<64x8xf32> to vector<16x1xf32>
      %253 = vector.extract_strided_slice %54 {offsets = [4, 0], sizes = [1, 64], strides = [1, 1]} : vector<8x64xf32> to vector<1x64xf32>
      %254 = vector.broadcast %252 : vector<16x1xf32> to vector<16x64xf32>
      %255 = vector.broadcast %253 : vector<1x64xf32> to vector<16x64xf32>
      %256 = arith.mulf %254, %255 : vector<16x64xf32>
      %257 = arith.addf %251, %256 : vector<16x64xf32>
      %cst_81 = arith.constant dense<0.000000e+00> : vector<1x64xf32>
      %258 = tpu.matmul %223, %257, %cst_81 {dimension_numbers = #tpu.dot_dimension_numbers<[1], [0], [0], [1], [0, 0, 1, 1], [], []>} : vector<1x16xf32>, vector<16x64xf32>, vector<1x64xf32> -> vector<1x64xf32>
      %c4_82 = arith.constant 4 : index
      %c192_83 = arith.constant 192 : index
      %259 = vector.load %arg11[%c4_82, %c192_83] : memref<8x256xf32, #tpu.memory_space<vmem>>, vector<1x64xf32>
      tpu.vector_store %arg11[%c4_82, %c192_83], %258 {strides = array<i32>} : memref<8x256xf32, #tpu.memory_space<vmem>>, vector<1x64xf32>,
      %260 = vector.extract_strided_slice %36 {offsets = [5, 0], sizes = [1, 64], strides = [1, 1]} : vector<8x64xf32> to vector<1x64xf32>
      %261 = vector.broadcast %260 : vector<1x64xf32> to vector<16x64xf32>
      %262 = arith.mulf %261, %3 : vector<16x64xf32>
      %263 = math.exp %262 : vector<16x64xf32>
      %264 = vector.extract_strided_slice %42 {offsets = [5, 0], sizes = [1, 16], strides = [1, 1]} : vector<8x16xf32> to vector<1x16xf32>
      %265 = arith.mulf %263, %230 : vector<16x64xf32>
      %266 = vector.extract_strided_slice %46 {offsets = [0, 5], sizes = [16, 1], strides = [1, 1]} : vector<64x8xf32> to vector<16x1xf32>
      %267 = vector.extract_strided_slice %48 {offsets = [5, 0], sizes = [1, 64], strides = [1, 1]} : vector<8x64xf32> to vector<1x64xf32>
      %268 = vector.broadcast %266 : vector<16x1xf32> to vector<16x64xf32>
      %269 = vector.broadcast %267 : vector<1x64xf32> to vector<16x64xf32>
      %270 = arith.mulf %268, %269 : vector<16x64xf32>
      %271 = arith.addf %265, %270 : vector<16x64xf32>
      %cst_84 = arith.constant dense<0.000000e+00> : vector<1x64xf32>
      %272 = tpu.matmul %264, %271, %cst_84 {dimension_numbers = #tpu.dot_dimension_numbers<[1], [0], [0], [1], [0, 0, 1, 1], [], []>} : vector<1x16xf32>, vector<16x64xf32>, vector<1x64xf32> -> vector<1x64xf32>
      %c5 = arith.constant 5 : index
      %c0_85 = arith.constant 0 : index
      %273 = vector.load %arg11[%c5, %c0_85] : memref<8x256xf32, #tpu.memory_space<vmem>>, vector<1x64xf32>
      tpu.vector_store %arg11[%c5, %c0_85], %272 {strides = array<i32>} : memref<8x256xf32, #tpu.memory_space<vmem>>, vector<1x64xf32>,
      %274 = arith.mulf %263, %239 : vector<16x64xf32>
      %275 = vector.extract_strided_slice %46 {offsets = [16, 5], sizes = [16, 1], strides = [1, 1]} : vector<64x8xf32> to vector<16x1xf32>
      %276 = vector.extract_strided_slice %50 {offsets = [5, 0], sizes = [1, 64], strides = [1, 1]} : vector<8x64xf32> to vector<1x64xf32>
      %277 = vector.broadcast %275 : vector<16x1xf32> to vector<16x64xf32>
      %278 = vector.broadcast %276 : vector<1x64xf32> to vector<16x64xf32>
      %279 = arith.mulf %277, %278 : vector<16x64xf32>
      %280 = arith.addf %274, %279 : vector<16x64xf32>
      %cst_86 = arith.constant dense<0.000000e+00> : vector<1x64xf32>
      %281 = tpu.matmul %264, %280, %cst_86 {dimension_numbers = #tpu.dot_dimension_numbers<[1], [0], [0], [1], [0, 0, 1, 1], [], []>} : vector<1x16xf32>, vector<16x64xf32>, vector<1x64xf32> -> vector<1x64xf32>
      %c5_87 = arith.constant 5 : index
      %c64_88 = arith.constant 64 : index
      %282 = vector.load %arg11[%c5_87, %c64_88] : memref<8x256xf32, #tpu.memory_space<vmem>>, vector<1x64xf32>
      tpu.vector_store %arg11[%c5_87, %c64_88], %281 {strides = array<i32>} : memref<8x256xf32, #tpu.memory_space<vmem>>, vector<1x64xf32>,
      %283 = arith.mulf %263, %248 : vector<16x64xf32>
      %284 = vector.extract_strided_slice %46 {offsets = [32, 5], sizes = [16, 1], strides = [1, 1]} : vector<64x8xf32> to vector<16x1xf32>
      %285 = vector.extract_strided_slice %52 {offsets = [5, 0], sizes = [1, 64], strides = [1, 1]} : vector<8x64xf32> to vector<1x64xf32>
      %286 = vector.broadcast %284 : vector<16x1xf32> to vector<16x64xf32>
      %287 = vector.broadcast %285 : vector<1x64xf32> to vector<16x64xf32>
      %288 = arith.mulf %286, %287 : vector<16x64xf32>
      %289 = arith.addf %283, %288 : vector<16x64xf32>
      %cst_89 = arith.constant dense<0.000000e+00> : vector<1x64xf32>
      %290 = tpu.matmul %264, %289, %cst_89 {dimension_numbers = #tpu.dot_dimension_numbers<[1], [0], [0], [1], [0, 0, 1, 1], [], []>} : vector<1x16xf32>, vector<16x64xf32>, vector<1x64xf32> -> vector<1x64xf32>
      %c5_90 = arith.constant 5 : index
      %c128_91 = arith.constant 128 : index
      %291 = vector.load %arg11[%c5_90, %c128_91] : memref<8x256xf32, #tpu.memory_space<vmem>>, vector<1x64xf32>
      tpu.vector_store %arg11[%c5_90, %c128_91], %290 {strides = array<i32>} : memref<8x256xf32, #tpu.memory_space<vmem>>, vector<1x64xf32>,
      %292 = arith.mulf %263, %257 : vector<16x64xf32>
      %293 = vector.extract_strided_slice %46 {offsets = [48, 5], sizes = [16, 1], strides = [1, 1]} : vector<64x8xf32> to vector<16x1xf32>
      %294 = vector.extract_strided_slice %54 {offsets = [5, 0], sizes = [1, 64], strides = [1, 1]} : vector<8x64xf32> to vector<1x64xf32>
      %295 = vector.broadcast %293 : vector<16x1xf32> to vector<16x64xf32>
      %296 = vector.broadcast %294 : vector<1x64xf32> to vector<16x64xf32>
      %297 = arith.mulf %295, %296 : vector<16x64xf32>
      %298 = arith.addf %292, %297 : vector<16x64xf32>
      %cst_92 = arith.constant dense<0.000000e+00> : vector<1x64xf32>
      %299 = tpu.matmul %264, %298, %cst_92 {dimension_numbers = #tpu.dot_dimension_numbers<[1], [0], [0], [1], [0, 0, 1, 1], [], []>} : vector<1x16xf32>, vector<16x64xf32>, vector<1x64xf32> -> vector<1x64xf32>
      %c5_93 = arith.constant 5 : index
      %c192_94 = arith.constant 192 : index
      %300 = vector.load %arg11[%c5_93, %c192_94] : memref<8x256xf32, #tpu.memory_space<vmem>>, vector<1x64xf32>
      tpu.vector_store %arg11[%c5_93, %c192_94], %299 {strides = array<i32>} : memref<8x256xf32, #tpu.memory_space<vmem>>, vector<1x64xf32>,
      %301 = vector.extract_strided_slice %36 {offsets = [6, 0], sizes = [1, 64], strides = [1, 1]} : vector<8x64xf32> to vector<1x64xf32>
      %302 = vector.broadcast %301 : vector<1x64xf32> to vector<16x64xf32>
      %303 = arith.mulf %302, %3 : vector<16x64xf32>
      %304 = math.exp %303 : vector<16x64xf32>
      %305 = vector.extract_strided_slice %42 {offsets = [6, 0], sizes = [1, 16], strides = [1, 1]} : vector<8x16xf32> to vector<1x16xf32>
      %306 = arith.mulf %304, %271 : vector<16x64xf32>
      %307 = vector.extract_strided_slice %46 {offsets = [0, 6], sizes = [16, 1], strides = [1, 1]} : vector<64x8xf32> to vector<16x1xf32>
      %308 = vector.extract_strided_slice %48 {offsets = [6, 0], sizes = [1, 64], strides = [1, 1]} : vector<8x64xf32> to vector<1x64xf32>
      %309 = vector.broadcast %307 : vector<16x1xf32> to vector<16x64xf32>
      %310 = vector.broadcast %308 : vector<1x64xf32> to vector<16x64xf32>
      %311 = arith.mulf %309, %310 : vector<16x64xf32>
      %312 = arith.addf %306, %311 : vector<16x64xf32>
      %cst_95 = arith.constant dense<0.000000e+00> : vector<1x64xf32>
      %313 = tpu.matmul %305, %312, %cst_95 {dimension_numbers = #tpu.dot_dimension_numbers<[1], [0], [0], [1], [0, 0, 1, 1], [], []>} : vector<1x16xf32>, vector<16x64xf32>, vector<1x64xf32> -> vector<1x64xf32>
      %c6 = arith.constant 6 : index
      %c0_96 = arith.constant 0 : index
      %314 = vector.load %arg11[%c6, %c0_96] : memref<8x256xf32, #tpu.memory_space<vmem>>, vector<1x64xf32>
      tpu.vector_store %arg11[%c6, %c0_96], %313 {strides = array<i32>} : memref<8x256xf32, #tpu.memory_space<vmem>>, vector<1x64xf32>,
      %315 = arith.mulf %304, %280 : vector<16x64xf32>
      %316 = vector.extract_strided_slice %46 {offsets = [16, 6], sizes = [16, 1], strides = [1, 1]} : vector<64x8xf32> to vector<16x1xf32>
      %317 = vector.extract_strided_slice %50 {offsets = [6, 0], sizes = [1, 64], strides = [1, 1]} : vector<8x64xf32> to vector<1x64xf32>
      %318 = vector.broadcast %316 : vector<16x1xf32> to vector<16x64xf32>
      %319 = vector.broadcast %317 : vector<1x64xf32> to vector<16x64xf32>
      %320 = arith.mulf %318, %319 : vector<16x64xf32>
      %321 = arith.addf %315, %320 : vector<16x64xf32>
      %cst_97 = arith.constant dense<0.000000e+00> : vector<1x64xf32>
      %322 = tpu.matmul %305, %321, %cst_97 {dimension_numbers = #tpu.dot_dimension_numbers<[1], [0], [0], [1], [0, 0, 1, 1], [], []>} : vector<1x16xf32>, vector<16x64xf32>, vector<1x64xf32> -> vector<1x64xf32>
      %c6_98 = arith.constant 6 : index
      %c64_99 = arith.constant 64 : index
      %323 = vector.load %arg11[%c6_98, %c64_99] : memref<8x256xf32, #tpu.memory_space<vmem>>, vector<1x64xf32>
      tpu.vector_store %arg11[%c6_98, %c64_99], %322 {strides = array<i32>} : memref<8x256xf32, #tpu.memory_space<vmem>>, vector<1x64xf32>,
      %324 = arith.mulf %304, %289 : vector<16x64xf32>
      %325 = vector.extract_strided_slice %46 {offsets = [32, 6], sizes = [16, 1], strides = [1, 1]} : vector<64x8xf32> to vector<16x1xf32>
      %326 = vector.extract_strided_slice %52 {offsets = [6, 0], sizes = [1, 64], strides = [1, 1]} : vector<8x64xf32> to vector<1x64xf32>
      %327 = vector.broadcast %325 : vector<16x1xf32> to vector<16x64xf32>
      %328 = vector.broadcast %326 : vector<1x64xf32> to vector<16x64xf32>
      %329 = arith.mulf %327, %328 : vector<16x64xf32>
      %330 = arith.addf %324, %329 : vector<16x64xf32>
      %cst_100 = arith.constant dense<0.000000e+00> : vector<1x64xf32>
      %331 = tpu.matmul %305, %330, %cst_100 {dimension_numbers = #tpu.dot_dimension_numbers<[1], [0], [0], [1], [0, 0, 1, 1], [], []>} : vector<1x16xf32>, vector<16x64xf32>, vector<1x64xf32> -> vector<1x64xf32>
      %c6_101 = arith.constant 6 : index
      %c128_102 = arith.constant 128 : index
      %332 = vector.load %arg11[%c6_101, %c128_102] : memref<8x256xf32, #tpu.memory_space<vmem>>, vector<1x64xf32>
      tpu.vector_store %arg11[%c6_101, %c128_102], %331 {strides = array<i32>} : memref<8x256xf32, #tpu.memory_space<vmem>>, vector<1x64xf32>,
      %333 = arith.mulf %304, %298 : vector<16x64xf32>
      %334 = vector.extract_strided_slice %46 {offsets = [48, 6], sizes = [16, 1], strides = [1, 1]} : vector<64x8xf32> to vector<16x1xf32>
      %335 = vector.extract_strided_slice %54 {offsets = [6, 0], sizes = [1, 64], strides = [1, 1]} : vector<8x64xf32> to vector<1x64xf32>
      %336 = vector.broadcast %334 : vector<16x1xf32> to vector<16x64xf32>
      %337 = vector.broadcast %335 : vector<1x64xf32> to vector<16x64xf32>
      %338 = arith.mulf %336, %337 : vector<16x64xf32>
      %339 = arith.addf %333, %338 : vector<16x64xf32>
      %cst_103 = arith.constant dense<0.000000e+00> : vector<1x64xf32>
      %340 = tpu.matmul %305, %339, %cst_103 {dimension_numbers = #tpu.dot_dimension_numbers<[1], [0], [0], [1], [0, 0, 1, 1], [], []>} : vector<1x16xf32>, vector<16x64xf32>, vector<1x64xf32> -> vector<1x64xf32>
      %c6_104 = arith.constant 6 : index
      %c192_105 = arith.constant 192 : index
      %341 = vector.load %arg11[%c6_104, %c192_105] : memref<8x256xf32, #tpu.memory_space<vmem>>, vector<1x64xf32>
      tpu.vector_store %arg11[%c6_104, %c192_105], %340 {strides = array<i32>} : memref<8x256xf32, #tpu.memory_space<vmem>>, vector<1x64xf32>,
      %342 = vector.extract_strided_slice %36 {offsets = [7, 0], sizes = [1, 64], strides = [1, 1]} : vector<8x64xf32> to vector<1x64xf32>
      %343 = vector.broadcast %342 : vector<1x64xf32> to vector<16x64xf32>
      %344 = arith.mulf %343, %3 : vector<16x64xf32>
      %345 = math.exp %344 : vector<16x64xf32>
      %346 = vector.extract_strided_slice %42 {offsets = [7, 0], sizes = [1, 16], strides = [1, 1]} : vector<8x16xf32> to vector<1x16xf32>
      %347 = arith.mulf %345, %312 : vector<16x64xf32>
      %348 = vector.extract_strided_slice %46 {offsets = [0, 7], sizes = [16, 1], strides = [1, 1]} : vector<64x8xf32> to vector<16x1xf32>
      %349 = vector.extract_strided_slice %48 {offsets = [7, 0], sizes = [1, 64], strides = [1, 1]} : vector<8x64xf32> to vector<1x64xf32>
      %350 = vector.broadcast %348 : vector<16x1xf32> to vector<16x64xf32>
      %351 = vector.broadcast %349 : vector<1x64xf32> to vector<16x64xf32>
      %352 = arith.mulf %350, %351 : vector<16x64xf32>
      %353 = arith.addf %347, %352 : vector<16x64xf32>
      %cst_106 = arith.constant dense<0.000000e+00> : vector<1x64xf32>
      %354 = tpu.matmul %346, %353, %cst_106 {dimension_numbers = #tpu.dot_dimension_numbers<[1], [0], [0], [1], [0, 0, 1, 1], [], []>} : vector<1x16xf32>, vector<16x64xf32>, vector<1x64xf32> -> vector<1x64xf32>
      %c7 = arith.constant 7 : index
      %c0_107 = arith.constant 0 : index
      %355 = vector.load %arg11[%c7, %c0_107] : memref<8x256xf32, #tpu.memory_space<vmem>>, vector<1x64xf32>
      tpu.vector_store %arg11[%c7, %c0_107], %354 {strides = array<i32>} : memref<8x256xf32, #tpu.memory_space<vmem>>, vector<1x64xf32>,
      %356 = arith.mulf %345, %321 : vector<16x64xf32>
      %357 = vector.extract_strided_slice %46 {offsets = [16, 7], sizes = [16, 1], strides = [1, 1]} : vector<64x8xf32> to vector<16x1xf32>
      %358 = vector.extract_strided_slice %50 {offsets = [7, 0], sizes = [1, 64], strides = [1, 1]} : vector<8x64xf32> to vector<1x64xf32>
      %359 = vector.broadcast %357 : vector<16x1xf32> to vector<16x64xf32>
      %360 = vector.broadcast %358 : vector<1x64xf32> to vector<16x64xf32>
      %361 = arith.mulf %359, %360 : vector<16x64xf32>
      %362 = arith.addf %356, %361 : vector<16x64xf32>
      %cst_108 = arith.constant dense<0.000000e+00> : vector<1x64xf32>
      %363 = tpu.matmul %346, %362, %cst_108 {dimension_numbers = #tpu.dot_dimension_numbers<[1], [0], [0], [1], [0, 0, 1, 1], [], []>} : vector<1x16xf32>, vector<16x64xf32>, vector<1x64xf32> -> vector<1x64xf32>
      %c7_109 = arith.constant 7 : index
      %c64_110 = arith.constant 64 : index
      %364 = vector.load %arg11[%c7_109, %c64_110] : memref<8x256xf32, #tpu.memory_space<vmem>>, vector<1x64xf32>
      tpu.vector_store %arg11[%c7_109, %c64_110], %363 {strides = array<i32>} : memref<8x256xf32, #tpu.memory_space<vmem>>, vector<1x64xf32>,
      %365 = arith.mulf %345, %330 : vector<16x64xf32>
      %366 = vector.extract_strided_slice %46 {offsets = [32, 7], sizes = [16, 1], strides = [1, 1]} : vector<64x8xf32> to vector<16x1xf32>
      %367 = vector.extract_strided_slice %52 {offsets = [7, 0], sizes = [1, 64], strides = [1, 1]} : vector<8x64xf32> to vector<1x64xf32>
      %368 = vector.broadcast %366 : vector<16x1xf32> to vector<16x64xf32>
      %369 = vector.broadcast %367 : vector<1x64xf32> to vector<16x64xf32>
      %370 = arith.mulf %368, %369 : vector<16x64xf32>
      %371 = arith.addf %365, %370 : vector<16x64xf32>
      %cst_111 = arith.constant dense<0.000000e+00> : vector<1x64xf32>
      %372 = tpu.matmul %346, %371, %cst_111 {dimension_numbers = #tpu.dot_dimension_numbers<[1], [0], [0], [1], [0, 0, 1, 1], [], []>} : vector<1x16xf32>, vector<16x64xf32>, vector<1x64xf32> -> vector<1x64xf32>
      %c7_112 = arith.constant 7 : index
      %c128_113 = arith.constant 128 : index
      %373 = vector.load %arg11[%c7_112, %c128_113] : memref<8x256xf32, #tpu.memory_space<vmem>>, vector<1x64xf32>
      tpu.vector_store %arg11[%c7_112, %c128_113], %372 {strides = array<i32>} : memref<8x256xf32, #tpu.memory_space<vmem>>, vector<1x64xf32>,
      %374 = arith.mulf %345, %339 : vector<16x64xf32>
      %375 = vector.extract_strided_slice %46 {offsets = [48, 7], sizes = [16, 1], strides = [1, 1]} : vector<64x8xf32> to vector<16x1xf32>
      %376 = vector.extract_strided_slice %54 {offsets = [7, 0], sizes = [1, 64], strides = [1, 1]} : vector<8x64xf32> to vector<1x64xf32>
      %377 = vector.broadcast %375 : vector<16x1xf32> to vector<16x64xf32>
      %378 = vector.broadcast %376 : vector<1x64xf32> to vector<16x64xf32>
      %379 = arith.mulf %377, %378 : vector<16x64xf32>
      %380 = arith.addf %374, %379 : vector<16x64xf32>
      %cst_114 = arith.constant dense<0.000000e+00> : vector<1x64xf32>
      %381 = tpu.matmul %346, %380, %cst_114 {dimension_numbers = #tpu.dot_dimension_numbers<[1], [0], [0], [1], [0, 0, 1, 1], [], []>} : vector<1x16xf32>, vector<16x64xf32>, vector<1x64xf32> -> vector<1x64xf32>
      %c7_115 = arith.constant 7 : index
      %c192_116 = arith.constant 192 : index
      %382 = vector.load %arg11[%c7_115, %c192_116] : memref<8x256xf32, #tpu.memory_space<vmem>>, vector<1x64xf32>
      tpu.vector_store %arg11[%c7_115, %c192_116], %381 {strides = array<i32>} : memref<8x256xf32, #tpu.memory_space<vmem>>, vector<1x64xf32>,
      %c0_117 = arith.constant 0 : index
      %c0_118 = arith.constant 0 : index
      %383 = vector.load %arg11[%c0_117, %c0_118] : memref<8x256xf32, #tpu.memory_space<vmem>>, vector<8x256xf32>
      %384 = vector.broadcast %5 : vector<1x256xf32> to vector<8x256xf32>
      %385 = arith.mulf %39, %384 : vector<8x256xf32>
      %386 = arith.addf %383, %385 : vector<8x256xf32>
      %c0_119 = arith.constant 0 : index
      %387 = arith.index_cast %17 : i32 to index
      %c0_120 = arith.constant 0 : index
      %388 = vector.load %arg9[%c0_119, %387, %c0_120] : memref<1x64x256xf32, #tpu.memory_space<vmem>>, vector<1x8x256xf32>
      %389 = vector.shape_cast %388 : vector<1x8x256xf32> to vector<8x256xf32>
      %390 = vector.shape_cast %386 : vector<8x256xf32> to vector<1x8x256xf32>
      tpu.vector_store %arg9[%c0_119, %387, %c0_120], %390 {strides = array<i32>} : memref<1x64x256xf32, #tpu.memory_space<vmem>>, vector<1x8x256xf32>,
      scf.yield %353, %362, %371, %380 : vector<16x64xf32>, vector<16x64xf32>, vector<16x64xf32>, vector<16x64xf32>
    }
    %c8_i32_12 = arith.constant 8 : i32
    %c0_13 = arith.constant 0 : index
    %c0_14 = arith.constant 0 : index
    %12 = vector.load %arg10[%c0_13, %c0_14] : memref<64x64xf32, #tpu.memory_space<vmem>>, vector<16x64xf32>
    tpu.vector_store %arg10[%c0_13, %c0_14], %11#0 {strides = array<i32>} : memref<64x64xf32, #tpu.memory_space<vmem>>, vector<16x64xf32>,
    %c16_15 = arith.constant 16 : index
    %c0_16 = arith.constant 0 : index
    %13 = vector.load %arg10[%c16_15, %c0_16] : memref<64x64xf32, #tpu.memory_space<vmem>>, vector<16x64xf32>
    tpu.vector_store %arg10[%c16_15, %c0_16], %11#1 {strides = array<i32>} : memref<64x64xf32, #tpu.memory_space<vmem>>, vector<16x64xf32>,
    %c32_17 = arith.constant 32 : index
    %c0_18 = arith.constant 0 : index
    %14 = vector.load %arg10[%c32_17, %c0_18] : memref<64x64xf32, #tpu.memory_space<vmem>>, vector<16x64xf32>
    tpu.vector_store %arg10[%c32_17, %c0_18], %11#2 {strides = array<i32>} : memref<64x64xf32, #tpu.memory_space<vmem>>, vector<16x64xf32>,
    %c48_19 = arith.constant 48 : index
    %c0_20 = arith.constant 0 : index
    %15 = vector.load %arg10[%c48_19, %c0_20] : memref<64x64xf32, #tpu.memory_space<vmem>>, vector<16x64xf32>
    tpu.vector_store %arg10[%c48_19, %c0_20], %11#3 {strides = array<i32>} : memref<64x64xf32, #tpu.memory_space<vmem>>, vector<16x64xf32>,
    return
  }
  func.func @transform_0(%arg0: i32, %arg1: i32) -> (i32, i32, i32) {
    %c0_i32 = arith.constant 0 : i32
    %c0_i32_0 = arith.constant 0 : i32
    return %arg0, %arg1, %c0_i32 : i32, i32, i32
  }
  func.func @transform_1(%arg0: i32, %arg1: i32) -> (i32, i32, i32) {
    %c0_i32 = arith.constant 0 : i32
    %c0_i32_0 = arith.constant 0 : i32
    return %arg0, %arg1, %c0_i32 : i32, i32, i32
  }
  func.func @transform_2(%arg0: i32, %arg1: i32) -> (i32, i32) {
    %c0_i32 = arith.constant 0 : i32
    %c0_i32_0 = arith.constant 0 : i32
    %c0_i32_1 = arith.constant 0 : i32
    return %c0_i32, %c0_i32_0 : i32, i32
  }
  func.func @transform_3(%arg0: i32, %arg1: i32) -> (i32, i32, i32) {
    %c0_i32 = arith.constant 0 : i32
    %c0_i32_0 = arith.constant 0 : i32
    return %arg0, %arg1, %c0_i32 : i32, i32, i32
  }
  func.func @transform_4(%arg0: i32, %arg1: i32) -> (i32, i32, i32) {
    %c0_i32 = arith.constant 0 : i32
    %c0_i32_0 = arith.constant 0 : i32
    return %arg0, %arg1, %c0_i32 : i32, i32, i32
  }
  func.func @transform_5(%arg0: i32, %arg1: i32) -> (i32, i32) {
    %c0_i32 = arith.constant 0 : i32
    %c0_i32_0 = arith.constant 0 : i32
    %c0_i32_1 = arith.constant 0 : i32
    return %c0_i32, %c0_i32_0 : i32, i32
  }
  func.func @transform_6(%arg0: i32, %arg1: i32) -> (i32, i32) {
    %c0_i32 = arith.constant 0 : i32
    %c0_i32_0 = arith.constant 0 : i32
    %c0_i32_1 = arith.constant 0 : i32
    return %c0_i32, %c0_i32_0 : i32, i32
  }
  func.func @transform_7(%arg0: i32, %arg1: i32) -> (i32, i32, i32) {
    %c0_i32 = arith.constant 0 : i32
    %c0_i32_0 = arith.constant 0 : i32
    return %arg0, %arg1, %c0_i32 : i32, i32, i32
  }
}

module attributes {stable_mosaic.version = 11 : i64} {
  func.func @_mm_kernel(%arg0: i32, %arg1: i32, %arg2: i32, %arg3: memref<128x64xf32, #tpu.memory_space<vmem>>, %arg4: memref<128x64xf32, #tpu.memory_space<vmem>>, %arg5: memref<64x32xbf16, #tpu.memory_space<vmem>>, %arg6: memref<1x32xf32, #tpu.memory_space<vmem>>, %arg7: memref<128x32xf32, #tpu.memory_space<vmem>>, %arg8: memref<128x32xf32, #tpu.memory_space<vmem>>) attributes {dimension_semantics = [#tpu.dimension_semantics<parallel>, #tpu.dimension_semantics<parallel>, #tpu.dimension_semantics<arbitrary>], iteration_bounds = array<i64: 1, 1, 1>, scalar_prefetch = 0 : i64, scratch_operands = 1 : i64, tpu.core_type = #tpu.core_type<tc>, window_params = [{transform_indices = @transform_0, window_bounds = array<i64: 128, 64>}, {transform_indices = @transform_1, window_bounds = array<i64: 128, 64>}, {transform_indices = @transform_2, window_bounds = array<i64: 64, 32>}, {transform_indices = @transform_3, window_bounds = array<i64: 1, 32>}, {transform_indices = @transform_4, window_bounds = array<i64: 128, 32>}]} {
    %c0_i32 = arith.constant 0 : i32
    %0 = arith.cmpi eq, %arg2, %c0_i32 : i32
    %1 = arith.extui %0 : i1 to i32
    %c0_i32_0 = arith.constant 0 : i32
    %2 = arith.cmpi ne, %1, %c0_i32_0 : i32
    scf.if %2 {
      %cst_13 = arith.constant 0.000000e+00 : f32
      %21 = vector.broadcast %cst_13 : f32 to vector<128x32xf32>
      %c0_14 = arith.constant 0 : index
      %c0_15 = arith.constant 0 : index
      %22 = vector.load %arg8[%c0_14, %c0_15] : memref<128x32xf32, #tpu.memory_space<vmem>>, vector<128x32xf32>
      tpu.vector_store %arg8[%c0_14, %c0_15], %21 {strides = array<i32>} : memref<128x32xf32, #tpu.memory_space<vmem>>, vector<128x32xf32>,
    } else {
    }
    %c0 = arith.constant 0 : index
    %c0_1 = arith.constant 0 : index
    %3 = vector.load %arg4[%c0, %c0_1] : memref<128x64xf32, #tpu.memory_space<vmem>>, vector<128x64xf32>
    %c0_2 = arith.constant 0 : index
    %c0_3 = arith.constant 0 : index
    %4 = vector.load %arg3[%c0_2, %c0_3] : memref<128x64xf32, #tpu.memory_space<vmem>>, vector<128x64xf32>
    %5 = arith.negf %3 : vector<128x64xf32>
    %6 = math.exp %5 : vector<128x64xf32>
    %cst = arith.constant 1.000000e+00 : f32
    %7 = vector.broadcast %cst : f32 to vector<128x64xf32>
    %8 = arith.addf %7, %6 : vector<128x64xf32>
    %9 = arith.divf %7, %8 : vector<128x64xf32>
    %10 = arith.mulf %3, %9 : vector<128x64xf32>
    %11 = arith.mulf %4, %10 : vector<128x64xf32>
    %12 = arith.truncf %11 : vector<128x64xf32> to vector<128x64xbf16>
    %c0_4 = arith.constant 0 : index
    %c0_5 = arith.constant 0 : index
    %13 = vector.load %arg8[%c0_4, %c0_5] : memref<128x32xf32, #tpu.memory_space<vmem>>, vector<128x32xf32>
    %c0_6 = arith.constant 0 : index
    %c0_7 = arith.constant 0 : index
    %14 = vector.load %arg5[%c0_6, %c0_7] : memref<64x32xbf16, #tpu.memory_space<vmem>>, vector<64x32xbf16>
    %cst_8 = arith.constant dense<0.000000e+00> : vector<128x32xf32>
    %15 = tpu.matmul %12, %14, %cst_8 {dimension_numbers = #tpu.dot_dimension_numbers<[1], [0], [0], [1], [0, 0, 1, 1], [], []>} : vector<128x64xbf16>, vector<64x32xbf16>, vector<128x32xf32> -> vector<128x32xf32>
    %16 = arith.addf %13, %15 : vector<128x32xf32>
    %c0_9 = arith.constant 0 : index
    %c0_10 = arith.constant 0 : index
    %17 = vector.load %arg8[%c0_9, %c0_10] : memref<128x32xf32, #tpu.memory_space<vmem>>, vector<128x32xf32>
    tpu.vector_store %arg8[%c0_9, %c0_10], %16 {strides = array<i32>} : memref<128x32xf32, #tpu.memory_space<vmem>>, vector<128x32xf32>,
    %c0_i32_11 = arith.constant 0 : i32
    %18 = arith.cmpi eq, %arg2, %c0_i32_11 : i32
    %19 = arith.extui %18 : i1 to i32
    %c0_i32_12 = arith.constant 0 : i32
    %20 = arith.cmpi ne, %19, %c0_i32_12 : i32
    scf.if %20 {
      %c0_13 = arith.constant 0 : index
      %c0_14 = arith.constant 0 : index
      %21 = vector.load %arg8[%c0_13, %c0_14] : memref<128x32xf32, #tpu.memory_space<vmem>>, vector<128x32xf32>
      %c0_15 = arith.constant 0 : index
      %c0_16 = arith.constant 0 : index
      %22 = vector.load %arg6[%c0_15, %c0_16] : memref<1x32xf32, #tpu.memory_space<vmem>>, vector<1x32xf32>
      %23 = vector.broadcast %22 : vector<1x32xf32> to vector<128x32xf32>
      %24 = arith.addf %21, %23 : vector<128x32xf32>
      %c0_17 = arith.constant 0 : index
      %c0_18 = arith.constant 0 : index
      %25 = vector.load %arg7[%c0_17, %c0_18] : memref<128x32xf32, #tpu.memory_space<vmem>>, vector<128x32xf32>
      tpu.vector_store %arg7[%c0_17, %c0_18], %24 {strides = array<i32>} : memref<128x32xf32, #tpu.memory_space<vmem>>, vector<128x32xf32>,
    } else {
    }
    return
  }
  func.func @transform_0(%arg0: i32, %arg1: i32, %arg2: i32) -> (i32, i32) {
    %c0_i32 = arith.constant 0 : i32
    return %arg0, %arg2 : i32, i32
  }
  func.func @transform_1(%arg0: i32, %arg1: i32, %arg2: i32) -> (i32, i32) {
    %c0_i32 = arith.constant 0 : i32
    return %arg0, %arg2 : i32, i32
  }
  func.func @transform_2(%arg0: i32, %arg1: i32, %arg2: i32) -> (i32, i32) {
    %c0_i32 = arith.constant 0 : i32
    return %arg2, %arg1 : i32, i32
  }
  func.func @transform_3(%arg0: i32, %arg1: i32, %arg2: i32) -> (i32, i32) {
    %c0_i32 = arith.constant 0 : i32
    %c0_i32_0 = arith.constant 0 : i32
    return %c0_i32, %arg1 : i32, i32
  }
  func.func @transform_4(%arg0: i32, %arg1: i32, %arg2: i32) -> (i32, i32) {
    %c0_i32 = arith.constant 0 : i32
    return %arg0, %arg1 : i32, i32
  }
}

</mosaic_0001>

<llo_original>
// kernel: _lambda_.6
$region0: #{_lambda_.6}
  #allocation0 [shape = 'u32[]', space=smem, size = 0x4, offset = 0x4, fixed_abs, tag = 'smem constant byte address 0x4 - core index']
  #allocation1 [shape = 'u32[144,128]{1,0:T(1,128)}', space=vmem, size = 0x12000, scoped, tag = 'internal scratch']
  #allocation2 [shape = 'f32[128,128]{1,0:T(8,128)}', space=vmem, size = 0x10000, scoped, tag = 'scratch operand']
  %s0 = inlined_call_operand.vmem [shape: bf16[128,32], index: 0, kind: input, shape index: {}]
  %s1 = inlined_call_operand.vmem [shape: bf16[32,128], index: 1, kind: input, shape index: {}]
  %s2 = inlined_call_operand.vmem [shape: f32[1,128], index: 2, kind: input, shape index: {}]
  %s3 = inlined_call_operand.vmem [shape: f32[128,128], index: 3, kind: output, shape index: {}]
  %s4 = sld [smem:[#allocation0]]
  $region30: #{_lambda_.6} parent=0
    _
  %s6 = ssub.s32 1, %s4
  %s7 = scalar_select 0, %s6, %s4
  // Predicated region
  $region2: #{_lambda_.6} parent=0 // pred_check
    _
  $region3: #{_lambda_.6} parent=0 // pred_check_branch
    %9 = sbr.rel (0) target = $region5
  $region4: #{_lambda_.6} parent=0 // pred_region
    _
  $region5: #{_lambda_.6} parent=0 // pred_fallthru
    _
  // Predicated region
  $region6: #{_lambda_.6} parent=0 // pred_check
    _
  $region7: #{_lambda_.6} parent=0 // pred_check_branch
    %11 = sbr.rel (0) target = $region9
  $region8: #{_lambda_.6} parent=0 // pred_region
    _
  $region9: #{_lambda_.6} parent=0 // pred_fallthru
    _
  // Predicated region
  $region10: #{_lambda_.6} parent=0 // pred_check
    _
  $region11: #{_lambda_.6} parent=0 // pred_check_branch
    %13 = sbr.rel (0) target = $region13
  $region12: #{_lambda_.6} parent=0 // pred_region
    _
  $region13: #{_lambda_.6} parent=0 // pred_fallthru
    _
  %p15 = scmp.eq.s32.totalorder 0, 0
  // Predicated region
  $region14: #{_lambda_.6} parent=0 // pred_check
    %p16 = pneg %p15
  $region15: #{_lambda_.6} parent=0 // pred_check_branch
    %18 = sbr.rel (%p16) target = $region17
  $region16: #{_lambda_.6} parent=0 // pred_region
    %19 = vst [vmem:[#allocation2] sm:$0xff] 0.0
    %20 = vst [vmem:[#allocation2 + $0x8] sm:$0xff] 0.0
    %21 = vst [vmem:[#allocation2 + $0x10] sm:$0xff] 0.0
    %22 = vst [vmem:[#allocation2 + $0x18] sm:$0xff] 0.0
    %23 = vst [vmem:[#allocation2 + $0x20] sm:$0xff] 0.0
    %24 = vst [vmem:[#allocation2 + $0x28] sm:$0xff] 0.0
    %25 = vst [vmem:[#allocation2 + $0x30] sm:$0xff] 0.0
    %26 = vst [vmem:[#allocation2 + $0x38] sm:$0xff] 0.0
    %27 = vst [vmem:[#allocation2 + $0x40] sm:$0xff] 0.0
    %28 = vst [vmem:[#allocation2 + $0x48] sm:$0xff] 0.0
    %29 = vst [vmem:[#allocation2 + $0x50] sm:$0xff] 0.0
    %30 = vst [vmem:[#allocation2 + $0x58] sm:$0xff] 0.0
    %31 = vst [vmem:[#allocation2 + $0x60] sm:$0xff] 0.0
    %32 = vst [vmem:[#allocation2 + $0x68] sm:$0xff] 0.0
    %33 = vst [vmem:[#allocation2 + $0x70] sm:$0xff] 0.0
    %34 = vst [vmem:[#allocation2 + $0x78] sm:$0xff] 0.0
  $region17: #{_lambda_.6} parent=0 // pred_fallthru
    _
  %v35 = vld [vmem:[%s0] sm:$0xf]
  %v36 = vld [vmem:[%s0 + $0x4] sm:$0xf]
  %v37 = vld [vmem:[%s0 + $0x8] sm:$0xf]
  %v38 = vld [vmem:[%s0 + $0xc] sm:$0xf]
  %v39 = vld [vmem:[%s0 + $0x10] sm:$0xf]
  %v40 = vld [vmem:[%s0 + $0x14] sm:$0xf]
  %v41 = vld [vmem:[%s0 + $0x18] sm:$0xf]
  %v42 = vld [vmem:[%s0 + $0x1c] sm:$0xf]
  %v43 = vld [vmem:[%s0 + $0x20] sm:$0xf]
  %v44 = vld [vmem:[%s0 + $0x24] sm:$0xf]
  %v45 = vld [vmem:[%s0 + $0x28] sm:$0xf]
  %v46 = vld [vmem:[%s0 + $0x2c] sm:$0xf]
  %v47 = vld [vmem:[%s0 + $0x30] sm:$0xf]
  %v48 = vld [vmem:[%s0 + $0x34] sm:$0xf]
  %v49 = vld [vmem:[%s0 + $0x38] sm:$0xf]
  %v50 = vld [vmem:[%s0 + $0x3c] sm:$0xf]
  %v51 = vld [vmem:[#allocation2] sm:$0xff]
  %v52 = vld [vmem:[#allocation2 + $0x8] sm:$0xff]
  %v53 = vld [vmem:[#allocation2 + $0x10] sm:$0xff]
  %v54 = vld [vmem:[#allocation2 + $0x18] sm:$0xff]
  %v55 = vld [vmem:[#allocation2 + $0x20] sm:$0xff]
  %v56 = vld [vmem:[#allocation2 + $0x28] sm:$0xff]
  %v57 = vld [vmem:[#allocation2 + $0x30] sm:$0xff]
  %v58 = vld [vmem:[#allocation2 + $0x38] sm:$0xff]
  %v59 = vld [vmem:[#allocation2 + $0x40] sm:$0xff]
  %v60 = vld [vmem:[#allocation2 + $0x48] sm:$0xff]
  %v61 = vld [vmem:[#allocation2 + $0x50] sm:$0xff]
  %v62 = vld [vmem:[#allocation2 + $0x58] sm:$0xff]
  %v63 = vld [vmem:[#allocation2 + $0x60] sm:$0xff]
  %v64 = vld [vmem:[#allocation2 + $0x68] sm:$0xff]
  %v65 = vld [vmem:[#allocation2 + $0x70] sm:$0xff]
  %v66 = vld [vmem:[#allocation2 + $0x78] sm:$0xff]
  %v67 = vld [vmem:[%s1] sm:$0xf]
  %v68 = vld [vmem:[%s1 + $0x4] sm:$0xf]
  %v69 = vld [vmem:[%s1 + $0x8] sm:$0xf]
  %v70 = vld [vmem:[%s1 + $0xc] sm:$0xf]
  %v87 = vunpack.c.l.b16 %v35
  %v88 = vunpack.c.l.b16 %v36
  %v89 = vunpack.c.l.b16 %v37
  %v90 = vunpack.c.l.b16 %v38
  %v91 = vunpack.c.l.b16 %v39
  %v92 = vunpack.c.l.b16 %v40
  %v93 = vunpack.c.l.b16 %v41
  %v94 = vunpack.c.l.b16 %v42
  %v95 = vunpack.c.l.b16 %v43
  %v96 = vunpack.c.l.b16 %v44
  %v97 = vunpack.c.l.b16 %v45
  %v98 = vunpack.c.l.b16 %v46
  %v99 = vunpack.c.l.b16 %v47
  %v100 = vunpack.c.l.b16 %v48
  %v101 = vunpack.c.l.b16 %v49
  %v102 = vunpack.c.l.b16 %v50
  %v103 = vpack.c.b16 %v88, %v87
  %v104 = vpack.c.b16 %v90, %v89
  %v105 = vpack.c.b16 %v92, %v91
  %v106 = vpack.c.b16 %v94, %v93
  %v107 = vpack.c.b16 %v96, %v95
  %v108 = vpack.c.b16 %v98, %v97
  %v109 = vpack.c.b16 %v100, %v99
  %v110 = vpack.c.b16 %v102, %v101
  %v115 = vunpack.c.l.b16 %v67
  %v116 = vunpack.c.l.b16 %v68
  %v117 = vunpack.c.l.b16 %v69
  %v118 = vunpack.c.l.b16 %v70
  %v119 = vpack.c.b16 %v116, %v115
  %v120 = vpack.c.b16 %v118, %v117
  %vm123 = vcmask 261120
  %v125 = vsel %vm123, %v103, 0
  %v128 = vsel %vm123, %v104, 0
  %v131 = vsel %vm123, %v105, 0
  %v134 = vsel %vm123, %v106, 0
  %v137 = vsel %vm123, %v107, 0
  %v140 = vsel %vm123, %v108, 0
  %v143 = vsel %vm123, %v109, 0
  %v146 = vsel %vm123, %v110, 0
  %148 = vmatprep.subr.bf16.mxu0 0
  %149 = vmatpush1.bf16.msra.mxu0 %v119
  %150 = vmatprep.subr.bf16.mxu0 0
  %151 = vmatpush1.bf16.msra.mxu0 %v120
  %152 = vmatprep.subr.bf16.mxu0 0
  %153 = vmatpush1.bf16.msra.mxu0 0
  %154 = vmatprep.subr.bf16.mxu0 0
  %155 = vmatpush1.bf16.msra.mxu0 0
  %156 = vmatprep.subr.bf16.mxu0 0
  %157 = vmatpush1.bf16.msra.mxu0 0
  %158 = vmatprep.subr.bf16.mxu0 0
  %159 = vmatpush1.bf16.msra.mxu0 0
  %160 = vmatprep.subr.bf16.mxu0 0
  %161 = vmatpush1.bf16.msra.mxu0 0
  %162 = vmatprep.subr.bf16.mxu0 0
  %163 = vmatpush1.bf16.msra.mxu0 0
  %164 = vmatprep.subr.bf16.mxu0 0
  %165 = vmatpush1.bf16.msra.mxu0 0
  %166 = vmatprep.subr.bf16.mxu0 0
  %167 = vmatpush1.bf16.msra.mxu0 0
  %168 = vmatprep.subr.bf16.mxu0 0
  %169 = vmatpush1.bf16.msra.mxu0 0
  %170 = vmatprep.subr.bf16.mxu0 0
  %171 = vmatpush1.bf16.msra.mxu0 0
  %172 = vmatprep.subr.bf16.mxu0 0
  %173 = vmatpush1.bf16.msra.mxu0 0
  %174 = vmatprep.subr.bf16.mxu0 0
  %175 = vmatpush1.bf16.msra.mxu0 0
  %176 = vmatprep.subr.bf16.mxu0 0
  %177 = vmatpush1.bf16.msra.mxu0 0
  %178 = vmatprep.subr.bf16.mxu0 0
  %179 = vmatpush1.bf16.msra.mxu0 0
  %180 = vmatprep.mubr.bf16.mxu0 0
  %181 = vmatmul.mubr.bf16.gmra.mrb[0].mxu0 %v125
  %v182 = vpop.f32.mrb[0].mxu0
  %v183 = vadd.f32 0.0, %v182
  %v184 = vpop.f32.mrb[0].mxu0
  %v185 = vpop.f32.mrb[0].mxu0
  %v186 = vadd.f32 0.0, %v185
  %v187 = vpop.f32.mrb[0].mxu0
  %188 = vmatprep.mubr.bf16.mxu0 0
  %189 = vmatmul.mubr.bf16.gmra.mrb[0].mxu0 %v128
  %v190 = vpop.f32.mrb[0].mxu0
  %v191 = vadd.f32 0.0, %v190
  %v192 = vpop.f32.mrb[0].mxu0
  %v193 = vpop.f32.mrb[0].mxu0
  %v194 = vadd.f32 0.0, %v193
  %v195 = vpop.f32.mrb[0].mxu0
  %196 = vmatprep.mubr.bf16.mxu0 0
  %197 = vmatmul.mubr.bf16.gmra.mrb[0].mxu0 %v131
  %v198 = vpop.f32.mrb[0].mxu0
  %v199 = vadd.f32 0.0, %v198
  %v200 = vpop.f32.mrb[0].mxu0
  %v201 = vpop.f32.mrb[0].mxu0
  %v202 = vadd.f32 0.0, %v201
  %v203 = vpop.f32.mrb[0].mxu0
  %204 = vmatprep.mubr.bf16.mxu0 0
  %205 = vmatmul.mubr.bf16.gmra.mrb[0].mxu0 %v134
  %v206 = vpop.f32.mrb[0].mxu0
  %v207 = vadd.f32 0.0, %v206
  %v208 = vpop.f32.mrb[0].mxu0
  %v209 = vpop.f32.mrb[0].mxu0
  %v210 = vadd.f32 0.0, %v209
  %v211 = vpop.f32.mrb[0].mxu0
  %212 = vmatprep.mubr.bf16.mxu0 0
  %213 = vmatmul.mubr.bf16.gmra.mrb[0].mxu0 %v137
  %v214 = vpop.f32.mrb[0].mxu0
  %v215 = vadd.f32 0.0, %v214
  %v216 = vpop.f32.mrb[0].mxu0
  %v217 = vpop.f32.mrb[0].mxu0
  %v218 = vadd.f32 0.0, %v217
  %v219 = vpop.f32.mrb[0].mxu0
  %220 = vmatprep.mubr.bf16.mxu0 0
  %221 = vmatmul.mubr.bf16.gmra.mrb[0].mxu0 %v140
  %v222 = vpop.f32.mrb[0].mxu0
  %v223 = vadd.f32 0.0, %v222
  %v224 = vpop.f32.mrb[0].mxu0
  %v225 = vpop.f32.mrb[0].mxu0
  %v226 = vadd.f32 0.0, %v225
  %v227 = vpop.f32.mrb[0].mxu0
  %228 = vmatprep.mubr.bf16.mxu0 0
  %229 = vmatmul.mubr.bf16.gmra.mrb[0].mxu0 %v143
  %v230 = vpop.f32.mrb[0].mxu0
  %v231 = vadd.f32 0.0, %v230
  %v232 = vpop.f32.mrb[0].mxu0
  %v233 = vpop.f32.mrb[0].mxu0
  %v234 = vadd.f32 0.0, %v233
  %v235 = vpop.f32.mrb[0].mxu0
  %236 = vmatprep.mubr.bf16.mxu0 0
  %237 = vmatmul.mubr.bf16.gmra.mrb[0].mxu0 %v146
  %v238 = vpop.f32.mrb[0].mxu0
  %v239 = vadd.f32 0.0, %v238
  %v240 = vpop.f32.mrb[0].mxu0
  %v241 = vpop.f32.mrb[0].mxu0
  %v242 = vadd.f32 0.0, %v241
  %v243 = vpop.f32.mrb[0].mxu0
  %244 = vdwg.mxu0
  %v245 = vadd.f32 %v51, %v183
  %v246 = vadd.f32 %v52, %v186
  %v247 = vadd.f32 %v53, %v191
  %v248 = vadd.f32 %v54, %v194
  %v249 = vadd.f32 %v55, %v199
  %v250 = vadd.f32 %v56, %v202
  %v251 = vadd.f32 %v57, %v207
  %v252 = vadd.f32 %v58, %v210
  %v253 = vadd.f32 %v59, %v215
  %v254 = vadd.f32 %v60, %v218
  %v255 = vadd.f32 %v61, %v223
  %v256 = vadd.f32 %v62, %v226
  %v257 = vadd.f32 %v63, %v231
  %v258 = vadd.f32 %v64, %v234
  %v259 = vadd.f32 %v65, %v239
  %v260 = vadd.f32 %v66, %v242
  %261 = vst [vmem:[#allocation2] sm:$0xff] %v245
  %262 = vst [vmem:[#allocation2 + $0x8] sm:$0xff] %v246
  %263 = vst [vmem:[#allocation2 + $0x10] sm:$0xff] %v247
  %264 = vst [vmem:[#allocation2 + $0x18] sm:$0xff] %v248
  %265 = vst [vmem:[#allocation2 + $0x20] sm:$0xff] %v249
  %266 = vst [vmem:[#allocation2 + $0x28] sm:$0xff] %v250
  %267 = vst [vmem:[#allocation2 + $0x30] sm:$0xff] %v251
  %268 = vst [vmem:[#allocation2 + $0x38] sm:$0xff] %v252
  %269 = vst [vmem:[#allocation2 + $0x40] sm:$0xff] %v253
  %270 = vst [vmem:[#allocation2 + $0x48] sm:$0xff] %v254
  %271 = vst [vmem:[#allocation2 + $0x50] sm:$0xff] %v255
  %272 = vst [vmem:[#allocation2 + $0x58] sm:$0xff] %v256
  %273 = vst [vmem:[#allocation2 + $0x60] sm:$0xff] %v257
  %274 = vst [vmem:[#allocation2 + $0x68] sm:$0xff] %v258
  %275 = vst [vmem:[#allocation2 + $0x70] sm:$0xff] %v259
  %276 = vst [vmem:[#allocation2 + $0x78] sm:$0xff] %v260
  // Predicated region
  $region18: #{_lambda_.6} parent=0 // pred_check
    %p277 = pneg %p15
  $region19: #{_lambda_.6} parent=0 // pred_check_branch
    %279 = sbr.rel (%p277) target = $region21
  $region20: #{_lambda_.6} parent=0 // pred_region
    %v280 = vld [vmem:[#allocation2] sm:$0xff]
    %v281 = vld [vmem:[#allocation2 + $0x8] sm:$0xff]
    %v282 = vld [vmem:[#allocation2 + $0x10] sm:$0xff]
    %v283 = vld [vmem:[#allocation2 + $0x18] sm:$0xff]
    %v284 = vld [vmem:[#allocation2 + $0x20] sm:$0xff]
    %v285 = vld [vmem:[#allocation2 + $0x28] sm:$0xff]
    %v286 = vld [vmem:[#allocation2 + $0x30] sm:$0xff]
    %v287 = vld [vmem:[#allocation2 + $0x38] sm:$0xff]
    %v288 = vld [vmem:[#allocation2 + $0x40] sm:$0xff]
    %v289 = vld [vmem:[#allocation2 + $0x48] sm:$0xff]
    %v290 = vld [vmem:[#allocation2 + $0x50] sm:$0xff]
    %v291 = vld [vmem:[#allocation2 + $0x58] sm:$0xff]
    %v292 = vld [vmem:[#allocation2 + $0x60] sm:$0xff]
    %v293 = vld [vmem:[#allocation2 + $0x68] sm:$0xff]
    %v294 = vld [vmem:[#allocation2 + $0x70] sm:$0xff]
    %v295 = vld [vmem:[#allocation2 + $0x78] sm:$0xff]
    %v296 = vld [vmem:[%s2] sm:$0x1]
    %v298 = vlaneseq
    %v299 = vshrl.u32 %v298, 7
    %v300 = vsub.s32 0, %v299
    %v301 = vrot.slane %v296, %v300
    %v303 = vadd.f32 %v280, %v301
    %v304 = vadd.f32 %v281, %v301
    %v305 = vadd.f32 %v282, %v301
    %v306 = vadd.f32 %v283, %v301
    %v307 = vadd.f32 %v284, %v301
    %v308 = vadd.f32 %v285, %v301
    %v309 = vadd.f32 %v286, %v301
    %v310 = vadd.f32 %v287, %v301
    %v311 = vadd.f32 %v288, %v301
    %v312 = vadd.f32 %v289, %v301
    %v313 = vadd.f32 %v290, %v301
    %v314 = vadd.f32 %v291, %v301
    %v315 = vadd.f32 %v292, %v301
    %v316 = vadd.f32 %v293, %v301
    %v317 = vadd.f32 %v294, %v301
    %v318 = vadd.f32 %v295, %v301
    %319 = vst [vmem:[%s3] sm:$0xff] %v303
    %320 = vst [vmem:[%s3 + $0x8] sm:$0xff] %v304
    %321 = vst [vmem:[%s3 + $0x10] sm:$0xff] %v305
    %322 = vst [vmem:[%s3 + $0x18] sm:$0xff] %v306
    %323 = vst [vmem:[%s3 + $0x20] sm:$0xff] %v307
    %324 = vst [vmem:[%s3 + $0x28] sm:$0xff] %v308
    %325 = vst [vmem:[%s3 + $0x30] sm:$0xff] %v309
    %326 = vst [vmem:[%s3 + $0x38] sm:$0xff] %v310
    %327 = vst [vmem:[%s3 + $0x40] sm:$0xff] %v311
    %328 = vst [vmem:[%s3 + $0x48] sm:$0xff] %v312
    %329 = vst [vmem:[%s3 + $0x50] sm:$0xff] %v313
    %330 = vst [vmem:[%s3 + $0x58] sm:$0xff] %v314
    %331 = vst [vmem:[%s3 + $0x60] sm:$0xff] %v315
    %332 = vst [vmem:[%s3 + $0x68] sm:$0xff] %v316
    %333 = vst [vmem:[%s3 + $0x70] sm:$0xff] %v317
    %334 = vst [vmem:[%s3 + $0x78] sm:$0xff] %v318
  $region21: #{_lambda_.6} parent=0 // pred_fallthru
    _
  // Predicated region
  $region22: #{_lambda_.6} parent=0 // pred_check
    _
  $region23: #{_lambda_.6} parent=0 // pred_check_branch
    %336 = sbr.rel (0) target = $region25
  $region24: #{_lambda_.6} parent=0 // pred_region
    _
  $region25: #{_lambda_.6} parent=0 // pred_fallthru
    _
  // Predicated region
  $region26: #{_lambda_.6} parent=0 // pred_check
    _
  $region27: #{_lambda_.6} parent=0 // pred_check_branch
    %338 = sbr.rel (0) target = $region29
  $region28: #{_lambda_.6} parent=0 // pred_region
    _
  $region29: #{_lambda_.6} parent=0 // pred_fallthru
    _

// kernel: _lambda_.8
$region0: #{_lambda_.8}
  #allocation0 [shape = 'u32[]', space=smem, size = 0x4, offset = 0x4, fixed_abs, tag = 'smem constant byte address 0x4 - core index']
  #allocation1 [shape = 'u32[144,128]{1,0:T(1,128)}', space=vmem, size = 0x12000, scoped, tag = 'internal scratch']
  #allocation2 [shape = 'f32[128,34]{1,0:T(8,128)}', space=vmem, size = 0x10000, scoped, tag = 'scratch operand']
  %s0 = inlined_call_operand.vmem [shape: bf16[128,64], index: 0, kind: input, shape index: {}]
  %s1 = inlined_call_operand.vmem [shape: bf16[64,34], index: 1, kind: input, shape index: {}]
  %s2 = inlined_call_operand.vmem [shape: f32[1,34], index: 2, kind: input, shape index: {}]
  %s3 = inlined_call_operand.vmem [shape: f32[128,34], index: 3, kind: output, shape index: {}]
  %s4 = sld [smem:[#allocation0]]
  $region30: #{_lambda_.8} parent=0
    _
  %s6 = ssub.s32 1, %s4
  %s7 = scalar_select 0, %s6, %s4
  // Predicated region
  $region2: #{_lambda_.8} parent=0 // pred_check
    _
  $region3: #{_lambda_.8} parent=0 // pred_check_branch
    %9 = sbr.rel (0) target = $region5
  $region4: #{_lambda_.8} parent=0 // pred_region
    _
  $region5: #{_lambda_.8} parent=0 // pred_fallthru
    _
  // Predicated region
  $region6: #{_lambda_.8} parent=0 // pred_check
    _
  $region7: #{_lambda_.8} parent=0 // pred_check_branch
    %11 = sbr.rel (0) target = $region9
  $region8: #{_lambda_.8} parent=0 // pred_region
    _
  $region9: #{_lambda_.8} parent=0 // pred_fallthru
    _
  // Predicated region
  $region10: #{_lambda_.8} parent=0 // pred_check
    _
  $region11: #{_lambda_.8} parent=0 // pred_check_branch
    %13 = sbr.rel (0) target = $region13
  $region12: #{_lambda_.8} parent=0 // pred_region
    _
  $region13: #{_lambda_.8} parent=0 // pred_fallthru
    _
  %p15 = scmp.eq.s32.totalorder 0, 0
  // Predicated region
  $region14: #{_lambda_.8} parent=0 // pred_check
    %p16 = pneg %p15
  $region15: #{_lambda_.8} parent=0 // pred_check_branch
    %18 = sbr.rel (%p16) target = $region17
  $region16: #{_lambda_.8} parent=0 // pred_region
    %vm19 = vcmask 277504
    %20 = vst.msk [vmem:[#allocation2] sm:$0xff] %vm19, 0.0
    %21 = vst.msk [vmem:[#allocation2 + $0x8] sm:$0xff] %vm19, 0.0
    %22 = vst.msk [vmem:[#allocation2 + $0x10] sm:$0xff] %vm19, 0.0
    %23 = vst.msk [vmem:[#allocation2 + $0x18] sm:$0xff] %vm19, 0.0
    %24 = vst.msk [vmem:[#allocation2 + $0x20] sm:$0xff] %vm19, 0.0
    %25 = vst.msk [vmem:[#allocation2 + $0x28] sm:$0xff] %vm19, 0.0
    %26 = vst.msk [vmem:[#allocation2 + $0x30] sm:$0xff] %vm19, 0.0
    %27 = vst.msk [vmem:[#allocation2 + $0x38] sm:$0xff] %vm19, 0.0
    %28 = vst.msk [vmem:[#allocation2 + $0x40] sm:$0xff] %vm19, 0.0
    %29 = vst.msk [vmem:[#allocation2 + $0x48] sm:$0xff] %vm19, 0.0
    %30 = vst.msk [vmem:[#allocation2 + $0x50] sm:$0xff] %vm19, 0.0
    %31 = vst.msk [vmem:[#allocation2 + $0x58] sm:$0xff] %vm19, 0.0
    %32 = vst.msk [vmem:[#allocation2 + $0x60] sm:$0xff] %vm19, 0.0
    %33 = vst.msk [vmem:[#allocation2 + $0x68] sm:$0xff] %vm19, 0.0
    %34 = vst.msk [vmem:[#allocation2 + $0x70] sm:$0xff] %vm19, 0.0
    %35 = vst.msk [vmem:[#allocation2 + $0x78] sm:$0xff] %vm19, 0.0
  $region17: #{_lambda_.8} parent=0 // pred_fallthru
    _
  %v36 = vld [vmem:[%s0] sm:$0xf]
  %v37 = vld [vmem:[%s0 + $0x4] sm:$0xf]
  %v38 = vld [vmem:[%s0 + $0x8] sm:$0xf]
  %v39 = vld [vmem:[%s0 + $0xc] sm:$0xf]
  %v40 = vld [vmem:[%s0 + $0x10] sm:$0xf]
  %v41 = vld [vmem:[%s0 + $0x14] sm:$0xf]
  %v42 = vld [vmem:[%s0 + $0x18] sm:$0xf]
  %v43 = vld [vmem:[%s0 + $0x1c] sm:$0xf]
  %v44 = vld [vmem:[%s0 + $0x20] sm:$0xf]
  %v45 = vld [vmem:[%s0 + $0x24] sm:$0xf]
  %v46 = vld [vmem:[%s0 + $0x28] sm:$0xf]
  %v47 = vld [vmem:[%s0 + $0x2c] sm:$0xf]
  %v48 = vld [vmem:[%s0 + $0x30] sm:$0xf]
  %v49 = vld [vmem:[%s0 + $0x34] sm:$0xf]
  %v50 = vld [vmem:[%s0 + $0x38] sm:$0xf]
  %v51 = vld [vmem:[%s0 + $0x3c] sm:$0xf]
  %v52 = vld [vmem:[#allocation2] sm:$0xff]
  %v53 = vld [vmem:[#allocation2 + $0x8] sm:$0xff]
  %v54 = vld [vmem:[#allocation2 + $0x10] sm:$0xff]
  %v55 = vld [vmem:[#allocation2 + $0x18] sm:$0xff]
  %v56 = vld [vmem:[#allocation2 + $0x20] sm:$0xff]
  %v57 = vld [vmem:[#allocation2 + $0x28] sm:$0xff]
  %v58 = vld [vmem:[#allocation2 + $0x30] sm:$0xff]
  %v59 = vld [vmem:[#allocation2 + $0x38] sm:$0xff]
  %v60 = vld [vmem:[#allocation2 + $0x40] sm:$0xff]
  %v61 = vld [vmem:[#allocation2 + $0x48] sm:$0xff]
  %v62 = vld [vmem:[#allocation2 + $0x50] sm:$0xff]
  %v63 = vld [vmem:[#allocation2 + $0x58] sm:$0xff]
  %v64 = vld [vmem:[#allocation2 + $0x60] sm:$0xff]
  %v65 = vld [vmem:[#allocation2 + $0x68] sm:$0xff]
  %v66 = vld [vmem:[#allocation2 + $0x70] sm:$0xff]
  %v67 = vld [vmem:[#allocation2 + $0x78] sm:$0xff]
  %v68 = vld [vmem:[%s1] sm:$0xf]
  %v69 = vld [vmem:[%s1 + $0x4] sm:$0xf]
  %v70 = vld [vmem:[%s1 + $0x8] sm:$0xf]
  %v71 = vld [vmem:[%s1 + $0xc] sm:$0xf]
  %v72 = vld [vmem:[%s1 + $0x10] sm:$0xf]
  %v73 = vld [vmem:[%s1 + $0x14] sm:$0xf]
  %v74 = vld [vmem:[%s1 + $0x18] sm:$0xf]
  %v75 = vld [vmem:[%s1 + $0x1c] sm:$0xf]
  %v92 = vunpack.c.l.b16 %v36
  %v93 = vunpack.c.l.b16 %v37
  %v94 = vunpack.c.l.b16 %v38
  %v95 = vunpack.c.l.b16 %v39
  %v96 = vunpack.c.l.b16 %v40
  %v97 = vunpack.c.l.b16 %v41
  %v98 = vunpack.c.l.b16 %v42
  %v99 = vunpack.c.l.b16 %v43
  %v100 = vunpack.c.l.b16 %v44
  %v101 = vunpack.c.l.b16 %v45
  %v102 = vunpack.c.l.b16 %v46
  %v103 = vunpack.c.l.b16 %v47
  %v104 = vunpack.c.l.b16 %v48
  %v105 = vunpack.c.l.b16 %v49
  %v106 = vunpack.c.l.b16 %v50
  %v107 = vunpack.c.l.b16 %v51
  %v108 = vpack.c.b16 %v93, %v92
  %v109 = vpack.c.b16 %v95, %v94
  %v110 = vpack.c.b16 %v97, %v96
  %v111 = vpack.c.b16 %v99, %v98
  %v112 = vpack.c.b16 %v101, %v100
  %v113 = vpack.c.b16 %v103, %v102
  %v114 = vpack.c.b16 %v105, %v104
  %v115 = vpack.c.b16 %v107, %v106
  %v124 = vunpack.c.l.b16 %v68
  %v125 = vunpack.c.l.b16 %v69
  %v126 = vunpack.c.l.b16 %v70
  %v127 = vunpack.c.l.b16 %v71
  %v128 = vunpack.c.l.b16 %v72
  %v129 = vunpack.c.l.b16 %v73
  %v130 = vunpack.c.l.b16 %v74
  %v131 = vunpack.c.l.b16 %v75
  %v132 = vpack.c.b16 %v125, %v124
  %v133 = vpack.c.b16 %v127, %v126
  %v134 = vpack.c.b16 %v129, %v128
  %v135 = vpack.c.b16 %v131, %v130
  %vm140 = vcmask 523264
  %v142 = vsel %vm140, %v108, 0
  %v145 = vsel %vm140, %v109, 0
  %v148 = vsel %vm140, %v110, 0
  %v151 = vsel %vm140, %v111, 0
  %v154 = vsel %vm140, %v112, 0
  %v157 = vsel %vm140, %v113, 0
  %v160 = vsel %vm140, %v114, 0
  %v163 = vsel %vm140, %v115, 0
  %165 = vmatprep.subr.bf16.mxu0 0
  %166 = vmatpush1.bf16.msra.mxu0 %v132
  %167 = vmatprep.subr.bf16.mxu0 0
  %168 = vmatpush1.bf16.msra.mxu0 %v133
  %169 = vmatprep.subr.bf16.mxu0 0
  %170 = vmatpush1.bf16.msra.mxu0 %v134
  %171 = vmatprep.subr.bf16.mxu0 0
  %172 = vmatpush1.bf16.msra.mxu0 %v135
  %173 = vmatprep.subr.bf16.mxu0 0
  %174 = vmatpush1.bf16.msra.mxu0 0
  %175 = vmatprep.subr.bf16.mxu0 0
  %176 = vmatpush1.bf16.msra.mxu0 0
  %177 = vmatprep.subr.bf16.mxu0 0
  %178 = vmatpush1.bf16.msra.mxu0 0
  %179 = vmatprep.subr.bf16.mxu0 0
  %180 = vmatpush1.bf16.msra.mxu0 0
  %181 = vmatprep.subr.bf16.mxu0 0
  %182 = vmatpush1.bf16.msra.mxu0 0
  %183 = vmatprep.subr.bf16.mxu0 0
  %184 = vmatpush1.bf16.msra.mxu0 0
  %185 = vmatprep.subr.bf16.mxu0 0
  %186 = vmatpush1.bf16.msra.mxu0 0
  %187 = vmatprep.subr.bf16.mxu0 0
  %188 = vmatpush1.bf16.msra.mxu0 0
  %189 = vmatprep.subr.bf16.mxu0 0
  %190 = vmatpush1.bf16.msra.mxu0 0
  %191 = vmatprep.subr.bf16.mxu0 0
  %192 = vmatpush1.bf16.msra.mxu0 0
  %193 = vmatprep.subr.bf16.mxu0 0
  %194 = vmatpush1.bf16.msra.mxu0 0
  %195 = vmatprep.subr.bf16.mxu0 0
  %196 = vmatpush1.bf16.msra.mxu0 0
  %197 = vmatprep.mubr.bf16.mxu0 0
  %198 = vmatmul.mubr.bf16.gmra.mrb[0].mxu0 %v142
  %v199 = vpop.f32.mrb[0].mxu0
  %v200 = vadd.f32 0.0, %v199
  %v201 = vpop.f32.mrb[0].mxu0
  %v202 = vpop.f32.mrb[0].mxu0
  %v203 = vadd.f32 0.0, %v202
  %v204 = vpop.f32.mrb[0].mxu0
  %205 = vmatprep.mubr.bf16.mxu0 0
  %206 = vmatmul.mubr.bf16.gmra.mrb[0].mxu0 %v145
  %v207 = vpop.f32.mrb[0].mxu0
  %v208 = vadd.f32 0.0, %v207
  %v209 = vpop.f32.mrb[0].mxu0
  %v210 = vpop.f32.mrb[0].mxu0
  %v211 = vadd.f32 0.0, %v210
  %v212 = vpop.f32.mrb[0].mxu0
  %213 = vmatprep.mubr.bf16.mxu0 0
  %214 = vmatmul.mubr.bf16.gmra.mrb[0].mxu0 %v148
  %v215 = vpop.f32.mrb[0].mxu0
  %v216 = vadd.f32 0.0, %v215
  %v217 = vpop.f32.mrb[0].mxu0
  %v218 = vpop.f32.mrb[0].mxu0
  %v219 = vadd.f32 0.0, %v218
  %v220 = vpop.f32.mrb[0].mxu0
  %221 = vmatprep.mubr.bf16.mxu0 0
  %222 = vmatmul.mubr.bf16.gmra.mrb[0].mxu0 %v151
  %v223 = vpop.f32.mrb[0].mxu0
  %v224 = vadd.f32 0.0, %v223
  %v225 = vpop.f32.mrb[0].mxu0
  %v226 = vpop.f32.mrb[0].mxu0
  %v227 = vadd.f32 0.0, %v226
  %v228 = vpop.f32.mrb[0].mxu0
  %229 = vmatprep.mubr.bf16.mxu0 0
  %230 = vmatmul.mubr.bf16.gmra.mrb[0].mxu0 %v154
  %v231 = vpop.f32.mrb[0].mxu0
  %v232 = vadd.f32 0.0, %v231
  %v233 = vpop.f32.mrb[0].mxu0
  %v234 = vpop.f32.mrb[0].mxu0
  %v235 = vadd.f32 0.0, %v234
  %v236 = vpop.f32.mrb[0].mxu0
  %237 = vmatprep.mubr.bf16.mxu0 0
  %238 = vmatmul.mubr.bf16.gmra.mrb[0].mxu0 %v157
  %v239 = vpop.f32.mrb[0].mxu0
  %v240 = vadd.f32 0.0, %v239
  %v241 = vpop.f32.mrb[0].mxu0
  %v242 = vpop.f32.mrb[0].mxu0
  %v243 = vadd.f32 0.0, %v242
  %v244 = vpop.f32.mrb[0].mxu0
  %245 = vmatprep.mubr.bf16.mxu0 0
  %246 = vmatmul.mubr.bf16.gmra.mrb[0].mxu0 %v160
  %v247 = vpop.f32.mrb[0].mxu0
  %v248 = vadd.f32 0.0, %v247
  %v249 = vpop.f32.mrb[0].mxu0
  %v250 = vpop.f32.mrb[0].mxu0
  %v251 = vadd.f32 0.0, %v250
  %v252 = vpop.f32.mrb[0].mxu0
  %253 = vmatprep.mubr.bf16.mxu0 0
  %254 = vmatmul.mubr.bf16.gmra.mrb[0].mxu0 %v163
  %v255 = vpop.f32.mrb[0].mxu0
  %v256 = vadd.f32 0.0, %v255
  %v257 = vpop.f32.mrb[0].mxu0
  %v258 = vpop.f32.mrb[0].mxu0
  %v259 = vadd.f32 0.0, %v258
  %v260 = vpop.f32.mrb[0].mxu0
  %261 = vdwg.mxu0
  %v262 = vadd.f32 %v52, %v200
  %v263 = vadd.f32 %v53, %v203
  %v264 = vadd.f32 %v54, %v208
  %v265 = vadd.f32 %v55, %v211
  %v266 = vadd.f32 %v56, %v216
  %v267 = vadd.f32 %v57, %v219
  %v268 = vadd.f32 %v58, %v224
  %v269 = vadd.f32 %v59, %v227
  %v270 = vadd.f32 %v60, %v232
  %v271 = vadd.f32 %v61, %v235
  %v272 = vadd.f32 %v62, %v240
  %v273 = vadd.f32 %v63, %v243
  %v274 = vadd.f32 %v64, %v248
  %v275 = vadd.f32 %v65, %v251
  %v276 = vadd.f32 %v66, %v256
  %v277 = vadd.f32 %v67, %v259
  %vm278 = vcmask 277504
  %279 = vst.msk [vmem:[#allocation2] sm:$0xff] %vm278, %v262
  %280 = vst.msk [vmem:[#allocation2 + $0x8] sm:$0xff] %vm278, %v263
  %281 = vst.msk [vmem:[#allocation2 + $0x10] sm:$0xff] %vm278, %v264
  %282 = vst.msk [vmem:[#allocation2 + $0x18] sm:$0xff] %vm278, %v265
  %283 = vst.msk [vmem:[#allocation2 + $0x20] sm:$0xff] %vm278, %v266
  %284 = vst.msk [vmem:[#allocation2 + $0x28] sm:$0xff] %vm278, %v267
  %285 = vst.msk [vmem:[#allocation2 + $0x30] sm:$0xff] %vm278, %v268
  %286 = vst.msk [vmem:[#allocation2 + $0x38] sm:$0xff] %vm278, %v269
  %287 = vst.msk [vmem:[#allocation2 + $0x40] sm:$0xff] %vm278, %v270
  %288 = vst.msk [vmem:[#allocation2 + $0x48] sm:$0xff] %vm278, %v271
  %289 = vst.msk [vmem:[#allocation2 + $0x50] sm:$0xff] %vm278, %v272
  %290 = vst.msk [vmem:[#allocation2 + $0x58] sm:$0xff] %vm278, %v273
  %291 = vst.msk [vmem:[#allocation2 + $0x60] sm:$0xff] %vm278, %v274
  %292 = vst.msk [vmem:[#allocation2 + $0x68] sm:$0xff] %vm278, %v275
  %293 = vst.msk [vmem:[#allocation2 + $0x70] sm:$0xff] %vm278, %v276
  %294 = vst.msk [vmem:[#allocation2 + $0x78] sm:$0xff] %vm278, %v277
  // Predicated region
  $region18: #{_lambda_.8} parent=0 // pred_check
    %p295 = pneg %p15
  $region19: #{_lambda_.8} parent=0 // pred_check_branch
    %297 = sbr.rel (%p295) target = $region21
  $region20: #{_lambda_.8} parent=0 // pred_region
    %v298 = vld [vmem:[#allocation2] sm:$0xff]
    %v299 = vld [vmem:[#allocation2 + $0x8] sm:$0xff]
    %v300 = vld [vmem:[#allocation2 + $0x10] sm:$0xff]
    %v301 = vld [vmem:[#allocation2 + $0x18] sm:$0xff]
    %v302 = vld [vmem:[#allocation2 + $0x20] sm:$0xff]
    %v303 = vld [vmem:[#allocation2 + $0x28] sm:$0xff]
    %v304 = vld [vmem:[#allocation2 + $0x30] sm:$0xff]
    %v305 = vld [vmem:[#allocation2 + $0x38] sm:$0xff]
    %v306 = vld [vmem:[#allocation2 + $0x40] sm:$0xff]
    %v307 = vld [vmem:[#allocation2 + $0x48] sm:$0xff]
    %v308 = vld [vmem:[#allocation2 + $0x50] sm:$0xff]
    %v309 = vld [vmem:[#allocation2 + $0x58] sm:$0xff]
    %v310 = vld [vmem:[#allocation2 + $0x60] sm:$0xff]
    %v311 = vld [vmem:[#allocation2 + $0x68] sm:$0xff]
    %v312 = vld [vmem:[#allocation2 + $0x70] sm:$0xff]
    %v313 = vld [vmem:[#allocation2 + $0x78] sm:$0xff]
    %v314 = vld [vmem:[%s2] sm:$0x1]
    %v316 = vlaneseq
    %v317 = vshrl.u32 %v316, 7
    %v318 = vsub.s32 0, %v317
    %v319 = vrot.slane %v314, %v318
    %v321 = vadd.f32 %v298, %v319
    %v322 = vadd.f32 %v299, %v319
    %v323 = vadd.f32 %v300, %v319
    %v324 = vadd.f32 %v301, %v319
    %v325 = vadd.f32 %v302, %v319
    %v326 = vadd.f32 %v303, %v319
    %v327 = vadd.f32 %v304, %v319
    %v328 = vadd.f32 %v305, %v319
    %v329 = vadd.f32 %v306, %v319
    %v330 = vadd.f32 %v307, %v319
    %v331 = vadd.f32 %v308, %v319
    %v332 = vadd.f32 %v309, %v319
    %v333 = vadd.f32 %v310, %v319
    %v334 = vadd.f32 %v311, %v319
    %v335 = vadd.f32 %v312, %v319
    %v336 = vadd.f32 %v313, %v319
    %337 = vst.msk [vmem:[%s3] sm:$0xff] %vm278, %v321
    %338 = vst.msk [vmem:[%s3 + $0x8] sm:$0xff] %vm278, %v322
    %339 = vst.msk [vmem:[%s3 + $0x10] sm:$0xff] %vm278, %v323
    %340 = vst.msk [vmem:[%s3 + $0x18] sm:$0xff] %vm278, %v324
    %341 = vst.msk [vmem:[%s3 + $0x20] sm:$0xff] %vm278, %v325
    %342 = vst.msk [vmem:[%s3 + $0x28] sm:$0xff] %vm278, %v326
    %343 = vst.msk [vmem:[%s3 + $0x30] sm:$0xff] %vm278, %v327
    %344 = vst.msk [vmem:[%s3 + $0x38] sm:$0xff] %vm278, %v328
    %345 = vst.msk [vmem:[%s3 + $0x40] sm:$0xff] %vm278, %v329
    %346 = vst.msk [vmem:[%s3 + $0x48] sm:$0xff] %vm278, %v330
    %347 = vst.msk [vmem:[%s3 + $0x50] sm:$0xff] %vm278, %v331
    %348 = vst.msk [vmem:[%s3 + $0x58] sm:$0xff] %vm278, %v332
    %349 = vst.msk [vmem:[%s3 + $0x60] sm:$0xff] %vm278, %v333
    %350 = vst.msk [vmem:[%s3 + $0x68] sm:$0xff] %vm278, %v334
    %351 = vst.msk [vmem:[%s3 + $0x70] sm:$0xff] %vm278, %v335
    %352 = vst.msk [vmem:[%s3 + $0x78] sm:$0xff] %vm278, %v336
  $region21: #{_lambda_.8} parent=0 // pred_fallthru
    _
  // Predicated region
  $region22: #{_lambda_.8} parent=0 // pred_check
    _
  $region23: #{_lambda_.8} parent=0 // pred_check_branch
    %354 = sbr.rel (0) target = $region25
  $region24: #{_lambda_.8} parent=0 // pred_region
    _
  $region25: #{_lambda_.8} parent=0 // pred_fallthru
    _
  // Predicated region
  $region26: #{_lambda_.8} parent=0 // pred_check
    _
  $region27: #{_lambda_.8} parent=0 // pred_check_branch
    %356 = sbr.rel (0) target = $region29
  $region28: #{_lambda_.8} parent=0 // pred_region
    _
  $region29: #{_lambda_.8} parent=0 // pred_fallthru
    _

// kernel: tile.1
$region0: #{tile.1}
  #allocation0 [shape = 's32[1]{0}', space=sflag, size = 0x4, scoped, tag = 'scoped memory for tile.1']
  %s0 = inlined_call_operand.<no memory space> [shape: f32[], index: 0, kind: input, shape index: {}]
  %s1 = inlined_call_operand.vmem [shape: f32[1,256], index: 1, kind: output, shape index: {}]
  %v2 = vstv %s0
  %3 = vst [vmem:[%s1] sm:$0x1] %v2
  %s4 = scalar_lea.vmem %s1, 1
  %5 = vst [vmem:[%s4] sm:$0x1] %v2

// kernel: _lambda_.7
$region0: #{_lambda_.7}
  #allocation0 [shape = 'u32[]', space=smem, size = 0x4, offset = 0x4, fixed_abs, tag = 'smem constant byte address 0x4 - core index']
  #allocation1 [shape = 'u32[144,128]{1,0:T(1,128)}', space=vmem, size = 0x12000, scoped, tag = 'internal scratch']
  #allocation2 [shape = 'f32[10,10,4]{2,1,0:T(8,128)}', space=vmem, size = 0x14000, scoped, tag = 'scratch operand']
  #allocation3 [shape = 'f32[64,4]{1,0:T(8,128)}', space=vmem, size = 0x8000, scoped, tag = 'scratch operand']
  %s0 = inlined_call_operand.vmem [shape: f32[2,64,64], index: 0, kind: input, shape index: {}]
  %s1 = inlined_call_operand.vmem [shape: bf16[64,4], index: 1, kind: input, shape index: {}]
  %s2 = inlined_call_operand.vmem [shape: f32[1,4], index: 2, kind: input, shape index: {}]
  %s3 = inlined_call_operand.vmem [shape: f32[9,4], index: 3, kind: input, shape index: {}]
  %s4 = inlined_call_operand.vmem [shape: bf16[4,64], index: 4, kind: input, shape index: {}]
  %s5 = inlined_call_operand.vmem [shape: f32[2,64,64], index: 5, kind: output, shape index: {}]
  %s6 = sld [smem:[#allocation0]]
  $region53: #{_lambda_.7} parent=0
    _
  %s8 = ssub.s32 1, %s6
  %s9 = scalar_select 0, %s8, %s6
  loop: start=0, step=1, limit=4
  $region2: #{_lambda_.7} parent=0 // loop_pre_header
    _
  $region3: #{_lambda_.7} parent=0 // loop_header
    %s11 = sphi 0, %s15
    %p12 = scmp.ge.s32.totalorder %s11, 4
    %s21 = sphi 0, %s23
    %s24 = sphi 0, %s21
    %s25 = sphi 0, %s24
    %s41 = sphi 0, %s25
    %s45 = sphi 0, %s45
    %s47 = sphi 0, %s45
    %s48 = sphi 0, %s47
    %s62 = sphi 0, %s48
    %s66 = sphi 0, %s66
    %s68 = sphi 0, %s66
    %s69 = sphi 0, %s68
    %s83 = sphi 0, %s69
    %s87 = sphi 0, %s87
    %s89 = sphi 0, %s87
    %s90 = sphi 0, %s89
    %s104 = sphi 0, %s90
    %s108 = sphi 0, %s108
    %s110 = sphi 0, %s108
    %s111 = sphi 0, %s110
    %s125 = sphi 0, %s111
    %s131 = sphi 0, %s133
    %s134 = sphi 0, %s131
    %s135 = sphi 0, %s134
    %s151 = sphi 0, %s135
  $region4: #{_lambda_.7} parent=0 // loop_header_branch
    %14 = sbr.rel (%p12) target = $region8
  $region5: #{_lambda_.7} parent=0 // loop_body
    %s16 = ssub.s32 %s11, 1
    %s17 = ssub.s32 %s11, 2
    %s18 = sadd.s32 %s11, 1
    %s19 = ssub.s32 %s11, %s18
    %p20 = scmp.eq.s32.totalorder %s19, 0
    %s22 = sadd.s32 %s21, 1
    %s23 = scalar_select %p20, %s21, %s22
    %p26 = pneg %p20
    %p27 = scmp.eq.s32.totalorder %s11, 1
    %p28 = por %p26, %p27
    %p29 = scmp.ne.s32.totalorder %s21, %s24
    %p30 = scmp.eq.s32.totalorder %s11, 0
    %p31 = por %p29, %p30
    %p32 = scmp.ne.s32.totalorder %s21, %s24
    %p33 = scmp.eq.s32.totalorder %s16, 1
    %p34 = por %p32, %p33
    %p35 = scmp.ne.s32.totalorder %s24, %s25
    %p36 = scmp.eq.s32.totalorder %s16, 0
    %p37 = por %p35, %p36
    %p38 = scmp.ne.s32.totalorder %s24, %s25
    %p39 = scmp.eq.s32.totalorder %s17, 1
    %p40 = por %p38, %p39
    %p42 = scmp.ne.s32.totalorder %s25, %s41
    %p43 = scmp.eq.s32.totalorder %s17, 0
    %p44 = por %p42, %p43
    %s46 = sadd.s32 %s45, 1
    %p49 = scmp.eq.s32.totalorder %s11, 1
    %p50 = scmp.ne.s32.totalorder %s45, %s47
    %p51 = scmp.eq.s32.totalorder %s11, 0
    %p52 = por %p50, %p51
    %p53 = scmp.ne.s32.totalorder %s45, %s47
    %p54 = scmp.eq.s32.totalorder %s16, 1
    %p55 = por %p53, %p54
    %p56 = scmp.ne.s32.totalorder %s47, %s48
    %p57 = scmp.eq.s32.totalorder %s16, 0
    %p58 = por %p56, %p57
    %p59 = scmp.ne.s32.totalorder %s47, %s48
    %p60 = scmp.eq.s32.totalorder %s17, 1
    %p61 = por %p59, %p60
    %p63 = scmp.ne.s32.totalorder %s48, %s62
    %p64 = scmp.eq.s32.totalorder %s17, 0
    %p65 = por %p63, %p64
    %s67 = sadd.s32 %s66, 1
    %p70 = scmp.eq.s32.totalorder %s11, 1
    %p71 = scmp.ne.s32.totalorder %s66, %s68
    %p72 = scmp.eq.s32.totalorder %s11, 0
    %p73 = por %p71, %p72
    %p74 = scmp.ne.s32.totalorder %s66, %s68
    %p75 = scmp.eq.s32.totalorder %s16, 1
    %p76 = por %p74, %p75
    %p77 = scmp.ne.s32.totalorder %s68, %s69
    %p78 = scmp.eq.s32.totalorder %s16, 0
    %p79 = por %p77, %p78
    %p80 = scmp.ne.s32.totalorder %s68, %s69
    %p81 = scmp.eq.s32.totalorder %s17, 1
    %p82 = por %p80, %p81
    %p84 = scmp.ne.s32.totalorder %s69, %s83
    %p85 = scmp.eq.s32.totalorder %s17, 0
    %p86 = por %p84, %p85
    %s88 = sadd.s32 %s87, 1
    %p91 = scmp.eq.s32.totalorder %s11, 1
    %p92 = scmp.ne.s32.totalorder %s87, %s89
    %p93 = scmp.eq.s32.totalorder %s11, 0
    %p94 = por %p92, %p93
    %p95 = scmp.ne.s32.totalorder %s87, %s89
    %p96 = scmp.eq.s32.totalorder %s16, 1
    %p97 = por %p95, %p96
    %p98 = scmp.ne.s32.totalorder %s89, %s90
    %p99 = scmp.eq.s32.totalorder %s16, 0
    %p100 = por %p98, %p99
    %p101 = scmp.ne.s32.totalorder %s89, %s90
    %p102 = scmp.eq.s32.totalorder %s17, 1
    %p103 = por %p101, %p102
    %p105 = scmp.ne.s32.totalorder %s90, %s104
    %p106 = scmp.eq.s32.totalorder %s17, 0
    %p107 = por %p105, %p106
    %s109 = sadd.s32 %s108, 1
    %p112 = scmp.eq.s32.totalorder %s11, 1
    %p113 = scmp.ne.s32.totalorder %s108, %s110
    %p114 = scmp.eq.s32.totalorder %s11, 0
    %p115 = por %p113, %p114
    %p116 = scmp.ne.s32.totalorder %s108, %s110
    %p117 = scmp.eq.s32.totalorder %s16, 1
    %p118 = por %p116, %p117
    %p119 = scmp.ne.s32.totalorder %s110, %s111
    %p120 = scmp.eq.s32.totalorder %s16, 0
    %p121 = por %p119, %p120
    %p122 = scmp.ne.s32.totalorder %s110, %s111
    %p123 = scmp.eq.s32.totalorder %s17, 1
    %p124 = por %p122, %p123
    %p126 = scmp.ne.s32.totalorder %s111, %s125
    %p127 = scmp.eq.s32.totalorder %s17, 0
    %p128 = por %p126, %p127
    %s129 = ssub.s32 %s11, %s18
    %p130 = scmp.eq.s32.totalorder %s129, 0
    %s132 = sadd.s32 %s131, 1
    %s133 = scalar_select %p130, %s131, %s132
    %p136 = pneg %p130
    %p137 = scmp.eq.s32.totalorder %s11, 1
    %p138 = por %p136, %p137
    %p139 = scmp.ne.s32.totalorder %s131, %s134
    %p140 = scmp.eq.s32.totalorder %s11, 0
    %p141 = por %p139, %p140
    %p142 = scmp.ne.s32.totalorder %s131, %s134
    %p143 = scmp.eq.s32.totalorder %s16, 1
    %p144 = por %p142, %p143
    %p145 = scmp.ne.s32.totalorder %s134, %s135
    %p146 = scmp.eq.s32.totalorder %s16, 0
    %p147 = por %p145, %p146
    %p148 = scmp.ne.s32.totalorder %s134, %s135
    %p149 = scmp.eq.s32.totalorder %s17, 1
    %p150 = por %p148, %p149
    %p152 = scmp.ne.s32.totalorder %s135, %s151
    %p153 = scmp.eq.s32.totalorder %s17, 0
    %p154 = por %p152, %p153
    %p155 = scmp.le.s32.totalorder 1, %s11
    %p156 = scmp.lt.s32.totalorder %s11, 3
    %p157 = pnand %p155, %p156
    %p158 = pneg %p157
    // Predicated region
    $region9: #{_lambda_.7} parent=5 // pred_check
      _
    $region10: #{_lambda_.7} parent=5 // pred_check_branch
      %160 = sbr.rel (%p157) target = $region12
    $region11: #{_lambda_.7} parent=5 // pred_region
      %s161 = ssub.s32 %s11, 1
      // Predicated region
      $region13: #{_lambda_.7} parent=11 // pred_check
        %p162 = pneg %p58
      $region14: #{_lambda_.7} parent=11 // pred_check_branch
        %164 = sbr.rel (%p162) target = $region16
      $region15: #{_lambda_.7} parent=11 // pred_region
        _
      $region16: #{_lambda_.7} parent=11 // pred_fallthru
        _
      // Predicated region
      $region17: #{_lambda_.7} parent=11 // pred_check
        %p165 = pneg %p79
      $region18: #{_lambda_.7} parent=11 // pred_check_branch
        %167 = sbr.rel (%p165) target = $region20
      $region19: #{_lambda_.7} parent=11 // pred_region
        _
      $region20: #{_lambda_.7} parent=11 // pred_fallthru
        _
      // Predicated region
      $region21: #{_lambda_.7} parent=11 // pred_check
        %p168 = pneg %p100
      $region22: #{_lambda_.7} parent=11 // pred_check_branch
        %170 = sbr.rel (%p168) target = $region24
      $region23: #{_lambda_.7} parent=11 // pred_region
        _
      $region24: #{_lambda_.7} parent=11 // pred_fallthru
        _
      // Predicated region
      $region25: #{_lambda_.7} parent=11 // pred_check
        %p171 = pneg %p121
      $region26: #{_lambda_.7} parent=11 // pred_check_branch
        %173 = sbr.rel (%p171) target = $region28
      $region27: #{_lambda_.7} parent=11 // pred_region
        _
      $region28: #{_lambda_.7} parent=11 // pred_fallthru
        _
    $region12: #{_lambda_.7} parent=5 // pred_fallthru
      _
    %p174 = scmp.lt.s32.totalorder %s11, 2
    // Predicated region
    $region29: #{_lambda_.7} parent=5 // pred_check
      %p175 = pneg %p174
    $region30: #{_lambda_.7} parent=5 // pred_check_branch
      %177 = sbr.rel (%p175) target = $region32
    $region31: #{_lambda_.7} parent=5 // pred_region
      // Predicated region
      $region33: #{_lambda_.7} parent=31 // pred_check
        %p178 = pneg %p31
      $region34: #{_lambda_.7} parent=31 // pred_check_branch
        %180 = sbr.rel (%p178) target = $region36
      $region35: #{_lambda_.7} parent=31 // pred_region
        %p181 = scmp.lt.s32.totalorder %s11, 1
        %s182 = scalar_select %p181, %s11, 1
        %s183 = smul.addr %s182, 8
        %s184 = smul.addr %s183, 8
        %s185 = scalar_lea.vmem %s0, %s184
      $region36: #{_lambda_.7} parent=31 // pred_fallthru
        _
    $region32: #{_lambda_.7} parent=5 // pred_fallthru
      _
    %p186 = scmp.le.s32.totalorder 1, %s11
    %p187 = scmp.lt.s32.totalorder %s11, 3
    %p188 = pnand %p186, %p187
    %p189 = pneg %p188
    // Predicated region
    $region37: #{_lambda_.7} parent=5 // pred_check
      _
    $region38: #{_lambda_.7} parent=5 // pred_check_branch
      %191 = sbr.rel (%p188) target = $region40
    $region39: #{_lambda_.7} parent=5 // pred_region
      %s192 = ssub.s32 %s11, 1
      %p193 = scmp.lt.s32.totalorder %s16, 1
      %s194 = scalar_select %p193, %s16, 1
      %s195 = smul.addr %s194, 8
      %s196 = smul.addr %s195, 8
      %s197 = scalar_lea.vmem %s0, %s196
      %p198 = pneg %p37
      %p199 = pneg %p34
      %p200 = pneg %p58
      %p201 = pneg %p55
      %p202 = pneg %p79
      %p203 = pneg %p76
      %p204 = pneg %p100
      %p205 = pneg %p97
      %p206 = pneg %p121
      %p207 = pneg %p118
      %p208 = pneg %p147
      %p209 = pneg %p144
      %p210 = scmp.lt.s32.totalorder %s16, 1
      %s211 = scalar_select %p210, %s16, 1
      %s212 = smul.addr %s211, 8
      %s213 = smul.addr %s212, 8
      %s214 = scalar_lea.vmem %s5, %s213
      %p215 = scmp.lt.s32.totalorder %s16, 1
      %s216 = scalar_select %p215, %s16, 1
      %s217 = smul.addr %s216, 8
      %s218 = smul.addr %s217, 8
      %s219 = scalar_lea.vmem %s0, %s218
      %p220 = scmp.lt.s32.totalorder %s16, 1
      %s221 = scalar_select %p220, %s16, 1
      %s222 = smul.addr %s221, 8
      %s223 = smul.addr %s222, 8
      %s224 = scalar_lea.vmem %s5, %s223
      %v226 = vld [vmem:[%s219] sm:$0xff]
      %v227 = vld [vmem:[%s219 + $0x8] sm:$0xff]
      %v228 = vld [vmem:[%s219 + $0x10] sm:$0xff]
      %v229 = vld [vmem:[%s219 + $0x18] sm:$0xff]
      %v230 = vld [vmem:[%s219 + $0x20] sm:$0xff]
      %v231 = vld [vmem:[%s219 + $0x28] sm:$0xff]
      %v232 = vld [vmem:[%s219 + $0x30] sm:$0xff]
      %v233 = vld [vmem:[%s219 + $0x38] sm:$0xff]
      %v234 = vpack.c.bf16 %v227, %v226
      %v235 = vpack.c.bf16 %v229, %v228
      %v236 = vpack.c.bf16 %v231, %v230
      %v237 = vpack.c.bf16 %v233, %v232
      %v238 = vld [vmem:[%s1] sm:$0xf]
      %v239 = vld [vmem:[%s1 + $0x4] sm:$0xf]
      %v240 = vld [vmem:[%s1 + $0x8] sm:$0xf]
      %v241 = vld [vmem:[%s1 + $0xc] sm:$0xf]
      %v242 = vld [vmem:[%s1 + $0x10] sm:$0xf]
      %v243 = vld [vmem:[%s1 + $0x14] sm:$0xf]
      %v244 = vld [vmem:[%s1 + $0x18] sm:$0xf]
      %v245 = vld [vmem:[%s1 + $0x1c] sm:$0xf]
      %v246 = vld [vmem:[%s2] sm:$0x1]
      %v248 = vlaneseq
      %v249 = vshrl.u32 %v248, 7
      %v250 = vsub.s32 0, %v249
      %v251 = vrot.slane %v246, %v250
      %v261 = vunpack.c.l.b16 %v238
      %v262 = vunpack.c.l.b16 %v239
      %v263 = vunpack.c.l.b16 %v240
      %v264 = vunpack.c.l.b16 %v241
      %v265 = vunpack.c.l.b16 %v242
      %v266 = vunpack.c.l.b16 %v243
      %v267 = vunpack.c.l.b16 %v244
      %v268 = vunpack.c.l.b16 %v245
      %v269 = vpack.c.b16 %v262, %v261
      %v270 = vpack.c.b16 %v264, %v263
      %v271 = vpack.c.b16 %v266, %v265
      %v272 = vpack.c.b16 %v268, %v267
      %vm277 = vcmask 523264
      %v279 = vsel %vm277, %v234, 0
      %v282 = vsel %vm277, %v235, 0
      %v285 = vsel %vm277, %v236, 0
      %v288 = vsel %vm277, %v237, 0
      %290 = vmatprep.subr.bf16.mxu0 0
      %291 = vmatpush1.bf16.msra.mxu0 %v269
      %292 = vmatprep.subr.bf16.mxu0 0
      %293 = vmatpush1.bf16.msra.mxu0 %v270
      %294 = vmatprep.subr.bf16.mxu0 0
      %295 = vmatpush1.bf16.msra.mxu0 %v271
      %296 = vmatprep.subr.bf16.mxu0 0
      %297 = vmatpush1.bf16.msra.mxu0 %v272
      %298 = vmatprep.subr.bf16.mxu0 0
      %299 = vmatpush1.bf16.msra.mxu0 0
      %300 = vmatprep.subr.bf16.mxu0 0
      %301 = vmatpush1.bf16.msra.mxu0 0
      %302 = vmatprep.subr.bf16.mxu0 0
      %303 = vmatpush1.bf16.msra.mxu0 0
      %304 = vmatprep.subr.bf16.mxu0 0
      %305 = vmatpush1.bf16.msra.mxu0 0
      %306 = vmatprep.subr.bf16.mxu0 0
      %307 = vmatpush1.bf16.msra.mxu0 0
      %308 = vmatprep.subr.bf16.mxu0 0
      %309 = vmatpush1.bf16.msra.mxu0 0
      %310 = vmatprep.subr.bf16.mxu0 0
      %311 = vmatpush1.bf16.msra.mxu0 0
      %312 = vmatprep.subr.bf16.mxu0 0
      %313 = vmatpush1.bf16.msra.mxu0 0
      %314 = vmatprep.subr.bf16.mxu0 0
      %315 = vmatpush1.bf16.msra.mxu0 0
      %316 = vmatprep.subr.bf16.mxu0 0
      %317 = vmatpush1.bf16.msra.mxu0 0
      %318 = vmatprep.subr.bf16.mxu0 0
      %319 = vmatpush1.bf16.msra.mxu0 0
      %320 = vmatprep.subr.bf16.mxu0 0
      %321 = vmatpush1.bf16.msra.mxu0 0
      %322 = vmatprep.mubr.bf16.mxu0 0
      %323 = vmatmul.mubr.bf16.gmra.mrb[0].mxu0 %v279
      %v324 = vpop.f32.mrb[0].mxu0
      %v325 = vadd.f32 %v251, %v324
      %v326 = vpop.f32.mrb[0].mxu0
      %v327 = vpop.f32.mrb[0].mxu0
      %v328 = vadd.f32 %v251, %v327
      %v329 = vpop.f32.mrb[0].mxu0
      %330 = vmatprep.mubr.bf16.mxu0 0
      %331 = vmatmul.mubr.bf16.gmra.mrb[0].mxu0 %v282
      %v332 = vpop.f32.mrb[0].mxu0
      %v333 = vadd.f32 %v251, %v332
      %v334 = vpop.f32.mrb[0].mxu0
      %v335 = vpop.f32.mrb[0].mxu0
      %v336 = vadd.f32 %v251, %v335
      %v337 = vpop.f32.mrb[0].mxu0
      %338 = vmatprep.mubr.bf16.mxu0 0
      %339 = vmatmul.mubr.bf16.gmra.mrb[0].mxu0 %v285
      %v340 = vpop.f32.mrb[0].mxu0
      %v341 = vadd.f32 %v251, %v340
      %v342 = vpop.f32.mrb[0].mxu0
      %v343 = vpop.f32.mrb[0].mxu0
      %v344 = vadd.f32 %v251, %v343
      %v345 = vpop.f32.mrb[0].mxu0
      %346 = vmatprep.mubr.bf16.mxu0 0
      %347 = vmatmul.mubr.bf16.gmra.mrb[0].mxu0 %v288
      %v348 = vpop.f32.mrb[0].mxu0
      %v349 = vadd.f32 %v251, %v348
      %v350 = vpop.f32.mrb[0].mxu0
      %v351 = vpop.f32.mrb[0].mxu0
      %v352 = vadd.f32 %v251, %v351
      %v353 = vpop.f32.mrb[0].mxu0
      %354 = vdwg.mxu0
      %vm355 = vcmask 31744
      %356 = vst.msk [vmem:[#allocation2] sm:$0xff] %vm355, 0.0
      %vm357 = vcmask 25600
      %358 = vst.msk [vmem:[#allocation2 + $0x8] sm:$0x3] %vm357, 0.0
      %359 = vst.msk [vmem:[#allocation2 + $0x10] sm:$0xff] %vm355, 0.0
      %360 = vst.msk [vmem:[#allocation2 + $0x18] sm:$0x3] %vm357, 0.0
      %361 = vst.msk [vmem:[#allocation2 + $0x20] sm:$0xff] %vm355, 0.0
      %362 = vst.msk [vmem:[#allocation2 + $0x28] sm:$0x3] %vm357, 0.0
      %363 = vst.msk [vmem:[#allocation2 + $0x30] sm:$0xff] %vm355, 0.0
      %364 = vst.msk [vmem:[#allocation2 + $0x38] sm:$0x3] %vm357, 0.0
      %365 = vst.msk [vmem:[#allocation2 + $0x40] sm:$0xff] %vm355, 0.0
      %366 = vst.msk [vmem:[#allocation2 + $0x48] sm:$0x3] %vm357, 0.0
      %367 = vst.msk [vmem:[#allocation2 + $0x50] sm:$0xff] %vm355, 0.0
      %368 = vst.msk [vmem:[#allocation2 + $0x58] sm:$0x3] %vm357, 0.0
      %369 = vst.msk [vmem:[#allocation2 + $0x60] sm:$0xff] %vm355, 0.0
      %370 = vst.msk [vmem:[#allocation2 + $0x68] sm:$0x3] %vm357, 0.0
      %371 = vst.msk [vmem:[#allocation2 + $0x70] sm:$0xff] %vm355, 0.0
      %372 = vst.msk [vmem:[#allocation2 + $0x78] sm:$0x3] %vm357, 0.0
      %373 = vst.msk [vmem:[#allocation2 + $0x80] sm:$0xff] %vm355, 0.0
      %374 = vst.msk [vmem:[#allocation2 + $0x88] sm:$0x3] %vm357, 0.0
      %375 = vst.msk [vmem:[#allocation2 + $0x90] sm:$0xff] %vm355, 0.0
      %376 = vst.msk [vmem:[#allocation2 + $0x98] sm:$0x3] %vm357, 0.0
      %s377 = scalar_lea.vmem [#allocation2], 16
      %378 = vst.msk [vmem:[%s377 + $0x1] sm:$0xff] %vm355, %v325
      %s379 = scalar_lea.vmem [#allocation2], 32
      %380 = vst.msk [vmem:[%s379 + $0x1] sm:$0xff] %vm355, %v328
      %s381 = scalar_lea.vmem [#allocation2], 48
      %382 = vst.msk [vmem:[%s381 + $0x1] sm:$0xff] %vm355, %v333
      %s383 = scalar_lea.vmem [#allocation2], 64
      %384 = vst.msk [vmem:[%s383 + $0x1] sm:$0xff] %vm355, %v336
      %s385 = scalar_lea.vmem [#allocation2], 80
      %386 = vst.msk [vmem:[%s385 + $0x1] sm:$0xff] %vm355, %v341
      %s387 = scalar_lea.vmem [#allocation2], 96
      %388 = vst.msk [vmem:[%s387 + $0x1] sm:$0xff] %vm355, %v344
      %s389 = scalar_lea.vmem [#allocation2], 112
      %390 = vst.msk [vmem:[%s389 + $0x1] sm:$0xff] %vm355, %v349
      %s391 = scalar_lea.vmem [#allocation2], 128
      %392 = vst.msk [vmem:[%s391 + $0x1] sm:$0xff] %vm355, %v352
      %v393 = vld [vmem:[#allocation2] sm:$0xff]
      %v394 = vld [vmem:[%s3] sm:$0x1]
      %v395 = vlaneseq
      %v396 = vshrl.u32 %v395, 7
      %v397 = vsub.s32 0, %v396
      %v398 = vrot.slane %v394, %v397
      %v399 = vmul.f32 %v393, %v398
      %v400 = vadd.f32 %v399, 0.0
      %v401 = vld [vmem:[#allocation2 + $0x1] sm:$0xff]
      %v402 = vld [vmem:[%s3 + $0x1] sm:$0x1]
      %v403 = vlaneseq
      %v404 = vshrl.u32 %v403, 7
      %v405 = vsub.s32 0, %v404
      %v406 = vrot.slane %v402, %v405
      %v407 = vmul.f32 %v401, %v406
      %v408 = vadd.f32 %v400, %v407
      %v409 = vld [vmem:[#allocation2 + $0x2] sm:$0xff]
      %v410 = vld [vmem:[%s3 + $0x2] sm:$0x1]
      %v411 = vlaneseq
      %v412 = vshrl.u32 %v411, 7
      %v413 = vsub.s32 0, %v412
      %v414 = vrot.slane %v410, %v413
      %v415 = vmul.f32 %v409, %v414
      %v416 = vadd.f32 %v408, %v415
      %v417 = vld [vmem:[%s377] sm:$0xff]
      %v418 = vld [vmem:[%s3 + $0x3] sm:$0x1]
      %v419 = vlaneseq
      %v420 = vshrl.u32 %v419, 7
      %v421 = vsub.s32 0, %v420
      %v422 = vrot.slane %v418, %v421
      %v423 = vmul.f32 %v417, %v422
      %v424 = vadd.f32 %v416, %v423
      %v425 = vld [vmem:[%s377 + $0x1] sm:$0xff]
      %v426 = vld [vmem:[%s3 + $0x4] sm:$0x1]
      %v427 = vlaneseq
      %v428 = vshrl.u32 %v427, 7
      %v429 = vsub.s32 0, %v428
      %v430 = vrot.slane %v426, %v429
      %v431 = vmul.f32 %v425, %v430
      %v432 = vadd.f32 %v424, %v431
      %v433 = vld [vmem:[%s377 + $0x2] sm:$0xff]
      %v434 = vld [vmem:[%s3 + $0x5] sm:$0x1]
      %v435 = vlaneseq
      %v436 = vshrl.u32 %v435, 7
      %v437 = vsub.s32 0, %v436
      %v438 = vrot.slane %v434, %v437
      %v439 = vmul.f32 %v433, %v438
      %v440 = vadd.f32 %v432, %v439
      %v441 = vld [vmem:[%s379] sm:$0xff]
      %v442 = vld [vmem:[%s3 + $0x6] sm:$0x1]
      %v443 = vlaneseq
      %v444 = vshrl.u32 %v443, 7
      %v445 = vsub.s32 0, %v444
      %v446 = vrot.slane %v442, %v445
      %v447 = vmul.f32 %v441, %v446
      %v448 = vadd.f32 %v440, %v447
      %v449 = vld [vmem:[%s379 + $0x1] sm:$0xff]
      %v450 = vld [vmem:[%s3 + $0x7] sm:$0x1]
      %v451 = vlaneseq
      %v452 = vshrl.u32 %v451, 7
      %v453 = vsub.s32 0, %v452
      %v454 = vrot.slane %v450, %v453
      %v455 = vmul.f32 %v449, %v454
      %v456 = vadd.f32 %v448, %v455
      %v457 = vld [vmem:[%s379 + $0x2] sm:$0xff]
      %v458 = vld [vmem:[%s3 + $0x8] sm:$0x1]
      %v459 = vlaneseq
      %v460 = vshrl.u32 %v459, 7
      %v461 = vsub.s32 0, %v460
      %v462 = vrot.slane %v458, %v461
      %v463 = vmul.f32 %v457, %v462
      %v464 = vadd.f32 %v456, %v463
      %465 = vst.msk [vmem:[#allocation3] sm:$0xff] %vm355, %v464
      %v466 = vld [vmem:[%s377] sm:$0xff]
      %v467 = vld [vmem:[%s3] sm:$0x1]
      %v468 = vlaneseq
      %v469 = vshrl.u32 %v468, 7
      %v470 = vsub.s32 0, %v469
      %v471 = vrot.slane %v467, %v470
      %v472 = vmul.f32 %v466, %v471
      %v473 = vadd.f32 %v472, 0.0
      %v474 = vld [vmem:[%s377 + $0x1] sm:$0xff]
      %v475 = vld [vmem:[%s3 + $0x1] sm:$0x1]
      %v476 = vlaneseq
      %v477 = vshrl.u32 %v476, 7
      %v478 = vsub.s32 0, %v477
      %v479 = vrot.slane %v475, %v478
      %v480 = vmul.f32 %v474, %v479
      %v481 = vadd.f32 %v473, %v480
      %v482 = vld [vmem:[%s377 + $0x2] sm:$0xff]
      %v483 = vld [vmem:[%s3 + $0x2] sm:$0x1]
      %v484 = vlaneseq
      %v485 = vshrl.u32 %v484, 7
      %v486 = vsub.s32 0, %v485
      %v487 = vrot.slane %v483, %v486
      %v488 = vmul.f32 %v482, %v487
      %v489 = vadd.f32 %v481, %v488
      %v490 = vld [vmem:[%s379] sm:$0xff]
      %v491 = vld [vmem:[%s3 + $0x3] sm:$0x1]
      %v492 = vlaneseq
      %v493 = vshrl.u32 %v492, 7
      %v494 = vsub.s32 0, %v493
      %v495 = vrot.slane %v491, %v494
      %v496 = vmul.f32 %v490, %v495
      %v497 = vadd.f32 %v489, %v496
      %v498 = vld [vmem:[%s379 + $0x1] sm:$0xff]
      %v499 = vld [vmem:[%s3 + $0x4] sm:$0x1]
      %v500 = vlaneseq
      %v501 = vshrl.u32 %v500, 7
      %v502 = vsub.s32 0, %v501
      %v503 = vrot.slane %v499, %v502
      %v504 = vmul.f32 %v498, %v503
      %v505 = vadd.f32 %v497, %v504
      %v506 = vld [vmem:[%s379 + $0x2] sm:$0xff]
      %v507 = vld [vmem:[%s3 + $0x5] sm:$0x1]
      %v508 = vlaneseq
      %v509 = vshrl.u32 %v508, 7
      %v510 = vsub.s32 0, %v509
      %v511 = vrot.slane %v507, %v510
      %v512 = vmul.f32 %v506, %v511
      %v513 = vadd.f32 %v505, %v512
      %v514 = vld [vmem:[%s381] sm:$0xff]
      %v515 = vld [vmem:[%s3 + $0x6] sm:$0x1]
      %v516 = vlaneseq
      %v517 = vshrl.u32 %v516, 7
      %v518 = vsub.s32 0, %v517
      %v519 = vrot.slane %v515, %v518
      %v520 = vmul.f32 %v514, %v519
      %v521 = vadd.f32 %v513, %v520
      %v522 = vld [vmem:[%s381 + $0x1] sm:$0xff]
      %v523 = vld [vmem:[%s3 + $0x7] sm:$0x1]
      %v524 = vlaneseq
      %v525 = vshrl.u32 %v524, 7
      %v526 = vsub.s32 0, %v525
      %v527 = vrot.slane %v523, %v526
      %v528 = vmul.f32 %v522, %v527
      %v529 = vadd.f32 %v521, %v528
      %v530 = vld [vmem:[%s381 + $0x2] sm:$0xff]
      %v531 = vld [vmem:[%s3 + $0x8] sm:$0x1]
      %v532 = vlaneseq
      %v533 = vshrl.u32 %v532, 7
      %v534 = vsub.s32 0, %v533
      %v535 = vrot.slane %v531, %v534
      %v536 = vmul.f32 %v530, %v535
      %v537 = vadd.f32 %v529, %v536
      %538 = vst.msk [vmem:[#allocation3 + $0x8] sm:$0xff] %vm355, %v537
      %v539 = vld [vmem:[%s379] sm:$0xff]
      %v540 = vld [vmem:[%s3] sm:$0x1]
      %v541 = vlaneseq
      %v542 = vshrl.u32 %v541, 7
      %v543 = vsub.s32 0, %v542
      %v544 = vrot.slane %v540, %v543
      %v545 = vmul.f32 %v539, %v544
      %v546 = vadd.f32 %v545, 0.0
      %v547 = vld [vmem:[%s379 + $0x1] sm:$0xff]
      %v548 = vld [vmem:[%s3 + $0x1] sm:$0x1]
      %v549 = vlaneseq
      %v550 = vshrl.u32 %v549, 7
      %v551 = vsub.s32 0, %v550
      %v552 = vrot.slane %v548, %v551
      %v553 = vmul.f32 %v547, %v552
      %v554 = vadd.f32 %v546, %v553
      %v555 = vld [vmem:[%s379 + $0x2] sm:$0xff]
      %v556 = vld [vmem:[%s3 + $0x2] sm:$0x1]
      %v557 = vlaneseq
      %v558 = vshrl.u32 %v557, 7
      %v559 = vsub.s32 0, %v558
      %v560 = vrot.slane %v556, %v559
      %v561 = vmul.f32 %v555, %v560
      %v562 = vadd.f32 %v554, %v561
      %v563 = vld [vmem:[%s381] sm:$0xff]
      %v564 = vld [vmem:[%s3 + $0x3] sm:$0x1]
      %v565 = vlaneseq
      %v566 = vshrl.u32 %v565, 7
      %v567 = vsub.s32 0, %v566
      %v568 = vrot.slane %v564, %v567
      %v569 = vmul.f32 %v563, %v568
      %v570 = vadd.f32 %v562, %v569
      %v571 = vld [vmem:[%s381 + $0x1] sm:$0xff]
      %v572 = vld [vmem:[%s3 + $0x4] sm:$0x1]
      %v573 = vlaneseq
      %v574 = vshrl.u32 %v573, 7
      %v575 = vsub.s32 0, %v574
      %v576 = vrot.slane %v572, %v575
      %v577 = vmul.f32 %v571, %v576
      %v578 = vadd.f32 %v570, %v577
      %v579 = vld [vmem:[%s381 + $0x2] sm:$0xff]
      %v580 = vld [vmem:[%s3 + $0x5] sm:$0x1]
      %v581 = vlaneseq
      %v582 = vshrl.u32 %v581, 7
      %v583 = vsub.s32 0, %v582
      %v584 = vrot.slane %v580, %v583
      %v585 = vmul.f32 %v579, %v584
      %v586 = vadd.f32 %v578, %v585
      %v587 = vld [vmem:[%s383] sm:$0xff]
      %v588 = vld [vmem:[%s3 + $0x6] sm:$0x1]
      %v589 = vlaneseq
      %v590 = vshrl.u32 %v589, 7
      %v591 = vsub.s32 0, %v590
      %v592 = vrot.slane %v588, %v591
      %v593 = vmul.f32 %v587, %v592
      %v594 = vadd.f32 %v586, %v593
      %v595 = vld [vmem:[%s383 + $0x1] sm:$0xff]
      %v596 = vld [vmem:[%s3 + $0x7] sm:$0x1]
      %v597 = vlaneseq
      %v598 = vshrl.u32 %v597, 7
      %v599 = vsub.s32 0, %v598
      %v600 = vrot.slane %v596, %v599
      %v601 = vmul.f32 %v595, %v600
      %v602 = vadd.f32 %v594, %v601
      %v603 = vld [vmem:[%s383 + $0x2] sm:$0xff]
      %v604 = vld [vmem:[%s3 + $0x8] sm:$0x1]
      %v605 = vlaneseq
      %v606 = vshrl.u32 %v605, 7
      %v607 = vsub.s32 0, %v606
      %v608 = vrot.slane %v604, %v607
      %v609 = vmul.f32 %v603, %v608
      %v610 = vadd.f32 %v602, %v609
      %611 = vst.msk [vmem:[#allocation3 + $0x10] sm:$0xff] %vm355, %v610
      %v612 = vld [vmem:[%s381] sm:$0xff]
      %v613 = vld [vmem:[%s3] sm:$0x1]
      %v614 = vlaneseq
      %v615 = vshrl.u32 %v614, 7
      %v616 = vsub.s32 0, %v615
      %v617 = vrot.slane %v613, %v616
      %v618 = vmul.f32 %v612, %v617
      %v619 = vadd.f32 %v618, 0.0
      %v620 = vld [vmem:[%s381 + $0x1] sm:$0xff]
      %v621 = vld [vmem:[%s3 + $0x1] sm:$0x1]
      %v622 = vlaneseq
      %v623 = vshrl.u32 %v622, 7
      %v624 = vsub.s32 0, %v623
      %v625 = vrot.slane %v621, %v624
      %v626 = vmul.f32 %v620, %v625
      %v627 = vadd.f32 %v619, %v626
      %v628 = vld [vmem:[%s381 + $0x2] sm:$0xff]
      %v629 = vld [vmem:[%s3 + $0x2] sm:$0x1]
      %v630 = vlaneseq
      %v631 = vshrl.u32 %v630, 7
      %v632 = vsub.s32 0, %v631
      %v633 = vrot.slane %v629, %v632
      %v634 = vmul.f32 %v628, %v633
      %v635 = vadd.f32 %v627, %v634
      %v636 = vld [vmem:[%s383] sm:$0xff]
      %v637 = vld [vmem:[%s3 + $0x3] sm:$0x1]
      %v638 = vlaneseq
      %v639 = vshrl.u32 %v638, 7
      %v640 = vsub.s32 0, %v639
      %v641 = vrot.slane %v637, %v640
      %v642 = vmul.f32 %v636, %v641
      %v643 = vadd.f32 %v635, %v642
      %v644 = vld [vmem:[%s383 + $0x1] sm:$0xff]
      %v645 = vld [vmem:[%s3 + $0x4] sm:$0x1]
      %v646 = vlaneseq
      %v647 = vshrl.u32 %v646, 7
      %v648 = vsub.s32 0, %v647
      %v649 = vrot.slane %v645, %v648
      %v650 = vmul.f32 %v644, %v649
      %v651 = vadd.f32 %v643, %v650
      %v652 = vld [vmem:[%s383 + $0x2] sm:$0xff]
      %v653 = vld [vmem:[%s3 + $0x5] sm:$0x1]
      %v654 = vlaneseq
      %v655 = vshrl.u32 %v654, 7
      %v656 = vsub.s32 0, %v655
      %v657 = vrot.slane %v653, %v656
      %v658 = vmul.f32 %v652, %v657
      %v659 = vadd.f32 %v651, %v658
      %v660 = vld [vmem:[%s385] sm:$0xff]
      %v661 = vld [vmem:[%s3 + $0x6] sm:$0x1]
      %v662 = vlaneseq
      %v663 = vshrl.u32 %v662, 7
      %v664 = vsub.s32 0, %v663
      %v665 = vrot.slane %v661, %v664
      %v666 = vmul.f32 %v660, %v665
      %v667 = vadd.f32 %v659, %v666
      %v668 = vld [vmem:[%s385 + $0x1] sm:$0xff]
      %v669 = vld [vmem:[%s3 + $0x7] sm:$0x1]
      %v670 = vlaneseq
      %v671 = vshrl.u32 %v670, 7
      %v672 = vsub.s32 0, %v671
      %v673 = vrot.slane %v669, %v672
      %v674 = vmul.f32 %v668, %v673
      %v675 = vadd.f32 %v667, %v674
      %v676 = vld [vmem:[%s385 + $0x2] sm:$0xff]
      %v677 = vld [vmem:[%s3 + $0x8] sm:$0x1]
      %v678 = vlaneseq
      %v679 = vshrl.u32 %v678, 7
      %v680 = vsub.s32 0, %v679
      %v681 = vrot.slane %v677, %v680
      %v682 = vmul.f32 %v676, %v681
      %v683 = vadd.f32 %v675, %v682
      %684 = vst.msk [vmem:[#allocation3 + $0x18] sm:$0xff] %vm355, %v683
      %v685 = vld [vmem:[%s383] sm:$0xff]
      %v686 = vld [vmem:[%s3] sm:$0x1]
      %v687 = vlaneseq
      %v688 = vshrl.u32 %v687, 7
      %v689 = vsub.s32 0, %v688
      %v690 = vrot.slane %v686, %v689
      %v691 = vmul.f32 %v685, %v690
      %v692 = vadd.f32 %v691, 0.0
      %v693 = vld [vmem:[%s383 + $0x1] sm:$0xff]
      %v694 = vld [vmem:[%s3 + $0x1] sm:$0x1]
      %v695 = vlaneseq
      %v696 = vshrl.u32 %v695, 7
      %v697 = vsub.s32 0, %v696
      %v698 = vrot.slane %v694, %v697
      %v699 = vmul.f32 %v693, %v698
      %v700 = vadd.f32 %v692, %v699
      %v701 = vld [vmem:[%s383 + $0x2] sm:$0xff]
      %v702 = vld [vmem:[%s3 + $0x2] sm:$0x1]
      %v703 = vlaneseq
      %v704 = vshrl.u32 %v703, 7
      %v705 = vsub.s32 0, %v704
      %v706 = vrot.slane %v702, %v705
      %v707 = vmul.f32 %v701, %v706
      %v708 = vadd.f32 %v700, %v707
      %v709 = vld [vmem:[%s385] sm:$0xff]
      %v710 = vld [vmem:[%s3 + $0x3] sm:$0x1]
      %v711 = vlaneseq
      %v712 = vshrl.u32 %v711, 7
      %v713 = vsub.s32 0, %v712
      %v714 = vrot.slane %v710, %v713
      %v715 = vmul.f32 %v709, %v714
      %v716 = vadd.f32 %v708, %v715
      %v717 = vld [vmem:[%s385 + $0x1] sm:$0xff]
      %v718 = vld [vmem:[%s3 + $0x4] sm:$0x1]
      %v719 = vlaneseq
      %v720 = vshrl.u32 %v719, 7
      %v721 = vsub.s32 0, %v720
      %v722 = vrot.slane %v718, %v721
      %v723 = vmul.f32 %v717, %v722
      %v724 = vadd.f32 %v716, %v723
      %v725 = vld [vmem:[%s385 + $0x2] sm:$0xff]
      %v726 = vld [vmem:[%s3 + $0x5] sm:$0x1]
      %v727 = vlaneseq
      %v728 = vshrl.u32 %v727, 7
      %v729 = vsub.s32 0, %v728
      %v730 = vrot.slane %v726, %v729
      %v731 = vmul.f32 %v725, %v730
      %v732 = vadd.f32 %v724, %v731
      %v733 = vld [vmem:[%s387] sm:$0xff]
      %v734 = vld [vmem:[%s3 + $0x6] sm:$0x1]
      %v735 = vlaneseq
      %v736 = vshrl.u32 %v735, 7
      %v737 = vsub.s32 0, %v736
      %v738 = vrot.slane %v734, %v737
      %v739 = vmul.f32 %v733, %v738
      %v740 = vadd.f32 %v732, %v739
      %v741 = vld [vmem:[%s387 + $0x1] sm:$0xff]
      %v742 = vld [vmem:[%s3 + $0x7] sm:$0x1]
      %v743 = vlaneseq
      %v744 = vshrl.u32 %v743, 7
      %v745 = vsub.s32 0, %v744
      %v746 = vrot.slane %v742, %v745
      %v747 = vmul.f32 %v741, %v746
      %v748 = vadd.f32 %v740, %v747
      %v749 = vld [vmem:[%s387 + $0x2] sm:$0xff]
      %v750 = vld [vmem:[%s3 + $0x8] sm:$0x1]
      %v751 = vlaneseq
      %v752 = vshrl.u32 %v751, 7
      %v753 = vsub.s32 0, %v752
      %v754 = vrot.slane %v750, %v753
      %v755 = vmul.f32 %v749, %v754
      %v756 = vadd.f32 %v748, %v755
      %757 = vst.msk [vmem:[#allocation3 + $0x20] sm:$0xff] %vm355, %v756
      %v758 = vld [vmem:[%s385] sm:$0xff]
      %v759 = vld [vmem:[%s3] sm:$0x1]
      %v760 = vlaneseq
      %v761 = vshrl.u32 %v760, 7
      %v762 = vsub.s32 0, %v761
      %v763 = vrot.slane %v759, %v762
      %v764 = vmul.f32 %v758, %v763
      %v765 = vadd.f32 %v764, 0.0
      %v766 = vld [vmem:[%s385 + $0x1] sm:$0xff]
      %v767 = vld [vmem:[%s3 + $0x1] sm:$0x1]
      %v768 = vlaneseq
      %v769 = vshrl.u32 %v768, 7
      %v770 = vsub.s32 0, %v769
      %v771 = vrot.slane %v767, %v770
      %v772 = vmul.f32 %v766, %v771
      %v773 = vadd.f32 %v765, %v772
      %v774 = vld [vmem:[%s385 + $0x2] sm:$0xff]
      %v775 = vld [vmem:[%s3 + $0x2] sm:$0x1]
      %v776 = vlaneseq
      %v777 = vshrl.u32 %v776, 7
      %v778 = vsub.s32 0, %v777
      %v779 = vrot.slane %v775, %v778
      %v780 = vmul.f32 %v774, %v779
      %v781 = vadd.f32 %v773, %v780
      %v782 = vld [vmem:[%s387] sm:$0xff]
      %v783 = vld [vmem:[%s3 + $0x3] sm:$0x1]
      %v784 = vlaneseq
      %v785 = vshrl.u32 %v784, 7
      %v786 = vsub.s32 0, %v785
      %v787 = vrot.slane %v783, %v786
      %v788 = vmul.f32 %v782, %v787
      %v789 = vadd.f32 %v781, %v788
      %v790 = vld [vmem:[%s387 + $0x1] sm:$0xff]
      %v791 = vld [vmem:[%s3 + $0x4] sm:$0x1]
      %v792 = vlaneseq
      %v793 = vshrl.u32 %v792, 7
      %v794 = vsub.s32 0, %v793
      %v795 = vrot.slane %v791, %v794
      %v796 = vmul.f32 %v790, %v795
      %v797 = vadd.f32 %v789, %v796
      %v798 = vld [vmem:[%s387 + $0x2] sm:$0xff]
      %v799 = vld [vmem:[%s3 + $0x5] sm:$0x1]
      %v800 = vlaneseq
      %v801 = vshrl.u32 %v800, 7
      %v802 = vsub.s32 0, %v801
      %v803 = vrot.slane %v799, %v802
      %v804 = vmul.f32 %v798, %v803
      %v805 = vadd.f32 %v797, %v804
      %v806 = vld [vmem:[%s389] sm:$0xff]
      %v807 = vld [vmem:[%s3 + $0x6] sm:$0x1]
      %v808 = vlaneseq
      %v809 = vshrl.u32 %v808, 7
      %v810 = vsub.s32 0, %v809
      %v811 = vrot.slane %v807, %v810
      %v812 = vmul.f32 %v806, %v811
      %v813 = vadd.f32 %v805, %v812
      %v814 = vld [vmem:[%s389 + $0x1] sm:$0xff]
      %v815 = vld [vmem:[%s3 + $0x7] sm:$0x1]
      %v816 = vlaneseq
      %v817 = vshrl.u32 %v816, 7
      %v818 = vsub.s32 0, %v817
      %v819 = vrot.slane %v815, %v818
      %v820 = vmul.f32 %v814, %v819
      %v821 = vadd.f32 %v813, %v820
      %v822 = vld [vmem:[%s389 + $0x2] sm:$0xff]
      %v823 = vld [vmem:[%s3 + $0x8] sm:$0x1]
      %v824 = vlaneseq
      %v825 = vshrl.u32 %v824, 7
      %v826 = vsub.s32 0, %v825
      %v827 = vrot.slane %v823, %v826
      %v828 = vmul.f32 %v822, %v827
      %v829 = vadd.f32 %v821, %v828
      %830 = vst.msk [vmem:[#allocation3 + $0x28] sm:$0xff] %vm355, %v829
      %v831 = vld [vmem:[%s387] sm:$0xff]
      %v832 = vld [vmem:[%s3] sm:$0x1]
      %v833 = vlaneseq
      %v834 = vshrl.u32 %v833, 7
      %v835 = vsub.s32 0, %v834
      %v836 = vrot.slane %v832, %v835
      %v837 = vmul.f32 %v831, %v836
      %v838 = vadd.f32 %v837, 0.0
      %v839 = vld [vmem:[%s387 + $0x1] sm:$0xff]
      %v840 = vld [vmem:[%s3 + $0x1] sm:$0x1]
      %v841 = vlaneseq
      %v842 = vshrl.u32 %v841, 7
      %v843 = vsub.s32 0, %v842
      %v844 = vrot.slane %v840, %v843
      %v845 = vmul.f32 %v839, %v844
      %v846 = vadd.f32 %v838, %v845
      %v847 = vld [vmem:[%s387 + $0x2] sm:$0xff]
      %v848 = vld [vmem:[%s3 + $0x2] sm:$0x1]
      %v849 = vlaneseq
      %v850 = vshrl.u32 %v849, 7
      %v851 = vsub.s32 0, %v850
      %v852 = vrot.slane %v848, %v851
      %v853 = vmul.f32 %v847, %v852
      %v854 = vadd.f32 %v846, %v853
      %v855 = vld [vmem:[%s389] sm:$0xff]
      %v856 = vld [vmem:[%s3 + $0x3] sm:$0x1]
      %v857 = vlaneseq
      %v858 = vshrl.u32 %v857, 7
      %v859 = vsub.s32 0, %v858
      %v860 = vrot.slane %v856, %v859
      %v861 = vmul.f32 %v855, %v860
      %v862 = vadd.f32 %v854, %v861
      %v863 = vld [vmem:[%s389 + $0x1] sm:$0xff]
      %v864 = vld [vmem:[%s3 + $0x4] sm:$0x1]
      %v865 = vlaneseq
      %v866 = vshrl.u32 %v865, 7
      %v867 = vsub.s32 0, %v866
      %v868 = vrot.slane %v864, %v867
      %v869 = vmul.f32 %v863, %v868
      %v870 = vadd.f32 %v862, %v869
      %v871 = vld [vmem:[%s389 + $0x2] sm:$0xff]
      %v872 = vld [vmem:[%s3 + $0x5] sm:$0x1]
      %v873 = vlaneseq
      %v874 = vshrl.u32 %v873, 7
      %v875 = vsub.s32 0, %v874
      %v876 = vrot.slane %v872, %v875
      %v877 = vmul.f32 %v871, %v876
      %v878 = vadd.f32 %v870, %v877
      %v879 = vld [vmem:[%s391] sm:$0xff]
      %v880 = vld [vmem:[%s3 + $0x6] sm:$0x1]
      %v881 = vlaneseq
      %v882 = vshrl.u32 %v881, 7
      %v883 = vsub.s32 0, %v882
      %v884 = vrot.slane %v880, %v883
      %v885 = vmul.f32 %v879, %v884
      %v886 = vadd.f32 %v878, %v885
      %v887 = vld [vmem:[%s391 + $0x1] sm:$0xff]
      %v888 = vld [vmem:[%s3 + $0x7] sm:$0x1]
      %v889 = vlaneseq
      %v890 = vshrl.u32 %v889, 7
      %v891 = vsub.s32 0, %v890
      %v892 = vrot.slane %v888, %v891
      %v893 = vmul.f32 %v887, %v892
      %v894 = vadd.f32 %v886, %v893
      %v895 = vld [vmem:[%s391 + $0x2] sm:$0xff]
      %v896 = vld [vmem:[%s3 + $0x8] sm:$0x1]
      %v897 = vlaneseq
      %v898 = vshrl.u32 %v897, 7
      %v899 = vsub.s32 0, %v898
      %v900 = vrot.slane %v896, %v899
      %v901 = vmul.f32 %v895, %v900
      %v902 = vadd.f32 %v894, %v901
      %903 = vst.msk [vmem:[#allocation3 + $0x30] sm:$0xff] %vm355, %v902
      %v904 = vld [vmem:[%s389] sm:$0xff]
      %v905 = vld [vmem:[%s3] sm:$0x1]
      %v906 = vlaneseq
      %v907 = vshrl.u32 %v906, 7
      %v908 = vsub.s32 0, %v907
      %v909 = vrot.slane %v905, %v908
      %v910 = vmul.f32 %v904, %v909
      %v911 = vadd.f32 %v910, 0.0
      %v912 = vld [vmem:[%s389 + $0x1] sm:$0xff]
      %v913 = vld [vmem:[%s3 + $0x1] sm:$0x1]
      %v914 = vlaneseq
      %v915 = vshrl.u32 %v914, 7
      %v916 = vsub.s32 0, %v915
      %v917 = vrot.slane %v913, %v916
      %v918 = vmul.f32 %v912, %v917
      %v919 = vadd.f32 %v911, %v918
      %v920 = vld [vmem:[%s389 + $0x2] sm:$0xff]
      %v921 = vld [vmem:[%s3 + $0x2] sm:$0x1]
      %v922 = vlaneseq
      %v923 = vshrl.u32 %v922, 7
      %v924 = vsub.s32 0, %v923
      %v925 = vrot.slane %v921, %v924
      %v926 = vmul.f32 %v920, %v925
      %v927 = vadd.f32 %v919, %v926
      %v928 = vld [vmem:[%s391] sm:$0xff]
      %v929 = vld [vmem:[%s3 + $0x3] sm:$0x1]
      %v930 = vlaneseq
      %v931 = vshrl.u32 %v930, 7
      %v932 = vsub.s32 0, %v931
      %v933 = vrot.slane %v929, %v932
      %v934 = vmul.f32 %v928, %v933
      %v935 = vadd.f32 %v927, %v934
      %v936 = vld [vmem:[%s391 + $0x1] sm:$0xff]
      %v937 = vld [vmem:[%s3 + $0x4] sm:$0x1]
      %v938 = vlaneseq
      %v939 = vshrl.u32 %v938, 7
      %v940 = vsub.s32 0, %v939
      %v941 = vrot.slane %v937, %v940
      %v942 = vmul.f32 %v936, %v941
      %v943 = vadd.f32 %v935, %v942
      %v944 = vld [vmem:[%s391 + $0x2] sm:$0xff]
      %v945 = vld [vmem:[%s3 + $0x5] sm:$0x1]
      %v946 = vlaneseq
      %v947 = vshrl.u32 %v946, 7
      %v948 = vsub.s32 0, %v947
      %v949 = vrot.slane %v945, %v948
      %v950 = vmul.f32 %v944, %v949
      %v951 = vadd.f32 %v943, %v950
      %s952 = scalar_lea.vmem [#allocation2], 144
      %v953 = vld [vmem:[%s952] sm:$0xff]
      %v954 = vld [vmem:[%s3 + $0x6] sm:$0x1]
      %v955 = vlaneseq
      %v956 = vshrl.u32 %v955, 7
      %v957 = vsub.s32 0, %v956
      %v958 = vrot.slane %v954, %v957
      %v959 = vmul.f32 %v953, %v958
      %v960 = vadd.f32 %v951, %v959
      %v961 = vld [vmem:[%s952 + $0x1] sm:$0xff]
      %v962 = vld [vmem:[%s3 + $0x7] sm:$0x1]
      %v963 = vlaneseq
      %v964 = vshrl.u32 %v963, 7
      %v965 = vsub.s32 0, %v964
      %v966 = vrot.slane %v962, %v965
      %v967 = vmul.f32 %v961, %v966
      %v968 = vadd.f32 %v960, %v967
      %v969 = vld [vmem:[%s952 + $0x2] sm:$0xff]
      %v970 = vld [vmem:[%s3 + $0x8] sm:$0x1]
      %v971 = vlaneseq
      %v972 = vshrl.u32 %v971, 7
      %v973 = vsub.s32 0, %v972
      %v974 = vrot.slane %v970, %v973
      %v975 = vmul.f32 %v969, %v974
      %v976 = vadd.f32 %v968, %v975
      %977 = vst.msk [vmem:[#allocation3 + $0x38] sm:$0xff] %vm355, %v976
      %v978 = vld [vmem:[#allocation3] sm:$0xff]
      %v979 = vld [vmem:[#allocation3 + $0x8] sm:$0xff]
      %v980 = vld [vmem:[#allocation3 + $0x10] sm:$0xff]
      %v981 = vld [vmem:[#allocation3 + $0x18] sm:$0xff]
      %v982 = vld [vmem:[#allocation3 + $0x20] sm:$0xff]
      %v983 = vld [vmem:[#allocation3 + $0x28] sm:$0xff]
      %v984 = vld [vmem:[#allocation3 + $0x30] sm:$0xff]
      %v985 = vld [vmem:[#allocation3 + $0x38] sm:$0xff]
      %v986 = vpack.c.bf16 %v979, %v978
      %v987 = vpack.c.bf16 %v981, %v980
      %v988 = vpack.c.bf16 %v983, %v982
      %v989 = vpack.c.bf16 %v985, %v984
      %v990 = vld [vmem:[%s4] sm:$0x3]
      %v992 = vsel %vm355, %v986, 0
      %v995 = vsel %vm355, %v987, 0
      %v998 = vsel %vm355, %v988, 0
      %v1001 = vsel %vm355, %v989, 0
      %vm1003 = vcmask 1041408
      %v1005 = vsel %vm1003, %v990, 0
      %1007 = vmatprep.subr.bf16.mxu0 0
      %1008 = vmatpush1.bf16.msra.mxu0 %v1005
      %1009 = vmatprep.subr.bf16.mxu0 0
      %1010 = vmatpush1.bf16.msra.mxu0 0
      %1011 = vmatprep.subr.bf16.mxu0 0
      %1012 = vmatpush1.bf16.msra.mxu0 0
      %1013 = vmatprep.subr.bf16.mxu0 0
      %1014 = vmatpush1.bf16.msra.mxu0 0
      %1015 = vmatprep.subr.bf16.mxu0 0
      %1016 = vmatpush1.bf16.msra.mxu0 0
      %1017 = vmatprep.subr.bf16.mxu0 0
      %1018 = vmatpush1.bf16.msra.mxu0 0
      %1019 = vmatprep.subr.bf16.mxu0 0
      %1020 = vmatpush1.bf16.msra.mxu0 0
      %1021 = vmatprep.subr.bf16.mxu0 0
      %1022 = vmatpush1.bf16.msra.mxu0 0
      %1023 = vmatprep.subr.bf16.mxu0 0
      %1024 = vmatpush1.bf16.msra.mxu0 0
      %1025 = vmatprep.subr.bf16.mxu0 0
      %1026 = vmatpush1.bf16.msra.mxu0 0
      %1027 = vmatprep.subr.bf16.mxu0 0
      %1028 = vmatpush1.bf16.msra.mxu0 0
      %1029 = vmatprep.subr.bf16.mxu0 0
      %1030 = vmatpush1.bf16.msra.mxu0 0
      %1031 = vmatprep.subr.bf16.mxu0 0
      %1032 = vmatpush1.bf16.msra.mxu0 0
      %1033 = vmatprep.subr.bf16.mxu0 0
      %1034 = vmatpush1.bf16.msra.mxu0 0
      %1035 = vmatprep.subr.bf16.mxu0 0
      %1036 = vmatpush1.bf16.msra.mxu0 0
      %1037 = vmatprep.subr.bf16.mxu0 0
      %1038 = vmatpush1.bf16.msra.mxu0 0
      %1039 = vmatprep.mubr.bf16.mxu0 0
      %1040 = vmatmul.mubr.bf16.gmra.mrb[0].mxu0 %v992
      %v1041 = vpop.f32.mrb[0].mxu0
      %v1042 = vadd.f32 0.0, %v1041
      %v1043 = vpop.f32.mrb[0].mxu0
      %v1044 = vpop.f32.mrb[0].mxu0
      %v1045 = vadd.f32 0.0, %v1044
      %v1046 = vpop.f32.mrb[0].mxu0
      %1047 = vmatprep.mubr.bf16.mxu0 0
      %1048 = vmatmul.mubr.bf16.gmra.mrb[0].mxu0 %v995
      %v1049 = vpop.f32.mrb[0].mxu0
      %v1050 = vadd.f32 0.0, %v1049
      %v1051 = vpop.f32.mrb[0].mxu0
      %v1052 = vpop.f32.mrb[0].mxu0
      %v1053 = vadd.f32 0.0, %v1052
      %v1054 = vpop.f32.mrb[0].mxu0
      %1055 = vmatprep.mubr.bf16.mxu0 0
      %1056 = vmatmul.mubr.bf16.gmra.mrb[0].mxu0 %v998
      %v1057 = vpop.f32.mrb[0].mxu0
      %v1058 = vadd.f32 0.0, %v1057
      %v1059 = vpop.f32.mrb[0].mxu0
      %v1060 = vpop.f32.mrb[0].mxu0
      %v1061 = vadd.f32 0.0, %v1060
      %v1062 = vpop.f32.mrb[0].mxu0
      %1063 = vmatprep.mubr.bf16.mxu0 0
      %1064 = vmatmul.mubr.bf16.gmra.mrb[0].mxu0 %v1001
      %v1065 = vpop.f32.mrb[0].mxu0
      %v1066 = vadd.f32 0.0, %v1065
      %v1067 = vpop.f32.mrb[0].mxu0
      %v1068 = vpop.f32.mrb[0].mxu0
      %v1069 = vadd.f32 0.0, %v1068
      %v1070 = vpop.f32.mrb[0].mxu0
      %1071 = vdwg.mxu0
      %v1072 = vxor.u32 %v1042, 2147483648
      %v1073 = vxor.u32 %v1045, 2147483648
      %v1074 = vxor.u32 %v1050, 2147483648
      %v1075 = vxor.u32 %v1053, 2147483648
      %v1076 = vxor.u32 %v1058, 2147483648
      %v1077 = vxor.u32 %v1061, 2147483648
      %v1078 = vxor.u32 %v1066, 2147483648
      %v1079 = vxor.u32 %v1069, 2147483648
      %v1080 = vmul.f32 %v1072, 1.442695
      %v1081 = vpow.pop %v1080
      %v1082 = vmul.f32 %v1073, 1.442695
      %v1083 = vpow.pop %v1082
      %v1084 = vmul.f32 %v1074, 1.442695
      %v1085 = vpow.pop %v1084
      %v1086 = vmul.f32 %v1075, 1.442695
      %v1087 = vpow.pop %v1086
      %v1088 = vmul.f32 %v1076, 1.442695
      %v1089 = vpow.pop %v1088
      %v1090 = vmul.f32 %v1077, 1.442695
      %v1091 = vpow.pop %v1090
      %v1092 = vmul.f32 %v1078, 1.442695
      %v1093 = vpow.pop %v1092
      %v1094 = vmul.f32 %v1079, 1.442695
      %v1095 = vpow.pop %v1094
      %v1096 = vadd.f32 %v1081, 1.0
      %v1097 = vadd.f32 %v1083, 1.0
      %v1098 = vadd.f32 %v1085, 1.0
      %v1099 = vadd.f32 %v1087, 1.0
      %v1100 = vadd.f32 %v1089, 1.0
      %v1101 = vadd.f32 %v1091, 1.0
      %v1102 = vadd.f32 %v1093, 1.0
      %v1103 = vadd.f32 %v1095, 1.0
      %v1104 = vrcp.pop %v1096
      %v1105 = vmul.f32 1.0, %v1104
      %v1106 = vrcp.pop %v1097
      %v1107 = vmul.f32 1.0, %v1106
      %v1108 = vrcp.pop %v1098
      %v1109 = vmul.f32 1.0, %v1108
      %v1110 = vrcp.pop %v1099
      %v1111 = vmul.f32 1.0, %v1110
      %v1112 = vrcp.pop %v1100
      %v1113 = vmul.f32 1.0, %v1112
      %v1114 = vrcp.pop %v1101
      %v1115 = vmul.f32 1.0, %v1114
      %v1116 = vrcp.pop %v1102
      %v1117 = vmul.f32 1.0, %v1116
      %v1118 = vrcp.pop %v1103
      %v1119 = vmul.f32 1.0, %v1118
      %v1120 = vmul.f32 %v1042, %v1105
      %v1121 = vmul.f32 %v1045, %v1107
      %v1122 = vmul.f32 %v1050, %v1109
      %v1123 = vmul.f32 %v1053, %v1111
      %v1124 = vmul.f32 %v1058, %v1113
      %v1125 = vmul.f32 %v1061, %v1115
      %v1126 = vmul.f32 %v1066, %v1117
      %v1127 = vmul.f32 %v1069, %v1119
      %1128 = vst.msk [vmem:[%s224] sm:$0xff] %vm277, %v1120
      %1129 = vst.msk [vmem:[%s224 + $0x8] sm:$0xff] %vm277, %v1121
      %1130 = vst.msk [vmem:[%s224 + $0x10] sm:$0xff] %vm277, %v1122
      %1131 = vst.msk [vmem:[%s224 + $0x18] sm:$0xff] %vm277, %v1123
      %1132 = vst.msk [vmem:[%s224 + $0x20] sm:$0xff] %vm277, %v1124
      %1133 = vst.msk [vmem:[%s224 + $0x28] sm:$0xff] %vm277, %v1125
      %1134 = vst.msk [vmem:[%s224 + $0x30] sm:$0xff] %vm277, %v1126
      %1135 = vst.msk [vmem:[%s224 + $0x38] sm:$0xff] %vm277, %v1127
      %p1136 = scmp.lt.s32.totalorder %s16, 1
      %s1137 = scalar_select %p1136, %s16, 1
      %s1138 = smul.addr %s1137, 8
      %s1139 = smul.addr %s1138, 8
      %s1140 = scalar_lea.vmem %s5, %s1139
      // Predicated region
      $region41: #{_lambda_.7} parent=39 // pred_check
        %p1141 = pneg %p144
      $region42: #{_lambda_.7} parent=39 // pred_check_branch
        %1143 = sbr.rel (%p1141) target = $region44
      $region43: #{_lambda_.7} parent=39 // pred_region
        _
      $region44: #{_lambda_.7} parent=39 // pred_fallthru
        _
    $region40: #{_lambda_.7} parent=5 // pred_fallthru
      _
    %p1144 = scmp.le.s32.totalorder 2, %s11
    // Predicated region
    $region45: #{_lambda_.7} parent=5 // pred_check
      %p1145 = pneg %p1144
    $region46: #{_lambda_.7} parent=5 // pred_check_branch
      %1147 = sbr.rel (%p1145) target = $region48
    $region47: #{_lambda_.7} parent=5 // pred_region
      %s1148 = ssub.s32 %s11, 2
      // Predicated region
      $region49: #{_lambda_.7} parent=47 // pred_check
        %p1149 = pneg %p150
      $region50: #{_lambda_.7} parent=47 // pred_check_branch
        %1151 = sbr.rel (%p1149) target = $region52
      $region51: #{_lambda_.7} parent=47 // pred_region
        %p1152 = scmp.lt.s32.totalorder %s17, 1
        %s1153 = scalar_select %p1152, %s17, 1
        %s1154 = smul.addr %s1153, 8
        %s1155 = smul.addr %s1154, 8
        %s1156 = scalar_lea.vmem %s5, %s1155
      $region52: #{_lambda_.7} parent=47 // pred_fallthru
        _
    $region48: #{_lambda_.7} parent=5 // pred_fallthru
      _
  $region6: #{_lambda_.7} parent=0 // loop_footer
    %s15 = sadd.s32 1, %s11
  $region7: #{_lambda_.7} parent=0 // loop_footer_branch
    %10 = sbr.rel target = $region3
  $region8: #{_lambda_.7} parent=0 // loop_exit
    _

// kernel: _lambda_.9
$region0: #{_lambda_.9}
  #allocation0 [shape = 'u32[]', space=smem, size = 0x4, offset = 0x4, fixed_abs, tag = 'smem constant byte address 0x4 - core index']
  #allocation1 [shape = 'u32[144,128]{1,0:T(1,128)}', space=vmem, size = 0x12000, scoped, tag = 'internal scratch']
  #allocation2 [shape = 'f32[128,64]{1,0:T(8,128)}', space=vmem, size = 0x10000, scoped, tag = 'scratch operand']
  %s0 = inlined_call_operand.vmem [shape: bf16[128,2], index: 0, kind: input, shape index: {}]
  %s1 = inlined_call_operand.vmem [shape: bf16[2,64], index: 1, kind: input, shape index: {}]
  %s2 = inlined_call_operand.vmem [shape: f32[1,64], index: 2, kind: input, shape index: {}]
  %s3 = inlined_call_operand.vmem [shape: f32[128,64], index: 3, kind: output, shape index: {}]
  %s4 = sld [smem:[#allocation0]]
  $region30: #{_lambda_.9} parent=0
    _
  %s6 = ssub.s32 1, %s4
  %s7 = scalar_select 0, %s6, %s4
  // Predicated region
  $region2: #{_lambda_.9} parent=0 // pred_check
    _
  $region3: #{_lambda_.9} parent=0 // pred_check_branch
    %9 = sbr.rel (0) target = $region5
  $region4: #{_lambda_.9} parent=0 // pred_region
    _
  $region5: #{_lambda_.9} parent=0 // pred_fallthru
    _
  // Predicated region
  $region6: #{_lambda_.9} parent=0 // pred_check
    _
  $region7: #{_lambda_.9} parent=0 // pred_check_branch
    %11 = sbr.rel (0) target = $region9
  $region8: #{_lambda_.9} parent=0 // pred_region
    _
  $region9: #{_lambda_.9} parent=0 // pred_fallthru
    _
  // Predicated region
  $region10: #{_lambda_.9} parent=0 // pred_check
    _
  $region11: #{_lambda_.9} parent=0 // pred_check_branch
    %13 = sbr.rel (0) target = $region13
  $region12: #{_lambda_.9} parent=0 // pred_region
    _
  $region13: #{_lambda_.9} parent=0 // pred_fallthru
    _
  %p15 = scmp.eq.s32.totalorder 0, 0
  // Predicated region
  $region14: #{_lambda_.9} parent=0 // pred_check
    %p16 = pneg %p15
  $region15: #{_lambda_.9} parent=0 // pred_check_branch
    %18 = sbr.rel (%p16) target = $region17
  $region16: #{_lambda_.9} parent=0 // pred_region
    %vm19 = vcmask 523264
    %20 = vst.msk [vmem:[#allocation2] sm:$0xff] %vm19, 0.0
    %21 = vst.msk [vmem:[#allocation2 + $0x8] sm:$0xff] %vm19, 0.0
    %22 = vst.msk [vmem:[#allocation2 + $0x10] sm:$0xff] %vm19, 0.0
    %23 = vst.msk [vmem:[#allocation2 + $0x18] sm:$0xff] %vm19, 0.0
    %24 = vst.msk [vmem:[#allocation2 + $0x20] sm:$0xff] %vm19, 0.0
    %25 = vst.msk [vmem:[#allocation2 + $0x28] sm:$0xff] %vm19, 0.0
    %26 = vst.msk [vmem:[#allocation2 + $0x30] sm:$0xff] %vm19, 0.0
    %27 = vst.msk [vmem:[#allocation2 + $0x38] sm:$0xff] %vm19, 0.0
    %28 = vst.msk [vmem:[#allocation2 + $0x40] sm:$0xff] %vm19, 0.0
    %29 = vst.msk [vmem:[#allocation2 + $0x48] sm:$0xff] %vm19, 0.0
    %30 = vst.msk [vmem:[#allocation2 + $0x50] sm:$0xff] %vm19, 0.0
    %31 = vst.msk [vmem:[#allocation2 + $0x58] sm:$0xff] %vm19, 0.0
    %32 = vst.msk [vmem:[#allocation2 + $0x60] sm:$0xff] %vm19, 0.0
    %33 = vst.msk [vmem:[#allocation2 + $0x68] sm:$0xff] %vm19, 0.0
    %34 = vst.msk [vmem:[#allocation2 + $0x70] sm:$0xff] %vm19, 0.0
    %35 = vst.msk [vmem:[#allocation2 + $0x78] sm:$0xff] %vm19, 0.0
  $region17: #{_lambda_.9} parent=0 // pred_fallthru
    _
  %v36 = vld [vmem:[%s0] sm:$0xf]
  %v37 = vld [vmem:[%s0 + $0x4] sm:$0xf]
  %v38 = vld [vmem:[%s0 + $0x8] sm:$0xf]
  %v39 = vld [vmem:[%s0 + $0xc] sm:$0xf]
  %v40 = vld [vmem:[%s0 + $0x10] sm:$0xf]
  %v41 = vld [vmem:[%s0 + $0x14] sm:$0xf]
  %v42 = vld [vmem:[%s0 + $0x18] sm:$0xf]
  %v43 = vld [vmem:[%s0 + $0x1c] sm:$0xf]
  %v44 = vld [vmem:[%s0 + $0x20] sm:$0xf]
  %v45 = vld [vmem:[%s0 + $0x24] sm:$0xf]
  %v46 = vld [vmem:[%s0 + $0x28] sm:$0xf]
  %v47 = vld [vmem:[%s0 + $0x2c] sm:$0xf]
  %v48 = vld [vmem:[%s0 + $0x30] sm:$0xf]
  %v49 = vld [vmem:[%s0 + $0x34] sm:$0xf]
  %v50 = vld [vmem:[%s0 + $0x38] sm:$0xf]
  %v51 = vld [vmem:[%s0 + $0x3c] sm:$0xf]
  %v52 = vld [vmem:[#allocation2] sm:$0xff]
  %v53 = vld [vmem:[#allocation2 + $0x8] sm:$0xff]
  %v54 = vld [vmem:[#allocation2 + $0x10] sm:$0xff]
  %v55 = vld [vmem:[#allocation2 + $0x18] sm:$0xff]
  %v56 = vld [vmem:[#allocation2 + $0x20] sm:$0xff]
  %v57 = vld [vmem:[#allocation2 + $0x28] sm:$0xff]
  %v58 = vld [vmem:[#allocation2 + $0x30] sm:$0xff]
  %v59 = vld [vmem:[#allocation2 + $0x38] sm:$0xff]
  %v60 = vld [vmem:[#allocation2 + $0x40] sm:$0xff]
  %v61 = vld [vmem:[#allocation2 + $0x48] sm:$0xff]
  %v62 = vld [vmem:[#allocation2 + $0x50] sm:$0xff]
  %v63 = vld [vmem:[#allocation2 + $0x58] sm:$0xff]
  %v64 = vld [vmem:[#allocation2 + $0x60] sm:$0xff]
  %v65 = vld [vmem:[#allocation2 + $0x68] sm:$0xff]
  %v66 = vld [vmem:[#allocation2 + $0x70] sm:$0xff]
  %v67 = vld [vmem:[#allocation2 + $0x78] sm:$0xff]
  %v68 = vld [vmem:[%s1] sm:$0x1]
  %v85 = vunpack.c.l.b16 %v36
  %v86 = vunpack.c.l.b16 %v37
  %v87 = vunpack.c.l.b16 %v38
  %v88 = vunpack.c.l.b16 %v39
  %v89 = vunpack.c.l.b16 %v40
  %v90 = vunpack.c.l.b16 %v41
  %v91 = vunpack.c.l.b16 %v42
  %v92 = vunpack.c.l.b16 %v43
  %v93 = vunpack.c.l.b16 %v44
  %v94 = vunpack.c.l.b16 %v45
  %v95 = vunpack.c.l.b16 %v46
  %v96 = vunpack.c.l.b16 %v47
  %v97 = vunpack.c.l.b16 %v48
  %v98 = vunpack.c.l.b16 %v49
  %v99 = vunpack.c.l.b16 %v50
  %v100 = vunpack.c.l.b16 %v51
  %v101 = vpack.c.b16 %v86, %v85
  %v102 = vpack.c.b16 %v88, %v87
  %v103 = vpack.c.b16 %v90, %v89
  %v104 = vpack.c.b16 %v92, %v91
  %v105 = vpack.c.b16 %v94, %v93
  %v106 = vpack.c.b16 %v96, %v95
  %v107 = vpack.c.b16 %v98, %v97
  %v108 = vpack.c.b16 %v100, %v99
  %vm109 = vcmask 15360
  %v111 = vsel %vm109, %v101, 0
  %v114 = vsel %vm109, %v102, 0
  %v117 = vsel %vm109, %v103, 0
  %v120 = vsel %vm109, %v104, 0
  %v123 = vsel %vm109, %v105, 0
  %v126 = vsel %vm109, %v106, 0
  %v129 = vsel %vm109, %v107, 0
  %v132 = vsel %vm109, %v108, 0
  %vm134 = vcmask 1040384
  %v136 = vsel %vm134, %v68, 0
  %138 = vmatprep.subr.bf16.mxu0 0
  %139 = vmatpush1.bf16.msra.mxu0 %v136
  %140 = vmatprep.subr.bf16.mxu0 0
  %141 = vmatpush1.bf16.msra.mxu0 0
  %142 = vmatprep.subr.bf16.mxu0 0
  %143 = vmatpush1.bf16.msra.mxu0 0
  %144 = vmatprep.subr.bf16.mxu0 0
  %145 = vmatpush1.bf16.msra.mxu0 0
  %146 = vmatprep.subr.bf16.mxu0 0
  %147 = vmatpush1.bf16.msra.mxu0 0
  %148 = vmatprep.subr.bf16.mxu0 0
  %149 = vmatpush1.bf16.msra.mxu0 0
  %150 = vmatprep.subr.bf16.mxu0 0
  %151 = vmatpush1.bf16.msra.mxu0 0
  %152 = vmatprep.subr.bf16.mxu0 0
  %153 = vmatpush1.bf16.msra.mxu0 0
  %154 = vmatprep.subr.bf16.mxu0 0
  %155 = vmatpush1.bf16.msra.mxu0 0
  %156 = vmatprep.subr.bf16.mxu0 0
  %157 = vmatpush1.bf16.msra.mxu0 0
  %158 = vmatprep.subr.bf16.mxu0 0
  %159 = vmatpush1.bf16.msra.mxu0 0
  %160 = vmatprep.subr.bf16.mxu0 0
  %161 = vmatpush1.bf16.msra.mxu0 0
  %162 = vmatprep.subr.bf16.mxu0 0
  %163 = vmatpush1.bf16.msra.mxu0 0
  %164 = vmatprep.subr.bf16.mxu0 0
  %165 = vmatpush1.bf16.msra.mxu0 0
  %166 = vmatprep.subr.bf16.mxu0 0
  %167 = vmatpush1.bf16.msra.mxu0 0
  %168 = vmatprep.subr.bf16.mxu0 0
  %169 = vmatpush1.bf16.msra.mxu0 0
  %170 = vmatprep.mubr.bf16.mxu0 0
  %171 = vmatmul.mubr.bf16.gmra.mrb[0].mxu0 %v111
  %v172 = vpop.f32.mrb[0].mxu0
  %v173 = vadd.f32 0.0, %v172
  %v174 = vpop.f32.mrb[0].mxu0
  %v175 = vpop.f32.mrb[0].mxu0
  %v176 = vadd.f32 0.0, %v175
  %v177 = vpop.f32.mrb[0].mxu0
  %178 = vmatprep.mubr.bf16.mxu0 0
  %179 = vmatmul.mubr.bf16.gmra.mrb[0].mxu0 %v114
  %v180 = vpop.f32.mrb[0].mxu0
  %v181 = vadd.f32 0.0, %v180
  %v182 = vpop.f32.mrb[0].mxu0
  %v183 = vpop.f32.mrb[0].mxu0
  %v184 = vadd.f32 0.0, %v183
  %v185 = vpop.f32.mrb[0].mxu0
  %186 = vmatprep.mubr.bf16.mxu0 0
  %187 = vmatmul.mubr.bf16.gmra.mrb[0].mxu0 %v117
  %v188 = vpop.f32.mrb[0].mxu0
  %v189 = vadd.f32 0.0, %v188
  %v190 = vpop.f32.mrb[0].mxu0
  %v191 = vpop.f32.mrb[0].mxu0
  %v192 = vadd.f32 0.0, %v191
  %v193 = vpop.f32.mrb[0].mxu0
  %194 = vmatprep.mubr.bf16.mxu0 0
  %195 = vmatmul.mubr.bf16.gmra.mrb[0].mxu0 %v120
  %v196 = vpop.f32.mrb[0].mxu0
  %v197 = vadd.f32 0.0, %v196
  %v198 = vpop.f32.mrb[0].mxu0
  %v199 = vpop.f32.mrb[0].mxu0
  %v200 = vadd.f32 0.0, %v199
  %v201 = vpop.f32.mrb[0].mxu0
  %202 = vmatprep.mubr.bf16.mxu0 0
  %203 = vmatmul.mubr.bf16.gmra.mrb[0].mxu0 %v123
  %v204 = vpop.f32.mrb[0].mxu0
  %v205 = vadd.f32 0.0, %v204
  %v206 = vpop.f32.mrb[0].mxu0
  %v207 = vpop.f32.mrb[0].mxu0
  %v208 = vadd.f32 0.0, %v207
  %v209 = vpop.f32.mrb[0].mxu0
  %210 = vmatprep.mubr.bf16.mxu0 0
  %211 = vmatmul.mubr.bf16.gmra.mrb[0].mxu0 %v126
  %v212 = vpop.f32.mrb[0].mxu0
  %v213 = vadd.f32 0.0, %v212
  %v214 = vpop.f32.mrb[0].mxu0
  %v215 = vpop.f32.mrb[0].mxu0
  %v216 = vadd.f32 0.0, %v215
  %v217 = vpop.f32.mrb[0].mxu0
  %218 = vmatprep.mubr.bf16.mxu0 0
  %219 = vmatmul.mubr.bf16.gmra.mrb[0].mxu0 %v129
  %v220 = vpop.f32.mrb[0].mxu0
  %v221 = vadd.f32 0.0, %v220
  %v222 = vpop.f32.mrb[0].mxu0
  %v223 = vpop.f32.mrb[0].mxu0
  %v224 = vadd.f32 0.0, %v223
  %v225 = vpop.f32.mrb[0].mxu0
  %226 = vmatprep.mubr.bf16.mxu0 0
  %227 = vmatmul.mubr.bf16.gmra.mrb[0].mxu0 %v132
  %v228 = vpop.f32.mrb[0].mxu0
  %v229 = vadd.f32 0.0, %v228
  %v230 = vpop.f32.mrb[0].mxu0
  %v231 = vpop.f32.mrb[0].mxu0
  %v232 = vadd.f32 0.0, %v231
  %v233 = vpop.f32.mrb[0].mxu0
  %234 = vdwg.mxu0
  %v235 = vadd.f32 %v52, %v173
  %v236 = vadd.f32 %v53, %v176
  %v237 = vadd.f32 %v54, %v181
  %v238 = vadd.f32 %v55, %v184
  %v239 = vadd.f32 %v56, %v189
  %v240 = vadd.f32 %v57, %v192
  %v241 = vadd.f32 %v58, %v197
  %v242 = vadd.f32 %v59, %v200
  %v243 = vadd.f32 %v60, %v205
  %v244 = vadd.f32 %v61, %v208
  %v245 = vadd.f32 %v62, %v213
  %v246 = vadd.f32 %v63, %v216
  %v247 = vadd.f32 %v64, %v221
  %v248 = vadd.f32 %v65, %v224
  %v249 = vadd.f32 %v66, %v229
  %v250 = vadd.f32 %v67, %v232
  %vm251 = vcmask 523264
  %252 = vst.msk [vmem:[#allocation2] sm:$0xff] %vm251, %v235
  %253 = vst.msk [vmem:[#allocation2 + $0x8] sm:$0xff] %vm251, %v236
  %254 = vst.msk [vmem:[#allocation2 + $0x10] sm:$0xff] %vm251, %v237
  %255 = vst.msk [vmem:[#allocation2 + $0x18] sm:$0xff] %vm251, %v238
  %256 = vst.msk [vmem:[#allocation2 + $0x20] sm:$0xff] %vm251, %v239
  %257 = vst.msk [vmem:[#allocation2 + $0x28] sm:$0xff] %vm251, %v240
  %258 = vst.msk [vmem:[#allocation2 + $0x30] sm:$0xff] %vm251, %v241
  %259 = vst.msk [vmem:[#allocation2 + $0x38] sm:$0xff] %vm251, %v242
  %260 = vst.msk [vmem:[#allocation2 + $0x40] sm:$0xff] %vm251, %v243
  %261 = vst.msk [vmem:[#allocation2 + $0x48] sm:$0xff] %vm251, %v244
  %262 = vst.msk [vmem:[#allocation2 + $0x50] sm:$0xff] %vm251, %v245
  %263 = vst.msk [vmem:[#allocation2 + $0x58] sm:$0xff] %vm251, %v246
  %264 = vst.msk [vmem:[#allocation2 + $0x60] sm:$0xff] %vm251, %v247
  %265 = vst.msk [vmem:[#allocation2 + $0x68] sm:$0xff] %vm251, %v248
  %266 = vst.msk [vmem:[#allocation2 + $0x70] sm:$0xff] %vm251, %v249
  %267 = vst.msk [vmem:[#allocation2 + $0x78] sm:$0xff] %vm251, %v250
  // Predicated region
  $region18: #{_lambda_.9} parent=0 // pred_check
    %p268 = pneg %p15
  $region19: #{_lambda_.9} parent=0 // pred_check_branch
    %270 = sbr.rel (%p268) target = $region21
  $region20: #{_lambda_.9} parent=0 // pred_region
    %v271 = vld [vmem:[#allocation2] sm:$0xff]
    %v272 = vld [vmem:[#allocation2 + $0x8] sm:$0xff]
    %v273 = vld [vmem:[#allocation2 + $0x10] sm:$0xff]
    %v274 = vld [vmem:[#allocation2 + $0x18] sm:$0xff]
    %v275 = vld [vmem:[#allocation2 + $0x20] sm:$0xff]
    %v276 = vld [vmem:[#allocation2 + $0x28] sm:$0xff]
    %v277 = vld [vmem:[#allocation2 + $0x30] sm:$0xff]
    %v278 = vld [vmem:[#allocation2 + $0x38] sm:$0xff]
    %v279 = vld [vmem:[#allocation2 + $0x40] sm:$0xff]
    %v280 = vld [vmem:[#allocation2 + $0x48] sm:$0xff]
    %v281 = vld [vmem:[#allocation2 + $0x50] sm:$0xff]
    %v282 = vld [vmem:[#allocation2 + $0x58] sm:$0xff]
    %v283 = vld [vmem:[#allocation2 + $0x60] sm:$0xff]
    %v284 = vld [vmem:[#allocation2 + $0x68] sm:$0xff]
    %v285 = vld [vmem:[#allocation2 + $0x70] sm:$0xff]
    %v286 = vld [vmem:[#allocation2 + $0x78] sm:$0xff]
    %v287 = vld [vmem:[%s2] sm:$0x1]
    %v289 = vlaneseq
    %v290 = vshrl.u32 %v289, 7
    %v291 = vsub.s32 0, %v290
    %v292 = vrot.slane %v287, %v291
    %v294 = vadd.f32 %v271, %v292
    %v295 = vadd.f32 %v272, %v292
    %v296 = vadd.f32 %v273, %v292
    %v297 = vadd.f32 %v274, %v292
    %v298 = vadd.f32 %v275, %v292
    %v299 = vadd.f32 %v276, %v292
    %v300 = vadd.f32 %v277, %v292
    %v301 = vadd.f32 %v278, %v292
    %v302 = vadd.f32 %v279, %v292
    %v303 = vadd.f32 %v280, %v292
    %v304 = vadd.f32 %v281, %v292
    %v305 = vadd.f32 %v282, %v292
    %v306 = vadd.f32 %v283, %v292
    %v307 = vadd.f32 %v284, %v292
    %v308 = vadd.f32 %v285, %v292
    %v309 = vadd.f32 %v286, %v292
    %310 = vst.msk [vmem:[%s3] sm:$0xff] %vm251, %v294
    %311 = vst.msk [vmem:[%s3 + $0x8] sm:$0xff] %vm251, %v295
    %312 = vst.msk [vmem:[%s3 + $0x10] sm:$0xff] %vm251, %v296
    %313 = vst.msk [vmem:[%s3 + $0x18] sm:$0xff] %vm251, %v297
    %314 = vst.msk [vmem:[%s3 + $0x20] sm:$0xff] %vm251, %v298
    %315 = vst.msk [vmem:[%s3 + $0x28] sm:$0xff] %vm251, %v299
    %316 = vst.msk [vmem:[%s3 + $0x30] sm:$0xff] %vm251, %v300
    %317 = vst.msk [vmem:[%s3 + $0x38] sm:$0xff] %vm251, %v301
    %318 = vst.msk [vmem:[%s3 + $0x40] sm:$0xff] %vm251, %v302
    %319 = vst.msk [vmem:[%s3 + $0x48] sm:$0xff] %vm251, %v303
    %320 = vst.msk [vmem:[%s3 + $0x50] sm:$0xff] %vm251, %v304
    %321 = vst.msk [vmem:[%s3 + $0x58] sm:$0xff] %vm251, %v305
    %322 = vst.msk [vmem:[%s3 + $0x60] sm:$0xff] %vm251, %v306
    %323 = vst.msk [vmem:[%s3 + $0x68] sm:$0xff] %vm251, %v307
    %324 = vst.msk [vmem:[%s3 + $0x70] sm:$0xff] %vm251, %v308
    %325 = vst.msk [vmem:[%s3 + $0x78] sm:$0xff] %vm251, %v309
  $region21: #{_lambda_.9} parent=0 // pred_fallthru
    _
  // Predicated region
  $region22: #{_lambda_.9} parent=0 // pred_check
    _
  $region23: #{_lambda_.9} parent=0 // pred_check_branch
    %327 = sbr.rel (0) target = $region25
  $region24: #{_lambda_.9} parent=0 // pred_region
    _
  $region25: #{_lambda_.9} parent=0 // pred_fallthru
    _
  // Predicated region
  $region26: #{_lambda_.9} parent=0 // pred_check
    _
  $region27: #{_lambda_.9} parent=0 // pred_check_branch
    %329 = sbr.rel (0) target = $region29
  $region28: #{_lambda_.9} parent=0 // pred_region
    _
  $region29: #{_lambda_.9} parent=0 // pred_fallthru
    _

// kernel: _lambda_.11
$region0: #{_lambda_.11}
  #allocation0 [shape = 'u32[]', space=smem, size = 0x4, offset = 0x4, fixed_abs, tag = 'smem constant byte address 0x4 - core index']
  #allocation1 [shape = 'u32[144,128]{1,0:T(1,128)}', space=vmem, size = 0x12000, scoped, tag = 'internal scratch']
  #allocation2 [shape = 'f32[128,32]{1,0:T(8,128)}', space=vmem, size = 0x10000, scoped, tag = 'scratch operand']
  %s0 = inlined_call_operand.vmem [shape: f32[128,64], index: 0, kind: input, shape index: {}]
  %s1 = inlined_call_operand.vmem [shape: f32[128,64], index: 1, kind: input, shape index: {}]
  %s2 = inlined_call_operand.vmem [shape: bf16[64,32], index: 2, kind: input, shape index: {}]
  %s3 = inlined_call_operand.vmem [shape: f32[1,32], index: 3, kind: input, shape index: {}]
  %s4 = inlined_call_operand.vmem [shape: f32[128,32], index: 4, kind: output, shape index: {}]
  %s5 = sld [smem:[#allocation0]]
  $region34: #{_lambda_.11} parent=0
    _
  %s7 = ssub.s32 1, %s5
  %s8 = scalar_select 0, %s7, %s5
  // Predicated region
  $region2: #{_lambda_.11} parent=0 // pred_check
    _
  $region3: #{_lambda_.11} parent=0 // pred_check_branch
    %10 = sbr.rel (0) target = $region5
  $region4: #{_lambda_.11} parent=0 // pred_region
    _
  $region5: #{_lambda_.11} parent=0 // pred_fallthru
    _
  // Predicated region
  $region6: #{_lambda_.11} parent=0 // pred_check
    _
  $region7: #{_lambda_.11} parent=0 // pred_check_branch
    %12 = sbr.rel (0) target = $region9
  $region8: #{_lambda_.11} parent=0 // pred_region
    _
  $region9: #{_lambda_.11} parent=0 // pred_fallthru
    _
  // Predicated region
  $region10: #{_lambda_.11} parent=0 // pred_check
    _
  $region11: #{_lambda_.11} parent=0 // pred_check_branch
    %14 = sbr.rel (0) target = $region13
  $region12: #{_lambda_.11} parent=0 // pred_region
    _
  $region13: #{_lambda_.11} parent=0 // pred_fallthru
    _
  // Predicated region
  $region14: #{_lambda_.11} parent=0 // pred_check
    _
  $region15: #{_lambda_.11} parent=0 // pred_check_branch
    %16 = sbr.rel (0) target = $region17
  $region16: #{_lambda_.11} parent=0 // pred_region
    _
  $region17: #{_lambda_.11} parent=0 // pred_fallthru
    _
  %p18 = scmp.eq.s32.totalorder 0, 0
  // Predicated region
  $region18: #{_lambda_.11} parent=0 // pred_check
    %p19 = pneg %p18
  $region19: #{_lambda_.11} parent=0 // pred_check_branch
    %21 = sbr.rel (%p19) target = $region21
  $region20: #{_lambda_.11} parent=0 // pred_region
    %vm22 = vcmask 261120
    %23 = vst.msk [vmem:[#allocation2] sm:$0xff] %vm22, 0.0
    %24 = vst.msk [vmem:[#allocation2 + $0x8] sm:$0xff] %vm22, 0.0
    %25 = vst.msk [vmem:[#allocation2 + $0x10] sm:$0xff] %vm22, 0.0
    %26 = vst.msk [vmem:[#allocation2 + $0x18] sm:$0xff] %vm22, 0.0
    %27 = vst.msk [vmem:[#allocation2 + $0x20] sm:$0xff] %vm22, 0.0
    %28 = vst.msk [vmem:[#allocation2 + $0x28] sm:$0xff] %vm22, 0.0
    %29 = vst.msk [vmem:[#allocation2 + $0x30] sm:$0xff] %vm22, 0.0
    %30 = vst.msk [vmem:[#allocation2 + $0x38] sm:$0xff] %vm22, 0.0
    %31 = vst.msk [vmem:[#allocation2 + $0x40] sm:$0xff] %vm22, 0.0
    %32 = vst.msk [vmem:[#allocation2 + $0x48] sm:$0xff] %vm22, 0.0
    %33 = vst.msk [vmem:[#allocation2 + $0x50] sm:$0xff] %vm22, 0.0
    %34 = vst.msk [vmem:[#allocation2 + $0x58] sm:$0xff] %vm22, 0.0
    %35 = vst.msk [vmem:[#allocation2 + $0x60] sm:$0xff] %vm22, 0.0
    %36 = vst.msk [vmem:[#allocation2 + $0x68] sm:$0xff] %vm22, 0.0
    %37 = vst.msk [vmem:[#allocation2 + $0x70] sm:$0xff] %vm22, 0.0
    %38 = vst.msk [vmem:[#allocation2 + $0x78] sm:$0xff] %vm22, 0.0
  $region21: #{_lambda_.11} parent=0 // pred_fallthru
    _
  %v39 = vld [vmem:[%s1] sm:$0xff]
  %v40 = vld [vmem:[%s1 + $0x8] sm:$0xff]
  %v41 = vld [vmem:[%s1 + $0x10] sm:$0xff]
  %v42 = vld [vmem:[%s1 + $0x18] sm:$0xff]
  %v43 = vld [vmem:[%s1 + $0x20] sm:$0xff]
  %v44 = vld [vmem:[%s1 + $0x28] sm:$0xff]
  %v45 = vld [vmem:[%s1 + $0x30] sm:$0xff]
  %v46 = vld [vmem:[%s1 + $0x38] sm:$0xff]
  %v47 = vld [vmem:[%s1 + $0x40] sm:$0xff]
  %v48 = vld [vmem:[%s1 + $0x48] sm:$0xff]
  %v49 = vld [vmem:[%s1 + $0x50] sm:$0xff]
  %v50 = vld [vmem:[%s1 + $0x58] sm:$0xff]
  %v51 = vld [vmem:[%s1 + $0x60] sm:$0xff]
  %v52 = vld [vmem:[%s1 + $0x68] sm:$0xff]
  %v53 = vld [vmem:[%s1 + $0x70] sm:$0xff]
  %v54 = vld [vmem:[%s1 + $0x78] sm:$0xff]
  %v55 = vld [vmem:[%s0] sm:$0xff]
  %v56 = vld [vmem:[%s0 + $0x8] sm:$0xff]
  %v57 = vld [vmem:[%s0 + $0x10] sm:$0xff]
  %v58 = vld [vmem:[%s0 + $0x18] sm:$0xff]
  %v59 = vld [vmem:[%s0 + $0x20] sm:$0xff]
  %v60 = vld [vmem:[%s0 + $0x28] sm:$0xff]
  %v61 = vld [vmem:[%s0 + $0x30] sm:$0xff]
  %v62 = vld [vmem:[%s0 + $0x38] sm:$0xff]
  %v63 = vld [vmem:[%s0 + $0x40] sm:$0xff]
  %v64 = vld [vmem:[%s0 + $0x48] sm:$0xff]
  %v65 = vld [vmem:[%s0 + $0x50] sm:$0xff]
  %v66 = vld [vmem:[%s0 + $0x58] sm:$0xff]
  %v67 = vld [vmem:[%s0 + $0x60] sm:$0xff]
  %v68 = vld [vmem:[%s0 + $0x68] sm:$0xff]
  %v69 = vld [vmem:[%s0 + $0x70] sm:$0xff]
  %v70 = vld [vmem:[%s0 + $0x78] sm:$0xff]
  %v71 = vxor.u32 %v39, 2147483648
  %v72 = vxor.u32 %v40, 2147483648
  %v73 = vxor.u32 %v41, 2147483648
  %v74 = vxor.u32 %v42, 2147483648
  %v75 = vxor.u32 %v43, 2147483648
  %v76 = vxor.u32 %v44, 2147483648
  %v77 = vxor.u32 %v45, 2147483648
  %v78 = vxor.u32 %v46, 2147483648
  %v79 = vxor.u32 %v47, 2147483648
  %v80 = vxor.u32 %v48, 2147483648
  %v81 = vxor.u32 %v49, 2147483648
  %v82 = vxor.u32 %v50, 2147483648
  %v83 = vxor.u32 %v51, 2147483648
  %v84 = vxor.u32 %v52, 2147483648
  %v85 = vxor.u32 %v53, 2147483648
  %v86 = vxor.u32 %v54, 2147483648
  %v87 = vmul.f32 %v71, 1.442695
  %v88 = vpow.pop %v87
  %v89 = vmul.f32 %v72, 1.442695
  %v90 = vpow.pop %v89
  %v91 = vmul.f32 %v73, 1.442695
  %v92 = vpow.pop %v91
  %v93 = vmul.f32 %v74, 1.442695
  %v94 = vpow.pop %v93
  %v95 = vmul.f32 %v75, 1.442695
  %v96 = vpow.pop %v95
  %v97 = vmul.f32 %v76, 1.442695
  %v98 = vpow.pop %v97
  %v99 = vmul.f32 %v77, 1.442695
  %v100 = vpow.pop %v99
  %v101 = vmul.f32 %v78, 1.442695
  %v102 = vpow.pop %v101
  %v103 = vmul.f32 %v79, 1.442695
  %v104 = vpow.pop %v103
  %v105 = vmul.f32 %v80, 1.442695
  %v106 = vpow.pop %v105
  %v107 = vmul.f32 %v81, 1.442695
  %v108 = vpow.pop %v107
  %v109 = vmul.f32 %v82, 1.442695
  %v110 = vpow.pop %v109
  %v111 = vmul.f32 %v83, 1.442695
  %v112 = vpow.pop %v111
  %v113 = vmul.f32 %v84, 1.442695
  %v114 = vpow.pop %v113
  %v115 = vmul.f32 %v85, 1.442695
  %v116 = vpow.pop %v115
  %v117 = vmul.f32 %v86, 1.442695
  %v118 = vpow.pop %v117
  %v119 = vadd.f32 %v88, 1.0
  %v120 = vadd.f32 %v90, 1.0
  %v121 = vadd.f32 %v92, 1.0
  %v122 = vadd.f32 %v94, 1.0
  %v123 = vadd.f32 %v96, 1.0
  %v124 = vadd.f32 %v98, 1.0
  %v125 = vadd.f32 %v100, 1.0
  %v126 = vadd.f32 %v102, 1.0
  %v127 = vadd.f32 %v104, 1.0
  %v128 = vadd.f32 %v106, 1.0
  %v129 = vadd.f32 %v108, 1.0
  %v130 = vadd.f32 %v110, 1.0
  %v131 = vadd.f32 %v112, 1.0
  %v132 = vadd.f32 %v114, 1.0
  %v133 = vadd.f32 %v116, 1.0
  %v134 = vadd.f32 %v118, 1.0
  %v135 = vrcp.pop %v119
  %v136 = vmul.f32 1.0, %v135
  %v137 = vrcp.pop %v120
  %v138 = vmul.f32 1.0, %v137
  %v139 = vrcp.pop %v121
  %v140 = vmul.f32 1.0, %v139
  %v141 = vrcp.pop %v122
  %v142 = vmul.f32 1.0, %v141
  %v143 = vrcp.pop %v123
  %v144 = vmul.f32 1.0, %v143
  %v145 = vrcp.pop %v124
  %v146 = vmul.f32 1.0, %v145
  %v147 = vrcp.pop %v125
  %v148 = vmul.f32 1.0, %v147
  %v149 = vrcp.pop %v126
  %v150 = vmul.f32 1.0, %v149
  %v151 = vrcp.pop %v127
  %v152 = vmul.f32 1.0, %v151
  %v153 = vrcp.pop %v128
  %v154 = vmul.f32 1.0, %v153
  %v155 = vrcp.pop %v129
  %v156 = vmul.f32 1.0, %v155
  %v157 = vrcp.pop %v130
  %v158 = vmul.f32 1.0, %v157
  %v159 = vrcp.pop %v131
  %v160 = vmul.f32 1.0, %v159
  %v161 = vrcp.pop %v132
  %v162 = vmul.f32 1.0, %v161
  %v163 = vrcp.pop %v133
  %v164 = vmul.f32 1.0, %v163
  %v165 = vrcp.pop %v134
  %v166 = vmul.f32 1.0, %v165
  %v167 = vmul.f32 %v39, %v136
  %v168 = vmul.f32 %v40, %v138
  %v169 = vmul.f32 %v41, %v140
  %v170 = vmul.f32 %v42, %v142
  %v171 = vmul.f32 %v43, %v144
  %v172 = vmul.f32 %v44, %v146
  %v173 = vmul.f32 %v45, %v148
  %v174 = vmul.f32 %v46, %v150
  %v175 = vmul.f32 %v47, %v152
  %v176 = vmul.f32 %v48, %v154
  %v177 = vmul.f32 %v49, %v156
  %v178 = vmul.f32 %v50, %v158
  %v179 = vmul.f32 %v51, %v160
  %v180 = vmul.f32 %v52, %v162
  %v181 = vmul.f32 %v53, %v164
  %v182 = vmul.f32 %v54, %v166
  %v183 = vmul.f32 %v55, %v167
  %v184 = vmul.f32 %v56, %v168
  %v185 = vmul.f32 %v57, %v169
  %v186 = vmul.f32 %v58, %v170
  %v187 = vmul.f32 %v59, %v171
  %v188 = vmul.f32 %v60, %v172
  %v189 = vmul.f32 %v61, %v173
  %v190 = vmul.f32 %v62, %v174
  %v191 = vmul.f32 %v63, %v175
  %v192 = vmul.f32 %v64, %v176
  %v193 = vmul.f32 %v65, %v177
  %v194 = vmul.f32 %v66, %v178
  %v195 = vmul.f32 %v67, %v179
  %v196 = vmul.f32 %v68, %v180
  %v197 = vmul.f32 %v69, %v181
  %v198 = vmul.f32 %v70, %v182
  %v199 = vpack.c.bf16 %v184, %v183
  %v200 = vpack.c.bf16 %v186, %v185
  %v201 = vpack.c.bf16 %v188, %v187
  %v202 = vpack.c.bf16 %v190, %v189
  %v203 = vpack.c.bf16 %v192, %v191
  %v204 = vpack.c.bf16 %v194, %v193
  %v205 = vpack.c.bf16 %v196, %v195
  %v206 = vpack.c.bf16 %v198, %v197
  %v207 = vld [vmem:[#allocation2] sm:$0xff]
  %v208 = vld [vmem:[#allocation2 + $0x8] sm:$0xff]
  %v209 = vld [vmem:[#allocation2 + $0x10] sm:$0xff]
  %v210 = vld [vmem:[#allocation2 + $0x18] sm:$0xff]
  %v211 = vld [vmem:[#allocation2 + $0x20] sm:$0xff]
  %v212 = vld [vmem:[#allocation2 + $0x28] sm:$0xff]
  %v213 = vld [vmem:[#allocation2 + $0x30] sm:$0xff]
  %v214 = vld [vmem:[#allocation2 + $0x38] sm:$0xff]
  %v215 = vld [vmem:[#allocation2 + $0x40] sm:$0xff]
  %v216 = vld [vmem:[#allocation2 + $0x48] sm:$0xff]
  %v217 = vld [vmem:[#allocation2 + $0x50] sm:$0xff]
  %v218 = vld [vmem:[#allocation2 + $0x58] sm:$0xff]
  %v219 = vld [vmem:[#allocation2 + $0x60] sm:$0xff]
  %v220 = vld [vmem:[#allocation2 + $0x68] sm:$0xff]
  %v221 = vld [vmem:[#allocation2 + $0x70] sm:$0xff]
  %v222 = vld [vmem:[#allocation2 + $0x78] sm:$0xff]
  %v223 = vld [vmem:[%s2] sm:$0xf]
  %v224 = vld [vmem:[%s2 + $0x4] sm:$0xf]
  %v225 = vld [vmem:[%s2 + $0x8] sm:$0xf]
  %v226 = vld [vmem:[%s2 + $0xc] sm:$0xf]
  %v227 = vld [vmem:[%s2 + $0x10] sm:$0xf]
  %v228 = vld [vmem:[%s2 + $0x14] sm:$0xf]
  %v229 = vld [vmem:[%s2 + $0x18] sm:$0xf]
  %v230 = vld [vmem:[%s2 + $0x1c] sm:$0xf]
  %v239 = vunpack.c.l.b16 %v223
  %v240 = vunpack.c.l.b16 %v224
  %v241 = vunpack.c.l.b16 %v225
  %v242 = vunpack.c.l.b16 %v226
  %v243 = vunpack.c.l.b16 %v227
  %v244 = vunpack.c.l.b16 %v228
  %v245 = vunpack.c.l.b16 %v229
  %v246 = vunpack.c.l.b16 %v230
  %v247 = vpack.c.b16 %v240, %v239
  %v248 = vpack.c.b16 %v242, %v241
  %v249 = vpack.c.b16 %v244, %v243
  %v250 = vpack.c.b16 %v246, %v245
  %vm255 = vcmask 523264
  %v257 = vsel %vm255, %v199, 0
  %v260 = vsel %vm255, %v200, 0
  %v263 = vsel %vm255, %v201, 0
  %v266 = vsel %vm255, %v202, 0
  %v269 = vsel %vm255, %v203, 0
  %v272 = vsel %vm255, %v204, 0
  %v275 = vsel %vm255, %v205, 0
  %v278 = vsel %vm255, %v206, 0
  %280 = vmatprep.subr.bf16.mxu0 0
  %281 = vmatpush1.bf16.msra.mxu0 %v247
  %282 = vmatprep.subr.bf16.mxu0 0
  %283 = vmatpush1.bf16.msra.mxu0 %v248
  %284 = vmatprep.subr.bf16.mxu0 0
  %285 = vmatpush1.bf16.msra.mxu0 %v249
  %286 = vmatprep.subr.bf16.mxu0 0
  %287 = vmatpush1.bf16.msra.mxu0 %v250
  %288 = vmatprep.subr.bf16.mxu0 0
  %289 = vmatpush1.bf16.msra.mxu0 0
  %290 = vmatprep.subr.bf16.mxu0 0
  %291 = vmatpush1.bf16.msra.mxu0 0
  %292 = vmatprep.subr.bf16.mxu0 0
  %293 = vmatpush1.bf16.msra.mxu0 0
  %294 = vmatprep.subr.bf16.mxu0 0
  %295 = vmatpush1.bf16.msra.mxu0 0
  %296 = vmatprep.subr.bf16.mxu0 0
  %297 = vmatpush1.bf16.msra.mxu0 0
  %298 = vmatprep.subr.bf16.mxu0 0
  %299 = vmatpush1.bf16.msra.mxu0 0
  %300 = vmatprep.subr.bf16.mxu0 0
  %301 = vmatpush1.bf16.msra.mxu0 0
  %302 = vmatprep.subr.bf16.mxu0 0
  %303 = vmatpush1.bf16.msra.mxu0 0
  %304 = vmatprep.subr.bf16.mxu0 0
  %305 = vmatpush1.bf16.msra.mxu0 0
  %306 = vmatprep.subr.bf16.mxu0 0
  %307 = vmatpush1.bf16.msra.mxu0 0
  %308 = vmatprep.subr.bf16.mxu0 0
  %309 = vmatpush1.bf16.msra.mxu0 0
  %310 = vmatprep.subr.bf16.mxu0 0
  %311 = vmatpush1.bf16.msra.mxu0 0
  %312 = vmatprep.mubr.bf16.mxu0 0
  %313 = vmatmul.mubr.bf16.gmra.mrb[0].mxu0 %v257
  %v314 = vpop.f32.mrb[0].mxu0
  %v315 = vadd.f32 0.0, %v314
  %v316 = vpop.f32.mrb[0].mxu0
  %v317 = vpop.f32.mrb[0].mxu0
  %v318 = vadd.f32 0.0, %v317
  %v319 = vpop.f32.mrb[0].mxu0
  %320 = vmatprep.mubr.bf16.mxu0 0
  %321 = vmatmul.mubr.bf16.gmra.mrb[0].mxu0 %v260
  %v322 = vpop.f32.mrb[0].mxu0
  %v323 = vadd.f32 0.0, %v322
  %v324 = vpop.f32.mrb[0].mxu0
  %v325 = vpop.f32.mrb[0].mxu0
  %v326 = vadd.f32 0.0, %v325
  %v327 = vpop.f32.mrb[0].mxu0
  %328 = vmatprep.mubr.bf16.mxu0 0
  %329 = vmatmul.mubr.bf16.gmra.mrb[0].mxu0 %v263
  %v330 = vpop.f32.mrb[0].mxu0
  %v331 = vadd.f32 0.0, %v330
  %v332 = vpop.f32.mrb[0].mxu0
  %v333 = vpop.f32.mrb[0].mxu0
  %v334 = vadd.f32 0.0, %v333
  %v335 = vpop.f32.mrb[0].mxu0
  %336 = vmatprep.mubr.bf16.mxu0 0
  %337 = vmatmul.mubr.bf16.gmra.mrb[0].mxu0 %v266
  %v338 = vpop.f32.mrb[0].mxu0
  %v339 = vadd.f32 0.0, %v338
  %v340 = vpop.f32.mrb[0].mxu0
  %v341 = vpop.f32.mrb[0].mxu0
  %v342 = vadd.f32 0.0, %v341
  %v343 = vpop.f32.mrb[0].mxu0
  %344 = vmatprep.mubr.bf16.mxu0 0
  %345 = vmatmul.mubr.bf16.gmra.mrb[0].mxu0 %v269
  %v346 = vpop.f32.mrb[0].mxu0
  %v347 = vadd.f32 0.0, %v346
  %v348 = vpop.f32.mrb[0].mxu0
  %v349 = vpop.f32.mrb[0].mxu0
  %v350 = vadd.f32 0.0, %v349
  %v351 = vpop.f32.mrb[0].mxu0
  %352 = vmatprep.mubr.bf16.mxu0 0
  %353 = vmatmul.mubr.bf16.gmra.mrb[0].mxu0 %v272
  %v354 = vpop.f32.mrb[0].mxu0
  %v355 = vadd.f32 0.0, %v354
  %v356 = vpop.f32.mrb[0].mxu0
  %v357 = vpop.f32.mrb[0].mxu0
  %v358 = vadd.f32 0.0, %v357
  %v359 = vpop.f32.mrb[0].mxu0
  %360 = vmatprep.mubr.bf16.mxu0 0
  %361 = vmatmul.mubr.bf16.gmra.mrb[0].mxu0 %v275
  %v362 = vpop.f32.mrb[0].mxu0
  %v363 = vadd.f32 0.0, %v362
  %v364 = vpop.f32.mrb[0].mxu0
  %v365 = vpop.f32.mrb[0].mxu0
  %v366 = vadd.f32 0.0, %v365
  %v367 = vpop.f32.mrb[0].mxu0
  %368 = vmatprep.mubr.bf16.mxu0 0
  %369 = vmatmul.mubr.bf16.gmra.mrb[0].mxu0 %v278
  %v370 = vpop.f32.mrb[0].mxu0
  %v371 = vadd.f32 0.0, %v370
  %v372 = vpop.f32.mrb[0].mxu0
  %v373 = vpop.f32.mrb[0].mxu0
  %v374 = vadd.f32 0.0, %v373
  %v375 = vpop.f32.mrb[0].mxu0
  %376 = vdwg.mxu0
  %v377 = vadd.f32 %v207, %v315
  %v378 = vadd.f32 %v208, %v318
  %v379 = vadd.f32 %v209, %v323
  %v380 = vadd.f32 %v210, %v326
  %v381 = vadd.f32 %v211, %v331
  %v382 = vadd.f32 %v212, %v334
  %v383 = vadd.f32 %v213, %v339
  %v384 = vadd.f32 %v214, %v342
  %v385 = vadd.f32 %v215, %v347
  %v386 = vadd.f32 %v216, %v350
  %v387 = vadd.f32 %v217, %v355
  %v388 = vadd.f32 %v218, %v358
  %v389 = vadd.f32 %v219, %v363
  %v390 = vadd.f32 %v220, %v366
  %v391 = vadd.f32 %v221, %v371
  %v392 = vadd.f32 %v222, %v374
  %vm393 = vcmask 261120
  %394 = vst.msk [vmem:[#allocation2] sm:$0xff] %vm393, %v377
  %395 = vst.msk [vmem:[#allocation2 + $0x8] sm:$0xff] %vm393, %v378
  %396 = vst.msk [vmem:[#allocation2 + $0x10] sm:$0xff] %vm393, %v379
  %397 = vst.msk [vmem:[#allocation2 + $0x18] sm:$0xff] %vm393, %v380
  %398 = vst.msk [vmem:[#allocation2 + $0x20] sm:$0xff] %vm393, %v381
  %399 = vst.msk [vmem:[#allocation2 + $0x28] sm:$0xff] %vm393, %v382
  %400 = vst.msk [vmem:[#allocation2 + $0x30] sm:$0xff] %vm393, %v383
  %401 = vst.msk [vmem:[#allocation2 + $0x38] sm:$0xff] %vm393, %v384
  %402 = vst.msk [vmem:[#allocation2 + $0x40] sm:$0xff] %vm393, %v385
  %403 = vst.msk [vmem:[#allocation2 + $0x48] sm:$0xff] %vm393, %v386
  %404 = vst.msk [vmem:[#allocation2 + $0x50] sm:$0xff] %vm393, %v387
  %405 = vst.msk [vmem:[#allocation2 + $0x58] sm:$0xff] %vm393, %v388
  %406 = vst.msk [vmem:[#allocation2 + $0x60] sm:$0xff] %vm393, %v389
  %407 = vst.msk [vmem:[#allocation2 + $0x68] sm:$0xff] %vm393, %v390
  %408 = vst.msk [vmem:[#allocation2 + $0x70] sm:$0xff] %vm393, %v391
  %409 = vst.msk [vmem:[#allocation2 + $0x78] sm:$0xff] %vm393, %v392
  // Predicated region
  $region22: #{_lambda_.11} parent=0 // pred_check
    %p410 = pneg %p18
  $region23: #{_lambda_.11} parent=0 // pred_check_branch
    %412 = sbr.rel (%p410) target = $region25
  $region24: #{_lambda_.11} parent=0 // pred_region
    %v413 = vld [vmem:[#allocation2] sm:$0xff]
    %v414 = vld [vmem:[#allocation2 + $0x8] sm:$0xff]
    %v415 = vld [vmem:[#allocation2 + $0x10] sm:$0xff]
    %v416 = vld [vmem:[#allocation2 + $0x18] sm:$0xff]
    %v417 = vld [vmem:[#allocation2 + $0x20] sm:$0xff]
    %v418 = vld [vmem:[#allocation2 + $0x28] sm:$0xff]
    %v419 = vld [vmem:[#allocation2 + $0x30] sm:$0xff]
    %v420 = vld [vmem:[#allocation2 + $0x38] sm:$0xff]
    %v421 = vld [vmem:[#allocation2 + $0x40] sm:$0xff]
    %v422 = vld [vmem:[#allocation2 + $0x48] sm:$0xff]
    %v423 = vld [vmem:[#allocation2 + $0x50] sm:$0xff]
    %v424 = vld [vmem:[#allocation2 + $0x58] sm:$0xff]
    %v425 = vld [vmem:[#allocation2 + $0x60] sm:$0xff]
    %v426 = vld [vmem:[#allocation2 + $0x68] sm:$0xff]
    %v427 = vld [vmem:[#allocation2 + $0x70] sm:$0xff]
    %v428 = vld [vmem:[#allocation2 + $0x78] sm:$0xff]
    %v429 = vld [vmem:[%s3] sm:$0x1]
    %v431 = vlaneseq
    %v432 = vshrl.u32 %v431, 7
    %v433 = vsub.s32 0, %v432
    %v434 = vrot.slane %v429, %v433
    %v436 = vadd.f32 %v413, %v434
    %v437 = vadd.f32 %v414, %v434
    %v438 = vadd.f32 %v415, %v434
    %v439 = vadd.f32 %v416, %v434
    %v440 = vadd.f32 %v417, %v434
    %v441 = vadd.f32 %v418, %v434
    %v442 = vadd.f32 %v419, %v434
    %v443 = vadd.f32 %v420, %v434
    %v444 = vadd.f32 %v421, %v434
    %v445 = vadd.f32 %v422, %v434
    %v446 = vadd.f32 %v423, %v434
    %v447 = vadd.f32 %v424, %v434
    %v448 = vadd.f32 %v425, %v434
    %v449 = vadd.f32 %v426, %v434
    %v450 = vadd.f32 %v427, %v434
    %v451 = vadd.f32 %v428, %v434
    %452 = vst.msk [vmem:[%s4] sm:$0xff] %vm393, %v436
    %453 = vst.msk [vmem:[%s4 + $0x8] sm:$0xff] %vm393, %v437
    %454 = vst.msk [vmem:[%s4 + $0x10] sm:$0xff] %vm393, %v438
    %455 = vst.msk [vmem:[%s4 + $0x18] sm:$0xff] %vm393, %v439
    %456 = vst.msk [vmem:[%s4 + $0x20] sm:$0xff] %vm393, %v440
    %457 = vst.msk [vmem:[%s4 + $0x28] sm:$0xff] %vm393, %v441
    %458 = vst.msk [vmem:[%s4 + $0x30] sm:$0xff] %vm393, %v442
    %459 = vst.msk [vmem:[%s4 + $0x38] sm:$0xff] %vm393, %v443
    %460 = vst.msk [vmem:[%s4 + $0x40] sm:$0xff] %vm393, %v444
    %461 = vst.msk [vmem:[%s4 + $0x48] sm:$0xff] %vm393, %v445
    %462 = vst.msk [vmem:[%s4 + $0x50] sm:$0xff] %vm393, %v446
    %463 = vst.msk [vmem:[%s4 + $0x58] sm:$0xff] %vm393, %v447
    %464 = vst.msk [vmem:[%s4 + $0x60] sm:$0xff] %vm393, %v448
    %465 = vst.msk [vmem:[%s4 + $0x68] sm:$0xff] %vm393, %v449
    %466 = vst.msk [vmem:[%s4 + $0x70] sm:$0xff] %vm393, %v450
    %467 = vst.msk [vmem:[%s4 + $0x78] sm:$0xff] %vm393, %v451
  $region25: #{_lambda_.11} parent=0 // pred_fallthru
    _
  // Predicated region
  $region26: #{_lambda_.11} parent=0 // pred_check
    _
  $region27: #{_lambda_.11} parent=0 // pred_check_branch
    %469 = sbr.rel (0) target = $region29
  $region28: #{_lambda_.11} parent=0 // pred_region
    _
  $region29: #{_lambda_.11} parent=0 // pred_fallthru
    _
  // Predicated region
  $region30: #{_lambda_.11} parent=0 // pred_check
    _
  $region31: #{_lambda_.11} parent=0 // pred_check_branch
    %471 = sbr.rel (0) target = $region33
  $region32: #{_lambda_.11} parent=0 // pred_region
    _
  $region33: #{_lambda_.11} parent=0 // pred_fallthru
    _

// kernel: _lambda_.10
$region0: #{_lambda_.10}
  #allocation0 [shape = 'u32[]', space=smem, size = 0x4, offset = 0x4, fixed_abs, tag = 'smem constant byte address 0x4 - core index']
  #allocation1 [shape = 'u32[144,128]{1,0:T(1,128)}', space=vmem, size = 0x12000, scoped, tag = 'internal scratch']
  #allocation2 [shape = 'f32[64,64]{1,0:T(8,128)}', space=vmem, size = 0x8000, scoped, tag = 'scratch operand']
  #allocation3 [shape = 'f32[8,256]{1,0:T(8,128)}', space=vmem, size = 0x2000, scoped, tag = 'scratch operand']
  %s0 = inlined_call_operand.vmem [shape: f32[2,64,256], index: 0, kind: input, shape index: {}]
  %s1 = inlined_call_operand.vmem [shape: f32[2,64,64], index: 1, kind: input, shape index: {}]
  %s2 = inlined_call_operand.vmem [shape: f32[16,64], index: 2, kind: input, shape index: {}]
  %s3 = inlined_call_operand.vmem [shape: f32[2,64,64], index: 3, kind: input, shape index: {}]
  %s4 = inlined_call_operand.vmem [shape: f32[2,64,16], index: 4, kind: input, shape index: {}]
  %s5 = inlined_call_operand.vmem [shape: f32[1,256], index: 5, kind: input, shape index: {}]
  %s6 = inlined_call_operand.vmem [shape: f32[1,64], index: 6, kind: input, shape index: {}]
  %s7 = inlined_call_operand.vmem [shape: f32[2,64,256], index: 7, kind: output, shape index: {}]
  %s8 = sld [smem:[#allocation0]]
  $region72: #{_lambda_.10} parent=0
    _
  %s10 = ssub.s32 1, %s8
  %s11 = scalar_select 0, %s10, %s8
  loop: start=0, step=1, limit=4
  $region2: #{_lambda_.10} parent=0 // loop_pre_header
    _
  $region3: #{_lambda_.10} parent=0 // loop_header
    %s13 = sphi 0, %s17
    %p14 = scmp.ge.s32.totalorder %s13, 4
    %s20 = sphi 0, %s32
    %s21 = sphi 0, %s28
    %s22 = sphi 0, %s20
    %s23 = sphi 0, %s21
    %s24 = sphi 0, %s22
    %s25 = sphi 0, %s23
    %s37 = sphi 0, %s39
    %s40 = sphi 0, %s37
    %s41 = sphi 0, %s40
    %s57 = sphi 0, %s41
    %s65 = sphi 0, %s67
    %s68 = sphi 0, %s65
    %s69 = sphi 0, %s68
    %s85 = sphi 0, %s69
    %s89 = sphi 0, %s89
    %s91 = sphi 0, %s89
    %s92 = sphi 0, %s91
    %s106 = sphi 0, %s92
    %s114 = sphi 0, %s116
    %s117 = sphi 0, %s114
    %s118 = sphi 0, %s117
    %s134 = sphi 0, %s118
    %s142 = sphi 0, %s144
    %s145 = sphi 0, %s142
    %s146 = sphi 0, %s145
    %s162 = sphi 0, %s146
    %s166 = sphi 0, %s166
    %s168 = sphi 0, %s166
    %s169 = sphi 0, %s168
    %s183 = sphi 0, %s169
    %s187 = sphi 0, %s187
    %s189 = sphi 0, %s187
    %s190 = sphi 0, %s189
    %s204 = sphi 0, %s190
    %s212 = sphi 0, %s214
    %s215 = sphi 0, %s212
    %s216 = sphi 0, %s215
    %s232 = sphi 0, %s216
  $region4: #{_lambda_.10} parent=0 // loop_header_branch
    %16 = sbr.rel (%p14) target = $region8
  $region5: #{_lambda_.10} parent=0 // loop_body
    %s18 = ssub.s32 %s13, 1
    %s19 = ssub.s32 %s13, 2
    %s26 = sadd.s32 1, %s21
    %p27 = scmp.ge.s32.totalorder %s26, 1
    %s28 = scalar_select %p27, 0, %s26
    %s29 = sadd.s32 1, %s20
    %s30 = scalar_select %p27, %s29, %s20
    %p31 = scmp.ge.s32.totalorder %s30, 2
    %s32 = scalar_select %p31, 0, %s30
    %s33 = ssub.s32 %s20, %s32
    %s34 = ssub.s32 %s21, %s28
    %s35 = sor.u32 %s33, %s34
    %p36 = scmp.eq.s32.totalorder %s35, 0
    %s38 = sadd.s32 %s37, 1
    %s39 = scalar_select %p36, %s37, %s38
    %p42 = pneg %p36
    %p43 = scmp.eq.s32.totalorder %s13, 1
    %p44 = por %p42, %p43
    %p45 = scmp.ne.s32.totalorder %s37, %s40
    %p46 = scmp.eq.s32.totalorder %s13, 0
    %p47 = por %p45, %p46
    %p48 = scmp.ne.s32.totalorder %s37, %s40
    %p49 = scmp.eq.s32.totalorder %s18, 1
    %p50 = por %p48, %p49
    %p51 = scmp.ne.s32.totalorder %s40, %s41
    %p52 = scmp.eq.s32.totalorder %s18, 0
    %p53 = por %p51, %p52
    %p54 = scmp.ne.s32.totalorder %s40, %s41
    %p55 = scmp.eq.s32.totalorder %s19, 1
    %p56 = por %p54, %p55
    %p58 = scmp.ne.s32.totalorder %s41, %s57
    %p59 = scmp.eq.s32.totalorder %s19, 0
    %p60 = por %p58, %p59
    %s61 = ssub.s32 %s20, %s32
    %s62 = ssub.s32 %s21, %s28
    %s63 = sor.u32 %s61, %s62
    %p64 = scmp.eq.s32.totalorder %s63, 0
    %s66 = sadd.s32 %s65, 1
    %s67 = scalar_select %p64, %s65, %s66
    %p70 = pneg %p64
    %p71 = scmp.eq.s32.totalorder %s13, 1
    %p72 = por %p70, %p71
    %p73 = scmp.ne.s32.totalorder %s65, %s68
    %p74 = scmp.eq.s32.totalorder %s13, 0
    %p75 = por %p73, %p74
    %p76 = scmp.ne.s32.totalorder %s65, %s68
    %p77 = scmp.eq.s32.totalorder %s18, 1
    %p78 = por %p76, %p77
    %p79 = scmp.ne.s32.totalorder %s68, %s69
    %p80 = scmp.eq.s32.totalorder %s18, 0
    %p81 = por %p79, %p80
    %p82 = scmp.ne.s32.totalorder %s68, %s69
    %p83 = scmp.eq.s32.totalorder %s19, 1
    %p84 = por %p82, %p83
    %p86 = scmp.ne.s32.totalorder %s69, %s85
    %p87 = scmp.eq.s32.totalorder %s19, 0
    %p88 = por %p86, %p87
    %s90 = sadd.s32 %s89, 1
    %p93 = scmp.eq.s32.totalorder %s13, 1
    %p94 = scmp.ne.s32.totalorder %s89, %s91
    %p95 = scmp.eq.s32.totalorder %s13, 0
    %p96 = por %p94, %p95
    %p97 = scmp.ne.s32.totalorder %s89, %s91
    %p98 = scmp.eq.s32.totalorder %s18, 1
    %p99 = por %p97, %p98
    %p100 = scmp.ne.s32.totalorder %s91, %s92
    %p101 = scmp.eq.s32.totalorder %s18, 0
    %p102 = por %p100, %p101
    %p103 = scmp.ne.s32.totalorder %s91, %s92
    %p104 = scmp.eq.s32.totalorder %s19, 1
    %p105 = por %p103, %p104
    %p107 = scmp.ne.s32.totalorder %s92, %s106
    %p108 = scmp.eq.s32.totalorder %s19, 0
    %p109 = por %p107, %p108
    %s110 = ssub.s32 %s20, %s32
    %s111 = ssub.s32 %s21, %s28
    %s112 = sor.u32 %s110, %s111
    %p113 = scmp.eq.s32.totalorder %s112, 0
    %s115 = sadd.s32 %s114, 1
    %s116 = scalar_select %p113, %s114, %s115
    %p119 = pneg %p113
    %p120 = scmp.eq.s32.totalorder %s13, 1
    %p121 = por %p119, %p120
    %p122 = scmp.ne.s32.totalorder %s114, %s117
    %p123 = scmp.eq.s32.totalorder %s13, 0
    %p124 = por %p122, %p123
    %p125 = scmp.ne.s32.totalorder %s114, %s117
    %p126 = scmp.eq.s32.totalorder %s18, 1
    %p127 = por %p125, %p126
    %p128 = scmp.ne.s32.totalorder %s117, %s118
    %p129 = scmp.eq.s32.totalorder %s18, 0
    %p130 = por %p128, %p129
    %p131 = scmp.ne.s32.totalorder %s117, %s118
    %p132 = scmp.eq.s32.totalorder %s19, 1
    %p133 = por %p131, %p132
    %p135 = scmp.ne.s32.totalorder %s118, %s134
    %p136 = scmp.eq.s32.totalorder %s19, 0
    %p137 = por %p135, %p136
    %s138 = ssub.s32 %s20, %s32
    %s139 = ssub.s32 %s21, %s28
    %s140 = sor.u32 %s138, %s139
    %p141 = scmp.eq.s32.totalorder %s140, 0
    %s143 = sadd.s32 %s142, 1
    %s144 = scalar_select %p141, %s142, %s143
    %p147 = pneg %p141
    %p148 = scmp.eq.s32.totalorder %s13, 1
    %p149 = por %p147, %p148
    %p150 = scmp.ne.s32.totalorder %s142, %s145
    %p151 = scmp.eq.s32.totalorder %s13, 0
    %p152 = por %p150, %p151
    %p153 = scmp.ne.s32.totalorder %s142, %s145
    %p154 = scmp.eq.s32.totalorder %s18, 1
    %p155 = por %p153, %p154
    %p156 = scmp.ne.s32.totalorder %s145, %s146
    %p157 = scmp.eq.s32.totalorder %s18, 0
    %p158 = por %p156, %p157
    %p159 = scmp.ne.s32.totalorder %s145, %s146
    %p160 = scmp.eq.s32.totalorder %s19, 1
    %p161 = por %p159, %p160
    %p163 = scmp.ne.s32.totalorder %s146, %s162
    %p164 = scmp.eq.s32.totalorder %s19, 0
    %p165 = por %p163, %p164
    %s167 = sadd.s32 %s166, 1
    %p170 = scmp.eq.s32.totalorder %s13, 1
    %p171 = scmp.ne.s32.totalorder %s166, %s168
    %p172 = scmp.eq.s32.totalorder %s13, 0
    %p173 = por %p171, %p172
    %p174 = scmp.ne.s32.totalorder %s166, %s168
    %p175 = scmp.eq.s32.totalorder %s18, 1
    %p176 = por %p174, %p175
    %p177 = scmp.ne.s32.totalorder %s168, %s169
    %p178 = scmp.eq.s32.totalorder %s18, 0
    %p179 = por %p177, %p178
    %p180 = scmp.ne.s32.totalorder %s168, %s169
    %p181 = scmp.eq.s32.totalorder %s19, 1
    %p182 = por %p180, %p181
    %p184 = scmp.ne.s32.totalorder %s169, %s183
    %p185 = scmp.eq.s32.totalorder %s19, 0
    %p186 = por %p184, %p185
    %s188 = sadd.s32 %s187, 1
    %p191 = scmp.eq.s32.totalorder %s13, 1
    %p192 = scmp.ne.s32.totalorder %s187, %s189
    %p193 = scmp.eq.s32.totalorder %s13, 0
    %p194 = por %p192, %p193
    %p195 = scmp.ne.s32.totalorder %s187, %s189
    %p196 = scmp.eq.s32.totalorder %s18, 1
    %p197 = por %p195, %p196
    %p198 = scmp.ne.s32.totalorder %s189, %s190
    %p199 = scmp.eq.s32.totalorder %s18, 0
    %p200 = por %p198, %p199
    %p201 = scmp.ne.s32.totalorder %s189, %s190
    %p202 = scmp.eq.s32.totalorder %s19, 1
    %p203 = por %p201, %p202
    %p205 = scmp.ne.s32.totalorder %s190, %s204
    %p206 = scmp.eq.s32.totalorder %s19, 0
    %p207 = por %p205, %p206
    %s208 = ssub.s32 %s20, %s32
    %s209 = ssub.s32 %s21, %s28
    %s210 = sor.u32 %s208, %s209
    %p211 = scmp.eq.s32.totalorder %s210, 0
    %s213 = sadd.s32 %s212, 1
    %s214 = scalar_select %p211, %s212, %s213
    %p217 = pneg %p211
    %p218 = scmp.eq.s32.totalorder %s13, 1
    %p219 = por %p217, %p218
    %p220 = scmp.ne.s32.totalorder %s212, %s215
    %p221 = scmp.eq.s32.totalorder %s13, 0
    %p222 = por %p220, %p221
    %p223 = scmp.ne.s32.totalorder %s212, %s215
    %p224 = scmp.eq.s32.totalorder %s18, 1
    %p225 = por %p223, %p224
    %p226 = scmp.ne.s32.totalorder %s215, %s216
    %p227 = scmp.eq.s32.totalorder %s18, 0
    %p228 = por %p226, %p227
    %p229 = scmp.ne.s32.totalorder %s215, %s216
    %p230 = scmp.eq.s32.totalorder %s19, 1
    %p231 = por %p229, %p230
    %p233 = scmp.ne.s32.totalorder %s216, %s232
    %p234 = scmp.eq.s32.totalorder %s19, 0
    %p235 = por %p233, %p234
    %p236 = scmp.le.s32.totalorder 1, %s13
    %p237 = scmp.lt.s32.totalorder %s13, 3
    %p238 = pnand %p236, %p237
    %p239 = pneg %p238
    // Predicated region
    $region9: #{_lambda_.10} parent=5 // pred_check
      _
    $region10: #{_lambda_.10} parent=5 // pred_check_branch
      %241 = sbr.rel (%p238) target = $region12
    $region11: #{_lambda_.10} parent=5 // pred_region
      %s242 = ssub.s32 %s13, 1
      // Predicated region
      $region13: #{_lambda_.10} parent=11 // pred_check
        %p243 = pneg %p102
      $region14: #{_lambda_.10} parent=11 // pred_check_branch
        %245 = sbr.rel (%p243) target = $region16
      $region15: #{_lambda_.10} parent=11 // pred_region
        _
      $region16: #{_lambda_.10} parent=11 // pred_fallthru
        _
      // Predicated region
      $region17: #{_lambda_.10} parent=11 // pred_check
        %p246 = pneg %p179
      $region18: #{_lambda_.10} parent=11 // pred_check_branch
        %248 = sbr.rel (%p246) target = $region20
      $region19: #{_lambda_.10} parent=11 // pred_region
        _
      $region20: #{_lambda_.10} parent=11 // pred_fallthru
        _
      // Predicated region
      $region21: #{_lambda_.10} parent=11 // pred_check
        %p249 = pneg %p200
      $region22: #{_lambda_.10} parent=11 // pred_check_branch
        %251 = sbr.rel (%p249) target = $region24
      $region23: #{_lambda_.10} parent=11 // pred_region
        _
      $region24: #{_lambda_.10} parent=11 // pred_fallthru
        _
    $region12: #{_lambda_.10} parent=5 // pred_fallthru
      _
    %p252 = scmp.lt.s32.totalorder %s13, 2
    // Predicated region
    $region25: #{_lambda_.10} parent=5 // pred_check
      %p253 = pneg %p252
    $region26: #{_lambda_.10} parent=5 // pred_check_branch
      %255 = sbr.rel (%p253) target = $region28
    $region27: #{_lambda_.10} parent=5 // pred_region
      // Predicated region
      $region29: #{_lambda_.10} parent=27 // pred_check
        %p256 = pneg %p47
      $region30: #{_lambda_.10} parent=27 // pred_check_branch
        %258 = sbr.rel (%p256) target = $region32
      $region31: #{_lambda_.10} parent=27 // pred_region
        %s259 = smul.u32 8, %s21
        %p260 = scmp.lt.s32.totalorder %s20, 1
        %s261 = scalar_select %p260, %s20, 1
        %p262 = scmp.lt.s32.totalorder %s259, 7
        %s263 = scalar_select %p262, %s259, 7
        %s264 = smul.addr %s263, 2
        %s265 = smul.addr %s261, 16
        %s266 = sadd.s32 %s264, %s265
        %s267 = smul.addr %s266, 8
        %s268 = scalar_lea.vmem %s0, %s267
        %s269 = smul.u32 8, %s21
      $region32: #{_lambda_.10} parent=27 // pred_fallthru
        _
      // Predicated region
      $region33: #{_lambda_.10} parent=27 // pred_check
        %p270 = pneg %p75
      $region34: #{_lambda_.10} parent=27 // pred_check_branch
        %272 = sbr.rel (%p270) target = $region36
      $region35: #{_lambda_.10} parent=27 // pred_region
        %s273 = smul.u32 8, %s21
        %p274 = scmp.lt.s32.totalorder %s20, 1
        %s275 = scalar_select %p274, %s20, 1
        %p276 = scmp.lt.s32.totalorder %s273, 7
        %s277 = scalar_select %p276, %s273, 7
        %s278 = smul.addr %s275, 8
        %s279 = sadd.s32 %s277, %s278
        %s280 = smul.addr %s279, 8
        %s281 = scalar_lea.vmem %s1, %s280
        %s282 = smul.u32 8, %s21
      $region36: #{_lambda_.10} parent=27 // pred_fallthru
        _
      // Predicated region
      $region37: #{_lambda_.10} parent=27 // pred_check
        %p283 = pneg %p124
      $region38: #{_lambda_.10} parent=27 // pred_check_branch
        %285 = sbr.rel (%p283) target = $region40
      $region39: #{_lambda_.10} parent=27 // pred_region
        %s286 = smul.u32 8, %s21
        %p287 = scmp.lt.s32.totalorder %s20, 1
        %s288 = scalar_select %p287, %s20, 1
        %p289 = scmp.lt.s32.totalorder %s286, 7
        %s290 = scalar_select %p289, %s286, 7
        %s291 = smul.addr %s288, 8
        %s292 = sadd.s32 %s290, %s291
        %s293 = smul.addr %s292, 8
        %s294 = scalar_lea.vmem %s3, %s293
        %s295 = smul.u32 8, %s21
      $region40: #{_lambda_.10} parent=27 // pred_fallthru
        _
      // Predicated region
      $region41: #{_lambda_.10} parent=27 // pred_check
        %p296 = pneg %p152
      $region42: #{_lambda_.10} parent=27 // pred_check_branch
        %298 = sbr.rel (%p296) target = $region44
      $region43: #{_lambda_.10} parent=27 // pred_region
        %s299 = smul.u32 8, %s21
        %p300 = scmp.lt.s32.totalorder %s20, 1
        %s301 = scalar_select %p300, %s20, 1
        %p302 = scmp.lt.s32.totalorder %s299, 7
        %s303 = scalar_select %p302, %s299, 7
        %s304 = smul.addr %s301, 8
        %s305 = sadd.s32 %s303, %s304
        %s306 = smul.addr %s305, 8
        %s307 = scalar_lea.vmem %s4, %s306
        %s308 = smul.u32 8, %s21
      $region44: #{_lambda_.10} parent=27 // pred_fallthru
        _
    $region28: #{_lambda_.10} parent=5 // pred_fallthru
      _
    %p309 = scmp.le.s32.totalorder 1, %s13
    %p310 = scmp.lt.s32.totalorder %s13, 3
    %p311 = pnand %p309, %p310
    %p312 = pneg %p311
    // Predicated region
    $region45: #{_lambda_.10} parent=5 // pred_check
      _
    $region46: #{_lambda_.10} parent=5 // pred_check_branch
      %314 = sbr.rel (%p311) target = $region48
    $region47: #{_lambda_.10} parent=5 // pred_region
      %s315 = ssub.s32 %s13, 1
      %s316 = smul.u32 8, %s23
      %p317 = scmp.lt.s32.totalorder %s22, 1
      %s318 = scalar_select %p317, %s22, 1
      %p319 = scmp.lt.s32.totalorder %s316, 7
      %s320 = scalar_select %p319, %s316, 7
      %s321 = smul.addr %s320, 2
      %s322 = smul.addr %s318, 16
      %s323 = sadd.s32 %s321, %s322
      %s324 = smul.addr %s323, 8
      %s325 = scalar_lea.vmem %s0, %s324
      %p326 = pneg %p53
      %p327 = pneg %p50
      %s328 = smul.u32 8, %s23
      %p329 = scmp.lt.s32.totalorder %s22, 1
      %s330 = scalar_select %p329, %s22, 1
      %p331 = scmp.lt.s32.totalorder %s328, 7
      %s332 = scalar_select %p331, %s328, 7
      %s333 = smul.addr %s330, 8
      %s334 = sadd.s32 %s332, %s333
      %s335 = smul.addr %s334, 8
      %s336 = scalar_lea.vmem %s1, %s335
      %p337 = pneg %p81
      %p338 = pneg %p78
      %p339 = pneg %p102
      %p340 = pneg %p99
      %s341 = smul.u32 8, %s23
      %p342 = scmp.lt.s32.totalorder %s22, 1
      %s343 = scalar_select %p342, %s22, 1
      %p344 = scmp.lt.s32.totalorder %s341, 7
      %s345 = scalar_select %p344, %s341, 7
      %s346 = smul.addr %s343, 8
      %s347 = sadd.s32 %s345, %s346
      %s348 = smul.addr %s347, 8
      %s349 = scalar_lea.vmem %s3, %s348
      %p350 = pneg %p130
      %p351 = pneg %p127
      %s352 = smul.u32 8, %s23
      %p353 = scmp.lt.s32.totalorder %s22, 1
      %s354 = scalar_select %p353, %s22, 1
      %p355 = scmp.lt.s32.totalorder %s352, 7
      %s356 = scalar_select %p355, %s352, 7
      %s357 = smul.addr %s354, 8
      %s358 = sadd.s32 %s356, %s357
      %s359 = smul.addr %s358, 8
      %s360 = scalar_lea.vmem %s4, %s359
      %p361 = pneg %p158
      %p362 = pneg %p155
      %p363 = pneg %p179
      %p364 = pneg %p176
      %p365 = pneg %p200
      %p366 = pneg %p197
      %p367 = pneg %p228
      %p368 = pneg %p225
      %s369 = smul.u32 8, %s23
      %p370 = scmp.lt.s32.totalorder %s22, 1
      %s371 = scalar_select %p370, %s22, 1
      %p372 = scmp.lt.s32.totalorder %s369, 7
      %s373 = scalar_select %p372, %s369, 7
      %s374 = smul.addr %s373, 2
      %s375 = smul.addr %s371, 16
      %s376 = sadd.s32 %s374, %s375
      %s377 = smul.addr %s376, 8
      %s378 = scalar_lea.vmem %s7, %s377
      %s379 = smul.u32 8, %s23
      %p380 = scmp.lt.s32.totalorder %s22, 1
      %s381 = scalar_select %p380, %s22, 1
      %p382 = scmp.lt.s32.totalorder %s379, 7
      %s383 = scalar_select %p382, %s379, 7
      %s384 = smul.addr %s383, 2
      %s385 = smul.addr %s381, 16
      %s386 = sadd.s32 %s384, %s385
      %s387 = smul.addr %s386, 8
      %s388 = scalar_lea.vmem %s0, %s387
      %s389 = smul.u32 8, %s23
      %s390 = smul.u32 8, %s23
      %p391 = scmp.lt.s32.totalorder %s22, 1
      %s392 = scalar_select %p391, %s22, 1
      %p393 = scmp.lt.s32.totalorder %s390, 7
      %s394 = scalar_select %p393, %s390, 7
      %s395 = smul.addr %s392, 8
      %s396 = sadd.s32 %s394, %s395
      %s397 = smul.addr %s396, 8
      %s398 = scalar_lea.vmem %s1, %s397
      %s399 = smul.u32 8, %s23
      %s400 = smul.u32 8, %s23
      %p401 = scmp.lt.s32.totalorder %s22, 1
      %s402 = scalar_select %p401, %s22, 1
      %p403 = scmp.lt.s32.totalorder %s400, 7
      %s404 = scalar_select %p403, %s400, 7
      %s405 = smul.addr %s402, 8
      %s406 = sadd.s32 %s404, %s405
      %s407 = smul.addr %s406, 8
      %s408 = scalar_lea.vmem %s3, %s407
      %s409 = smul.u32 8, %s23
      %s410 = smul.u32 8, %s23
      %p411 = scmp.lt.s32.totalorder %s22, 1
      %s412 = scalar_select %p411, %s22, 1
      %p413 = scmp.lt.s32.totalorder %s410, 7
      %s414 = scalar_select %p413, %s410, 7
      %s415 = smul.addr %s412, 8
      %s416 = sadd.s32 %s414, %s415
      %s417 = smul.addr %s416, 8
      %s418 = scalar_lea.vmem %s4, %s417
      %s419 = smul.u32 8, %s23
      %s420 = smul.u32 8, %s23
      %p421 = scmp.lt.s32.totalorder %s22, 1
      %s422 = scalar_select %p421, %s22, 1
      %p423 = scmp.lt.s32.totalorder %s420, 7
      %s424 = scalar_select %p423, %s420, 7
      %s425 = smul.addr %s424, 2
      %s426 = smul.addr %s422, 16
      %s427 = sadd.s32 %s425, %s426
      %s428 = smul.addr %s427, 8
      %s429 = scalar_lea.vmem %s7, %s428
      %s430 = smul.u32 8, %s23
      %p431 = scmp.eq.s32.totalorder %s23, 0
      // Predicated region
      $region49: #{_lambda_.10} parent=47 // pred_check
        %p432 = pneg %p431
      $region50: #{_lambda_.10} parent=47 // pred_check_branch
        %434 = sbr.rel (%p432) target = $region52
      $region51: #{_lambda_.10} parent=47 // pred_region
        %vm435 = vcmask 523264
        %436 = vst.msk [vmem:[#allocation2] sm:$0xff] %vm435, 0.0
        %437 = vst.msk [vmem:[#allocation2 + $0x8] sm:$0xff] %vm435, 0.0
        %438 = vst.msk [vmem:[#allocation2 + $0x10] sm:$0xff] %vm435, 0.0
        %439 = vst.msk [vmem:[#allocation2 + $0x18] sm:$0xff] %vm435, 0.0
        %440 = vst.msk [vmem:[#allocation2 + $0x20] sm:$0xff] %vm435, 0.0
        %441 = vst.msk [vmem:[#allocation2 + $0x28] sm:$0xff] %vm435, 0.0
        %442 = vst.msk [vmem:[#allocation2 + $0x30] sm:$0xff] %vm435, 0.0
        %443 = vst.msk [vmem:[#allocation2 + $0x38] sm:$0xff] %vm435, 0.0
      $region52: #{_lambda_.10} parent=47 // pred_fallthru
        _
      %v444 = vld [vmem:[%s2] sm:$0xff]
      %v445 = vld [vmem:[%s2 + $0x8] sm:$0xff]
      %v446 = vld [vmem:[%s6] sm:$0x1]
      %v447 = vld [vmem:[%s5] sm:$0x3]
      %v448 = vld [vmem:[#allocation2] sm:$0xff]
      %v449 = vld [vmem:[#allocation2 + $0x8] sm:$0xff]
      %v450 = vld [vmem:[#allocation2 + $0x10] sm:$0xff]
      %v451 = vld [vmem:[#allocation2 + $0x18] sm:$0xff]
      %v452 = vld [vmem:[#allocation2 + $0x20] sm:$0xff]
      %v453 = vld [vmem:[#allocation2 + $0x28] sm:$0xff]
      %v454 = vld [vmem:[#allocation2 + $0x30] sm:$0xff]
      %v455 = vld [vmem:[#allocation2 + $0x38] sm:$0xff]
      loop: start=0, step=1, limit=8
      $region53: #{_lambda_.10} parent=47 // loop_pre_header
        _
      $region54: #{_lambda_.10} parent=47 // loop_header
        %s457 = sphi 0, %s461
        %p458 = scmp.ge.s32.totalorder %s457, 8
        %v462 = vphi %v448, %v3229
        %v463 = vphi %v449, %v3230
        %v464 = vphi %v450, %v3321
        %v465 = vphi %v451, %v3322
        %v466 = vphi %v452, %v3414
        %v467 = vphi %v453, %v3415
        %v468 = vphi %v454, %v3503
        %v469 = vphi %v455, %v3504
      $region55: #{_lambda_.10} parent=47 // loop_header_branch
        %460 = sbr.rel (%p458) target = $region59
      $region56: #{_lambda_.10} parent=47 // loop_body
        %s470 = smul.u32 %s457, 8
        %s471 = scalar_lea.vmem %s398, %s470
        %v472 = vld [vmem:[%s471] sm:$0xff]
        %v474 = vlaneseq
        %v475 = vshrl.u32 %v474, 7
        %v476 = vsub.s32 0, %v475
        %v477 = vrot.slane %v446, %v476
        %v479 = vadd.f32 %v472, %v477
        %v480 = vmax.f32 %v479, 0.0
        %vm481 = vcmp.ne.f32.partialorder %v479, %v479
        %v482 = vadd.f32 %v479, 0.0
        %v483 = vand.u32 2147483647, %v479
        %v484 = vsub.f32 0.0, %v483
        %v485 = vmul.f32 %v484, 1.442695
        %v486 = vpow.pop %v485
        %v487 = vadd.f32 %v486, 1.0
        %v488 = vlog2.pop %v487
        %v489 = vmul.f32 %v488, 0.6931472
        %v490 = vmul.f32 -0.5, %v486
        %v491 = vadd.f32 %v490, 1.0
        %v492 = vmul.f32 %v491, %v486
        %v493 = vand.u32 2147483647, %v486
        %vm494 = vcmp.lt.f32.partialorder %v493, 0.0004427343
        %v495 = vsel %vm494, %v492, %v489
        %v496 = vadd.f32 %v480, %v495
        %v497 = vsel %vm481, %v482, %v496
        %s498 = sshra.s32 %s470, 3
        %s499 = sand.u32 %s470, 7
        %s500 = smul.u32 %s498, 2
        %s501 = smul.addr %s500, 8
        %s502 = scalar_lea.vmem %s388, %s501
        %v503 = vld [vmem:[%s502] sm:$0xff]
        %v504 = vld [vmem:[%s502 + $0x8] sm:$0xff]
        %s505 = scalar_lea.vmem %s418, %s470
        %v506 = vld [vmem:[%s505] sm:$0xff]
        %s507 = scalar_lea.vmem %s408, %s470
        %v508 = vld [vmem:[%s507] sm:$0xff]
        %509 = vxpose.xlu0.b32.start [1/16] %v508, 128
        %510 = vxpose.xlu0.b32.cont [2/16] 0.0, 128
        %511 = vxpose.xlu0.b32.cont [3/16] 0.0, 128
        %512 = vxpose.xlu0.b32.cont [4/16] 0.0, 128
        %513 = vxpose.xlu0.b32.cont [5/16] 0.0, 128
        %514 = vxpose.xlu0.b32.cont [6/16] 0.0, 128
        %515 = vxpose.xlu0.b32.cont [7/16] 0.0, 128
        %516 = vxpose.xlu0.b32.cont [8/16] 0.0, 128
        %517 = vxpose.xlu0.b32.cont [9/16] 0.0, 128
        %518 = vxpose.xlu0.b32.cont [10/16] 0.0, 128
        %519 = vxpose.xlu0.b32.cont [11/16] 0.0, 128
        %520 = vxpose.xlu0.b32.cont [12/16] 0.0, 128
        %521 = vxpose.xlu0.b32.cont [13/16] 0.0, 128
        %522 = vxpose.xlu0.b32.cont [14/16] 0.0, 128
        %523 = vxpose.xlu0.b32.cont [15/16] 0.0, 128
        %524 = vxpose.xlu0.b32.end [16/16] 0.0, 128
        %v525 = vpop.trf.xlu0
        %v526 = vpop.trf.xlu0
        %v527 = vpop.trf.xlu0
        %v528 = vpop.trf.xlu0
        %v529 = vpop.trf.xlu0
        %v530 = vpop.trf.xlu0
        %v531 = vpop.trf.xlu0
        %v532 = vpop.trf.xlu0
        %v533 = vpop.trf.xlu0
        %v534 = vpop.trf.xlu0
        %v535 = vpop.trf.xlu0
        %v536 = vpop.trf.xlu0
        %v537 = vpop.trf.xlu0
        %v538 = vpop.trf.xlu0
        %v539 = vpop.trf.xlu0
        %v540 = vpop.trf.xlu0
        %v541 = vmul.f32 %v497, %v503
        %543 = vrot.lane.b32.xlu0 %v503, 64
        %v544 = vpop.permute.xlu0 %543
        %v546 = vmul.f32 %v497, %v544
        %v547 = vmul.f32 %v497, %v504
        %549 = vrot.lane.b32.xlu0 %v504, 64
        %v550 = vpop.permute.xlu0 %549
        %v552 = vmul.f32 %v497, %v550
        %v553 = vlaneseq
        %v554 = vshrl.u32 %v553, 7
        %v555 = vsub.s32 0, %v554
        %v556 = vrot.slane %v497, %v555
        %v557 = vmul.f32 %v556, %v444
        %v558 = vmul.f32 %v556, %v445
        %v559 = vmul.f32 %v557, 1.442695
        %v560 = vpow.pop %v559
        %v561 = vmul.f32 %v558, 1.442695
        %v562 = vpow.pop %v561
        %v563 = vmul.f32 %v560, %v462
        %v564 = vmul.f32 %v562, %v463
        %566 = vset.pattern.permute.xlu0 0
        %567 = vperm.xlu0 %566, %v525
        %v568 = vpop.permute.xlu0 %567
        %571 = vset.pattern.permute.xlu0 0
        %572 = vperm.xlu0 %571, %v526
        %v573 = vpop.permute.xlu0 %572
        %v575 = vlaneseq
        %v576 = vshrl.u32 %v575, 7
        %v577 = vsub.s32 0, %v576
        %v578 = vrot.slane %v541, %v577
        %v579 = vmul.f32 %v568, %v578
        %v580 = vmul.f32 %v573, %v578
        %v581 = vadd.f32 %v563, %v579
        %v582 = vadd.f32 %v564, %v580
        %vm583 = vcmask 130048
        %v585 = vsel %vm583, %v506, 0
        %587 = vmatprep.subr.mxu0 0.0
        %588 = vmatpush1.msra.mxu0 %v581
        %589 = vmatprep.subr.mxu0 0.0
        %590 = vmatpush1.msra.mxu0 %v582
        %591 = vmatprep.subr.mxu0 0.0
        %592 = vmatpush1.msra.mxu0 0.0
        %593 = vmatprep.subr.mxu0 0.0
        %594 = vmatpush1.msra.mxu0 0.0
        %595 = vmatprep.subr.mxu0 0.0
        %596 = vmatpush1.msra.mxu0 0.0
        %597 = vmatprep.subr.mxu0 0.0
        %598 = vmatpush1.msra.mxu0 0.0
        %599 = vmatprep.subr.mxu0 0.0
        %600 = vmatpush1.msra.mxu0 0.0
        %601 = vmatprep.subr.mxu0 0.0
        %602 = vmatpush1.msra.mxu0 0.0
        %603 = vmatprep.subr.mxu0 0.0
        %604 = vmatpush1.msra.mxu0 0.0
        %605 = vmatprep.subr.mxu0 0.0
        %606 = vmatpush1.msra.mxu0 0.0
        %607 = vmatprep.subr.mxu0 0.0
        %608 = vmatpush1.msra.mxu0 0.0
        %609 = vmatprep.subr.mxu0 0.0
        %610 = vmatpush1.msra.mxu0 0.0
        %611 = vmatprep.subr.mxu0 0.0
        %612 = vmatpush1.msra.mxu0 0.0
        %613 = vmatprep.subr.mxu0 0.0
        %614 = vmatpush1.msra.mxu0 0.0
        %615 = vmatprep.subr.mxu0 0.0
        %616 = vmatpush1.msra.mxu0 0.0
        %617 = vmatprep.subr.mxu0 0.0
        %618 = vmatpush1.msra.mxu0 0.0
        %619 = vmatprep.subr.mxu0 0.0
        %620 = vmatpush1.msra.mxu0 0.0
        %621 = vmatprep.subr.mxu0 0.0
        %622 = vmatpush1.msra.mxu0 0.0
        %623 = vmatprep.subr.mxu0 0.0
        %624 = vmatpush1.msra.mxu0 0.0
        %625 = vmatprep.subr.mxu0 0.0
        %626 = vmatpush1.msra.mxu0 0.0
        %627 = vmatprep.subr.mxu0 0.0
        %628 = vmatpush1.msra.mxu0 0.0
        %629 = vmatprep.subr.mxu0 0.0
        %630 = vmatpush1.msra.mxu0 0.0
        %631 = vmatprep.subr.mxu0 0.0
        %632 = vmatpush1.msra.mxu0 0.0
        %633 = vmatprep.subr.mxu0 0.0
        %634 = vmatpush1.msra.mxu0 0.0
        %635 = vmatprep.subr.mxu0 0.0
        %636 = vmatpush1.msra.mxu0 0.0
        %637 = vmatprep.subr.mxu0 0.0
        %638 = vmatpush1.msra.mxu0 0.0
        %639 = vmatprep.subr.mxu0 0.0
        %640 = vmatpush1.msra.mxu0 0.0
        %641 = vmatprep.subr.mxu0 0.0
        %642 = vmatpush1.msra.mxu0 0.0
        %643 = vmatprep.subr.mxu0 0.0
        %644 = vmatpush1.msra.mxu0 0.0
        %645 = vmatprep.subr.mxu0 0.0
        %646 = vmatpush1.msra.mxu0 0.0
        %647 = vmatprep.subr.mxu0 0.0
        %648 = vmatpush1.msra.mxu0 0.0
        %649 = vmatprep.subr.mxu0 0.0
        %650 = vmatpush1.msra.mxu0 0.0
        %651 = vmatprep.mubr.f32.mxu0 0.0
        %652 = vmatmul.mubr.f32.gmra.mrb[0].mxu0 %v585
        %v653 = vpop.f32.mrb[0].mxu0
        %v654 = vadd.f32 0.0, %v653
        %v655 = vpop.f32.mrb[0].mxu0
        %656 = vdwg.mxu0
        %vm657 = vcmask 516096
        %658 = vst.msk [vmem:[#allocation3] sm:$0x1] %vm657, %v654
        %v659 = vmul.f32 %v560, %v464
        %v660 = vmul.f32 %v562, %v465
        %662 = vset.pattern.permute.xlu0 0
        %663 = vperm.xlu0 %662, %v527
        %v664 = vpop.permute.xlu0 %663
        %667 = vset.pattern.permute.xlu0 0
        %668 = vperm.xlu0 %667, %v528
        %v669 = vpop.permute.xlu0 %668
        %v671 = vlaneseq
        %v672 = vshrl.u32 %v671, 7
        %v673 = vsub.s32 0, %v672
        %v674 = vrot.slane %v546, %v673
        %v675 = vmul.f32 %v664, %v674
        %v676 = vmul.f32 %v669, %v674
        %v677 = vadd.f32 %v659, %v675
        %v678 = vadd.f32 %v660, %v676
        %679 = vmatprep.subr.mxu0 0.0
        %680 = vmatpush1.msra.mxu0 %v677
        %681 = vmatprep.subr.mxu0 0.0
        %682 = vmatpush1.msra.mxu0 %v678
        %683 = vmatprep.subr.mxu0 0.0
        %684 = vmatpush1.msra.mxu0 0.0
        %685 = vmatprep.subr.mxu0 0.0
        %686 = vmatpush1.msra.mxu0 0.0
        %687 = vmatprep.subr.mxu0 0.0
        %688 = vmatpush1.msra.mxu0 0.0
        %689 = vmatprep.subr.mxu0 0.0
        %690 = vmatpush1.msra.mxu0 0.0
        %691 = vmatprep.subr.mxu0 0.0
        %692 = vmatpush1.msra.mxu0 0.0
        %693 = vmatprep.subr.mxu0 0.0
        %694 = vmatpush1.msra.mxu0 0.0
        %695 = vmatprep.subr.mxu0 0.0
        %696 = vmatpush1.msra.mxu0 0.0
        %697 = vmatprep.subr.mxu0 0.0
        %698 = vmatpush1.msra.mxu0 0.0
        %699 = vmatprep.subr.mxu0 0.0
        %700 = vmatpush1.msra.mxu0 0.0
        %701 = vmatprep.subr.mxu0 0.0
        %702 = vmatpush1.msra.mxu0 0.0
        %703 = vmatprep.subr.mxu0 0.0
        %704 = vmatpush1.msra.mxu0 0.0
        %705 = vmatprep.subr.mxu0 0.0
        %706 = vmatpush1.msra.mxu0 0.0
        %707 = vmatprep.subr.mxu0 0.0
        %708 = vmatpush1.msra.mxu0 0.0
        %709 = vmatprep.subr.mxu0 0.0
        %710 = vmatpush1.msra.mxu0 0.0
        %711 = vmatprep.subr.mxu0 0.0
        %712 = vmatpush1.msra.mxu0 0.0
        %713 = vmatprep.subr.mxu0 0.0
        %714 = vmatpush1.msra.mxu0 0.0
        %715 = vmatprep.subr.mxu0 0.0
        %716 = vmatpush1.msra.mxu0 0.0
        %717 = vmatprep.subr.mxu0 0.0
        %718 = vmatpush1.msra.mxu0 0.0
        %719 = vmatprep.subr.mxu0 0.0
        %720 = vmatpush1.msra.mxu0 0.0
        %721 = vmatprep.subr.mxu0 0.0
        %722 = vmatpush1.msra.mxu0 0.0
        %723 = vmatprep.subr.mxu0 0.0
        %724 = vmatpush1.msra.mxu0 0.0
        %725 = vmatprep.subr.mxu0 0.0
        %726 = vmatpush1.msra.mxu0 0.0
        %727 = vmatprep.subr.mxu0 0.0
        %728 = vmatpush1.msra.mxu0 0.0
        %729 = vmatprep.subr.mxu0 0.0
        %730 = vmatpush1.msra.mxu0 0.0
        %731 = vmatprep.subr.mxu0 0.0
        %732 = vmatpush1.msra.mxu0 0.0
        %733 = vmatprep.subr.mxu0 0.0
        %734 = vmatpush1.msra.mxu0 0.0
        %735 = vmatprep.subr.mxu0 0.0
        %736 = vmatpush1.msra.mxu0 0.0
        %737 = vmatprep.subr.mxu0 0.0
        %738 = vmatpush1.msra.mxu0 0.0
        %739 = vmatprep.subr.mxu0 0.0
        %740 = vmatpush1.msra.mxu0 0.0
        %741 = vmatprep.subr.mxu0 0.0
        %742 = vmatpush1.msra.mxu0 0.0
        %743 = vmatprep.mubr.f32.mxu0 0.0
        %744 = vmatmul.mubr.f32.gmra.mrb[0].mxu0 %v585
        %v745 = vpop.f32.mrb[0].mxu0
        %v746 = vadd.f32 0.0, %v745
        %v747 = vpop.f32.mrb[0].mxu0
        %748 = vdwg.mxu0
        %750 = vrot.lane.b32.xlu0 %v746, 64
        %v751 = vpop.permute.xlu0 %750
        %vm753 = vcmask 1040896
        %754 = vst.msk [vmem:[#allocation3] sm:$0x1] %vm753, %v751
        %v755 = vmul.f32 %v560, %v466
        %v756 = vmul.f32 %v562, %v467
        %758 = vset.pattern.permute.xlu0 0
        %759 = vperm.xlu0 %758, %v529
        %v760 = vpop.permute.xlu0 %759
        %763 = vset.pattern.permute.xlu0 0
        %764 = vperm.xlu0 %763, %v530
        %v765 = vpop.permute.xlu0 %764
        %v767 = vlaneseq
        %v768 = vshrl.u32 %v767, 7
        %v769 = vsub.s32 0, %v768
        %v770 = vrot.slane %v547, %v769
        %v771 = vmul.f32 %v760, %v770
        %v772 = vmul.f32 %v765, %v770
        %v773 = vadd.f32 %v755, %v771
        %v774 = vadd.f32 %v756, %v772
        %775 = vmatprep.subr.mxu0 0.0
        %776 = vmatpush1.msra.mxu0 %v773
        %777 = vmatprep.subr.mxu0 0.0
        %778 = vmatpush1.msra.mxu0 %v774
        %779 = vmatprep.subr.mxu0 0.0
        %780 = vmatpush1.msra.mxu0 0.0
        %781 = vmatprep.subr.mxu0 0.0
        %782 = vmatpush1.msra.mxu0 0.0
        %783 = vmatprep.subr.mxu0 0.0
        %784 = vmatpush1.msra.mxu0 0.0
        %785 = vmatprep.subr.mxu0 0.0
        %786 = vmatpush1.msra.mxu0 0.0
        %787 = vmatprep.subr.mxu0 0.0
        %788 = vmatpush1.msra.mxu0 0.0
        %789 = vmatprep.subr.mxu0 0.0
        %790 = vmatpush1.msra.mxu0 0.0
        %791 = vmatprep.subr.mxu0 0.0
        %792 = vmatpush1.msra.mxu0 0.0
        %793 = vmatprep.subr.mxu0 0.0
        %794 = vmatpush1.msra.mxu0 0.0
        %795 = vmatprep.subr.mxu0 0.0
        %796 = vmatpush1.msra.mxu0 0.0
        %797 = vmatprep.subr.mxu0 0.0
        %798 = vmatpush1.msra.mxu0 0.0
        %799 = vmatprep.subr.mxu0 0.0
        %800 = vmatpush1.msra.mxu0 0.0
        %801 = vmatprep.subr.mxu0 0.0
        %802 = vmatpush1.msra.mxu0 0.0
        %803 = vmatprep.subr.mxu0 0.0
        %804 = vmatpush1.msra.mxu0 0.0
        %805 = vmatprep.subr.mxu0 0.0
        %806 = vmatpush1.msra.mxu0 0.0
        %807 = vmatprep.subr.mxu0 0.0
        %808 = vmatpush1.msra.mxu0 0.0
        %809 = vmatprep.subr.mxu0 0.0
        %810 = vmatpush1.msra.mxu0 0.0
        %811 = vmatprep.subr.mxu0 0.0
        %812 = vmatpush1.msra.mxu0 0.0
        %813 = vmatprep.subr.mxu0 0.0
        %814 = vmatpush1.msra.mxu0 0.0
        %815 = vmatprep.subr.mxu0 0.0
        %816 = vmatpush1.msra.mxu0 0.0
        %817 = vmatprep.subr.mxu0 0.0
        %818 = vmatpush1.msra.mxu0 0.0
        %819 = vmatprep.subr.mxu0 0.0
        %820 = vmatpush1.msra.mxu0 0.0
        %821 = vmatprep.subr.mxu0 0.0
        %822 = vmatpush1.msra.mxu0 0.0
        %823 = vmatprep.subr.mxu0 0.0
        %824 = vmatpush1.msra.mxu0 0.0
        %825 = vmatprep.subr.mxu0 0.0
        %826 = vmatpush1.msra.mxu0 0.0
        %827 = vmatprep.subr.mxu0 0.0
        %828 = vmatpush1.msra.mxu0 0.0
        %829 = vmatprep.subr.mxu0 0.0
        %830 = vmatpush1.msra.mxu0 0.0
        %831 = vmatprep.subr.mxu0 0.0
        %832 = vmatpush1.msra.mxu0 0.0
        %833 = vmatprep.subr.mxu0 0.0
        %834 = vmatpush1.msra.mxu0 0.0
        %835 = vmatprep.subr.mxu0 0.0
        %836 = vmatpush1.msra.mxu0 0.0
        %837 = vmatprep.subr.mxu0 0.0
        %838 = vmatpush1.msra.mxu0 0.0
        %839 = vmatprep.mubr.f32.mxu0 0.0
        %840 = vmatmul.mubr.f32.gmra.mrb[0].mxu0 %v585
        %v841 = vpop.f32.mrb[0].mxu0
        %v842 = vadd.f32 0.0, %v841
        %v843 = vpop.f32.mrb[0].mxu0
        %844 = vdwg.mxu0
        %845 = vst.msk [vmem:[#allocation3 + $0x8] sm:$0x1] %vm657, %v842
        %v846 = vmul.f32 %v560, %v468
        %v847 = vmul.f32 %v562, %v469
        %849 = vset.pattern.permute.xlu0 0
        %850 = vperm.xlu0 %849, %v531
        %v851 = vpop.permute.xlu0 %850
        %854 = vset.pattern.permute.xlu0 0
        %855 = vperm.xlu0 %854, %v532
        %v856 = vpop.permute.xlu0 %855
        %v858 = vlaneseq
        %v859 = vshrl.u32 %v858, 7
        %v860 = vsub.s32 0, %v859
        %v861 = vrot.slane %v552, %v860
        %v862 = vmul.f32 %v851, %v861
        %v863 = vmul.f32 %v856, %v861
        %v864 = vadd.f32 %v846, %v862
        %v865 = vadd.f32 %v847, %v863
        %866 = vmatprep.subr.mxu0 0.0
        %867 = vmatpush1.msra.mxu0 %v864
        %868 = vmatprep.subr.mxu0 0.0
        %869 = vmatpush1.msra.mxu0 %v865
        %870 = vmatprep.subr.mxu0 0.0
        %871 = vmatpush1.msra.mxu0 0.0
        %872 = vmatprep.subr.mxu0 0.0
        %873 = vmatpush1.msra.mxu0 0.0
        %874 = vmatprep.subr.mxu0 0.0
        %875 = vmatpush1.msra.mxu0 0.0
        %876 = vmatprep.subr.mxu0 0.0
        %877 = vmatpush1.msra.mxu0 0.0
        %878 = vmatprep.subr.mxu0 0.0
        %879 = vmatpush1.msra.mxu0 0.0
        %880 = vmatprep.subr.mxu0 0.0
        %881 = vmatpush1.msra.mxu0 0.0
        %882 = vmatprep.subr.mxu0 0.0
        %883 = vmatpush1.msra.mxu0 0.0
        %884 = vmatprep.subr.mxu0 0.0
        %885 = vmatpush1.msra.mxu0 0.0
        %886 = vmatprep.subr.mxu0 0.0
        %887 = vmatpush1.msra.mxu0 0.0
        %888 = vmatprep.subr.mxu0 0.0
        %889 = vmatpush1.msra.mxu0 0.0
        %890 = vmatprep.subr.mxu0 0.0
        %891 = vmatpush1.msra.mxu0 0.0
        %892 = vmatprep.subr.mxu0 0.0
        %893 = vmatpush1.msra.mxu0 0.0
        %894 = vmatprep.subr.mxu0 0.0
        %895 = vmatpush1.msra.mxu0 0.0
        %896 = vmatprep.subr.mxu0 0.0
        %897 = vmatpush1.msra.mxu0 0.0
        %898 = vmatprep.subr.mxu0 0.0
        %899 = vmatpush1.msra.mxu0 0.0
        %900 = vmatprep.subr.mxu0 0.0
        %901 = vmatpush1.msra.mxu0 0.0
        %902 = vmatprep.subr.mxu0 0.0
        %903 = vmatpush1.msra.mxu0 0.0
        %904 = vmatprep.subr.mxu0 0.0
        %905 = vmatpush1.msra.mxu0 0.0
        %906 = vmatprep.subr.mxu0 0.0
        %907 = vmatpush1.msra.mxu0 0.0
        %908 = vmatprep.subr.mxu0 0.0
        %909 = vmatpush1.msra.mxu0 0.0
        %910 = vmatprep.subr.mxu0 0.0
        %911 = vmatpush1.msra.mxu0 0.0
        %912 = vmatprep.subr.mxu0 0.0
        %913 = vmatpush1.msra.mxu0 0.0
        %914 = vmatprep.subr.mxu0 0.0
        %915 = vmatpush1.msra.mxu0 0.0
        %916 = vmatprep.subr.mxu0 0.0
        %917 = vmatpush1.msra.mxu0 0.0
        %918 = vmatprep.subr.mxu0 0.0
        %919 = vmatpush1.msra.mxu0 0.0
        %920 = vmatprep.subr.mxu0 0.0
        %921 = vmatpush1.msra.mxu0 0.0
        %922 = vmatprep.subr.mxu0 0.0
        %923 = vmatpush1.msra.mxu0 0.0
        %924 = vmatprep.subr.mxu0 0.0
        %925 = vmatpush1.msra.mxu0 0.0
        %926 = vmatprep.subr.mxu0 0.0
        %927 = vmatpush1.msra.mxu0 0.0
        %928 = vmatprep.subr.mxu0 0.0
        %929 = vmatpush1.msra.mxu0 0.0
        %930 = vmatprep.mubr.f32.mxu0 0.0
        %931 = vmatmul.mubr.f32.gmra.mrb[0].mxu0 %v585
        %v932 = vpop.f32.mrb[0].mxu0
        %v933 = vadd.f32 0.0, %v932
        %v934 = vpop.f32.mrb[0].mxu0
        %935 = vdwg.mxu0
        %937 = vrot.lane.b32.xlu0 %v933, 64
        %v938 = vpop.permute.xlu0 %937
        %940 = vst.msk [vmem:[#allocation3 + $0x8] sm:$0x1] %vm753, %v938
        %v941 = vlaneseq
        %v942 = vshrl.u32 %v941, 7
        %v943 = vsub.s32 1, %v942
        %v944 = vrot.slane %v497, %v943
        %v945 = vmul.f32 %v944, %v444
        %v946 = vmul.f32 %v944, %v445
        %v947 = vmul.f32 %v945, 1.442695
        %v948 = vpow.pop %v947
        %v949 = vmul.f32 %v946, 1.442695
        %v950 = vpow.pop %v949
        %v951 = vmul.f32 %v948, %v581
        %v952 = vmul.f32 %v950, %v582
        %953 = vset.pattern.permute.xlu0 1
        %954 = vperm.xlu0 %953, %v525
        %v955 = vpop.permute.xlu0 %954
        %957 = vset.pattern.permute.xlu0 1
        %958 = vperm.xlu0 %957, %v526
        %v959 = vpop.permute.xlu0 %958
        %v961 = vlaneseq
        %v962 = vshrl.u32 %v961, 7
        %v963 = vsub.s32 1, %v962
        %v964 = vrot.slane %v541, %v963
        %v965 = vmul.f32 %v955, %v964
        %v966 = vmul.f32 %v959, %v964
        %v967 = vadd.f32 %v951, %v965
        %v968 = vadd.f32 %v952, %v966
        %v969 = vrot.slane %v506, 1
        %v970 = vsel %vm583, %v969, 0
        %972 = vmatprep.subr.mxu0 0.0
        %973 = vmatpush1.msra.mxu0 %v967
        %974 = vmatprep.subr.mxu0 0.0
        %975 = vmatpush1.msra.mxu0 %v968
        %976 = vmatprep.subr.mxu0 0.0
        %977 = vmatpush1.msra.mxu0 0.0
        %978 = vmatprep.subr.mxu0 0.0
        %979 = vmatpush1.msra.mxu0 0.0
        %980 = vmatprep.subr.mxu0 0.0
        %981 = vmatpush1.msra.mxu0 0.0
        %982 = vmatprep.subr.mxu0 0.0
        %983 = vmatpush1.msra.mxu0 0.0
        %984 = vmatprep.subr.mxu0 0.0
        %985 = vmatpush1.msra.mxu0 0.0
        %986 = vmatprep.subr.mxu0 0.0
        %987 = vmatpush1.msra.mxu0 0.0
        %988 = vmatprep.subr.mxu0 0.0
        %989 = vmatpush1.msra.mxu0 0.0
        %990 = vmatprep.subr.mxu0 0.0
        %991 = vmatpush1.msra.mxu0 0.0
        %992 = vmatprep.subr.mxu0 0.0
        %993 = vmatpush1.msra.mxu0 0.0
        %994 = vmatprep.subr.mxu0 0.0
        %995 = vmatpush1.msra.mxu0 0.0
        %996 = vmatprep.subr.mxu0 0.0
        %997 = vmatpush1.msra.mxu0 0.0
        %998 = vmatprep.subr.mxu0 0.0
        %999 = vmatpush1.msra.mxu0 0.0
        %1000 = vmatprep.subr.mxu0 0.0
        %1001 = vmatpush1.msra.mxu0 0.0
        %1002 = vmatprep.subr.mxu0 0.0
        %1003 = vmatpush1.msra.mxu0 0.0
        %1004 = vmatprep.subr.mxu0 0.0
        %1005 = vmatpush1.msra.mxu0 0.0
        %1006 = vmatprep.subr.mxu0 0.0
        %1007 = vmatpush1.msra.mxu0 0.0
        %1008 = vmatprep.subr.mxu0 0.0
        %1009 = vmatpush1.msra.mxu0 0.0
        %1010 = vmatprep.subr.mxu0 0.0
        %1011 = vmatpush1.msra.mxu0 0.0
        %1012 = vmatprep.subr.mxu0 0.0
        %1013 = vmatpush1.msra.mxu0 0.0
        %1014 = vmatprep.subr.mxu0 0.0
        %1015 = vmatpush1.msra.mxu0 0.0
        %1016 = vmatprep.subr.mxu0 0.0
        %1017 = vmatpush1.msra.mxu0 0.0
        %1018 = vmatprep.subr.mxu0 0.0
        %1019 = vmatpush1.msra.mxu0 0.0
        %1020 = vmatprep.subr.mxu0 0.0
        %1021 = vmatpush1.msra.mxu0 0.0
        %1022 = vmatprep.subr.mxu0 0.0
        %1023 = vmatpush1.msra.mxu0 0.0
        %1024 = vmatprep.subr.mxu0 0.0
        %1025 = vmatpush1.msra.mxu0 0.0
        %1026 = vmatprep.subr.mxu0 0.0
        %1027 = vmatpush1.msra.mxu0 0.0
        %1028 = vmatprep.subr.mxu0 0.0
        %1029 = vmatpush1.msra.mxu0 0.0
        %1030 = vmatprep.subr.mxu0 0.0
        %1031 = vmatpush1.msra.mxu0 0.0
        %1032 = vmatprep.subr.mxu0 0.0
        %1033 = vmatpush1.msra.mxu0 0.0
        %1034 = vmatprep.subr.mxu0 0.0
        %1035 = vmatpush1.msra.mxu0 0.0
        %1036 = vmatprep.mubr.f32.mxu0 0.0
        %1037 = vmatmul.mubr.f32.gmra.mrb[0].mxu0 %v970
        %v1038 = vpop.f32.mrb[0].mxu0
        %v1039 = vadd.f32 0.0, %v1038
        %v1040 = vpop.f32.mrb[0].mxu0
        %1041 = vdwg.mxu0
        %1042 = vst.msk [vmem:[#allocation3 + $0x1] sm:$0x1] %vm657, %v1039
        %v1043 = vmul.f32 %v948, %v677
        %v1044 = vmul.f32 %v950, %v678
        %1045 = vset.pattern.permute.xlu0 1
        %1046 = vperm.xlu0 %1045, %v527
        %v1047 = vpop.permute.xlu0 %1046
        %1049 = vset.pattern.permute.xlu0 1
        %1050 = vperm.xlu0 %1049, %v528
        %v1051 = vpop.permute.xlu0 %1050
        %v1053 = vlaneseq
        %v1054 = vshrl.u32 %v1053, 7
        %v1055 = vsub.s32 1, %v1054
        %v1056 = vrot.slane %v546, %v1055
        %v1057 = vmul.f32 %v1047, %v1056
        %v1058 = vmul.f32 %v1051, %v1056
        %v1059 = vadd.f32 %v1043, %v1057
        %v1060 = vadd.f32 %v1044, %v1058
        %1061 = vmatprep.subr.mxu0 0.0
        %1062 = vmatpush1.msra.mxu0 %v1059
        %1063 = vmatprep.subr.mxu0 0.0
        %1064 = vmatpush1.msra.mxu0 %v1060
        %1065 = vmatprep.subr.mxu0 0.0
        %1066 = vmatpush1.msra.mxu0 0.0
        %1067 = vmatprep.subr.mxu0 0.0
        %1068 = vmatpush1.msra.mxu0 0.0
        %1069 = vmatprep.subr.mxu0 0.0
        %1070 = vmatpush1.msra.mxu0 0.0
        %1071 = vmatprep.subr.mxu0 0.0
        %1072 = vmatpush1.msra.mxu0 0.0
        %1073 = vmatprep.subr.mxu0 0.0
        %1074 = vmatpush1.msra.mxu0 0.0
        %1075 = vmatprep.subr.mxu0 0.0
        %1076 = vmatpush1.msra.mxu0 0.0
        %1077 = vmatprep.subr.mxu0 0.0
        %1078 = vmatpush1.msra.mxu0 0.0
        %1079 = vmatprep.subr.mxu0 0.0
        %1080 = vmatpush1.msra.mxu0 0.0
        %1081 = vmatprep.subr.mxu0 0.0
        %1082 = vmatpush1.msra.mxu0 0.0
        %1083 = vmatprep.subr.mxu0 0.0
        %1084 = vmatpush1.msra.mxu0 0.0
        %1085 = vmatprep.subr.mxu0 0.0
        %1086 = vmatpush1.msra.mxu0 0.0
        %1087 = vmatprep.subr.mxu0 0.0
        %1088 = vmatpush1.msra.mxu0 0.0
        %1089 = vmatprep.subr.mxu0 0.0
        %1090 = vmatpush1.msra.mxu0 0.0
        %1091 = vmatprep.subr.mxu0 0.0
        %1092 = vmatpush1.msra.mxu0 0.0
        %1093 = vmatprep.subr.mxu0 0.0
        %1094 = vmatpush1.msra.mxu0 0.0
        %1095 = vmatprep.subr.mxu0 0.0
        %1096 = vmatpush1.msra.mxu0 0.0
        %1097 = vmatprep.subr.mxu0 0.0
        %1098 = vmatpush1.msra.mxu0 0.0
        %1099 = vmatprep.subr.mxu0 0.0
        %1100 = vmatpush1.msra.mxu0 0.0
        %1101 = vmatprep.subr.mxu0 0.0
        %1102 = vmatpush1.msra.mxu0 0.0
        %1103 = vmatprep.subr.mxu0 0.0
        %1104 = vmatpush1.msra.mxu0 0.0
        %1105 = vmatprep.subr.mxu0 0.0
        %1106 = vmatpush1.msra.mxu0 0.0
        %1107 = vmatprep.subr.mxu0 0.0
        %1108 = vmatpush1.msra.mxu0 0.0
        %1109 = vmatprep.subr.mxu0 0.0
        %1110 = vmatpush1.msra.mxu0 0.0
        %1111 = vmatprep.subr.mxu0 0.0
        %1112 = vmatpush1.msra.mxu0 0.0
        %1113 = vmatprep.subr.mxu0 0.0
        %1114 = vmatpush1.msra.mxu0 0.0
        %1115 = vmatprep.subr.mxu0 0.0
        %1116 = vmatpush1.msra.mxu0 0.0
        %1117 = vmatprep.subr.mxu0 0.0
        %1118 = vmatpush1.msra.mxu0 0.0
        %1119 = vmatprep.subr.mxu0 0.0
        %1120 = vmatpush1.msra.mxu0 0.0
        %1121 = vmatprep.subr.mxu0 0.0
        %1122 = vmatpush1.msra.mxu0 0.0
        %1123 = vmatprep.subr.mxu0 0.0
        %1124 = vmatpush1.msra.mxu0 0.0
        %1125 = vmatprep.mubr.f32.mxu0 0.0
        %1126 = vmatmul.mubr.f32.gmra.mrb[0].mxu0 %v970
        %v1127 = vpop.f32.mrb[0].mxu0
        %v1128 = vadd.f32 0.0, %v1127
        %v1129 = vpop.f32.mrb[0].mxu0
        %1130 = vdwg.mxu0
        %1132 = vrot.lane.b32.xlu0 %v1128, 64
        %v1133 = vpop.permute.xlu0 %1132
        %1135 = vst.msk [vmem:[#allocation3 + $0x1] sm:$0x1] %vm753, %v1133
        %v1136 = vmul.f32 %v948, %v773
        %v1137 = vmul.f32 %v950, %v774
        %1138 = vset.pattern.permute.xlu0 1
        %1139 = vperm.xlu0 %1138, %v529
        %v1140 = vpop.permute.xlu0 %1139
        %1142 = vset.pattern.permute.xlu0 1
        %1143 = vperm.xlu0 %1142, %v530
        %v1144 = vpop.permute.xlu0 %1143
        %v1146 = vlaneseq
        %v1147 = vshrl.u32 %v1146, 7
        %v1148 = vsub.s32 1, %v1147
        %v1149 = vrot.slane %v547, %v1148
        %v1150 = vmul.f32 %v1140, %v1149
        %v1151 = vmul.f32 %v1144, %v1149
        %v1152 = vadd.f32 %v1136, %v1150
        %v1153 = vadd.f32 %v1137, %v1151
        %1154 = vmatprep.subr.mxu0 0.0
        %1155 = vmatpush1.msra.mxu0 %v1152
        %1156 = vmatprep.subr.mxu0 0.0
        %1157 = vmatpush1.msra.mxu0 %v1153
        %1158 = vmatprep.subr.mxu0 0.0
        %1159 = vmatpush1.msra.mxu0 0.0
        %1160 = vmatprep.subr.mxu0 0.0
        %1161 = vmatpush1.msra.mxu0 0.0
        %1162 = vmatprep.subr.mxu0 0.0
        %1163 = vmatpush1.msra.mxu0 0.0
        %1164 = vmatprep.subr.mxu0 0.0
        %1165 = vmatpush1.msra.mxu0 0.0
        %1166 = vmatprep.subr.mxu0 0.0
        %1167 = vmatpush1.msra.mxu0 0.0
        %1168 = vmatprep.subr.mxu0 0.0
        %1169 = vmatpush1.msra.mxu0 0.0
        %1170 = vmatprep.subr.mxu0 0.0
        %1171 = vmatpush1.msra.mxu0 0.0
        %1172 = vmatprep.subr.mxu0 0.0
        %1173 = vmatpush1.msra.mxu0 0.0
        %1174 = vmatprep.subr.mxu0 0.0
        %1175 = vmatpush1.msra.mxu0 0.0
        %1176 = vmatprep.subr.mxu0 0.0
        %1177 = vmatpush1.msra.mxu0 0.0
        %1178 = vmatprep.subr.mxu0 0.0
        %1179 = vmatpush1.msra.mxu0 0.0
        %1180 = vmatprep.subr.mxu0 0.0
        %1181 = vmatpush1.msra.mxu0 0.0
        %1182 = vmatprep.subr.mxu0 0.0
        %1183 = vmatpush1.msra.mxu0 0.0
        %1184 = vmatprep.subr.mxu0 0.0
        %1185 = vmatpush1.msra.mxu0 0.0
        %1186 = vmatprep.subr.mxu0 0.0
        %1187 = vmatpush1.msra.mxu0 0.0
        %1188 = vmatprep.subr.mxu0 0.0
        %1189 = vmatpush1.msra.mxu0 0.0
        %1190 = vmatprep.subr.mxu0 0.0
        %1191 = vmatpush1.msra.mxu0 0.0
        %1192 = vmatprep.subr.mxu0 0.0
        %1193 = vmatpush1.msra.mxu0 0.0
        %1194 = vmatprep.subr.mxu0 0.0
        %1195 = vmatpush1.msra.mxu0 0.0
        %1196 = vmatprep.subr.mxu0 0.0
        %1197 = vmatpush1.msra.mxu0 0.0
        %1198 = vmatprep.subr.mxu0 0.0
        %1199 = vmatpush1.msra.mxu0 0.0
        %1200 = vmatprep.subr.mxu0 0.0
        %1201 = vmatpush1.msra.mxu0 0.0
        %1202 = vmatprep.subr.mxu0 0.0
        %1203 = vmatpush1.msra.mxu0 0.0
        %1204 = vmatprep.subr.mxu0 0.0
        %1205 = vmatpush1.msra.mxu0 0.0
        %1206 = vmatprep.subr.mxu0 0.0
        %1207 = vmatpush1.msra.mxu0 0.0
        %1208 = vmatprep.subr.mxu0 0.0
        %1209 = vmatpush1.msra.mxu0 0.0
        %1210 = vmatprep.subr.mxu0 0.0
        %1211 = vmatpush1.msra.mxu0 0.0
        %1212 = vmatprep.subr.mxu0 0.0
        %1213 = vmatpush1.msra.mxu0 0.0
        %1214 = vmatprep.subr.mxu0 0.0
        %1215 = vmatpush1.msra.mxu0 0.0
        %1216 = vmatprep.subr.mxu0 0.0
        %1217 = vmatpush1.msra.mxu0 0.0
        %1218 = vmatprep.mubr.f32.mxu0 0.0
        %1219 = vmatmul.mubr.f32.gmra.mrb[0].mxu0 %v970
        %v1220 = vpop.f32.mrb[0].mxu0
        %v1221 = vadd.f32 0.0, %v1220
        %v1222 = vpop.f32.mrb[0].mxu0
        %1223 = vdwg.mxu0
        %1224 = vst.msk [vmem:[#allocation3 + $0x9] sm:$0x1] %vm657, %v1221
        %v1225 = vmul.f32 %v948, %v864
        %v1226 = vmul.f32 %v950, %v865
        %1227 = vset.pattern.permute.xlu0 1
        %1228 = vperm.xlu0 %1227, %v531
        %v1229 = vpop.permute.xlu0 %1228
        %1231 = vset.pattern.permute.xlu0 1
        %1232 = vperm.xlu0 %1231, %v532
        %v1233 = vpop.permute.xlu0 %1232
        %v1235 = vlaneseq
        %v1236 = vshrl.u32 %v1235, 7
        %v1237 = vsub.s32 1, %v1236
        %v1238 = vrot.slane %v552, %v1237
        %v1239 = vmul.f32 %v1229, %v1238
        %v1240 = vmul.f32 %v1233, %v1238
        %v1241 = vadd.f32 %v1225, %v1239
        %v1242 = vadd.f32 %v1226, %v1240
        %1243 = vmatprep.subr.mxu0 0.0
        %1244 = vmatpush1.msra.mxu0 %v1241
        %1245 = vmatprep.subr.mxu0 0.0
        %1246 = vmatpush1.msra.mxu0 %v1242
        %1247 = vmatprep.subr.mxu0 0.0
        %1248 = vmatpush1.msra.mxu0 0.0
        %1249 = vmatprep.subr.mxu0 0.0
        %1250 = vmatpush1.msra.mxu0 0.0
        %1251 = vmatprep.subr.mxu0 0.0
        %1252 = vmatpush1.msra.mxu0 0.0
        %1253 = vmatprep.subr.mxu0 0.0
        %1254 = vmatpush1.msra.mxu0 0.0
        %1255 = vmatprep.subr.mxu0 0.0
        %1256 = vmatpush1.msra.mxu0 0.0
        %1257 = vmatprep.subr.mxu0 0.0
        %1258 = vmatpush1.msra.mxu0 0.0
        %1259 = vmatprep.subr.mxu0 0.0
        %1260 = vmatpush1.msra.mxu0 0.0
        %1261 = vmatprep.subr.mxu0 0.0
        %1262 = vmatpush1.msra.mxu0 0.0
        %1263 = vmatprep.subr.mxu0 0.0
        %1264 = vmatpush1.msra.mxu0 0.0
        %1265 = vmatprep.subr.mxu0 0.0
        %1266 = vmatpush1.msra.mxu0 0.0
        %1267 = vmatprep.subr.mxu0 0.0
        %1268 = vmatpush1.msra.mxu0 0.0
        %1269 = vmatprep.subr.mxu0 0.0
        %1270 = vmatpush1.msra.mxu0 0.0
        %1271 = vmatprep.subr.mxu0 0.0
        %1272 = vmatpush1.msra.mxu0 0.0
        %1273 = vmatprep.subr.mxu0 0.0
        %1274 = vmatpush1.msra.mxu0 0.0
        %1275 = vmatprep.subr.mxu0 0.0
        %1276 = vmatpush1.msra.mxu0 0.0
        %1277 = vmatprep.subr.mxu0 0.0
        %1278 = vmatpush1.msra.mxu0 0.0
        %1279 = vmatprep.subr.mxu0 0.0
        %1280 = vmatpush1.msra.mxu0 0.0
        %1281 = vmatprep.subr.mxu0 0.0
        %1282 = vmatpush1.msra.mxu0 0.0
        %1283 = vmatprep.subr.mxu0 0.0
        %1284 = vmatpush1.msra.mxu0 0.0
        %1285 = vmatprep.subr.mxu0 0.0
        %1286 = vmatpush1.msra.mxu0 0.0
        %1287 = vmatprep.subr.mxu0 0.0
        %1288 = vmatpush1.msra.mxu0 0.0
        %1289 = vmatprep.subr.mxu0 0.0
        %1290 = vmatpush1.msra.mxu0 0.0
        %1291 = vmatprep.subr.mxu0 0.0
        %1292 = vmatpush1.msra.mxu0 0.0
        %1293 = vmatprep.subr.mxu0 0.0
        %1294 = vmatpush1.msra.mxu0 0.0
        %1295 = vmatprep.subr.mxu0 0.0
        %1296 = vmatpush1.msra.mxu0 0.0
        %1297 = vmatprep.subr.mxu0 0.0
        %1298 = vmatpush1.msra.mxu0 0.0
        %1299 = vmatprep.subr.mxu0 0.0
        %1300 = vmatpush1.msra.mxu0 0.0
        %1301 = vmatprep.subr.mxu0 0.0
        %1302 = vmatpush1.msra.mxu0 0.0
        %1303 = vmatprep.subr.mxu0 0.0
        %1304 = vmatpush1.msra.mxu0 0.0
        %1305 = vmatprep.subr.mxu0 0.0
        %1306 = vmatpush1.msra.mxu0 0.0
        %1307 = vmatprep.mubr.f32.mxu0 0.0
        %1308 = vmatmul.mubr.f32.gmra.mrb[0].mxu0 %v970
        %v1309 = vpop.f32.mrb[0].mxu0
        %v1310 = vadd.f32 0.0, %v1309
        %v1311 = vpop.f32.mrb[0].mxu0
        %1312 = vdwg.mxu0
        %1314 = vrot.lane.b32.xlu0 %v1310, 64
        %v1315 = vpop.permute.xlu0 %1314
        %1317 = vst.msk [vmem:[#allocation3 + $0x9] sm:$0x1] %vm753, %v1315
        %v1318 = vlaneseq
        %v1319 = vshrl.u32 %v1318, 7
        %v1320 = vsub.s32 2, %v1319
        %v1321 = vrot.slane %v497, %v1320
        %v1322 = vmul.f32 %v1321, %v444
        %v1323 = vmul.f32 %v1321, %v445
        %v1324 = vmul.f32 %v1322, 1.442695
        %v1325 = vpow.pop %v1324
        %v1326 = vmul.f32 %v1323, 1.442695
        %v1327 = vpow.pop %v1326
        %v1328 = vmul.f32 %v1325, %v967
        %v1329 = vmul.f32 %v1327, %v968
        %1330 = vset.pattern.permute.xlu0 2
        %1331 = vperm.xlu0 %1330, %v525
        %v1332 = vpop.permute.xlu0 %1331
        %1334 = vset.pattern.permute.xlu0 2
        %1335 = vperm.xlu0 %1334, %v526
        %v1336 = vpop.permute.xlu0 %1335
        %v1338 = vlaneseq
        %v1339 = vshrl.u32 %v1338, 7
        %v1340 = vsub.s32 2, %v1339
        %v1341 = vrot.slane %v541, %v1340
        %v1342 = vmul.f32 %v1332, %v1341
        %v1343 = vmul.f32 %v1336, %v1341
        %v1344 = vadd.f32 %v1328, %v1342
        %v1345 = vadd.f32 %v1329, %v1343
        %v1346 = vrot.slane %v506, 2
        %v1347 = vsel %vm583, %v1346, 0
        %1349 = vmatprep.subr.mxu0 0.0
        %1350 = vmatpush1.msra.mxu0 %v1344
        %1351 = vmatprep.subr.mxu0 0.0
        %1352 = vmatpush1.msra.mxu0 %v1345
        %1353 = vmatprep.subr.mxu0 0.0
        %1354 = vmatpush1.msra.mxu0 0.0
        %1355 = vmatprep.subr.mxu0 0.0
        %1356 = vmatpush1.msra.mxu0 0.0
        %1357 = vmatprep.subr.mxu0 0.0
        %1358 = vmatpush1.msra.mxu0 0.0
        %1359 = vmatprep.subr.mxu0 0.0
        %1360 = vmatpush1.msra.mxu0 0.0
        %1361 = vmatprep.subr.mxu0 0.0
        %1362 = vmatpush1.msra.mxu0 0.0
        %1363 = vmatprep.subr.mxu0 0.0
        %1364 = vmatpush1.msra.mxu0 0.0
        %1365 = vmatprep.subr.mxu0 0.0
        %1366 = vmatpush1.msra.mxu0 0.0
        %1367 = vmatprep.subr.mxu0 0.0
        %1368 = vmatpush1.msra.mxu0 0.0
        %1369 = vmatprep.subr.mxu0 0.0
        %1370 = vmatpush1.msra.mxu0 0.0
        %1371 = vmatprep.subr.mxu0 0.0
        %1372 = vmatpush1.msra.mxu0 0.0
        %1373 = vmatprep.subr.mxu0 0.0
        %1374 = vmatpush1.msra.mxu0 0.0
        %1375 = vmatprep.subr.mxu0 0.0
        %1376 = vmatpush1.msra.mxu0 0.0
        %1377 = vmatprep.subr.mxu0 0.0
        %1378 = vmatpush1.msra.mxu0 0.0
        %1379 = vmatprep.subr.mxu0 0.0
        %1380 = vmatpush1.msra.mxu0 0.0
        %1381 = vmatprep.subr.mxu0 0.0
        %1382 = vmatpush1.msra.mxu0 0.0
        %1383 = vmatprep.subr.mxu0 0.0
        %1384 = vmatpush1.msra.mxu0 0.0
        %1385 = vmatprep.subr.mxu0 0.0
        %1386 = vmatpush1.msra.mxu0 0.0
        %1387 = vmatprep.subr.mxu0 0.0
        %1388 = vmatpush1.msra.mxu0 0.0
        %1389 = vmatprep.subr.mxu0 0.0
        %1390 = vmatpush1.msra.mxu0 0.0
        %1391 = vmatprep.subr.mxu0 0.0
        %1392 = vmatpush1.msra.mxu0 0.0
        %1393 = vmatprep.subr.mxu0 0.0
        %1394 = vmatpush1.msra.mxu0 0.0
        %1395 = vmatprep.subr.mxu0 0.0
        %1396 = vmatpush1.msra.mxu0 0.0
        %1397 = vmatprep.subr.mxu0 0.0
        %1398 = vmatpush1.msra.mxu0 0.0
        %1399 = vmatprep.subr.mxu0 0.0
        %1400 = vmatpush1.msra.mxu0 0.0
        %1401 = vmatprep.subr.mxu0 0.0
        %1402 = vmatpush1.msra.mxu0 0.0
        %1403 = vmatprep.subr.mxu0 0.0
        %1404 = vmatpush1.msra.mxu0 0.0
        %1405 = vmatprep.subr.mxu0 0.0
        %1406 = vmatpush1.msra.mxu0 0.0
        %1407 = vmatprep.subr.mxu0 0.0
        %1408 = vmatpush1.msra.mxu0 0.0
        %1409 = vmatprep.subr.mxu0 0.0
        %1410 = vmatpush1.msra.mxu0 0.0
        %1411 = vmatprep.subr.mxu0 0.0
        %1412 = vmatpush1.msra.mxu0 0.0
        %1413 = vmatprep.mubr.f32.mxu0 0.0
        %1414 = vmatmul.mubr.f32.gmra.mrb[0].mxu0 %v1347
        %v1415 = vpop.f32.mrb[0].mxu0
        %v1416 = vadd.f32 0.0, %v1415
        %v1417 = vpop.f32.mrb[0].mxu0
        %1418 = vdwg.mxu0
        %1419 = vst.msk [vmem:[#allocation3 + $0x2] sm:$0x1] %vm657, %v1416
        %v1420 = vmul.f32 %v1325, %v1059
        %v1421 = vmul.f32 %v1327, %v1060
        %1422 = vset.pattern.permute.xlu0 2
        %1423 = vperm.xlu0 %1422, %v527
        %v1424 = vpop.permute.xlu0 %1423
        %1426 = vset.pattern.permute.xlu0 2
        %1427 = vperm.xlu0 %1426, %v528
        %v1428 = vpop.permute.xlu0 %1427
        %v1430 = vlaneseq
        %v1431 = vshrl.u32 %v1430, 7
        %v1432 = vsub.s32 2, %v1431
        %v1433 = vrot.slane %v546, %v1432
        %v1434 = vmul.f32 %v1424, %v1433
        %v1435 = vmul.f32 %v1428, %v1433
        %v1436 = vadd.f32 %v1420, %v1434
        %v1437 = vadd.f32 %v1421, %v1435
        %1438 = vmatprep.subr.mxu0 0.0
        %1439 = vmatpush1.msra.mxu0 %v1436
        %1440 = vmatprep.subr.mxu0 0.0
        %1441 = vmatpush1.msra.mxu0 %v1437
        %1442 = vmatprep.subr.mxu0 0.0
        %1443 = vmatpush1.msra.mxu0 0.0
        %1444 = vmatprep.subr.mxu0 0.0
        %1445 = vmatpush1.msra.mxu0 0.0
        %1446 = vmatprep.subr.mxu0 0.0
        %1447 = vmatpush1.msra.mxu0 0.0
        %1448 = vmatprep.subr.mxu0 0.0
        %1449 = vmatpush1.msra.mxu0 0.0
        %1450 = vmatprep.subr.mxu0 0.0
        %1451 = vmatpush1.msra.mxu0 0.0
        %1452 = vmatprep.subr.mxu0 0.0
        %1453 = vmatpush1.msra.mxu0 0.0
        %1454 = vmatprep.subr.mxu0 0.0
        %1455 = vmatpush1.msra.mxu0 0.0
        %1456 = vmatprep.subr.mxu0 0.0
        %1457 = vmatpush1.msra.mxu0 0.0
        %1458 = vmatprep.subr.mxu0 0.0
        %1459 = vmatpush1.msra.mxu0 0.0
        %1460 = vmatprep.subr.mxu0 0.0
        %1461 = vmatpush1.msra.mxu0 0.0
        %1462 = vmatprep.subr.mxu0 0.0
        %1463 = vmatpush1.msra.mxu0 0.0
        %1464 = vmatprep.subr.mxu0 0.0
        %1465 = vmatpush1.msra.mxu0 0.0
        %1466 = vmatprep.subr.mxu0 0.0
        %1467 = vmatpush1.msra.mxu0 0.0
        %1468 = vmatprep.subr.mxu0 0.0
        %1469 = vmatpush1.msra.mxu0 0.0
        %1470 = vmatprep.subr.mxu0 0.0
        %1471 = vmatpush1.msra.mxu0 0.0
        %1472 = vmatprep.subr.mxu0 0.0
        %1473 = vmatpush1.msra.mxu0 0.0
        %1474 = vmatprep.subr.mxu0 0.0
        %1475 = vmatpush1.msra.mxu0 0.0
        %1476 = vmatprep.subr.mxu0 0.0
        %1477 = vmatpush1.msra.mxu0 0.0
        %1478 = vmatprep.subr.mxu0 0.0
        %1479 = vmatpush1.msra.mxu0 0.0
        %1480 = vmatprep.subr.mxu0 0.0
        %1481 = vmatpush1.msra.mxu0 0.0
        %1482 = vmatprep.subr.mxu0 0.0
        %1483 = vmatpush1.msra.mxu0 0.0
        %1484 = vmatprep.subr.mxu0 0.0
        %1485 = vmatpush1.msra.mxu0 0.0
        %1486 = vmatprep.subr.mxu0 0.0
        %1487 = vmatpush1.msra.mxu0 0.0
        %1488 = vmatprep.subr.mxu0 0.0
        %1489 = vmatpush1.msra.mxu0 0.0
        %1490 = vmatprep.subr.mxu0 0.0
        %1491 = vmatpush1.msra.mxu0 0.0
        %1492 = vmatprep.subr.mxu0 0.0
        %1493 = vmatpush1.msra.mxu0 0.0
        %1494 = vmatprep.subr.mxu0 0.0
        %1495 = vmatpush1.msra.mxu0 0.0
        %1496 = vmatprep.subr.mxu0 0.0
        %1497 = vmatpush1.msra.mxu0 0.0
        %1498 = vmatprep.subr.mxu0 0.0
        %1499 = vmatpush1.msra.mxu0 0.0
        %1500 = vmatprep.subr.mxu0 0.0
        %1501 = vmatpush1.msra.mxu0 0.0
        %1502 = vmatprep.mubr.f32.mxu0 0.0
        %1503 = vmatmul.mubr.f32.gmra.mrb[0].mxu0 %v1347
        %v1504 = vpop.f32.mrb[0].mxu0
        %v1505 = vadd.f32 0.0, %v1504
        %v1506 = vpop.f32.mrb[0].mxu0
        %1507 = vdwg.mxu0
        %1509 = vrot.lane.b32.xlu0 %v1505, 64
        %v1510 = vpop.permute.xlu0 %1509
        %1512 = vst.msk [vmem:[#allocation3 + $0x2] sm:$0x1] %vm753, %v1510
        %v1513 = vmul.f32 %v1325, %v1152
        %v1514 = vmul.f32 %v1327, %v1153
        %1515 = vset.pattern.permute.xlu0 2
        %1516 = vperm.xlu0 %1515, %v529
        %v1517 = vpop.permute.xlu0 %1516
        %1519 = vset.pattern.permute.xlu0 2
        %1520 = vperm.xlu0 %1519, %v530
        %v1521 = vpop.permute.xlu0 %1520
        %v1523 = vlaneseq
        %v1524 = vshrl.u32 %v1523, 7
        %v1525 = vsub.s32 2, %v1524
        %v1526 = vrot.slane %v547, %v1525
        %v1527 = vmul.f32 %v1517, %v1526
        %v1528 = vmul.f32 %v1521, %v1526
        %v1529 = vadd.f32 %v1513, %v1527
        %v1530 = vadd.f32 %v1514, %v1528
        %1531 = vmatprep.subr.mxu0 0.0
        %1532 = vmatpush1.msra.mxu0 %v1529
        %1533 = vmatprep.subr.mxu0 0.0
        %1534 = vmatpush1.msra.mxu0 %v1530
        %1535 = vmatprep.subr.mxu0 0.0
        %1536 = vmatpush1.msra.mxu0 0.0
        %1537 = vmatprep.subr.mxu0 0.0
        %1538 = vmatpush1.msra.mxu0 0.0
        %1539 = vmatprep.subr.mxu0 0.0
        %1540 = vmatpush1.msra.mxu0 0.0
        %1541 = vmatprep.subr.mxu0 0.0
        %1542 = vmatpush1.msra.mxu0 0.0
        %1543 = vmatprep.subr.mxu0 0.0
        %1544 = vmatpush1.msra.mxu0 0.0
        %1545 = vmatprep.subr.mxu0 0.0
        %1546 = vmatpush1.msra.mxu0 0.0
        %1547 = vmatprep.subr.mxu0 0.0
        %1548 = vmatpush1.msra.mxu0 0.0
        %1549 = vmatprep.subr.mxu0 0.0
        %1550 = vmatpush1.msra.mxu0 0.0
        %1551 = vmatprep.subr.mxu0 0.0
        %1552 = vmatpush1.msra.mxu0 0.0
        %1553 = vmatprep.subr.mxu0 0.0
        %1554 = vmatpush1.msra.mxu0 0.0
        %1555 = vmatprep.subr.mxu0 0.0
        %1556 = vmatpush1.msra.mxu0 0.0
        %1557 = vmatprep.subr.mxu0 0.0
        %1558 = vmatpush1.msra.mxu0 0.0
        %1559 = vmatprep.subr.mxu0 0.0
        %1560 = vmatpush1.msra.mxu0 0.0
        %1561 = vmatprep.subr.mxu0 0.0
        %1562 = vmatpush1.msra.mxu0 0.0
        %1563 = vmatprep.subr.mxu0 0.0
        %1564 = vmatpush1.msra.mxu0 0.0
        %1565 = vmatprep.subr.mxu0 0.0
        %1566 = vmatpush1.msra.mxu0 0.0
        %1567 = vmatprep.subr.mxu0 0.0
        %1568 = vmatpush1.msra.mxu0 0.0
        %1569 = vmatprep.subr.mxu0 0.0
        %1570 = vmatpush1.msra.mxu0 0.0
        %1571 = vmatprep.subr.mxu0 0.0
        %1572 = vmatpush1.msra.mxu0 0.0
        %1573 = vmatprep.subr.mxu0 0.0
        %1574 = vmatpush1.msra.mxu0 0.0
        %1575 = vmatprep.subr.mxu0 0.0
        %1576 = vmatpush1.msra.mxu0 0.0
        %1577 = vmatprep.subr.mxu0 0.0
        %1578 = vmatpush1.msra.mxu0 0.0
        %1579 = vmatprep.subr.mxu0 0.0
        %1580 = vmatpush1.msra.mxu0 0.0
        %1581 = vmatprep.subr.mxu0 0.0
        %1582 = vmatpush1.msra.mxu0 0.0
        %1583 = vmatprep.subr.mxu0 0.0
        %1584 = vmatpush1.msra.mxu0 0.0
        %1585 = vmatprep.subr.mxu0 0.0
        %1586 = vmatpush1.msra.mxu0 0.0
        %1587 = vmatprep.subr.mxu0 0.0
        %1588 = vmatpush1.msra.mxu0 0.0
        %1589 = vmatprep.subr.mxu0 0.0
        %1590 = vmatpush1.msra.mxu0 0.0
        %1591 = vmatprep.subr.mxu0 0.0
        %1592 = vmatpush1.msra.mxu0 0.0
        %1593 = vmatprep.subr.mxu0 0.0
        %1594 = vmatpush1.msra.mxu0 0.0
        %1595 = vmatprep.mubr.f32.mxu0 0.0
        %1596 = vmatmul.mubr.f32.gmra.mrb[0].mxu0 %v1347
        %v1597 = vpop.f32.mrb[0].mxu0
        %v1598 = vadd.f32 0.0, %v1597
        %v1599 = vpop.f32.mrb[0].mxu0
        %1600 = vdwg.mxu0
        %1601 = vst.msk [vmem:[#allocation3 + $0xa] sm:$0x1] %vm657, %v1598
        %v1602 = vmul.f32 %v1325, %v1241
        %v1603 = vmul.f32 %v1327, %v1242
        %1604 = vset.pattern.permute.xlu0 2
        %1605 = vperm.xlu0 %1604, %v531
        %v1606 = vpop.permute.xlu0 %1605
        %1608 = vset.pattern.permute.xlu0 2
        %1609 = vperm.xlu0 %1608, %v532
        %v1610 = vpop.permute.xlu0 %1609
        %v1612 = vlaneseq
        %v1613 = vshrl.u32 %v1612, 7
        %v1614 = vsub.s32 2, %v1613
        %v1615 = vrot.slane %v552, %v1614
        %v1616 = vmul.f32 %v1606, %v1615
        %v1617 = vmul.f32 %v1610, %v1615
        %v1618 = vadd.f32 %v1602, %v1616
        %v1619 = vadd.f32 %v1603, %v1617
        %1620 = vmatprep.subr.mxu0 0.0
        %1621 = vmatpush1.msra.mxu0 %v1618
        %1622 = vmatprep.subr.mxu0 0.0
        %1623 = vmatpush1.msra.mxu0 %v1619
        %1624 = vmatprep.subr.mxu0 0.0
        %1625 = vmatpush1.msra.mxu0 0.0
        %1626 = vmatprep.subr.mxu0 0.0
        %1627 = vmatpush1.msra.mxu0 0.0
        %1628 = vmatprep.subr.mxu0 0.0
        %1629 = vmatpush1.msra.mxu0 0.0
        %1630 = vmatprep.subr.mxu0 0.0
        %1631 = vmatpush1.msra.mxu0 0.0
        %1632 = vmatprep.subr.mxu0 0.0
        %1633 = vmatpush1.msra.mxu0 0.0
        %1634 = vmatprep.subr.mxu0 0.0
        %1635 = vmatpush1.msra.mxu0 0.0
        %1636 = vmatprep.subr.mxu0 0.0
        %1637 = vmatpush1.msra.mxu0 0.0
        %1638 = vmatprep.subr.mxu0 0.0
        %1639 = vmatpush1.msra.mxu0 0.0
        %1640 = vmatprep.subr.mxu0 0.0
        %1641 = vmatpush1.msra.mxu0 0.0
        %1642 = vmatprep.subr.mxu0 0.0
        %1643 = vmatpush1.msra.mxu0 0.0
        %1644 = vmatprep.subr.mxu0 0.0
        %1645 = vmatpush1.msra.mxu0 0.0
        %1646 = vmatprep.subr.mxu0 0.0
        %1647 = vmatpush1.msra.mxu0 0.0
        %1648 = vmatprep.subr.mxu0 0.0
        %1649 = vmatpush1.msra.mxu0 0.0
        %1650 = vmatprep.subr.mxu0 0.0
        %1651 = vmatpush1.msra.mxu0 0.0
        %1652 = vmatprep.subr.mxu0 0.0
        %1653 = vmatpush1.msra.mxu0 0.0
        %1654 = vmatprep.subr.mxu0 0.0
        %1655 = vmatpush1.msra.mxu0 0.0
        %1656 = vmatprep.subr.mxu0 0.0
        %1657 = vmatpush1.msra.mxu0 0.0
        %1658 = vmatprep.subr.mxu0 0.0
        %1659 = vmatpush1.msra.mxu0 0.0
        %1660 = vmatprep.subr.mxu0 0.0
        %1661 = vmatpush1.msra.mxu0 0.0
        %1662 = vmatprep.subr.mxu0 0.0
        %1663 = vmatpush1.msra.mxu0 0.0
        %1664 = vmatprep.subr.mxu0 0.0
        %1665 = vmatpush1.msra.mxu0 0.0
        %1666 = vmatprep.subr.mxu0 0.0
        %1667 = vmatpush1.msra.mxu0 0.0
        %1668 = vmatprep.subr.mxu0 0.0
        %1669 = vmatpush1.msra.mxu0 0.0
        %1670 = vmatprep.subr.mxu0 0.0
        %1671 = vmatpush1.msra.mxu0 0.0
        %1672 = vmatprep.subr.mxu0 0.0
        %1673 = vmatpush1.msra.mxu0 0.0
        %1674 = vmatprep.subr.mxu0 0.0
        %1675 = vmatpush1.msra.mxu0 0.0
        %1676 = vmatprep.subr.mxu0 0.0
        %1677 = vmatpush1.msra.mxu0 0.0
        %1678 = vmatprep.subr.mxu0 0.0
        %1679 = vmatpush1.msra.mxu0 0.0
        %1680 = vmatprep.subr.mxu0 0.0
        %1681 = vmatpush1.msra.mxu0 0.0
        %1682 = vmatprep.subr.mxu0 0.0
        %1683 = vmatpush1.msra.mxu0 0.0
        %1684 = vmatprep.mubr.f32.mxu0 0.0
        %1685 = vmatmul.mubr.f32.gmra.mrb[0].mxu0 %v1347
        %v1686 = vpop.f32.mrb[0].mxu0
        %v1687 = vadd.f32 0.0, %v1686
        %v1688 = vpop.f32.mrb[0].mxu0
        %1689 = vdwg.mxu0
        %1691 = vrot.lane.b32.xlu0 %v1687, 64
        %v1692 = vpop.permute.xlu0 %1691
        %1694 = vst.msk [vmem:[#allocation3 + $0xa] sm:$0x1] %vm753, %v1692
        %v1695 = vlaneseq
        %v1696 = vshrl.u32 %v1695, 7
        %v1697 = vsub.s32 3, %v1696
        %v1698 = vrot.slane %v497, %v1697
        %v1699 = vmul.f32 %v1698, %v444
        %v1700 = vmul.f32 %v1698, %v445
        %v1701 = vmul.f32 %v1699, 1.442695
        %v1702 = vpow.pop %v1701
        %v1703 = vmul.f32 %v1700, 1.442695
        %v1704 = vpow.pop %v1703
        %v1705 = vmul.f32 %v1702, %v1344
        %v1706 = vmul.f32 %v1704, %v1345
        %1707 = vset.pattern.permute.xlu0 3
        %1708 = vperm.xlu0 %1707, %v525
        %v1709 = vpop.permute.xlu0 %1708
        %1711 = vset.pattern.permute.xlu0 3
        %1712 = vperm.xlu0 %1711, %v526
        %v1713 = vpop.permute.xlu0 %1712
        %v1715 = vlaneseq
        %v1716 = vshrl.u32 %v1715, 7
        %v1717 = vsub.s32 3, %v1716
        %v1718 = vrot.slane %v541, %v1717
        %v1719 = vmul.f32 %v1709, %v1718
        %v1720 = vmul.f32 %v1713, %v1718
        %v1721 = vadd.f32 %v1705, %v1719
        %v1722 = vadd.f32 %v1706, %v1720
        %v1723 = vrot.slane %v506, 3
        %v1724 = vsel %vm583, %v1723, 0
        %1726 = vmatprep.subr.mxu0 0.0
        %1727 = vmatpush1.msra.mxu0 %v1721
        %1728 = vmatprep.subr.mxu0 0.0
        %1729 = vmatpush1.msra.mxu0 %v1722
        %1730 = vmatprep.subr.mxu0 0.0
        %1731 = vmatpush1.msra.mxu0 0.0
        %1732 = vmatprep.subr.mxu0 0.0
        %1733 = vmatpush1.msra.mxu0 0.0
        %1734 = vmatprep.subr.mxu0 0.0
        %1735 = vmatpush1.msra.mxu0 0.0
        %1736 = vmatprep.subr.mxu0 0.0
        %1737 = vmatpush1.msra.mxu0 0.0
        %1738 = vmatprep.subr.mxu0 0.0
        %1739 = vmatpush1.msra.mxu0 0.0
        %1740 = vmatprep.subr.mxu0 0.0
        %1741 = vmatpush1.msra.mxu0 0.0
        %1742 = vmatprep.subr.mxu0 0.0
        %1743 = vmatpush1.msra.mxu0 0.0
        %1744 = vmatprep.subr.mxu0 0.0
        %1745 = vmatpush1.msra.mxu0 0.0
        %1746 = vmatprep.subr.mxu0 0.0
        %1747 = vmatpush1.msra.mxu0 0.0
        %1748 = vmatprep.subr.mxu0 0.0
        %1749 = vmatpush1.msra.mxu0 0.0
        %1750 = vmatprep.subr.mxu0 0.0
        %1751 = vmatpush1.msra.mxu0 0.0
        %1752 = vmatprep.subr.mxu0 0.0
        %1753 = vmatpush1.msra.mxu0 0.0
        %1754 = vmatprep.subr.mxu0 0.0
        %1755 = vmatpush1.msra.mxu0 0.0
        %1756 = vmatprep.subr.mxu0 0.0
        %1757 = vmatpush1.msra.mxu0 0.0
        %1758 = vmatprep.subr.mxu0 0.0
        %1759 = vmatpush1.msra.mxu0 0.0
        %1760 = vmatprep.subr.mxu0 0.0
        %1761 = vmatpush1.msra.mxu0 0.0
        %1762 = vmatprep.subr.mxu0 0.0
        %1763 = vmatpush1.msra.mxu0 0.0
        %1764 = vmatprep.subr.mxu0 0.0
        %1765 = vmatpush1.msra.mxu0 0.0
        %1766 = vmatprep.subr.mxu0 0.0
        %1767 = vmatpush1.msra.mxu0 0.0
        %1768 = vmatprep.subr.mxu0 0.0
        %1769 = vmatpush1.msra.mxu0 0.0
        %1770 = vmatprep.subr.mxu0 0.0
        %1771 = vmatpush1.msra.mxu0 0.0
        %1772 = vmatprep.subr.mxu0 0.0
        %1773 = vmatpush1.msra.mxu0 0.0
        %1774 = vmatprep.subr.mxu0 0.0
        %1775 = vmatpush1.msra.mxu0 0.0
        %1776 = vmatprep.subr.mxu0 0.0
        %1777 = vmatpush1.msra.mxu0 0.0
        %1778 = vmatprep.subr.mxu0 0.0
        %1779 = vmatpush1.msra.mxu0 0.0
        %1780 = vmatprep.subr.mxu0 0.0
        %1781 = vmatpush1.msra.mxu0 0.0
        %1782 = vmatprep.subr.mxu0 0.0
        %1783 = vmatpush1.msra.mxu0 0.0
        %1784 = vmatprep.subr.mxu0 0.0
        %1785 = vmatpush1.msra.mxu0 0.0
        %1786 = vmatprep.subr.mxu0 0.0
        %1787 = vmatpush1.msra.mxu0 0.0
        %1788 = vmatprep.subr.mxu0 0.0
        %1789 = vmatpush1.msra.mxu0 0.0
        %1790 = vmatprep.mubr.f32.mxu0 0.0
        %1791 = vmatmul.mubr.f32.gmra.mrb[0].mxu0 %v1724
        %v1792 = vpop.f32.mrb[0].mxu0
        %v1793 = vadd.f32 0.0, %v1792
        %v1794 = vpop.f32.mrb[0].mxu0
        %1795 = vdwg.mxu0
        %1796 = vst.msk [vmem:[#allocation3 + $0x3] sm:$0x1] %vm657, %v1793
        %v1797 = vmul.f32 %v1702, %v1436
        %v1798 = vmul.f32 %v1704, %v1437
        %1799 = vset.pattern.permute.xlu0 3
        %1800 = vperm.xlu0 %1799, %v527
        %v1801 = vpop.permute.xlu0 %1800
        %1803 = vset.pattern.permute.xlu0 3
        %1804 = vperm.xlu0 %1803, %v528
        %v1805 = vpop.permute.xlu0 %1804
        %v1807 = vlaneseq
        %v1808 = vshrl.u32 %v1807, 7
        %v1809 = vsub.s32 3, %v1808
        %v1810 = vrot.slane %v546, %v1809
        %v1811 = vmul.f32 %v1801, %v1810
        %v1812 = vmul.f32 %v1805, %v1810
        %v1813 = vadd.f32 %v1797, %v1811
        %v1814 = vadd.f32 %v1798, %v1812
        %1815 = vmatprep.subr.mxu0 0.0
        %1816 = vmatpush1.msra.mxu0 %v1813
        %1817 = vmatprep.subr.mxu0 0.0
        %1818 = vmatpush1.msra.mxu0 %v1814
        %1819 = vmatprep.subr.mxu0 0.0
        %1820 = vmatpush1.msra.mxu0 0.0
        %1821 = vmatprep.subr.mxu0 0.0
        %1822 = vmatpush1.msra.mxu0 0.0
        %1823 = vmatprep.subr.mxu0 0.0
        %1824 = vmatpush1.msra.mxu0 0.0
        %1825 = vmatprep.subr.mxu0 0.0
        %1826 = vmatpush1.msra.mxu0 0.0
        %1827 = vmatprep.subr.mxu0 0.0
        %1828 = vmatpush1.msra.mxu0 0.0
        %1829 = vmatprep.subr.mxu0 0.0
        %1830 = vmatpush1.msra.mxu0 0.0
        %1831 = vmatprep.subr.mxu0 0.0
        %1832 = vmatpush1.msra.mxu0 0.0
        %1833 = vmatprep.subr.mxu0 0.0
        %1834 = vmatpush1.msra.mxu0 0.0
        %1835 = vmatprep.subr.mxu0 0.0
        %1836 = vmatpush1.msra.mxu0 0.0
        %1837 = vmatprep.subr.mxu0 0.0
        %1838 = vmatpush1.msra.mxu0 0.0
        %1839 = vmatprep.subr.mxu0 0.0
        %1840 = vmatpush1.msra.mxu0 0.0
        %1841 = vmatprep.subr.mxu0 0.0
        %1842 = vmatpush1.msra.mxu0 0.0
        %1843 = vmatprep.subr.mxu0 0.0
        %1844 = vmatpush1.msra.mxu0 0.0
        %1845 = vmatprep.subr.mxu0 0.0
        %1846 = vmatpush1.msra.mxu0 0.0
        %1847 = vmatprep.subr.mxu0 0.0
        %1848 = vmatpush1.msra.mxu0 0.0
        %1849 = vmatprep.subr.mxu0 0.0
        %1850 = vmatpush1.msra.mxu0 0.0
        %1851 = vmatprep.subr.mxu0 0.0
        %1852 = vmatpush1.msra.mxu0 0.0
        %1853 = vmatprep.subr.mxu0 0.0
        %1854 = vmatpush1.msra.mxu0 0.0
        %1855 = vmatprep.subr.mxu0 0.0
        %1856 = vmatpush1.msra.mxu0 0.0
        %1857 = vmatprep.subr.mxu0 0.0
        %1858 = vmatpush1.msra.mxu0 0.0
        %1859 = vmatprep.subr.mxu0 0.0
        %1860 = vmatpush1.msra.mxu0 0.0
        %1861 = vmatprep.subr.mxu0 0.0
        %1862 = vmatpush1.msra.mxu0 0.0
        %1863 = vmatprep.subr.mxu0 0.0
        %1864 = vmatpush1.msra.mxu0 0.0
        %1865 = vmatprep.subr.mxu0 0.0
        %1866 = vmatpush1.msra.mxu0 0.0
        %1867 = vmatprep.subr.mxu0 0.0
        %1868 = vmatpush1.msra.mxu0 0.0
        %1869 = vmatprep.subr.mxu0 0.0
        %1870 = vmatpush1.msra.mxu0 0.0
        %1871 = vmatprep.subr.mxu0 0.0
        %1872 = vmatpush1.msra.mxu0 0.0
        %1873 = vmatprep.subr.mxu0 0.0
        %1874 = vmatpush1.msra.mxu0 0.0
        %1875 = vmatprep.subr.mxu0 0.0
        %1876 = vmatpush1.msra.mxu0 0.0
        %1877 = vmatprep.subr.mxu0 0.0
        %1878 = vmatpush1.msra.mxu0 0.0
        %1879 = vmatprep.mubr.f32.mxu0 0.0
        %1880 = vmatmul.mubr.f32.gmra.mrb[0].mxu0 %v1724
        %v1881 = vpop.f32.mrb[0].mxu0
        %v1882 = vadd.f32 0.0, %v1881
        %v1883 = vpop.f32.mrb[0].mxu0
        %1884 = vdwg.mxu0
        %1886 = vrot.lane.b32.xlu0 %v1882, 64
        %v1887 = vpop.permute.xlu0 %1886
        %1889 = vst.msk [vmem:[#allocation3 + $0x3] sm:$0x1] %vm753, %v1887
        %v1890 = vmul.f32 %v1702, %v1529
        %v1891 = vmul.f32 %v1704, %v1530
        %1892 = vset.pattern.permute.xlu0 3
        %1893 = vperm.xlu0 %1892, %v529
        %v1894 = vpop.permute.xlu0 %1893
        %1896 = vset.pattern.permute.xlu0 3
        %1897 = vperm.xlu0 %1896, %v530
        %v1898 = vpop.permute.xlu0 %1897
        %v1900 = vlaneseq
        %v1901 = vshrl.u32 %v1900, 7
        %v1902 = vsub.s32 3, %v1901
        %v1903 = vrot.slane %v547, %v1902
        %v1904 = vmul.f32 %v1894, %v1903
        %v1905 = vmul.f32 %v1898, %v1903
        %v1906 = vadd.f32 %v1890, %v1904
        %v1907 = vadd.f32 %v1891, %v1905
        %1908 = vmatprep.subr.mxu0 0.0
        %1909 = vmatpush1.msra.mxu0 %v1906
        %1910 = vmatprep.subr.mxu0 0.0
        %1911 = vmatpush1.msra.mxu0 %v1907
        %1912 = vmatprep.subr.mxu0 0.0
        %1913 = vmatpush1.msra.mxu0 0.0
        %1914 = vmatprep.subr.mxu0 0.0
        %1915 = vmatpush1.msra.mxu0 0.0
        %1916 = vmatprep.subr.mxu0 0.0
        %1917 = vmatpush1.msra.mxu0 0.0
        %1918 = vmatprep.subr.mxu0 0.0
        %1919 = vmatpush1.msra.mxu0 0.0
        %1920 = vmatprep.subr.mxu0 0.0
        %1921 = vmatpush1.msra.mxu0 0.0
        %1922 = vmatprep.subr.mxu0 0.0
        %1923 = vmatpush1.msra.mxu0 0.0
        %1924 = vmatprep.subr.mxu0 0.0
        %1925 = vmatpush1.msra.mxu0 0.0
        %1926 = vmatprep.subr.mxu0 0.0
        %1927 = vmatpush1.msra.mxu0 0.0
        %1928 = vmatprep.subr.mxu0 0.0
        %1929 = vmatpush1.msra.mxu0 0.0
        %1930 = vmatprep.subr.mxu0 0.0
        %1931 = vmatpush1.msra.mxu0 0.0
        %1932 = vmatprep.subr.mxu0 0.0
        %1933 = vmatpush1.msra.mxu0 0.0
        %1934 = vmatprep.subr.mxu0 0.0
        %1935 = vmatpush1.msra.mxu0 0.0
        %1936 = vmatprep.subr.mxu0 0.0
        %1937 = vmatpush1.msra.mxu0 0.0
        %1938 = vmatprep.subr.mxu0 0.0
        %1939 = vmatpush1.msra.mxu0 0.0
        %1940 = vmatprep.subr.mxu0 0.0
        %1941 = vmatpush1.msra.mxu0 0.0
        %1942 = vmatprep.subr.mxu0 0.0
        %1943 = vmatpush1.msra.mxu0 0.0
        %1944 = vmatprep.subr.mxu0 0.0
        %1945 = vmatpush1.msra.mxu0 0.0
        %1946 = vmatprep.subr.mxu0 0.0
        %1947 = vmatpush1.msra.mxu0 0.0
        %1948 = vmatprep.subr.mxu0 0.0
        %1949 = vmatpush1.msra.mxu0 0.0
        %1950 = vmatprep.subr.mxu0 0.0
        %1951 = vmatpush1.msra.mxu0 0.0
        %1952 = vmatprep.subr.mxu0 0.0
        %1953 = vmatpush1.msra.mxu0 0.0
        %1954 = vmatprep.subr.mxu0 0.0
        %1955 = vmatpush1.msra.mxu0 0.0
        %1956 = vmatprep.subr.mxu0 0.0
        %1957 = vmatpush1.msra.mxu0 0.0
        %1958 = vmatprep.subr.mxu0 0.0
        %1959 = vmatpush1.msra.mxu0 0.0
        %1960 = vmatprep.subr.mxu0 0.0
        %1961 = vmatpush1.msra.mxu0 0.0
        %1962 = vmatprep.subr.mxu0 0.0
        %1963 = vmatpush1.msra.mxu0 0.0
        %1964 = vmatprep.subr.mxu0 0.0
        %1965 = vmatpush1.msra.mxu0 0.0
        %1966 = vmatprep.subr.mxu0 0.0
        %1967 = vmatpush1.msra.mxu0 0.0
        %1968 = vmatprep.subr.mxu0 0.0
        %1969 = vmatpush1.msra.mxu0 0.0
        %1970 = vmatprep.subr.mxu0 0.0
        %1971 = vmatpush1.msra.mxu0 0.0
        %1972 = vmatprep.mubr.f32.mxu0 0.0
        %1973 = vmatmul.mubr.f32.gmra.mrb[0].mxu0 %v1724
        %v1974 = vpop.f32.mrb[0].mxu0
        %v1975 = vadd.f32 0.0, %v1974
        %v1976 = vpop.f32.mrb[0].mxu0
        %1977 = vdwg.mxu0
        %1978 = vst.msk [vmem:[#allocation3 + $0xb] sm:$0x1] %vm657, %v1975
        %v1979 = vmul.f32 %v1702, %v1618
        %v1980 = vmul.f32 %v1704, %v1619
        %1981 = vset.pattern.permute.xlu0 3
        %1982 = vperm.xlu0 %1981, %v531
        %v1983 = vpop.permute.xlu0 %1982
        %1985 = vset.pattern.permute.xlu0 3
        %1986 = vperm.xlu0 %1985, %v532
        %v1987 = vpop.permute.xlu0 %1986
        %v1989 = vlaneseq
        %v1990 = vshrl.u32 %v1989, 7
        %v1991 = vsub.s32 3, %v1990
        %v1992 = vrot.slane %v552, %v1991
        %v1993 = vmul.f32 %v1983, %v1992
        %v1994 = vmul.f32 %v1987, %v1992
        %v1995 = vadd.f32 %v1979, %v1993
        %v1996 = vadd.f32 %v1980, %v1994
        %1997 = vmatprep.subr.mxu0 0.0
        %1998 = vmatpush1.msra.mxu0 %v1995
        %1999 = vmatprep.subr.mxu0 0.0
        %2000 = vmatpush1.msra.mxu0 %v1996
        %2001 = vmatprep.subr.mxu0 0.0
        %2002 = vmatpush1.msra.mxu0 0.0
        %2003 = vmatprep.subr.mxu0 0.0
        %2004 = vmatpush1.msra.mxu0 0.0
        %2005 = vmatprep.subr.mxu0 0.0
        %2006 = vmatpush1.msra.mxu0 0.0
        %2007 = vmatprep.subr.mxu0 0.0
        %2008 = vmatpush1.msra.mxu0 0.0
        %2009 = vmatprep.subr.mxu0 0.0
        %2010 = vmatpush1.msra.mxu0 0.0
        %2011 = vmatprep.subr.mxu0 0.0
        %2012 = vmatpush1.msra.mxu0 0.0
        %2013 = vmatprep.subr.mxu0 0.0
        %2014 = vmatpush1.msra.mxu0 0.0
        %2015 = vmatprep.subr.mxu0 0.0
        %2016 = vmatpush1.msra.mxu0 0.0
        %2017 = vmatprep.subr.mxu0 0.0
        %2018 = vmatpush1.msra.mxu0 0.0
        %2019 = vmatprep.subr.mxu0 0.0
        %2020 = vmatpush1.msra.mxu0 0.0
        %2021 = vmatprep.subr.mxu0 0.0
        %2022 = vmatpush1.msra.mxu0 0.0
        %2023 = vmatprep.subr.mxu0 0.0
        %2024 = vmatpush1.msra.mxu0 0.0
        %2025 = vmatprep.subr.mxu0 0.0
        %2026 = vmatpush1.msra.mxu0 0.0
        %2027 = vmatprep.subr.mxu0 0.0
        %2028 = vmatpush1.msra.mxu0 0.0
        %2029 = vmatprep.subr.mxu0 0.0
        %2030 = vmatpush1.msra.mxu0 0.0
        %2031 = vmatprep.subr.mxu0 0.0
        %2032 = vmatpush1.msra.mxu0 0.0
        %2033 = vmatprep.subr.mxu0 0.0
        %2034 = vmatpush1.msra.mxu0 0.0
        %2035 = vmatprep.subr.mxu0 0.0
        %2036 = vmatpush1.msra.mxu0 0.0
        %2037 = vmatprep.subr.mxu0 0.0
        %2038 = vmatpush1.msra.mxu0 0.0
        %2039 = vmatprep.subr.mxu0 0.0
        %2040 = vmatpush1.msra.mxu0 0.0
        %2041 = vmatprep.subr.mxu0 0.0
        %2042 = vmatpush1.msra.mxu0 0.0
        %2043 = vmatprep.subr.mxu0 0.0
        %2044 = vmatpush1.msra.mxu0 0.0
        %2045 = vmatprep.subr.mxu0 0.0
        %2046 = vmatpush1.msra.mxu0 0.0
        %2047 = vmatprep.subr.mxu0 0.0
        %2048 = vmatpush1.msra.mxu0 0.0
        %2049 = vmatprep.subr.mxu0 0.0
        %2050 = vmatpush1.msra.mxu0 0.0
        %2051 = vmatprep.subr.mxu0 0.0
        %2052 = vmatpush1.msra.mxu0 0.0
        %2053 = vmatprep.subr.mxu0 0.0
        %2054 = vmatpush1.msra.mxu0 0.0
        %2055 = vmatprep.subr.mxu0 0.0
        %2056 = vmatpush1.msra.mxu0 0.0
        %2057 = vmatprep.subr.mxu0 0.0
        %2058 = vmatpush1.msra.mxu0 0.0
        %2059 = vmatprep.subr.mxu0 0.0
        %2060 = vmatpush1.msra.mxu0 0.0
        %2061 = vmatprep.mubr.f32.mxu0 0.0
        %2062 = vmatmul.mubr.f32.gmra.mrb[0].mxu0 %v1724
        %v2063 = vpop.f32.mrb[0].mxu0
        %v2064 = vadd.f32 0.0, %v2063
        %v2065 = vpop.f32.mrb[0].mxu0
        %2066 = vdwg.mxu0
        %2068 = vrot.lane.b32.xlu0 %v2064, 64
        %v2069 = vpop.permute.xlu0 %2068
        %2071 = vst.msk [vmem:[#allocation3 + $0xb] sm:$0x1] %vm753, %v2069
        %v2072 = vlaneseq
        %v2073 = vshrl.u32 %v2072, 7
        %v2074 = vsub.s32 4, %v2073
        %v2075 = vrot.slane %v497, %v2074
        %v2076 = vmul.f32 %v2075, %v444
        %v2077 = vmul.f32 %v2075, %v445
        %v2078 = vmul.f32 %v2076, 1.442695
        %v2079 = vpow.pop %v2078
        %v2080 = vmul.f32 %v2077, 1.442695
        %v2081 = vpow.pop %v2080
        %v2082 = vmul.f32 %v2079, %v1721
        %v2083 = vmul.f32 %v2081, %v1722
        %2084 = vset.pattern.permute.xlu0 4
        %2085 = vperm.xlu0 %2084, %v525
        %v2086 = vpop.permute.xlu0 %2085
        %2088 = vset.pattern.permute.xlu0 4
        %2089 = vperm.xlu0 %2088, %v526
        %v2090 = vpop.permute.xlu0 %2089
        %v2092 = vlaneseq
        %v2093 = vshrl.u32 %v2092, 7
        %v2094 = vsub.s32 4, %v2093
        %v2095 = vrot.slane %v541, %v2094
        %v2096 = vmul.f32 %v2086, %v2095
        %v2097 = vmul.f32 %v2090, %v2095
        %v2098 = vadd.f32 %v2082, %v2096
        %v2099 = vadd.f32 %v2083, %v2097
        %v2100 = vrot.slane %v506, 4
        %v2101 = vsel %vm583, %v2100, 0
        %2103 = vmatprep.subr.mxu0 0.0
        %2104 = vmatpush1.msra.mxu0 %v2098
        %2105 = vmatprep.subr.mxu0 0.0
        %2106 = vmatpush1.msra.mxu0 %v2099
        %2107 = vmatprep.subr.mxu0 0.0
        %2108 = vmatpush1.msra.mxu0 0.0
        %2109 = vmatprep.subr.mxu0 0.0
        %2110 = vmatpush1.msra.mxu0 0.0
        %2111 = vmatprep.subr.mxu0 0.0
        %2112 = vmatpush1.msra.mxu0 0.0
        %2113 = vmatprep.subr.mxu0 0.0
        %2114 = vmatpush1.msra.mxu0 0.0
        %2115 = vmatprep.subr.mxu0 0.0
        %2116 = vmatpush1.msra.mxu0 0.0
        %2117 = vmatprep.subr.mxu0 0.0
        %2118 = vmatpush1.msra.mxu0 0.0
        %2119 = vmatprep.subr.mxu0 0.0
        %2120 = vmatpush1.msra.mxu0 0.0
        %2121 = vmatprep.subr.mxu0 0.0
        %2122 = vmatpush1.msra.mxu0 0.0
        %2123 = vmatprep.subr.mxu0 0.0
        %2124 = vmatpush1.msra.mxu0 0.0
        %2125 = vmatprep.subr.mxu0 0.0
        %2126 = vmatpush1.msra.mxu0 0.0
        %2127 = vmatprep.subr.mxu0 0.0
        %2128 = vmatpush1.msra.mxu0 0.0
        %2129 = vmatprep.subr.mxu0 0.0
        %2130 = vmatpush1.msra.mxu0 0.0
        %2131 = vmatprep.subr.mxu0 0.0
        %2132 = vmatpush1.msra.mxu0 0.0
        %2133 = vmatprep.subr.mxu0 0.0
        %2134 = vmatpush1.msra.mxu0 0.0
        %2135 = vmatprep.subr.mxu0 0.0
        %2136 = vmatpush1.msra.mxu0 0.0
        %2137 = vmatprep.subr.mxu0 0.0
        %2138 = vmatpush1.msra.mxu0 0.0
        %2139 = vmatprep.subr.mxu0 0.0
        %2140 = vmatpush1.msra.mxu0 0.0
        %2141 = vmatprep.subr.mxu0 0.0
        %2142 = vmatpush1.msra.mxu0 0.0
        %2143 = vmatprep.subr.mxu0 0.0
        %2144 = vmatpush1.msra.mxu0 0.0
        %2145 = vmatprep.subr.mxu0 0.0
        %2146 = vmatpush1.msra.mxu0 0.0
        %2147 = vmatprep.subr.mxu0 0.0
        %2148 = vmatpush1.msra.mxu0 0.0
        %2149 = vmatprep.subr.mxu0 0.0
        %2150 = vmatpush1.msra.mxu0 0.0
        %2151 = vmatprep.subr.mxu0 0.0
        %2152 = vmatpush1.msra.mxu0 0.0
        %2153 = vmatprep.subr.mxu0 0.0
        %2154 = vmatpush1.msra.mxu0 0.0
        %2155 = vmatprep.subr.mxu0 0.0
        %2156 = vmatpush1.msra.mxu0 0.0
        %2157 = vmatprep.subr.mxu0 0.0
        %2158 = vmatpush1.msra.mxu0 0.0
        %2159 = vmatprep.subr.mxu0 0.0
        %2160 = vmatpush1.msra.mxu0 0.0
        %2161 = vmatprep.subr.mxu0 0.0
        %2162 = vmatpush1.msra.mxu0 0.0
        %2163 = vmatprep.subr.mxu0 0.0
        %2164 = vmatpush1.msra.mxu0 0.0
        %2165 = vmatprep.subr.mxu0 0.0
        %2166 = vmatpush1.msra.mxu0 0.0
        %2167 = vmatprep.mubr.f32.mxu0 0.0
        %2168 = vmatmul.mubr.f32.gmra.mrb[0].mxu0 %v2101
        %v2169 = vpop.f32.mrb[0].mxu0
        %v2170 = vadd.f32 0.0, %v2169
        %v2171 = vpop.f32.mrb[0].mxu0
        %2172 = vdwg.mxu0
        %2173 = vst.msk [vmem:[#allocation3 + $0x4] sm:$0x1] %vm657, %v2170
        %v2174 = vmul.f32 %v2079, %v1813
        %v2175 = vmul.f32 %v2081, %v1814
        %2176 = vset.pattern.permute.xlu0 4
        %2177 = vperm.xlu0 %2176, %v527
        %v2178 = vpop.permute.xlu0 %2177
        %2180 = vset.pattern.permute.xlu0 4
        %2181 = vperm.xlu0 %2180, %v528
        %v2182 = vpop.permute.xlu0 %2181
        %v2184 = vlaneseq
        %v2185 = vshrl.u32 %v2184, 7
        %v2186 = vsub.s32 4, %v2185
        %v2187 = vrot.slane %v546, %v2186
        %v2188 = vmul.f32 %v2178, %v2187
        %v2189 = vmul.f32 %v2182, %v2187
        %v2190 = vadd.f32 %v2174, %v2188
        %v2191 = vadd.f32 %v2175, %v2189
        %2192 = vmatprep.subr.mxu0 0.0
        %2193 = vmatpush1.msra.mxu0 %v2190
        %2194 = vmatprep.subr.mxu0 0.0
        %2195 = vmatpush1.msra.mxu0 %v2191
        %2196 = vmatprep.subr.mxu0 0.0
        %2197 = vmatpush1.msra.mxu0 0.0
        %2198 = vmatprep.subr.mxu0 0.0
        %2199 = vmatpush1.msra.mxu0 0.0
        %2200 = vmatprep.subr.mxu0 0.0
        %2201 = vmatpush1.msra.mxu0 0.0
        %2202 = vmatprep.subr.mxu0 0.0
        %2203 = vmatpush1.msra.mxu0 0.0
        %2204 = vmatprep.subr.mxu0 0.0
        %2205 = vmatpush1.msra.mxu0 0.0
        %2206 = vmatprep.subr.mxu0 0.0
        %2207 = vmatpush1.msra.mxu0 0.0
        %2208 = vmatprep.subr.mxu0 0.0
        %2209 = vmatpush1.msra.mxu0 0.0
        %2210 = vmatprep.subr.mxu0 0.0
        %2211 = vmatpush1.msra.mxu0 0.0
        %2212 = vmatprep.subr.mxu0 0.0
        %2213 = vmatpush1.msra.mxu0 0.0
        %2214 = vmatprep.subr.mxu0 0.0
        %2215 = vmatpush1.msra.mxu0 0.0
        %2216 = vmatprep.subr.mxu0 0.0
        %2217 = vmatpush1.msra.mxu0 0.0
        %2218 = vmatprep.subr.mxu0 0.0
        %2219 = vmatpush1.msra.mxu0 0.0
        %2220 = vmatprep.subr.mxu0 0.0
        %2221 = vmatpush1.msra.mxu0 0.0
        %2222 = vmatprep.subr.mxu0 0.0
        %2223 = vmatpush1.msra.mxu0 0.0
        %2224 = vmatprep.subr.mxu0 0.0
        %2225 = vmatpush1.msra.mxu0 0.0
        %2226 = vmatprep.subr.mxu0 0.0
        %2227 = vmatpush1.msra.mxu0 0.0
        %2228 = vmatprep.subr.mxu0 0.0
        %2229 = vmatpush1.msra.mxu0 0.0
        %2230 = vmatprep.subr.mxu0 0.0
        %2231 = vmatpush1.msra.mxu0 0.0
        %2232 = vmatprep.subr.mxu0 0.0
        %2233 = vmatpush1.msra.mxu0 0.0
        %2234 = vmatprep.subr.mxu0 0.0
        %2235 = vmatpush1.msra.mxu0 0.0
        %2236 = vmatprep.subr.mxu0 0.0
        %2237 = vmatpush1.msra.mxu0 0.0
        %2238 = vmatprep.subr.mxu0 0.0
        %2239 = vmatpush1.msra.mxu0 0.0
        %2240 = vmatprep.subr.mxu0 0.0
        %2241 = vmatpush1.msra.mxu0 0.0
        %2242 = vmatprep.subr.mxu0 0.0
        %2243 = vmatpush1.msra.mxu0 0.0
        %2244 = vmatprep.subr.mxu0 0.0
        %2245 = vmatpush1.msra.mxu0 0.0
        %2246 = vmatprep.subr.mxu0 0.0
        %2247 = vmatpush1.msra.mxu0 0.0
        %2248 = vmatprep.subr.mxu0 0.0
        %2249 = vmatpush1.msra.mxu0 0.0
        %2250 = vmatprep.subr.mxu0 0.0
        %2251 = vmatpush1.msra.mxu0 0.0
        %2252 = vmatprep.subr.mxu0 0.0
        %2253 = vmatpush1.msra.mxu0 0.0
        %2254 = vmatprep.subr.mxu0 0.0
        %2255 = vmatpush1.msra.mxu0 0.0
        %2256 = vmatprep.mubr.f32.mxu0 0.0
        %2257 = vmatmul.mubr.f32.gmra.mrb[0].mxu0 %v2101
        %v2258 = vpop.f32.mrb[0].mxu0
        %v2259 = vadd.f32 0.0, %v2258
        %v2260 = vpop.f32.mrb[0].mxu0
        %2261 = vdwg.mxu0
        %2263 = vrot.lane.b32.xlu0 %v2259, 64
        %v2264 = vpop.permute.xlu0 %2263
        %2266 = vst.msk [vmem:[#allocation3 + $0x4] sm:$0x1] %vm753, %v2264
        %v2267 = vmul.f32 %v2079, %v1906
        %v2268 = vmul.f32 %v2081, %v1907
        %2269 = vset.pattern.permute.xlu0 4
        %2270 = vperm.xlu0 %2269, %v529
        %v2271 = vpop.permute.xlu0 %2270
        %2273 = vset.pattern.permute.xlu0 4
        %2274 = vperm.xlu0 %2273, %v530
        %v2275 = vpop.permute.xlu0 %2274
        %v2277 = vlaneseq
        %v2278 = vshrl.u32 %v2277, 7
        %v2279 = vsub.s32 4, %v2278
        %v2280 = vrot.slane %v547, %v2279
        %v2281 = vmul.f32 %v2271, %v2280
        %v2282 = vmul.f32 %v2275, %v2280
        %v2283 = vadd.f32 %v2267, %v2281
        %v2284 = vadd.f32 %v2268, %v2282
        %2285 = vmatprep.subr.mxu0 0.0
        %2286 = vmatpush1.msra.mxu0 %v2283
        %2287 = vmatprep.subr.mxu0 0.0
        %2288 = vmatpush1.msra.mxu0 %v2284
        %2289 = vmatprep.subr.mxu0 0.0
        %2290 = vmatpush1.msra.mxu0 0.0
        %2291 = vmatprep.subr.mxu0 0.0
        %2292 = vmatpush1.msra.mxu0 0.0
        %2293 = vmatprep.subr.mxu0 0.0
        %2294 = vmatpush1.msra.mxu0 0.0
        %2295 = vmatprep.subr.mxu0 0.0
        %2296 = vmatpush1.msra.mxu0 0.0
        %2297 = vmatprep.subr.mxu0 0.0
        %2298 = vmatpush1.msra.mxu0 0.0
        %2299 = vmatprep.subr.mxu0 0.0
        %2300 = vmatpush1.msra.mxu0 0.0
        %2301 = vmatprep.subr.mxu0 0.0
        %2302 = vmatpush1.msra.mxu0 0.0
        %2303 = vmatprep.subr.mxu0 0.0
        %2304 = vmatpush1.msra.mxu0 0.0
        %2305 = vmatprep.subr.mxu0 0.0
        %2306 = vmatpush1.msra.mxu0 0.0
        %2307 = vmatprep.subr.mxu0 0.0
        %2308 = vmatpush1.msra.mxu0 0.0
        %2309 = vmatprep.subr.mxu0 0.0
        %2310 = vmatpush1.msra.mxu0 0.0
        %2311 = vmatprep.subr.mxu0 0.0
        %2312 = vmatpush1.msra.mxu0 0.0
        %2313 = vmatprep.subr.mxu0 0.0
        %2314 = vmatpush1.msra.mxu0 0.0
        %2315 = vmatprep.subr.mxu0 0.0
        %2316 = vmatpush1.msra.mxu0 0.0
        %2317 = vmatprep.subr.mxu0 0.0
        %2318 = vmatpush1.msra.mxu0 0.0
        %2319 = vmatprep.subr.mxu0 0.0
        %2320 = vmatpush1.msra.mxu0 0.0
        %2321 = vmatprep.subr.mxu0 0.0
        %2322 = vmatpush1.msra.mxu0 0.0
        %2323 = vmatprep.subr.mxu0 0.0
        %2324 = vmatpush1.msra.mxu0 0.0
        %2325 = vmatprep.subr.mxu0 0.0
        %2326 = vmatpush1.msra.mxu0 0.0
        %2327 = vmatprep.subr.mxu0 0.0
        %2328 = vmatpush1.msra.mxu0 0.0
        %2329 = vmatprep.subr.mxu0 0.0
        %2330 = vmatpush1.msra.mxu0 0.0
        %2331 = vmatprep.subr.mxu0 0.0
        %2332 = vmatpush1.msra.mxu0 0.0
        %2333 = vmatprep.subr.mxu0 0.0
        %2334 = vmatpush1.msra.mxu0 0.0
        %2335 = vmatprep.subr.mxu0 0.0
        %2336 = vmatpush1.msra.mxu0 0.0
        %2337 = vmatprep.subr.mxu0 0.0
        %2338 = vmatpush1.msra.mxu0 0.0
        %2339 = vmatprep.subr.mxu0 0.0
        %2340 = vmatpush1.msra.mxu0 0.0
        %2341 = vmatprep.subr.mxu0 0.0
        %2342 = vmatpush1.msra.mxu0 0.0
        %2343 = vmatprep.subr.mxu0 0.0
        %2344 = vmatpush1.msra.mxu0 0.0
        %2345 = vmatprep.subr.mxu0 0.0
        %2346 = vmatpush1.msra.mxu0 0.0
        %2347 = vmatprep.subr.mxu0 0.0
        %2348 = vmatpush1.msra.mxu0 0.0
        %2349 = vmatprep.mubr.f32.mxu0 0.0
        %2350 = vmatmul.mubr.f32.gmra.mrb[0].mxu0 %v2101
        %v2351 = vpop.f32.mrb[0].mxu0
        %v2352 = vadd.f32 0.0, %v2351
        %v2353 = vpop.f32.mrb[0].mxu0
        %2354 = vdwg.mxu0
        %2355 = vst.msk [vmem:[#allocation3 + $0xc] sm:$0x1] %vm657, %v2352
        %v2356 = vmul.f32 %v2079, %v1995
        %v2357 = vmul.f32 %v2081, %v1996
        %2358 = vset.pattern.permute.xlu0 4
        %2359 = vperm.xlu0 %2358, %v531
        %v2360 = vpop.permute.xlu0 %2359
        %2362 = vset.pattern.permute.xlu0 4
        %2363 = vperm.xlu0 %2362, %v532
        %v2364 = vpop.permute.xlu0 %2363
        %v2366 = vlaneseq
        %v2367 = vshrl.u32 %v2366, 7
        %v2368 = vsub.s32 4, %v2367
        %v2369 = vrot.slane %v552, %v2368
        %v2370 = vmul.f32 %v2360, %v2369
        %v2371 = vmul.f32 %v2364, %v2369
        %v2372 = vadd.f32 %v2356, %v2370
        %v2373 = vadd.f32 %v2357, %v2371
        %2374 = vmatprep.subr.mxu0 0.0
        %2375 = vmatpush1.msra.mxu0 %v2372
        %2376 = vmatprep.subr.mxu0 0.0
        %2377 = vmatpush1.msra.mxu0 %v2373
        %2378 = vmatprep.subr.mxu0 0.0
        %2379 = vmatpush1.msra.mxu0 0.0
        %2380 = vmatprep.subr.mxu0 0.0
        %2381 = vmatpush1.msra.mxu0 0.0
        %2382 = vmatprep.subr.mxu0 0.0
        %2383 = vmatpush1.msra.mxu0 0.0
        %2384 = vmatprep.subr.mxu0 0.0
        %2385 = vmatpush1.msra.mxu0 0.0
        %2386 = vmatprep.subr.mxu0 0.0
        %2387 = vmatpush1.msra.mxu0 0.0
        %2388 = vmatprep.subr.mxu0 0.0
        %2389 = vmatpush1.msra.mxu0 0.0
        %2390 = vmatprep.subr.mxu0 0.0
        %2391 = vmatpush1.msra.mxu0 0.0
        %2392 = vmatprep.subr.mxu0 0.0
        %2393 = vmatpush1.msra.mxu0 0.0
        %2394 = vmatprep.subr.mxu0 0.0
        %2395 = vmatpush1.msra.mxu0 0.0
        %2396 = vmatprep.subr.mxu0 0.0
        %2397 = vmatpush1.msra.mxu0 0.0
        %2398 = vmatprep.subr.mxu0 0.0
        %2399 = vmatpush1.msra.mxu0 0.0
        %2400 = vmatprep.subr.mxu0 0.0
        %2401 = vmatpush1.msra.mxu0 0.0
        %2402 = vmatprep.subr.mxu0 0.0
        %2403 = vmatpush1.msra.mxu0 0.0
        %2404 = vmatprep.subr.mxu0 0.0
        %2405 = vmatpush1.msra.mxu0 0.0
        %2406 = vmatprep.subr.mxu0 0.0
        %2407 = vmatpush1.msra.mxu0 0.0
        %2408 = vmatprep.subr.mxu0 0.0
        %2409 = vmatpush1.msra.mxu0 0.0
        %2410 = vmatprep.subr.mxu0 0.0
        %2411 = vmatpush1.msra.mxu0 0.0
        %2412 = vmatprep.subr.mxu0 0.0
        %2413 = vmatpush1.msra.mxu0 0.0
        %2414 = vmatprep.subr.mxu0 0.0
        %2415 = vmatpush1.msra.mxu0 0.0
        %2416 = vmatprep.subr.mxu0 0.0
        %2417 = vmatpush1.msra.mxu0 0.0
        %2418 = vmatprep.subr.mxu0 0.0
        %2419 = vmatpush1.msra.mxu0 0.0
        %2420 = vmatprep.subr.mxu0 0.0
        %2421 = vmatpush1.msra.mxu0 0.0
        %2422 = vmatprep.subr.mxu0 0.0
        %2423 = vmatpush1.msra.mxu0 0.0
        %2424 = vmatprep.subr.mxu0 0.0
        %2425 = vmatpush1.msra.mxu0 0.0
        %2426 = vmatprep.subr.mxu0 0.0
        %2427 = vmatpush1.msra.mxu0 0.0
        %2428 = vmatprep.subr.mxu0 0.0
        %2429 = vmatpush1.msra.mxu0 0.0
        %2430 = vmatprep.subr.mxu0 0.0
        %2431 = vmatpush1.msra.mxu0 0.0
        %2432 = vmatprep.subr.mxu0 0.0
        %2433 = vmatpush1.msra.mxu0 0.0
        %2434 = vmatprep.subr.mxu0 0.0
        %2435 = vmatpush1.msra.mxu0 0.0
        %2436 = vmatprep.subr.mxu0 0.0
        %2437 = vmatpush1.msra.mxu0 0.0
        %2438 = vmatprep.mubr.f32.mxu0 0.0
        %2439 = vmatmul.mubr.f32.gmra.mrb[0].mxu0 %v2101
        %v2440 = vpop.f32.mrb[0].mxu0
        %v2441 = vadd.f32 0.0, %v2440
        %v2442 = vpop.f32.mrb[0].mxu0
        %2443 = vdwg.mxu0
        %2445 = vrot.lane.b32.xlu0 %v2441, 64
        %v2446 = vpop.permute.xlu0 %2445
        %2448 = vst.msk [vmem:[#allocation3 + $0xc] sm:$0x1] %vm753, %v2446
        %v2449 = vlaneseq
        %v2450 = vshrl.u32 %v2449, 7
        %v2451 = vsub.s32 5, %v2450
        %v2452 = vrot.slane %v497, %v2451
        %v2453 = vmul.f32 %v2452, %v444
        %v2454 = vmul.f32 %v2452, %v445
        %v2455 = vmul.f32 %v2453, 1.442695
        %v2456 = vpow.pop %v2455
        %v2457 = vmul.f32 %v2454, 1.442695
        %v2458 = vpow.pop %v2457
        %v2459 = vmul.f32 %v2456, %v2098
        %v2460 = vmul.f32 %v2458, %v2099
        %2461 = vset.pattern.permute.xlu0 5
        %2462 = vperm.xlu0 %2461, %v525
        %v2463 = vpop.permute.xlu0 %2462
        %2465 = vset.pattern.permute.xlu0 5
        %2466 = vperm.xlu0 %2465, %v526
        %v2467 = vpop.permute.xlu0 %2466
        %v2469 = vlaneseq
        %v2470 = vshrl.u32 %v2469, 7
        %v2471 = vsub.s32 5, %v2470
        %v2472 = vrot.slane %v541, %v2471
        %v2473 = vmul.f32 %v2463, %v2472
        %v2474 = vmul.f32 %v2467, %v2472
        %v2475 = vadd.f32 %v2459, %v2473
        %v2476 = vadd.f32 %v2460, %v2474
        %v2477 = vrot.slane %v506, 5
        %v2478 = vsel %vm583, %v2477, 0
        %2480 = vmatprep.subr.mxu0 0.0
        %2481 = vmatpush1.msra.mxu0 %v2475
        %2482 = vmatprep.subr.mxu0 0.0
        %2483 = vmatpush1.msra.mxu0 %v2476
        %2484 = vmatprep.subr.mxu0 0.0
        %2485 = vmatpush1.msra.mxu0 0.0
        %2486 = vmatprep.subr.mxu0 0.0
        %2487 = vmatpush1.msra.mxu0 0.0
        %2488 = vmatprep.subr.mxu0 0.0
        %2489 = vmatpush1.msra.mxu0 0.0
        %2490 = vmatprep.subr.mxu0 0.0
        %2491 = vmatpush1.msra.mxu0 0.0
        %2492 = vmatprep.subr.mxu0 0.0
        %2493 = vmatpush1.msra.mxu0 0.0
        %2494 = vmatprep.subr.mxu0 0.0
        %2495 = vmatpush1.msra.mxu0 0.0
        %2496 = vmatprep.subr.mxu0 0.0
        %2497 = vmatpush1.msra.mxu0 0.0
        %2498 = vmatprep.subr.mxu0 0.0
        %2499 = vmatpush1.msra.mxu0 0.0
        %2500 = vmatprep.subr.mxu0 0.0
        %2501 = vmatpush1.msra.mxu0 0.0
        %2502 = vmatprep.subr.mxu0 0.0
        %2503 = vmatpush1.msra.mxu0 0.0
        %2504 = vmatprep.subr.mxu0 0.0
        %2505 = vmatpush1.msra.mxu0 0.0
        %2506 = vmatprep.subr.mxu0 0.0
        %2507 = vmatpush1.msra.mxu0 0.0
        %2508 = vmatprep.subr.mxu0 0.0
        %2509 = vmatpush1.msra.mxu0 0.0
        %2510 = vmatprep.subr.mxu0 0.0
        %2511 = vmatpush1.msra.mxu0 0.0
        %2512 = vmatprep.subr.mxu0 0.0
        %2513 = vmatpush1.msra.mxu0 0.0
        %2514 = vmatprep.subr.mxu0 0.0
        %2515 = vmatpush1.msra.mxu0 0.0
        %2516 = vmatprep.subr.mxu0 0.0
        %2517 = vmatpush1.msra.mxu0 0.0
        %2518 = vmatprep.subr.mxu0 0.0
        %2519 = vmatpush1.msra.mxu0 0.0
        %2520 = vmatprep.subr.mxu0 0.0
        %2521 = vmatpush1.msra.mxu0 0.0
        %2522 = vmatprep.subr.mxu0 0.0
        %2523 = vmatpush1.msra.mxu0 0.0
        %2524 = vmatprep.subr.mxu0 0.0
        %2525 = vmatpush1.msra.mxu0 0.0
        %2526 = vmatprep.subr.mxu0 0.0
        %2527 = vmatpush1.msra.mxu0 0.0
        %2528 = vmatprep.subr.mxu0 0.0
        %2529 = vmatpush1.msra.mxu0 0.0
        %2530 = vmatprep.subr.mxu0 0.0
        %2531 = vmatpush1.msra.mxu0 0.0
        %2532 = vmatprep.subr.mxu0 0.0
        %2533 = vmatpush1.msra.mxu0 0.0
        %2534 = vmatprep.subr.mxu0 0.0
        %2535 = vmatpush1.msra.mxu0 0.0
        %2536 = vmatprep.subr.mxu0 0.0
        %2537 = vmatpush1.msra.mxu0 0.0
        %2538 = vmatprep.subr.mxu0 0.0
        %2539 = vmatpush1.msra.mxu0 0.0
        %2540 = vmatprep.subr.mxu0 0.0
        %2541 = vmatpush1.msra.mxu0 0.0
        %2542 = vmatprep.subr.mxu0 0.0
        %2543 = vmatpush1.msra.mxu0 0.0
        %2544 = vmatprep.mubr.f32.mxu0 0.0
        %2545 = vmatmul.mubr.f32.gmra.mrb[0].mxu0 %v2478
        %v2546 = vpop.f32.mrb[0].mxu0
        %v2547 = vadd.f32 0.0, %v2546
        %v2548 = vpop.f32.mrb[0].mxu0
        %2549 = vdwg.mxu0
        %2550 = vst.msk [vmem:[#allocation3 + $0x5] sm:$0x1] %vm657, %v2547
        %v2551 = vmul.f32 %v2456, %v2190
        %v2552 = vmul.f32 %v2458, %v2191
        %2553 = vset.pattern.permute.xlu0 5
        %2554 = vperm.xlu0 %2553, %v527
        %v2555 = vpop.permute.xlu0 %2554
        %2557 = vset.pattern.permute.xlu0 5
        %2558 = vperm.xlu0 %2557, %v528
        %v2559 = vpop.permute.xlu0 %2558
        %v2561 = vlaneseq
        %v2562 = vshrl.u32 %v2561, 7
        %v2563 = vsub.s32 5, %v2562
        %v2564 = vrot.slane %v546, %v2563
        %v2565 = vmul.f32 %v2555, %v2564
        %v2566 = vmul.f32 %v2559, %v2564
        %v2567 = vadd.f32 %v2551, %v2565
        %v2568 = vadd.f32 %v2552, %v2566
        %2569 = vmatprep.subr.mxu0 0.0
        %2570 = vmatpush1.msra.mxu0 %v2567
        %2571 = vmatprep.subr.mxu0 0.0
        %2572 = vmatpush1.msra.mxu0 %v2568
        %2573 = vmatprep.subr.mxu0 0.0
        %2574 = vmatpush1.msra.mxu0 0.0
        %2575 = vmatprep.subr.mxu0 0.0
        %2576 = vmatpush1.msra.mxu0 0.0
        %2577 = vmatprep.subr.mxu0 0.0
        %2578 = vmatpush1.msra.mxu0 0.0
        %2579 = vmatprep.subr.mxu0 0.0
        %2580 = vmatpush1.msra.mxu0 0.0
        %2581 = vmatprep.subr.mxu0 0.0
        %2582 = vmatpush1.msra.mxu0 0.0
        %2583 = vmatprep.subr.mxu0 0.0
        %2584 = vmatpush1.msra.mxu0 0.0
        %2585 = vmatprep.subr.mxu0 0.0
        %2586 = vmatpush1.msra.mxu0 0.0
        %2587 = vmatprep.subr.mxu0 0.0
        %2588 = vmatpush1.msra.mxu0 0.0
        %2589 = vmatprep.subr.mxu0 0.0
        %2590 = vmatpush1.msra.mxu0 0.0
        %2591 = vmatprep.subr.mxu0 0.0
        %2592 = vmatpush1.msra.mxu0 0.0
        %2593 = vmatprep.subr.mxu0 0.0
        %2594 = vmatpush1.msra.mxu0 0.0
        %2595 = vmatprep.subr.mxu0 0.0
        %2596 = vmatpush1.msra.mxu0 0.0
        %2597 = vmatprep.subr.mxu0 0.0
        %2598 = vmatpush1.msra.mxu0 0.0
        %2599 = vmatprep.subr.mxu0 0.0
        %2600 = vmatpush1.msra.mxu0 0.0
        %2601 = vmatprep.subr.mxu0 0.0
        %2602 = vmatpush1.msra.mxu0 0.0
        %2603 = vmatprep.subr.mxu0 0.0
        %2604 = vmatpush1.msra.mxu0 0.0
        %2605 = vmatprep.subr.mxu0 0.0
        %2606 = vmatpush1.msra.mxu0 0.0
        %2607 = vmatprep.subr.mxu0 0.0
        %2608 = vmatpush1.msra.mxu0 0.0
        %2609 = vmatprep.subr.mxu0 0.0
        %2610 = vmatpush1.msra.mxu0 0.0
        %2611 = vmatprep.subr.mxu0 0.0
        %2612 = vmatpush1.msra.mxu0 0.0
        %2613 = vmatprep.subr.mxu0 0.0
        %2614 = vmatpush1.msra.mxu0 0.0
        %2615 = vmatprep.subr.mxu0 0.0
        %2616 = vmatpush1.msra.mxu0 0.0
        %2617 = vmatprep.subr.mxu0 0.0
        %2618 = vmatpush1.msra.mxu0 0.0
        %2619 = vmatprep.subr.mxu0 0.0
        %2620 = vmatpush1.msra.mxu0 0.0
        %2621 = vmatprep.subr.mxu0 0.0
        %2622 = vmatpush1.msra.mxu0 0.0
        %2623 = vmatprep.subr.mxu0 0.0
        %2624 = vmatpush1.msra.mxu0 0.0
        %2625 = vmatprep.subr.mxu0 0.0
        %2626 = vmatpush1.msra.mxu0 0.0
        %2627 = vmatprep.subr.mxu0 0.0
        %2628 = vmatpush1.msra.mxu0 0.0
        %2629 = vmatprep.subr.mxu0 0.0
        %2630 = vmatpush1.msra.mxu0 0.0
        %2631 = vmatprep.subr.mxu0 0.0
        %2632 = vmatpush1.msra.mxu0 0.0
        %2633 = vmatprep.mubr.f32.mxu0 0.0
        %2634 = vmatmul.mubr.f32.gmra.mrb[0].mxu0 %v2478
        %v2635 = vpop.f32.mrb[0].mxu0
        %v2636 = vadd.f32 0.0, %v2635
        %v2637 = vpop.f32.mrb[0].mxu0
        %2638 = vdwg.mxu0
        %2640 = vrot.lane.b32.xlu0 %v2636, 64
        %v2641 = vpop.permute.xlu0 %2640
        %2643 = vst.msk [vmem:[#allocation3 + $0x5] sm:$0x1] %vm753, %v2641
        %v2644 = vmul.f32 %v2456, %v2283
        %v2645 = vmul.f32 %v2458, %v2284
        %2646 = vset.pattern.permute.xlu0 5
        %2647 = vperm.xlu0 %2646, %v529
        %v2648 = vpop.permute.xlu0 %2647
        %2650 = vset.pattern.permute.xlu0 5
        %2651 = vperm.xlu0 %2650, %v530
        %v2652 = vpop.permute.xlu0 %2651
        %v2654 = vlaneseq
        %v2655 = vshrl.u32 %v2654, 7
        %v2656 = vsub.s32 5, %v2655
        %v2657 = vrot.slane %v547, %v2656
        %v2658 = vmul.f32 %v2648, %v2657
        %v2659 = vmul.f32 %v2652, %v2657
        %v2660 = vadd.f32 %v2644, %v2658
        %v2661 = vadd.f32 %v2645, %v2659
        %2662 = vmatprep.subr.mxu0 0.0
        %2663 = vmatpush1.msra.mxu0 %v2660
        %2664 = vmatprep.subr.mxu0 0.0
        %2665 = vmatpush1.msra.mxu0 %v2661
        %2666 = vmatprep.subr.mxu0 0.0
        %2667 = vmatpush1.msra.mxu0 0.0
        %2668 = vmatprep.subr.mxu0 0.0
        %2669 = vmatpush1.msra.mxu0 0.0
        %2670 = vmatprep.subr.mxu0 0.0
        %2671 = vmatpush1.msra.mxu0 0.0
        %2672 = vmatprep.subr.mxu0 0.0
        %2673 = vmatpush1.msra.mxu0 0.0
        %2674 = vmatprep.subr.mxu0 0.0
        %2675 = vmatpush1.msra.mxu0 0.0
        %2676 = vmatprep.subr.mxu0 0.0
        %2677 = vmatpush1.msra.mxu0 0.0
        %2678 = vmatprep.subr.mxu0 0.0
        %2679 = vmatpush1.msra.mxu0 0.0
        %2680 = vmatprep.subr.mxu0 0.0
        %2681 = vmatpush1.msra.mxu0 0.0
        %2682 = vmatprep.subr.mxu0 0.0
        %2683 = vmatpush1.msra.mxu0 0.0
        %2684 = vmatprep.subr.mxu0 0.0
        %2685 = vmatpush1.msra.mxu0 0.0
        %2686 = vmatprep.subr.mxu0 0.0
        %2687 = vmatpush1.msra.mxu0 0.0
        %2688 = vmatprep.subr.mxu0 0.0
        %2689 = vmatpush1.msra.mxu0 0.0
        %2690 = vmatprep.subr.mxu0 0.0
        %2691 = vmatpush1.msra.mxu0 0.0
        %2692 = vmatprep.subr.mxu0 0.0
        %2693 = vmatpush1.msra.mxu0 0.0
        %2694 = vmatprep.subr.mxu0 0.0
        %2695 = vmatpush1.msra.mxu0 0.0
        %2696 = vmatprep.subr.mxu0 0.0
        %2697 = vmatpush1.msra.mxu0 0.0
        %2698 = vmatprep.subr.mxu0 0.0
        %2699 = vmatpush1.msra.mxu0 0.0
        %2700 = vmatprep.subr.mxu0 0.0
        %2701 = vmatpush1.msra.mxu0 0.0
        %2702 = vmatprep.subr.mxu0 0.0
        %2703 = vmatpush1.msra.mxu0 0.0
        %2704 = vmatprep.subr.mxu0 0.0
        %2705 = vmatpush1.msra.mxu0 0.0
        %2706 = vmatprep.subr.mxu0 0.0
        %2707 = vmatpush1.msra.mxu0 0.0
        %2708 = vmatprep.subr.mxu0 0.0
        %2709 = vmatpush1.msra.mxu0 0.0
        %2710 = vmatprep.subr.mxu0 0.0
        %2711 = vmatpush1.msra.mxu0 0.0
        %2712 = vmatprep.subr.mxu0 0.0
        %2713 = vmatpush1.msra.mxu0 0.0
        %2714 = vmatprep.subr.mxu0 0.0
        %2715 = vmatpush1.msra.mxu0 0.0
        %2716 = vmatprep.subr.mxu0 0.0
        %2717 = vmatpush1.msra.mxu0 0.0
        %2718 = vmatprep.subr.mxu0 0.0
        %2719 = vmatpush1.msra.mxu0 0.0
        %2720 = vmatprep.subr.mxu0 0.0
        %2721 = vmatpush1.msra.mxu0 0.0
        %2722 = vmatprep.subr.mxu0 0.0
        %2723 = vmatpush1.msra.mxu0 0.0
        %2724 = vmatprep.subr.mxu0 0.0
        %2725 = vmatpush1.msra.mxu0 0.0
        %2726 = vmatprep.mubr.f32.mxu0 0.0
        %2727 = vmatmul.mubr.f32.gmra.mrb[0].mxu0 %v2478
        %v2728 = vpop.f32.mrb[0].mxu0
        %v2729 = vadd.f32 0.0, %v2728
        %v2730 = vpop.f32.mrb[0].mxu0
        %2731 = vdwg.mxu0
        %2732 = vst.msk [vmem:[#allocation3 + $0xd] sm:$0x1] %vm657, %v2729
        %v2733 = vmul.f32 %v2456, %v2372
        %v2734 = vmul.f32 %v2458, %v2373
        %2735 = vset.pattern.permute.xlu0 5
        %2736 = vperm.xlu0 %2735, %v531
        %v2737 = vpop.permute.xlu0 %2736
        %2739 = vset.pattern.permute.xlu0 5
        %2740 = vperm.xlu0 %2739, %v532
        %v2741 = vpop.permute.xlu0 %2740
        %v2743 = vlaneseq
        %v2744 = vshrl.u32 %v2743, 7
        %v2745 = vsub.s32 5, %v2744
        %v2746 = vrot.slane %v552, %v2745
        %v2747 = vmul.f32 %v2737, %v2746
        %v2748 = vmul.f32 %v2741, %v2746
        %v2749 = vadd.f32 %v2733, %v2747
        %v2750 = vadd.f32 %v2734, %v2748
        %2751 = vmatprep.subr.mxu0 0.0
        %2752 = vmatpush1.msra.mxu0 %v2749
        %2753 = vmatprep.subr.mxu0 0.0
        %2754 = vmatpush1.msra.mxu0 %v2750
        %2755 = vmatprep.subr.mxu0 0.0
        %2756 = vmatpush1.msra.mxu0 0.0
        %2757 = vmatprep.subr.mxu0 0.0
        %2758 = vmatpush1.msra.mxu0 0.0
        %2759 = vmatprep.subr.mxu0 0.0
        %2760 = vmatpush1.msra.mxu0 0.0
        %2761 = vmatprep.subr.mxu0 0.0
        %2762 = vmatpush1.msra.mxu0 0.0
        %2763 = vmatprep.subr.mxu0 0.0
        %2764 = vmatpush1.msra.mxu0 0.0
        %2765 = vmatprep.subr.mxu0 0.0
        %2766 = vmatpush1.msra.mxu0 0.0
        %2767 = vmatprep.subr.mxu0 0.0
        %2768 = vmatpush1.msra.mxu0 0.0
        %2769 = vmatprep.subr.mxu0 0.0
        %2770 = vmatpush1.msra.mxu0 0.0
        %2771 = vmatprep.subr.mxu0 0.0
        %2772 = vmatpush1.msra.mxu0 0.0
        %2773 = vmatprep.subr.mxu0 0.0
        %2774 = vmatpush1.msra.mxu0 0.0
        %2775 = vmatprep.subr.mxu0 0.0
        %2776 = vmatpush1.msra.mxu0 0.0
        %2777 = vmatprep.subr.mxu0 0.0
        %2778 = vmatpush1.msra.mxu0 0.0
        %2779 = vmatprep.subr.mxu0 0.0
        %2780 = vmatpush1.msra.mxu0 0.0
        %2781 = vmatprep.subr.mxu0 0.0
        %2782 = vmatpush1.msra.mxu0 0.0
        %2783 = vmatprep.subr.mxu0 0.0
        %2784 = vmatpush1.msra.mxu0 0.0
        %2785 = vmatprep.subr.mxu0 0.0
        %2786 = vmatpush1.msra.mxu0 0.0
        %2787 = vmatprep.subr.mxu0 0.0
        %2788 = vmatpush1.msra.mxu0 0.0
        %2789 = vmatprep.subr.mxu0 0.0
        %2790 = vmatpush1.msra.mxu0 0.0
        %2791 = vmatprep.subr.mxu0 0.0
        %2792 = vmatpush1.msra.mxu0 0.0
        %2793 = vmatprep.subr.mxu0 0.0
        %2794 = vmatpush1.msra.mxu0 0.0
        %2795 = vmatprep.subr.mxu0 0.0
        %2796 = vmatpush1.msra.mxu0 0.0
        %2797 = vmatprep.subr.mxu0 0.0
        %2798 = vmatpush1.msra.mxu0 0.0
        %2799 = vmatprep.subr.mxu0 0.0
        %2800 = vmatpush1.msra.mxu0 0.0
        %2801 = vmatprep.subr.mxu0 0.0
        %2802 = vmatpush1.msra.mxu0 0.0
        %2803 = vmatprep.subr.mxu0 0.0
        %2804 = vmatpush1.msra.mxu0 0.0
        %2805 = vmatprep.subr.mxu0 0.0
        %2806 = vmatpush1.msra.mxu0 0.0
        %2807 = vmatprep.subr.mxu0 0.0
        %2808 = vmatpush1.msra.mxu0 0.0
        %2809 = vmatprep.subr.mxu0 0.0
        %2810 = vmatpush1.msra.mxu0 0.0
        %2811 = vmatprep.subr.mxu0 0.0
        %2812 = vmatpush1.msra.mxu0 0.0
        %2813 = vmatprep.subr.mxu0 0.0
        %2814 = vmatpush1.msra.mxu0 0.0
        %2815 = vmatprep.mubr.f32.mxu0 0.0
        %2816 = vmatmul.mubr.f32.gmra.mrb[0].mxu0 %v2478
        %v2817 = vpop.f32.mrb[0].mxu0
        %v2818 = vadd.f32 0.0, %v2817
        %v2819 = vpop.f32.mrb[0].mxu0
        %2820 = vdwg.mxu0
        %2822 = vrot.lane.b32.xlu0 %v2818, 64
        %v2823 = vpop.permute.xlu0 %2822
        %2825 = vst.msk [vmem:[#allocation3 + $0xd] sm:$0x1] %vm753, %v2823
        %v2826 = vlaneseq
        %v2827 = vshrl.u32 %v2826, 7
        %v2828 = vsub.s32 6, %v2827
        %v2829 = vrot.slane %v497, %v2828
        %v2830 = vmul.f32 %v2829, %v444
        %v2831 = vmul.f32 %v2829, %v445
        %v2832 = vmul.f32 %v2830, 1.442695
        %v2833 = vpow.pop %v2832
        %v2834 = vmul.f32 %v2831, 1.442695
        %v2835 = vpow.pop %v2834
        %v2836 = vmul.f32 %v2833, %v2475
        %v2837 = vmul.f32 %v2835, %v2476
        %2838 = vset.pattern.permute.xlu0 6
        %2839 = vperm.xlu0 %2838, %v525
        %v2840 = vpop.permute.xlu0 %2839
        %2842 = vset.pattern.permute.xlu0 6
        %2843 = vperm.xlu0 %2842, %v526
        %v2844 = vpop.permute.xlu0 %2843
        %v2846 = vlaneseq
        %v2847 = vshrl.u32 %v2846, 7
        %v2848 = vsub.s32 6, %v2847
        %v2849 = vrot.slane %v541, %v2848
        %v2850 = vmul.f32 %v2840, %v2849
        %v2851 = vmul.f32 %v2844, %v2849
        %v2852 = vadd.f32 %v2836, %v2850
        %v2853 = vadd.f32 %v2837, %v2851
        %v2854 = vrot.slane %v506, 6
        %v2855 = vsel %vm583, %v2854, 0
        %2857 = vmatprep.subr.mxu0 0.0
        %2858 = vmatpush1.msra.mxu0 %v2852
        %2859 = vmatprep.subr.mxu0 0.0
        %2860 = vmatpush1.msra.mxu0 %v2853
        %2861 = vmatprep.subr.mxu0 0.0
        %2862 = vmatpush1.msra.mxu0 0.0
        %2863 = vmatprep.subr.mxu0 0.0
        %2864 = vmatpush1.msra.mxu0 0.0
        %2865 = vmatprep.subr.mxu0 0.0
        %2866 = vmatpush1.msra.mxu0 0.0
        %2867 = vmatprep.subr.mxu0 0.0
        %2868 = vmatpush1.msra.mxu0 0.0
        %2869 = vmatprep.subr.mxu0 0.0
        %2870 = vmatpush1.msra.mxu0 0.0
        %2871 = vmatprep.subr.mxu0 0.0
        %2872 = vmatpush1.msra.mxu0 0.0
        %2873 = vmatprep.subr.mxu0 0.0
        %2874 = vmatpush1.msra.mxu0 0.0
        %2875 = vmatprep.subr.mxu0 0.0
        %2876 = vmatpush1.msra.mxu0 0.0
        %2877 = vmatprep.subr.mxu0 0.0
        %2878 = vmatpush1.msra.mxu0 0.0
        %2879 = vmatprep.subr.mxu0 0.0
        %2880 = vmatpush1.msra.mxu0 0.0
        %2881 = vmatprep.subr.mxu0 0.0
        %2882 = vmatpush1.msra.mxu0 0.0
        %2883 = vmatprep.subr.mxu0 0.0
        %2884 = vmatpush1.msra.mxu0 0.0
        %2885 = vmatprep.subr.mxu0 0.0
        %2886 = vmatpush1.msra.mxu0 0.0
        %2887 = vmatprep.subr.mxu0 0.0
        %2888 = vmatpush1.msra.mxu0 0.0
        %2889 = vmatprep.subr.mxu0 0.0
        %2890 = vmatpush1.msra.mxu0 0.0
        %2891 = vmatprep.subr.mxu0 0.0
        %2892 = vmatpush1.msra.mxu0 0.0
        %2893 = vmatprep.subr.mxu0 0.0
        %2894 = vmatpush1.msra.mxu0 0.0
        %2895 = vmatprep.subr.mxu0 0.0
        %2896 = vmatpush1.msra.mxu0 0.0
        %2897 = vmatprep.subr.mxu0 0.0
        %2898 = vmatpush1.msra.mxu0 0.0
        %2899 = vmatprep.subr.mxu0 0.0
        %2900 = vmatpush1.msra.mxu0 0.0
        %2901 = vmatprep.subr.mxu0 0.0
        %2902 = vmatpush1.msra.mxu0 0.0
        %2903 = vmatprep.subr.mxu0 0.0
        %2904 = vmatpush1.msra.mxu0 0.0
        %2905 = vmatprep.subr.mxu0 0.0
        %2906 = vmatpush1.msra.mxu0 0.0
        %2907 = vmatprep.subr.mxu0 0.0
        %2908 = vmatpush1.msra.mxu0 0.0
        %2909 = vmatprep.subr.mxu0 0.0
        %2910 = vmatpush1.msra.mxu0 0.0
        %2911 = vmatprep.subr.mxu0 0.0
        %2912 = vmatpush1.msra.mxu0 0.0
        %2913 = vmatprep.subr.mxu0 0.0
        %2914 = vmatpush1.msra.mxu0 0.0
        %2915 = vmatprep.subr.mxu0 0.0
        %2916 = vmatpush1.msra.mxu0 0.0
        %2917 = vmatprep.subr.mxu0 0.0
        %2918 = vmatpush1.msra.mxu0 0.0
        %2919 = vmatprep.subr.mxu0 0.0
        %2920 = vmatpush1.msra.mxu0 0.0
        %2921 = vmatprep.mubr.f32.mxu0 0.0
        %2922 = vmatmul.mubr.f32.gmra.mrb[0].mxu0 %v2855
        %v2923 = vpop.f32.mrb[0].mxu0
        %v2924 = vadd.f32 0.0, %v2923
        %v2925 = vpop.f32.mrb[0].mxu0
        %2926 = vdwg.mxu0
        %2927 = vst.msk [vmem:[#allocation3 + $0x6] sm:$0x1] %vm657, %v2924
        %v2928 = vmul.f32 %v2833, %v2567
        %v2929 = vmul.f32 %v2835, %v2568
        %2930 = vset.pattern.permute.xlu0 6
        %2931 = vperm.xlu0 %2930, %v527
        %v2932 = vpop.permute.xlu0 %2931
        %2934 = vset.pattern.permute.xlu0 6
        %2935 = vperm.xlu0 %2934, %v528
        %v2936 = vpop.permute.xlu0 %2935
        %v2938 = vlaneseq
        %v2939 = vshrl.u32 %v2938, 7
        %v2940 = vsub.s32 6, %v2939
        %v2941 = vrot.slane %v546, %v2940
        %v2942 = vmul.f32 %v2932, %v2941
        %v2943 = vmul.f32 %v2936, %v2941
        %v2944 = vadd.f32 %v2928, %v2942
        %v2945 = vadd.f32 %v2929, %v2943
        %2946 = vmatprep.subr.mxu0 0.0
        %2947 = vmatpush1.msra.mxu0 %v2944
        %2948 = vmatprep.subr.mxu0 0.0
        %2949 = vmatpush1.msra.mxu0 %v2945
        %2950 = vmatprep.subr.mxu0 0.0
        %2951 = vmatpush1.msra.mxu0 0.0
        %2952 = vmatprep.subr.mxu0 0.0
        %2953 = vmatpush1.msra.mxu0 0.0
        %2954 = vmatprep.subr.mxu0 0.0
        %2955 = vmatpush1.msra.mxu0 0.0
        %2956 = vmatprep.subr.mxu0 0.0
        %2957 = vmatpush1.msra.mxu0 0.0
        %2958 = vmatprep.subr.mxu0 0.0
        %2959 = vmatpush1.msra.mxu0 0.0
        %2960 = vmatprep.subr.mxu0 0.0
        %2961 = vmatpush1.msra.mxu0 0.0
        %2962 = vmatprep.subr.mxu0 0.0
        %2963 = vmatpush1.msra.mxu0 0.0
        %2964 = vmatprep.subr.mxu0 0.0
        %2965 = vmatpush1.msra.mxu0 0.0
        %2966 = vmatprep.subr.mxu0 0.0
        %2967 = vmatpush1.msra.mxu0 0.0
        %2968 = vmatprep.subr.mxu0 0.0
        %2969 = vmatpush1.msra.mxu0 0.0
        %2970 = vmatprep.subr.mxu0 0.0
        %2971 = vmatpush1.msra.mxu0 0.0
        %2972 = vmatprep.subr.mxu0 0.0
        %2973 = vmatpush1.msra.mxu0 0.0
        %2974 = vmatprep.subr.mxu0 0.0
        %2975 = vmatpush1.msra.mxu0 0.0
        %2976 = vmatprep.subr.mxu0 0.0
        %2977 = vmatpush1.msra.mxu0 0.0
        %2978 = vmatprep.subr.mxu0 0.0
        %2979 = vmatpush1.msra.mxu0 0.0
        %2980 = vmatprep.subr.mxu0 0.0
        %2981 = vmatpush1.msra.mxu0 0.0
        %2982 = vmatprep.subr.mxu0 0.0
        %2983 = vmatpush1.msra.mxu0 0.0
        %2984 = vmatprep.subr.mxu0 0.0
        %2985 = vmatpush1.msra.mxu0 0.0
        %2986 = vmatprep.subr.mxu0 0.0
        %2987 = vmatpush1.msra.mxu0 0.0
        %2988 = vmatprep.subr.mxu0 0.0
        %2989 = vmatpush1.msra.mxu0 0.0
        %2990 = vmatprep.subr.mxu0 0.0
        %2991 = vmatpush1.msra.mxu0 0.0
        %2992 = vmatprep.subr.mxu0 0.0
        %2993 = vmatpush1.msra.mxu0 0.0
        %2994 = vmatprep.subr.mxu0 0.0
        %2995 = vmatpush1.msra.mxu0 0.0
        %2996 = vmatprep.subr.mxu0 0.0
        %2997 = vmatpush1.msra.mxu0 0.0
        %2998 = vmatprep.subr.mxu0 0.0
        %2999 = vmatpush1.msra.mxu0 0.0
        %3000 = vmatprep.subr.mxu0 0.0
        %3001 = vmatpush1.msra.mxu0 0.0
        %3002 = vmatprep.subr.mxu0 0.0
        %3003 = vmatpush1.msra.mxu0 0.0
        %3004 = vmatprep.subr.mxu0 0.0
        %3005 = vmatpush1.msra.mxu0 0.0
        %3006 = vmatprep.subr.mxu0 0.0
        %3007 = vmatpush1.msra.mxu0 0.0
        %3008 = vmatprep.subr.mxu0 0.0
        %3009 = vmatpush1.msra.mxu0 0.0
        %3010 = vmatprep.mubr.f32.mxu0 0.0
        %3011 = vmatmul.mubr.f32.gmra.mrb[0].mxu0 %v2855
        %v3012 = vpop.f32.mrb[0].mxu0
        %v3013 = vadd.f32 0.0, %v3012
        %v3014 = vpop.f32.mrb[0].mxu0
        %3015 = vdwg.mxu0
        %3017 = vrot.lane.b32.xlu0 %v3013, 64
        %v3018 = vpop.permute.xlu0 %3017
        %3020 = vst.msk [vmem:[#allocation3 + $0x6] sm:$0x1] %vm753, %v3018
        %v3021 = vmul.f32 %v2833, %v2660
        %v3022 = vmul.f32 %v2835, %v2661
        %3023 = vset.pattern.permute.xlu0 6
        %3024 = vperm.xlu0 %3023, %v529
        %v3025 = vpop.permute.xlu0 %3024
        %3027 = vset.pattern.permute.xlu0 6
        %3028 = vperm.xlu0 %3027, %v530
        %v3029 = vpop.permute.xlu0 %3028
        %v3031 = vlaneseq
        %v3032 = vshrl.u32 %v3031, 7
        %v3033 = vsub.s32 6, %v3032
        %v3034 = vrot.slane %v547, %v3033
        %v3035 = vmul.f32 %v3025, %v3034
        %v3036 = vmul.f32 %v3029, %v3034
        %v3037 = vadd.f32 %v3021, %v3035
        %v3038 = vadd.f32 %v3022, %v3036
        %3039 = vmatprep.subr.mxu0 0.0
        %3040 = vmatpush1.msra.mxu0 %v3037
        %3041 = vmatprep.subr.mxu0 0.0
        %3042 = vmatpush1.msra.mxu0 %v3038
        %3043 = vmatprep.subr.mxu0 0.0
        %3044 = vmatpush1.msra.mxu0 0.0
        %3045 = vmatprep.subr.mxu0 0.0
        %3046 = vmatpush1.msra.mxu0 0.0
        %3047 = vmatprep.subr.mxu0 0.0
        %3048 = vmatpush1.msra.mxu0 0.0
        %3049 = vmatprep.subr.mxu0 0.0
        %3050 = vmatpush1.msra.mxu0 0.0
        %3051 = vmatprep.subr.mxu0 0.0
        %3052 = vmatpush1.msra.mxu0 0.0
        %3053 = vmatprep.subr.mxu0 0.0
        %3054 = vmatpush1.msra.mxu0 0.0
        %3055 = vmatprep.subr.mxu0 0.0
        %3056 = vmatpush1.msra.mxu0 0.0
        %3057 = vmatprep.subr.mxu0 0.0
        %3058 = vmatpush1.msra.mxu0 0.0
        %3059 = vmatprep.subr.mxu0 0.0
        %3060 = vmatpush1.msra.mxu0 0.0
        %3061 = vmatprep.subr.mxu0 0.0
        %3062 = vmatpush1.msra.mxu0 0.0
        %3063 = vmatprep.subr.mxu0 0.0
        %3064 = vmatpush1.msra.mxu0 0.0
        %3065 = vmatprep.subr.mxu0 0.0
        %3066 = vmatpush1.msra.mxu0 0.0
        %3067 = vmatprep.subr.mxu0 0.0
        %3068 = vmatpush1.msra.mxu0 0.0
        %3069 = vmatprep.subr.mxu0 0.0
        %3070 = vmatpush1.msra.mxu0 0.0
        %3071 = vmatprep.subr.mxu0 0.0
        %3072 = vmatpush1.msra.mxu0 0.0
        %3073 = vmatprep.subr.mxu0 0.0
        %3074 = vmatpush1.msra.mxu0 0.0
        %3075 = vmatprep.subr.mxu0 0.0
        %3076 = vmatpush1.msra.mxu0 0.0
        %3077 = vmatprep.subr.mxu0 0.0
        %3078 = vmatpush1.msra.mxu0 0.0
        %3079 = vmatprep.subr.mxu0 0.0
        %3080 = vmatpush1.msra.mxu0 0.0
        %3081 = vmatprep.subr.mxu0 0.0
        %3082 = vmatpush1.msra.mxu0 0.0
        %3083 = vmatprep.subr.mxu0 0.0
        %3084 = vmatpush1.msra.mxu0 0.0
        %3085 = vmatprep.subr.mxu0 0.0
        %3086 = vmatpush1.msra.mxu0 0.0
        %3087 = vmatprep.subr.mxu0 0.0
        %3088 = vmatpush1.msra.mxu0 0.0
        %3089 = vmatprep.subr.mxu0 0.0
        %3090 = vmatpush1.msra.mxu0 0.0
        %3091 = vmatprep.subr.mxu0 0.0
        %3092 = vmatpush1.msra.mxu0 0.0
        %3093 = vmatprep.subr.mxu0 0.0
        %3094 = vmatpush1.msra.mxu0 0.0
        %3095 = vmatprep.subr.mxu0 0.0
        %3096 = vmatpush1.msra.mxu0 0.0
        %3097 = vmatprep.subr.mxu0 0.0
        %3098 = vmatpush1.msra.mxu0 0.0
        %3099 = vmatprep.subr.mxu0 0.0
        %3100 = vmatpush1.msra.mxu0 0.0
        %3101 = vmatprep.subr.mxu0 0.0
        %3102 = vmatpush1.msra.mxu0 0.0
        %3103 = vmatprep.mubr.f32.mxu0 0.0
        %3104 = vmatmul.mubr.f32.gmra.mrb[0].mxu0 %v2855
        %v3105 = vpop.f32.mrb[0].mxu0
        %v3106 = vadd.f32 0.0, %v3105
        %v3107 = vpop.f32.mrb[0].mxu0
        %3108 = vdwg.mxu0
        %3109 = vst.msk [vmem:[#allocation3 + $0xe] sm:$0x1] %vm657, %v3106
        %v3110 = vmul.f32 %v2833, %v2749
        %v3111 = vmul.f32 %v2835, %v2750
        %3112 = vset.pattern.permute.xlu0 6
        %3113 = vperm.xlu0 %3112, %v531
        %v3114 = vpop.permute.xlu0 %3113
        %3116 = vset.pattern.permute.xlu0 6
        %3117 = vperm.xlu0 %3116, %v532
        %v3118 = vpop.permute.xlu0 %3117
        %v3120 = vlaneseq
        %v3121 = vshrl.u32 %v3120, 7
        %v3122 = vsub.s32 6, %v3121
        %v3123 = vrot.slane %v552, %v3122
        %v3124 = vmul.f32 %v3114, %v3123
        %v3125 = vmul.f32 %v3118, %v3123
        %v3126 = vadd.f32 %v3110, %v3124
        %v3127 = vadd.f32 %v3111, %v3125
        %3128 = vmatprep.subr.mxu0 0.0
        %3129 = vmatpush1.msra.mxu0 %v3126
        %3130 = vmatprep.subr.mxu0 0.0
        %3131 = vmatpush1.msra.mxu0 %v3127
        %3132 = vmatprep.subr.mxu0 0.0
        %3133 = vmatpush1.msra.mxu0 0.0
        %3134 = vmatprep.subr.mxu0 0.0
        %3135 = vmatpush1.msra.mxu0 0.0
        %3136 = vmatprep.subr.mxu0 0.0
        %3137 = vmatpush1.msra.mxu0 0.0
        %3138 = vmatprep.subr.mxu0 0.0
        %3139 = vmatpush1.msra.mxu0 0.0
        %3140 = vmatprep.subr.mxu0 0.0
        %3141 = vmatpush1.msra.mxu0 0.0
        %3142 = vmatprep.subr.mxu0 0.0
        %3143 = vmatpush1.msra.mxu0 0.0
        %3144 = vmatprep.subr.mxu0 0.0
        %3145 = vmatpush1.msra.mxu0 0.0
        %3146 = vmatprep.subr.mxu0 0.0
        %3147 = vmatpush1.msra.mxu0 0.0
        %3148 = vmatprep.subr.mxu0 0.0
        %3149 = vmatpush1.msra.mxu0 0.0
        %3150 = vmatprep.subr.mxu0 0.0
        %3151 = vmatpush1.msra.mxu0 0.0
        %3152 = vmatprep.subr.mxu0 0.0
        %3153 = vmatpush1.msra.mxu0 0.0
        %3154 = vmatprep.subr.mxu0 0.0
        %3155 = vmatpush1.msra.mxu0 0.0
        %3156 = vmatprep.subr.mxu0 0.0
        %3157 = vmatpush1.msra.mxu0 0.0
        %3158 = vmatprep.subr.mxu0 0.0
        %3159 = vmatpush1.msra.mxu0 0.0
        %3160 = vmatprep.subr.mxu0 0.0
        %3161 = vmatpush1.msra.mxu0 0.0
        %3162 = vmatprep.subr.mxu0 0.0
        %3163 = vmatpush1.msra.mxu0 0.0
        %3164 = vmatprep.subr.mxu0 0.0
        %3165 = vmatpush1.msra.mxu0 0.0
        %3166 = vmatprep.subr.mxu0 0.0
        %3167 = vmatpush1.msra.mxu0 0.0
        %3168 = vmatprep.subr.mxu0 0.0
        %3169 = vmatpush1.msra.mxu0 0.0
        %3170 = vmatprep.subr.mxu0 0.0
        %3171 = vmatpush1.msra.mxu0 0.0
        %3172 = vmatprep.subr.mxu0 0.0
        %3173 = vmatpush1.msra.mxu0 0.0
        %3174 = vmatprep.subr.mxu0 0.0
        %3175 = vmatpush1.msra.mxu0 0.0
        %3176 = vmatprep.subr.mxu0 0.0
        %3177 = vmatpush1.msra.mxu0 0.0
        %3178 = vmatprep.subr.mxu0 0.0
        %3179 = vmatpush1.msra.mxu0 0.0
        %3180 = vmatprep.subr.mxu0 0.0
        %3181 = vmatpush1.msra.mxu0 0.0
        %3182 = vmatprep.subr.mxu0 0.0
        %3183 = vmatpush1.msra.mxu0 0.0
        %3184 = vmatprep.subr.mxu0 0.0
        %3185 = vmatpush1.msra.mxu0 0.0
        %3186 = vmatprep.subr.mxu0 0.0
        %3187 = vmatpush1.msra.mxu0 0.0
        %3188 = vmatprep.subr.mxu0 0.0
        %3189 = vmatpush1.msra.mxu0 0.0
        %3190 = vmatprep.subr.mxu0 0.0
        %3191 = vmatpush1.msra.mxu0 0.0
        %3192 = vmatprep.mubr.f32.mxu0 0.0
        %3193 = vmatmul.mubr.f32.gmra.mrb[0].mxu0 %v2855
        %v3194 = vpop.f32.mrb[0].mxu0
        %v3195 = vadd.f32 0.0, %v3194
        %v3196 = vpop.f32.mrb[0].mxu0
        %3197 = vdwg.mxu0
        %3199 = vrot.lane.b32.xlu0 %v3195, 64
        %v3200 = vpop.permute.xlu0 %3199
        %3202 = vst.msk [vmem:[#allocation3 + $0xe] sm:$0x1] %vm753, %v3200
        %v3203 = vlaneseq
        %v3204 = vshrl.u32 %v3203, 7
        %v3205 = vsub.s32 7, %v3204
        %v3206 = vrot.slane %v497, %v3205
        %v3207 = vmul.f32 %v3206, %v444
        %v3208 = vmul.f32 %v3206, %v445
        %v3209 = vmul.f32 %v3207, 1.442695
        %v3210 = vpow.pop %v3209
        %v3211 = vmul.f32 %v3208, 1.442695
        %v3212 = vpow.pop %v3211
        %v3213 = vmul.f32 %v3210, %v2852
        %v3214 = vmul.f32 %v3212, %v2853
        %3215 = vset.pattern.permute.xlu0 7
        %3216 = vperm.xlu0 %3215, %v525
        %v3217 = vpop.permute.xlu0 %3216
        %3219 = vset.pattern.permute.xlu0 7
        %3220 = vperm.xlu0 %3219, %v526
        %v3221 = vpop.permute.xlu0 %3220
        %v3223 = vlaneseq
        %v3224 = vshrl.u32 %v3223, 7
        %v3225 = vsub.s32 7, %v3224
        %v3226 = vrot.slane %v541, %v3225
        %v3227 = vmul.f32 %v3217, %v3226
        %v3228 = vmul.f32 %v3221, %v3226
        %v3229 = vadd.f32 %v3213, %v3227
        %v3230 = vadd.f32 %v3214, %v3228
        %v3231 = vrot.slane %v506, 7
        %v3232 = vsel %vm583, %v3231, 0
        %3234 = vmatprep.subr.mxu0 0.0
        %3235 = vmatpush1.msra.mxu0 %v3229
        %3236 = vmatprep.subr.mxu0 0.0
        %3237 = vmatpush1.msra.mxu0 %v3230
        %3238 = vmatprep.subr.mxu0 0.0
        %3239 = vmatpush1.msra.mxu0 0.0
        %3240 = vmatprep.subr.mxu0 0.0
        %3241 = vmatpush1.msra.mxu0 0.0
        %3242 = vmatprep.subr.mxu0 0.0
        %3243 = vmatpush1.msra.mxu0 0.0
        %3244 = vmatprep.subr.mxu0 0.0
        %3245 = vmatpush1.msra.mxu0 0.0
        %3246 = vmatprep.subr.mxu0 0.0
        %3247 = vmatpush1.msra.mxu0 0.0
        %3248 = vmatprep.subr.mxu0 0.0
        %3249 = vmatpush1.msra.mxu0 0.0
        %3250 = vmatprep.subr.mxu0 0.0
        %3251 = vmatpush1.msra.mxu0 0.0
        %3252 = vmatprep.subr.mxu0 0.0
        %3253 = vmatpush1.msra.mxu0 0.0
        %3254 = vmatprep.subr.mxu0 0.0
        %3255 = vmatpush1.msra.mxu0 0.0
        %3256 = vmatprep.subr.mxu0 0.0
        %3257 = vmatpush1.msra.mxu0 0.0
        %3258 = vmatprep.subr.mxu0 0.0
        %3259 = vmatpush1.msra.mxu0 0.0
        %3260 = vmatprep.subr.mxu0 0.0
        %3261 = vmatpush1.msra.mxu0 0.0
        %3262 = vmatprep.subr.mxu0 0.0
        %3263 = vmatpush1.msra.mxu0 0.0
        %3264 = vmatprep.subr.mxu0 0.0
        %3265 = vmatpush1.msra.mxu0 0.0
        %3266 = vmatprep.subr.mxu0 0.0
        %3267 = vmatpush1.msra.mxu0 0.0
        %3268 = vmatprep.subr.mxu0 0.0
        %3269 = vmatpush1.msra.mxu0 0.0
        %3270 = vmatprep.subr.mxu0 0.0
        %3271 = vmatpush1.msra.mxu0 0.0
        %3272 = vmatprep.subr.mxu0 0.0
        %3273 = vmatpush1.msra.mxu0 0.0
        %3274 = vmatprep.subr.mxu0 0.0
        %3275 = vmatpush1.msra.mxu0 0.0
        %3276 = vmatprep.subr.mxu0 0.0
        %3277 = vmatpush1.msra.mxu0 0.0
        %3278 = vmatprep.subr.mxu0 0.0
        %3279 = vmatpush1.msra.mxu0 0.0
        %3280 = vmatprep.subr.mxu0 0.0
        %3281 = vmatpush1.msra.mxu0 0.0
        %3282 = vmatprep.subr.mxu0 0.0
        %3283 = vmatpush1.msra.mxu0 0.0
        %3284 = vmatprep.subr.mxu0 0.0
        %3285 = vmatpush1.msra.mxu0 0.0
        %3286 = vmatprep.subr.mxu0 0.0
        %3287 = vmatpush1.msra.mxu0 0.0
        %3288 = vmatprep.subr.mxu0 0.0
        %3289 = vmatpush1.msra.mxu0 0.0
        %3290 = vmatprep.subr.mxu0 0.0
        %3291 = vmatpush1.msra.mxu0 0.0
        %3292 = vmatprep.subr.mxu0 0.0
        %3293 = vmatpush1.msra.mxu0 0.0
        %3294 = vmatprep.subr.mxu0 0.0
        %3295 = vmatpush1.msra.mxu0 0.0
        %3296 = vmatprep.subr.mxu0 0.0
        %3297 = vmatpush1.msra.mxu0 0.0
        %3298 = vmatprep.mubr.f32.mxu0 0.0
        %3299 = vmatmul.mubr.f32.gmra.mrb[0].mxu0 %v3232
        %v3300 = vpop.f32.mrb[0].mxu0
        %v3301 = vadd.f32 0.0, %v3300
        %v3302 = vpop.f32.mrb[0].mxu0
        %3303 = vdwg.mxu0
        %3304 = vst.msk [vmem:[#allocation3 + $0x7] sm:$0x1] %vm657, %v3301
        %v3305 = vmul.f32 %v3210, %v2944
        %v3306 = vmul.f32 %v3212, %v2945
        %3307 = vset.pattern.permute.xlu0 7
        %3308 = vperm.xlu0 %3307, %v527
        %v3309 = vpop.permute.xlu0 %3308
        %3311 = vset.pattern.permute.xlu0 7
        %3312 = vperm.xlu0 %3311, %v528
        %v3313 = vpop.permute.xlu0 %3312
        %v3315 = vlaneseq
        %v3316 = vshrl.u32 %v3315, 7
        %v3317 = vsub.s32 7, %v3316
        %v3318 = vrot.slane %v546, %v3317
        %v3319 = vmul.f32 %v3309, %v3318
        %v3320 = vmul.f32 %v3313, %v3318
        %v3321 = vadd.f32 %v3305, %v3319
        %v3322 = vadd.f32 %v3306, %v3320
        %3323 = vmatprep.subr.mxu0 0.0
        %3324 = vmatpush1.msra.mxu0 %v3321
        %3325 = vmatprep.subr.mxu0 0.0
        %3326 = vmatpush1.msra.mxu0 %v3322
        %3327 = vmatprep.subr.mxu0 0.0
        %3328 = vmatpush1.msra.mxu0 0.0
        %3329 = vmatprep.subr.mxu0 0.0
        %3330 = vmatpush1.msra.mxu0 0.0
        %3331 = vmatprep.subr.mxu0 0.0
        %3332 = vmatpush1.msra.mxu0 0.0
        %3333 = vmatprep.subr.mxu0 0.0
        %3334 = vmatpush1.msra.mxu0 0.0
        %3335 = vmatprep.subr.mxu0 0.0
        %3336 = vmatpush1.msra.mxu0 0.0
        %3337 = vmatprep.subr.mxu0 0.0
        %3338 = vmatpush1.msra.mxu0 0.0
        %3339 = vmatprep.subr.mxu0 0.0
        %3340 = vmatpush1.msra.mxu0 0.0
        %3341 = vmatprep.subr.mxu0 0.0
        %3342 = vmatpush1.msra.mxu0 0.0
        %3343 = vmatprep.subr.mxu0 0.0
        %3344 = vmatpush1.msra.mxu0 0.0
        %3345 = vmatprep.subr.mxu0 0.0
        %3346 = vmatpush1.msra.mxu0 0.0
        %3347 = vmatprep.subr.mxu0 0.0
        %3348 = vmatpush1.msra.mxu0 0.0
        %3349 = vmatprep.subr.mxu0 0.0
        %3350 = vmatpush1.msra.mxu0 0.0
        %3351 = vmatprep.subr.mxu0 0.0
        %3352 = vmatpush1.msra.mxu0 0.0
        %3353 = vmatprep.subr.mxu0 0.0
        %3354 = vmatpush1.msra.mxu0 0.0
        %3355 = vmatprep.subr.mxu0 0.0
        %3356 = vmatpush1.msra.mxu0 0.0
        %3357 = vmatprep.subr.mxu0 0.0
        %3358 = vmatpush1.msra.mxu0 0.0
        %3359 = vmatprep.subr.mxu0 0.0
        %3360 = vmatpush1.msra.mxu0 0.0
        %3361 = vmatprep.subr.mxu0 0.0
        %3362 = vmatpush1.msra.mxu0 0.0
        %3363 = vmatprep.subr.mxu0 0.0
        %3364 = vmatpush1.msra.mxu0 0.0
        %3365 = vmatprep.subr.mxu0 0.0
        %3366 = vmatpush1.msra.mxu0 0.0
        %3367 = vmatprep.subr.mxu0 0.0
        %3368 = vmatpush1.msra.mxu0 0.0
        %3369 = vmatprep.subr.mxu0 0.0
        %3370 = vmatpush1.msra.mxu0 0.0
        %3371 = vmatprep.subr.mxu0 0.0
        %3372 = vmatpush1.msra.mxu0 0.0
        %3373 = vmatprep.subr.mxu0 0.0
        %3374 = vmatpush1.msra.mxu0 0.0
        %3375 = vmatprep.subr.mxu0 0.0
        %3376 = vmatpush1.msra.mxu0 0.0
        %3377 = vmatprep.subr.mxu0 0.0
        %3378 = vmatpush1.msra.mxu0 0.0
        %3379 = vmatprep.subr.mxu0 0.0
        %3380 = vmatpush1.msra.mxu0 0.0
        %3381 = vmatprep.subr.mxu0 0.0
        %3382 = vmatpush1.msra.mxu0 0.0
        %3383 = vmatprep.subr.mxu0 0.0
        %3384 = vmatpush1.msra.mxu0 0.0
        %3385 = vmatprep.subr.mxu0 0.0
        %3386 = vmatpush1.msra.mxu0 0.0
        %3387 = vmatprep.mubr.f32.mxu0 0.0
        %3388 = vmatmul.mubr.f32.gmra.mrb[0].mxu0 %v3232
        %v3389 = vpop.f32.mrb[0].mxu0
        %v3390 = vadd.f32 0.0, %v3389
        %v3391 = vpop.f32.mrb[0].mxu0
        %3392 = vdwg.mxu0
        %3394 = vrot.lane.b32.xlu0 %v3390, 64
        %v3395 = vpop.permute.xlu0 %3394
        %3397 = vst.msk [vmem:[#allocation3 + $0x7] sm:$0x1] %vm753, %v3395
        %v3398 = vmul.f32 %v3210, %v3037
        %v3399 = vmul.f32 %v3212, %v3038
        %3400 = vset.pattern.permute.xlu0 7
        %3401 = vperm.xlu0 %3400, %v529
        %v3402 = vpop.permute.xlu0 %3401
        %3404 = vset.pattern.permute.xlu0 7
        %3405 = vperm.xlu0 %3404, %v530
        %v3406 = vpop.permute.xlu0 %3405
        %v3408 = vlaneseq
        %v3409 = vshrl.u32 %v3408, 7
        %v3410 = vsub.s32 7, %v3409
        %v3411 = vrot.slane %v547, %v3410
        %v3412 = vmul.f32 %v3402, %v3411
        %v3413 = vmul.f32 %v3406, %v3411
        %v3414 = vadd.f32 %v3398, %v3412
        %v3415 = vadd.f32 %v3399, %v3413
        %3416 = vmatprep.subr.mxu0 0.0
        %3417 = vmatpush1.msra.mxu0 %v3414
        %3418 = vmatprep.subr.mxu0 0.0
        %3419 = vmatpush1.msra.mxu0 %v3415
        %3420 = vmatprep.subr.mxu0 0.0
        %3421 = vmatpush1.msra.mxu0 0.0
        %3422 = vmatprep.subr.mxu0 0.0
        %3423 = vmatpush1.msra.mxu0 0.0
        %3424 = vmatprep.subr.mxu0 0.0
        %3425 = vmatpush1.msra.mxu0 0.0
        %3426 = vmatprep.subr.mxu0 0.0
        %3427 = vmatpush1.msra.mxu0 0.0
        %3428 = vmatprep.subr.mxu0 0.0
        %3429 = vmatpush1.msra.mxu0 0.0
        %3430 = vmatprep.subr.mxu0 0.0
        %3431 = vmatpush1.msra.mxu0 0.0
        %3432 = vmatprep.subr.mxu0 0.0
        %3433 = vmatpush1.msra.mxu0 0.0
        %3434 = vmatprep.subr.mxu0 0.0
        %3435 = vmatpush1.msra.mxu0 0.0
        %3436 = vmatprep.subr.mxu0 0.0
        %3437 = vmatpush1.msra.mxu0 0.0
        %3438 = vmatprep.subr.mxu0 0.0
        %3439 = vmatpush1.msra.mxu0 0.0
        %3440 = vmatprep.subr.mxu0 0.0
        %3441 = vmatpush1.msra.mxu0 0.0
        %3442 = vmatprep.subr.mxu0 0.0
        %3443 = vmatpush1.msra.mxu0 0.0
        %3444 = vmatprep.subr.mxu0 0.0
        %3445 = vmatpush1.msra.mxu0 0.0
        %3446 = vmatprep.subr.mxu0 0.0
        %3447 = vmatpush1.msra.mxu0 0.0
        %3448 = vmatprep.subr.mxu0 0.0
        %3449 = vmatpush1.msra.mxu0 0.0
        %3450 = vmatprep.subr.mxu0 0.0
        %3451 = vmatpush1.msra.mxu0 0.0
        %3452 = vmatprep.subr.mxu0 0.0
        %3453 = vmatpush1.msra.mxu0 0.0
        %3454 = vmatprep.subr.mxu0 0.0
        %3455 = vmatpush1.msra.mxu0 0.0
        %3456 = vmatprep.subr.mxu0 0.0
        %3457 = vmatpush1.msra.mxu0 0.0
        %3458 = vmatprep.subr.mxu0 0.0
        %3459 = vmatpush1.msra.mxu0 0.0
        %3460 = vmatprep.subr.mxu0 0.0
        %3461 = vmatpush1.msra.mxu0 0.0
        %3462 = vmatprep.subr.mxu0 0.0
        %3463 = vmatpush1.msra.mxu0 0.0
        %3464 = vmatprep.subr.mxu0 0.0
        %3465 = vmatpush1.msra.mxu0 0.0
        %3466 = vmatprep.subr.mxu0 0.0
        %3467 = vmatpush1.msra.mxu0 0.0
        %3468 = vmatprep.subr.mxu0 0.0
        %3469 = vmatpush1.msra.mxu0 0.0
        %3470 = vmatprep.subr.mxu0 0.0
        %3471 = vmatpush1.msra.mxu0 0.0
        %3472 = vmatprep.subr.mxu0 0.0
        %3473 = vmatpush1.msra.mxu0 0.0
        %3474 = vmatprep.subr.mxu0 0.0
        %3475 = vmatpush1.msra.mxu0 0.0
        %3476 = vmatprep.subr.mxu0 0.0
        %3477 = vmatpush1.msra.mxu0 0.0
        %3478 = vmatprep.subr.mxu0 0.0
        %3479 = vmatpush1.msra.mxu0 0.0
        %3480 = vmatprep.mubr.f32.mxu0 0.0
        %3481 = vmatmul.mubr.f32.gmra.mrb[0].mxu0 %v3232
        %v3482 = vpop.f32.mrb[0].mxu0
        %v3483 = vadd.f32 0.0, %v3482
        %v3484 = vpop.f32.mrb[0].mxu0
        %3485 = vdwg.mxu0
        %3486 = vst.msk [vmem:[#allocation3 + $0xf] sm:$0x1] %vm657, %v3483
        %v3487 = vmul.f32 %v3210, %v3126
        %v3488 = vmul.f32 %v3212, %v3127
        %3489 = vset.pattern.permute.xlu0 7
        %3490 = vperm.xlu0 %3489, %v531
        %v3491 = vpop.permute.xlu0 %3490
        %3493 = vset.pattern.permute.xlu0 7
        %3494 = vperm.xlu0 %3493, %v532
        %v3495 = vpop.permute.xlu0 %3494
        %v3497 = vlaneseq
        %v3498 = vshrl.u32 %v3497, 7
        %v3499 = vsub.s32 7, %v3498
        %v3500 = vrot.slane %v552, %v3499
        %v3501 = vmul.f32 %v3491, %v3500
        %v3502 = vmul.f32 %v3495, %v3500
        %v3503 = vadd.f32 %v3487, %v3501
        %v3504 = vadd.f32 %v3488, %v3502
        %3505 = vmatprep.subr.mxu0 0.0
        %3506 = vmatpush1.msra.mxu0 %v3503
        %3507 = vmatprep.subr.mxu0 0.0
        %3508 = vmatpush1.msra.mxu0 %v3504
        %3509 = vmatprep.subr.mxu0 0.0
        %3510 = vmatpush1.msra.mxu0 0.0
        %3511 = vmatprep.subr.mxu0 0.0
        %3512 = vmatpush1.msra.mxu0 0.0
        %3513 = vmatprep.subr.mxu0 0.0
        %3514 = vmatpush1.msra.mxu0 0.0
        %3515 = vmatprep.subr.mxu0 0.0
        %3516 = vmatpush1.msra.mxu0 0.0
        %3517 = vmatprep.subr.mxu0 0.0
        %3518 = vmatpush1.msra.mxu0 0.0
        %3519 = vmatprep.subr.mxu0 0.0
        %3520 = vmatpush1.msra.mxu0 0.0
        %3521 = vmatprep.subr.mxu0 0.0
        %3522 = vmatpush1.msra.mxu0 0.0
        %3523 = vmatprep.subr.mxu0 0.0
        %3524 = vmatpush1.msra.mxu0 0.0
        %3525 = vmatprep.subr.mxu0 0.0
        %3526 = vmatpush1.msra.mxu0 0.0
        %3527 = vmatprep.subr.mxu0 0.0
        %3528 = vmatpush1.msra.mxu0 0.0
        %3529 = vmatprep.subr.mxu0 0.0
        %3530 = vmatpush1.msra.mxu0 0.0
        %3531 = vmatprep.subr.mxu0 0.0
        %3532 = vmatpush1.msra.mxu0 0.0
        %3533 = vmatprep.subr.mxu0 0.0
        %3534 = vmatpush1.msra.mxu0 0.0
        %3535 = vmatprep.subr.mxu0 0.0
        %3536 = vmatpush1.msra.mxu0 0.0
        %3537 = vmatprep.subr.mxu0 0.0
        %3538 = vmatpush1.msra.mxu0 0.0
        %3539 = vmatprep.subr.mxu0 0.0
        %3540 = vmatpush1.msra.mxu0 0.0
        %3541 = vmatprep.subr.mxu0 0.0
        %3542 = vmatpush1.msra.mxu0 0.0
        %3543 = vmatprep.subr.mxu0 0.0
        %3544 = vmatpush1.msra.mxu0 0.0
        %3545 = vmatprep.subr.mxu0 0.0
        %3546 = vmatpush1.msra.mxu0 0.0
        %3547 = vmatprep.subr.mxu0 0.0
        %3548 = vmatpush1.msra.mxu0 0.0
        %3549 = vmatprep.subr.mxu0 0.0
        %3550 = vmatpush1.msra.mxu0 0.0
        %3551 = vmatprep.subr.mxu0 0.0
        %3552 = vmatpush1.msra.mxu0 0.0
        %3553 = vmatprep.subr.mxu0 0.0
        %3554 = vmatpush1.msra.mxu0 0.0
        %3555 = vmatprep.subr.mxu0 0.0
        %3556 = vmatpush1.msra.mxu0 0.0
        %3557 = vmatprep.subr.mxu0 0.0
        %3558 = vmatpush1.msra.mxu0 0.0
        %3559 = vmatprep.subr.mxu0 0.0
        %3560 = vmatpush1.msra.mxu0 0.0
        %3561 = vmatprep.subr.mxu0 0.0
        %3562 = vmatpush1.msra.mxu0 0.0
        %3563 = vmatprep.subr.mxu0 0.0
        %3564 = vmatpush1.msra.mxu0 0.0
        %3565 = vmatprep.subr.mxu0 0.0
        %3566 = vmatpush1.msra.mxu0 0.0
        %3567 = vmatprep.subr.mxu0 0.0
        %3568 = vmatpush1.msra.mxu0 0.0
        %3569 = vmatprep.mubr.f32.mxu0 0.0
        %3570 = vmatmul.mubr.f32.gmra.mrb[0].mxu0 %v3232
        %v3571 = vpop.f32.mrb[0].mxu0
        %v3572 = vadd.f32 0.0, %v3571
        %v3573 = vpop.f32.mrb[0].mxu0
        %3574 = vdwg.mxu0
        %3576 = vrot.lane.b32.xlu0 %v3572, 64
        %v3577 = vpop.permute.xlu0 %3576
        %3579 = vst.msk [vmem:[#allocation3 + $0xf] sm:$0x1] %vm753, %v3577
        %v3580 = vld [vmem:[#allocation3] sm:$0xff]
        %v3581 = vld [vmem:[#allocation3 + $0x8] sm:$0xff]
        %v3583 = vlaneseq
        %v3584 = vshrl.u32 %v3583, 7
        %v3585 = vsub.s32 0, %v3584
        %v3586 = vrot.slane %v447, %v3585
        %v3587 = vlaneseq
        %v3588 = vshrl.u32 %v3587, 7
        %v3589 = vsub.s32 1, %v3588
        %v3590 = vrot.slane %v447, %v3589
        %v3593 = vmul.f32 %v503, %v3586
        %v3594 = vmul.f32 %v504, %v3590
        %v3595 = vadd.f32 %v3580, %v3593
        %v3596 = vadd.f32 %v3581, %v3594
        %s3597 = smul.addr %s500, 8
        %s3598 = scalar_lea.vmem %s429, %s3597
        %3599 = vst [vmem:[%s3598] sm:$0xff] %v3595
        %3600 = vst [vmem:[%s3598 + $0x8] sm:$0xff] %v3596
      $region57: #{_lambda_.10} parent=47 // loop_footer
        %s461 = sadd.s32 1, %s457
      $region58: #{_lambda_.10} parent=47 // loop_footer_branch
        %456 = sbr.rel target = $region54
      $region59: #{_lambda_.10} parent=47 // loop_exit
        _
      %vm3601 = vcmask 523264
      %3602 = vst.msk [vmem:[#allocation2] sm:$0xff] %vm3601, %v462
      %3603 = vst.msk [vmem:[#allocation2 + $0x8] sm:$0xff] %vm3601, %v463
      %3604 = vst.msk [vmem:[#allocation2 + $0x10] sm:$0xff] %vm3601, %v464
      %3605 = vst.msk [vmem:[#allocation2 + $0x18] sm:$0xff] %vm3601, %v465
      %3606 = vst.msk [vmem:[#allocation2 + $0x20] sm:$0xff] %vm3601, %v466
      %3607 = vst.msk [vmem:[#allocation2 + $0x28] sm:$0xff] %vm3601, %v467
      %3608 = vst.msk [vmem:[#allocation2 + $0x30] sm:$0xff] %vm3601, %v468
      %3609 = vst.msk [vmem:[#allocation2 + $0x38] sm:$0xff] %vm3601, %v469
      %s3610 = smul.u32 8, %s23
      %p3611 = scmp.lt.s32.totalorder %s22, 1
      %s3612 = scalar_select %p3611, %s22, 1
      %p3613 = scmp.lt.s32.totalorder %s3610, 7
      %s3614 = scalar_select %p3613, %s3610, 7
      %s3615 = smul.addr %s3614, 2
      %s3616 = smul.addr %s3612, 16
      %s3617 = sadd.s32 %s3615, %s3616
      %s3618 = smul.addr %s3617, 8
      %s3619 = scalar_lea.vmem %s7, %s3618
      // Predicated region
      $region60: #{_lambda_.10} parent=47 // pred_check
        %p3620 = pneg %p225
      $region61: #{_lambda_.10} parent=47 // pred_check_branch
        %3622 = sbr.rel (%p3620) target = $region63
      $region62: #{_lambda_.10} parent=47 // pred_region
        %s3623 = smul.u32 8, %s23
      $region63: #{_lambda_.10} parent=47 // pred_fallthru
        _
    $region48: #{_lambda_.10} parent=5 // pred_fallthru
      _
    %p3624 = scmp.le.s32.totalorder 2, %s13
    // Predicated region
    $region64: #{_lambda_.10} parent=5 // pred_check
      %p3625 = pneg %p3624
    $region65: #{_lambda_.10} parent=5 // pred_check_branch
      %3627 = sbr.rel (%p3625) target = $region67
    $region66: #{_lambda_.10} parent=5 // pred_region
      %s3628 = ssub.s32 %s13, 2
      // Predicated region
      $region68: #{_lambda_.10} parent=66 // pred_check
        %p3629 = pneg %p231
      $region69: #{_lambda_.10} parent=66 // pred_check_branch
        %3631 = sbr.rel (%p3629) target = $region71
      $region70: #{_lambda_.10} parent=66 // pred_region
        %s3632 = smul.u32 8, %s25
        %p3633 = scmp.lt.s32.totalorder %s24, 1
        %s3634 = scalar_select %p3633, %s24, 1
        %p3635 = scmp.lt.s32.totalorder %s3632, 7
        %s3636 = scalar_select %p3635, %s3632, 7
        %s3637 = smul.addr %s3636, 2
        %s3638 = smul.addr %s3634, 16
        %s3639 = sadd.s32 %s3637, %s3638
        %s3640 = smul.addr %s3639, 8
        %s3641 = scalar_lea.vmem %s7, %s3640
      $region71: #{_lambda_.10} parent=66 // pred_fallthru
        _
    $region67: #{_lambda_.10} parent=5 // pred_fallthru
      _
  $region6: #{_lambda_.10} parent=0 // loop_footer
    %s17 = sadd.s32 1, %s13
  $region7: #{_lambda_.10} parent=0 // loop_footer_branch
    %12 = sbr.rel target = $region3
  $region8: #{_lambda_.10} parent=0 // loop_exit
    _

</llo_original>
